<compile_context>
chip_gen: v6e
topology: v6e:2x2x1
jax: 0.10.0
libtpu: 0.0.40
codegen_flags: <defaults>
</compile_context>

<pallas_src>
import functools

import jax
import jax.numpy as jnp
from jax.experimental import pallas as pl
from jax.experimental.pallas import tpu as pltpu

# ----------------------------- config ---------------------------------------
B = 32           # number of graphs per call (batched per perf feedback)
TILE_B = 8       # graphs per grid step (multiple of 8 for sublane alignment)
N = 16           # nodes per (densely padded) graph
FEAT_DIM = 32    # params.feat_dim   (omics feature dim)
EMB_DIM = 64     # params.emb_dim    (1808 = 3*560 + 2*64)
REPR_DIM = 280   # flattened per-node 'repr' dim from each of RGCN / GAT
GOUT_DIM = 2 * REPR_DIM                     # 560 (RGCN repr ++ GAT repr)
GREP_DIM = 3 * GOUT_DIM + 2 * EMB_DIM       # 1808
BN_EPS = 1e-5


# ----------------------------- fused kernel ----------------------------------
def _graph_classifier_kernel(
    # scalar-prefetch (SMEM) refs: full (B,) index arrays
    hidx_ref, tidx_ref,
    # per-tile tensor inputs (VMEM)
    rgcn_ref, gat_ref, cnt_ref, hfeat_ref, tfeat_ref,
    # weights (VMEM, constant index_map -> resident across grid steps)
    mp1w_ref, mp1b_ref, bns_ref, bnb_ref, mp2w_ref, mp2b_ref,
    fcw_ref, fcb_ref, fc1w_ref, fc1b_ref, fc2w_ref, fc2b_ref,
    # outputs
    out_ref, grep_ref):
  tb, nn, _ = rgcn_ref.shape                       # (TILE_B, N, 280)

  # ---- mean_nodes readout: vectorized masked mean over valid nodes ----------
  cnt = cnt_ref[...]                               # (TILE_B, 1) int32
  node_iota = jax.lax.broadcasted_iota(jnp.int32, (tb, nn, 1), 1)
  valid = node_iota < cnt[:, None, :]              # (TILE_B, N, 1)
  # guard against fully padded graphs (count == 0): divide by max(count, 1)
  inv_n = 1.0 / jnp.maximum(cnt, 1).astype(jnp.float32)   # (TILE_B, 1)
  rgcn = rgcn_ref[...]                             # (TILE_B, N, 280)
  gat = gat_ref[...]
  g1_mean = jnp.sum(jnp.where(valid, rgcn, 0.0), axis=1) * inv_n   # (TILE_B, 280)
  g2_mean = jnp.sum(jnp.where(valid, gat, 0.0), axis=1) * inv_n    # (TILE_B, 280)

  # ---- head / tail gather via dynamic sublane-slice loads --------------------
  base = pl.program_id(0) * tb                     # global graph offset
  h1r, h2r, t1r, t2r = [], [], [], []
  for b in range(tb):                              # static unroll over the tile
    h = jnp.clip(hidx_ref[base + b], 0, nn - 1)    # node with ndata['id'] == 1
    t = jnp.clip(tidx_ref[base + b], 0, nn - 1)    # node with ndata['id'] == 2
    h1r.append(rgcn_ref[b, pl.ds(h, 1), :])        # (1, 280)
    h2r.append(gat_ref[b, pl.ds(h, 1), :])
    t1r.append(rgcn_ref[b, pl.ds(t, 1), :])
    t2r.append(gat_ref[b, pl.ds(t, 1), :])
  head1 = jnp.concatenate(h1r, axis=0)             # (TILE_B, 280)
  head2 = jnp.concatenate(h2r, axis=0)
  tail1 = jnp.concatenate(t1r, axis=0)
  tail2 = jnp.concatenate(t2r, axis=0)

  # ---- omics fusion MLP: mp_layer2(bn1(relu(mp_layer1(feats)))) --------------
  feats = jnp.concatenate([hfeat_ref[...], tfeat_ref[...]], axis=0)  # (2*TILE_B, F)
  hh = jnp.dot(feats.astype(jnp.bfloat16), mp1w_ref[...],
               preferred_element_type=jnp.float32) + mp1b_ref[...]
  hh = jnp.maximum(hh, 0.0)                        # ReLU
  hh = hh * bns_ref[...] + bnb_ref[...]            # BatchNorm1d (eval, folded)
  fused = jnp.dot(hh.astype(jnp.bfloat16), mp2w_ref[...],
                  preferred_element_type=jnp.float32) + mp2b_ref[...]
  fuse_feat = jnp.concatenate([fused[:tb], fused[tb:]], axis=1)      # (TILE_B, 128)

  # ---- g_rep (same feature ordering as the torch cat); written once ----------
  g_rep = jnp.concatenate(
      [g1_mean, g2_mean, head1, head2, tail1, tail2, fuse_feat], axis=1)  # (TILE_B, 1808)
  grep_ref[...] = g_rep

  # ---- classifier head: fc_layer -> ReLU -> fc_layer_1 -> ReLU -> fc_layer_2 -
  # single (TILE_B,1808)x(1808,512) dot; dropout == identity in eval mode
  h0 = jnp.dot(g_rep.astype(jnp.bfloat16), fcw_ref[...],
               preferred_element_type=jnp.float32) + fcb_ref[...]
  h0 = jnp.maximum(h0, 0.0)                        # (TILE_B, 512)
  h1 = jnp.dot(h0.astype(jnp.bfloat16), fc1w_ref[...],
               preferred_element_type=jnp.float32) + fc1b_ref[...]
  h1 = jnp.maximum(h1, 0.0)                        # (TILE_B, 128)
  # fc_layer_2 (128 -> 1) as a VPU reduction instead of a 1-column MXU matmul
  out_ref[...] = (jnp.sum(h1 * fc2w_ref[...], axis=-1, keepdims=True)
                  + fc2b_ref[...])                 # (TILE_B, 1)


# --------------------------- pallas wrapper -----------------------------------
@functools.partial(jax.jit, static_argnames=("batch_tile",))
def graph_classifier_forward(repr_rgcn, repr_gat, head_idx, tail_idx,
                             node_counts, head_feat, tail_feat, params,
                             *, batch_tile=TILE_B):
  b, n, _ = repr_rgcn.shape
  assert b % batch_tile == 0, (b, batch_tile)
  grid = (b // batch_tile,)
  counts2d = node_counts.astype(jnp.int32).reshape(b, 1)

  weight_args = (params["mp1_w"], params["mp1_b"],
                 params["bn_scale"], params["bn_shift"],
                 params["mp2_w"], params["mp2_b"],
                 params["fc_w"], params["fc_b"],
                 params["fc1_w"], params["fc1_b"],
                 params["fc2_w"], params["fc2_b"])

  def batch_spec(shape):                 # tiled along the batch axis
    nd = len(shape)
    blk = (batch_tile,) + tuple(shape[1:])
    return pl.BlockSpec(blk, lambda i, *_: (i,) + (0,) * (nd - 1))

  def const_spec(shape):                 # weights: same block every step
    nd = len(shape)
    return pl.BlockSpec(tuple(shape), lambda i, *_: (0,) * nd)

  in_specs = ([batch_spec(repr_rgcn.shape), batch_spec(repr_gat.shape),
               batch_spec(counts2d.shape), batch_spec(head_feat.shape),
               batch_spec(tail_feat.shape)]
              + [const_spec(w.shape) for w in weight_args])

  out, g_rep = pl.pallas_call(
      _graph_classifier_kernel,
      out_shape=(jax.ShapeDtypeStruct((b, 1), jnp.float32),
                 jax.ShapeDtypeStruct((b, GREP_DIM), jnp.float32)),
      grid_spec=pltpu.PrefetchScalarGridSpec(
          num_scalar_prefetch=2,                    # head_idx, tail_idx (SMEM)
          grid=grid,
          in_specs=in_specs,
          out_specs=[batch_spec((b, 1)), batch_spec((b, GREP_DIM))]),
      compiler_params=pltpu.CompilerParams(
          dimension_semantics=("parallel",)),       # split tiles over v7x TCs
  )(head_idx.astype(jnp.int32), tail_idx.astype(jnp.int32),
    repr_rgcn, repr_gat, counts2d, head_feat, tail_feat, *weight_args)

  return out[:, 0], g_rep                           # .squeeze(-1)


# ----------------------------- parameters ------------------------------------
def init_params(key):
  ks = jax.random.split(key, 5)

  def lin(k, fan_in, fan_out):
    bound = 1.0 / (fan_in ** 0.5)
    kw, kb = jax.random.split(k)
    w = jax.random.uniform(kw, (fan_in, fan_out), jnp.float32, -bound, bound)
    bvec = jax.random.uniform(kb, (1, fan_out), jnp.float32, -bound, bound)
    return w, bvec

  p = {}
  w, bvec = lin(ks[0], FEAT_DIM, 256)                   # mp_layer1
  p["mp1_w"], p["mp1_b"] = w.astype(jnp.bfloat16), bvec
  w, bvec = lin(ks[1], 256, EMB_DIM)                    # mp_layer2
  p["mp2_w"], p["mp2_b"] = w.astype(jnp.bfloat16), bvec

  # BatchNorm1d(256) default init: gamma=1, beta=0, running_mean=0, running_var=1
  gamma = jnp.ones((1, 256), jnp.float32)
  beta = jnp.zeros((1, 256), jnp.float32)
  rmean = jnp.zeros((1, 256), jnp.float32)
  rvar = jnp.ones((1, 256), jnp.float32)
  p["bn_scale"] = gamma / jnp.sqrt(rvar + BN_EPS)       # folded eval-mode BN
  p["bn_shift"] = beta - rmean * p["bn_scale"]

  w, bvec = lin(ks[2], GREP_DIM, 512)                   # fc_layer (1808 -> 512)
  p["fc_w"], p["fc_b"] = w.astype(jnp.bfloat16), bvec
  w, bvec = lin(ks[3], 512, 128)                        # fc_layer_1
  p["fc1_w"], p["fc1_b"] = w.astype(jnp.bfloat16), bvec
  w, bvec = lin(ks[4], 128, 1)                          # fc_layer_2
  p["fc2_w"] = w.reshape(1, 128)                        # f32 row for VPU reduce
  p["fc2_b"] = bvec.reshape(1, 1)
  return p


# ------------------------ pure-JAX reference (same bf16 casts) ----------------
def reference_forward(repr_rgcn, repr_gat, head_idx, tail_idx, node_counts,
                      head_feat, tail_feat, params):
  b, n, _ = repr_rgcn.shape
  iota = jnp.arange(n)[None, :, None]
  cnt = node_counts.astype(jnp.int32)[:, None, None]
  valid = iota < cnt
  inv_n = (1.0 / jnp.maximum(node_counts.astype(jnp.float32), 1.0))[:, None]
  g1 = jnp.sum(jnp.where(valid, repr_rgcn, 0.0), axis=1) * inv_n
  g2 = jnp.sum(jnp.where(valid, repr_gat, 0.0), axis=1) * inv_n

  hidx = jnp.clip(head_idx, 0, n - 1)
  tidx = jnp.clip(tail_idx, 0, n - 1)
  gather = jax.vmap(
      lambda xb, i: jax.lax.dynamic_index_in_dim(xb, i, axis=0, keepdims=False))
  h1, h2 = gather(repr_rgcn, hidx), gather(repr_gat, hidx)
  t1, t2 = gather(repr_rgcn, tidx), gather(repr_gat, tidx)

  def bdot(x, w):
    return jnp.dot(x.astype(jnp.bfloat16), w, preferred_element_type=jnp.float32)

  feats = jnp.concatenate([head_feat, tail_feat], axis=0)
  hh = jnp.maximum(bdot(feats, params["mp1_w"]) + params["mp1_b"], 0.0)
  hh = hh * params["bn_scale"] + params["bn_shift"]
  fused = bdot(hh, params["mp2_w"]) + params["mp2_b"]
  fuse_feat = jnp.concatenate([fused[:b], fused[b:]], axis=1)

  g_rep = jnp.concatenate([g1, g2, h1, h2, t1, t2, fuse_feat], axis=1)
  h0 = jnp.maximum(bdot(g_rep, params["fc_w"]) + params["fc_b"], 0.0)
  h1a = jnp.maximum(bdot(h0, params["fc1_w"]) + params["fc1_b"], 0.0)
  out = jnp.sum(h1a * params["fc2_w"], axis=-1) + params["fc2_b"][0, 0]
  return out, g_rep


# ------------------------------- main -----------------------------------------
if __name__ == "__main__":
  key = jax.random.PRNGKey(0)
  k1, k2, k3, k4, k5, k6, k7, k8 = jax.random.split(key, 8)

  repr_rgcn = jax.random.normal(k1, (B, N, REPR_DIM), jnp.float32)
  repr_gat = jax.random.normal(k2, (B, N, REPR_DIM), jnp.float32)
  head_feat = jax.random.normal(k3, (B, FEAT_DIM), jnp.float32)
  tail_feat = jax.random.normal(k4, (B, FEAT_DIM), jnp.float32)
  head_idx = jax.random.randint(k5, (B,), 0, N, jnp.int32)   # ndata['id'] == 1
  tail_idx = jax.random.randint(k6, (B,), 0, N, jnp.int32)   # ndata['id'] == 2
  # true node count per graph (rest is padding); include an empty graph to
  # exercise the mean_nodes divide-by-zero guard.
  node_counts = jax.random.randint(k7, (B,), 1, N + 1, jnp.int32)
  node_counts = node_counts.at[3].set(0)

  params = init_params(k8)

  output, g_rep = graph_classifier_forward(
      repr_rgcn, repr_gat, head_idx, tail_idx, node_counts,
      head_feat, tail_feat, params, batch_tile=TILE_B)
  jax.block_until_ready((output, g_rep))

  out_ref, grep_ref = reference_forward(
      repr_rgcn, repr_gat, head_idx, tail_idx, node_counts,
      head_feat, tail_feat, params)

  assert output.shape == (B,), output.shape
  assert g_rep.shape == (B, GREP_DIM), g_rep.shape
  assert bool(jnp.all(jnp.isfinite(output)))
  assert bool(jnp.all(jnp.isfinite(g_rep)))
  assert bool(jnp.allclose(g_rep, grep_ref, rtol=5e-2, atol=5e-2))
  assert bool(jnp.allclose(output, out_ref, rtol=5e-2, atol=5e-2))
  print("KERNEL_OK")
</pallas_src>

<mosaic_0001>
module attributes {stable_mosaic.version = 11 : i64} {
  func.func @_graph_classifier_kernel(%arg0: i32, %arg1: memref<32xi32, #tpu.memory_space<smem>>, %arg2: memref<32xi32, #tpu.memory_space<smem>>, %arg3: memref<8x16x280xf32, #tpu.memory_space<vmem>>, %arg4: memref<8x16x280xf32, #tpu.memory_space<vmem>>, %arg5: memref<8x1xi32, #tpu.memory_space<vmem>>, %arg6: memref<8x32xf32, #tpu.memory_space<vmem>>, %arg7: memref<8x32xf32, #tpu.memory_space<vmem>>, %arg8: memref<32x256xbf16, #tpu.memory_space<vmem>>, %arg9: memref<1x256xf32, #tpu.memory_space<vmem>>, %arg10: memref<1x256xf32, #tpu.memory_space<vmem>>, %arg11: memref<1x256xf32, #tpu.memory_space<vmem>>, %arg12: memref<256x64xbf16, #tpu.memory_space<vmem>>, %arg13: memref<1x64xf32, #tpu.memory_space<vmem>>, %arg14: memref<1808x512xbf16, #tpu.memory_space<vmem>>, %arg15: memref<1x512xf32, #tpu.memory_space<vmem>>, %arg16: memref<512x128xbf16, #tpu.memory_space<vmem>>, %arg17: memref<1x128xf32, #tpu.memory_space<vmem>>, %arg18: memref<1x128xf32, #tpu.memory_space<vmem>>, %arg19: memref<1x1xf32, #tpu.memory_space<vmem>>, %arg20: memref<8x1xf32, #tpu.memory_space<vmem>>, %arg21: memref<8x1808xf32, #tpu.memory_space<vmem>>) attributes {dimension_semantics = [#tpu.dimension_semantics<parallel>], iteration_bounds = array<i64: 4>, scalar_prefetch = 2 : i64, scratch_operands = 0 : i64, tpu.core_type = #tpu.core_type<tc>, window_params = [{transform_indices = @transform_0, window_bounds = array<i64: 8, 16, 280>}, {transform_indices = @transform_1, window_bounds = array<i64: 8, 16, 280>}, {transform_indices = @transform_2, window_bounds = array<i64: 8, 1>}, {transform_indices = @transform_3, window_bounds = array<i64: 8, 32>}, {transform_indices = @transform_4, window_bounds = array<i64: 8, 32>}, {pipeline_mode = #tpu.pipeline_mode<synchronous>, transform_indices = @transform_5, window_bounds = array<i64: 32, 256>}, {pipeline_mode = #tpu.pipeline_mode<synchronous>, transform_indices = @transform_6, window_bounds = array<i64: 1, 256>}, {pipeline_mode = #tpu.pipeline_mode<synchronous>, transform_indices = @transform_7, window_bounds = array<i64: 1, 256>}, {pipeline_mode = #tpu.pipeline_mode<synchronous>, transform_indices = @transform_8, window_bounds = array<i64: 1, 256>}, {pipeline_mode = #tpu.pipeline_mode<synchronous>, transform_indices = @transform_9, window_bounds = array<i64: 256, 64>}, {pipeline_mode = #tpu.pipeline_mode<synchronous>, transform_indices = @transform_10, window_bounds = array<i64: 1, 64>}, {pipeline_mode = #tpu.pipeline_mode<synchronous>, transform_indices = @transform_11, window_bounds = array<i64: 1808, 512>}, {pipeline_mode = #tpu.pipeline_mode<synchronous>, transform_indices = @transform_12, window_bounds = array<i64: 1, 512>}, {pipeline_mode = #tpu.pipeline_mode<synchronous>, transform_indices = @transform_13, window_bounds = array<i64: 512, 128>}, {pipeline_mode = #tpu.pipeline_mode<synchronous>, transform_indices = @transform_14, window_bounds = array<i64: 1, 128>}, {pipeline_mode = #tpu.pipeline_mode<synchronous>, transform_indices = @transform_15, window_bounds = array<i64: 1, 128>}, {pipeline_mode = #tpu.pipeline_mode<synchronous>, transform_indices = @transform_16, window_bounds = array<i64: 1, 1>}, {transform_indices = @transform_17, window_bounds = array<i64: 8, 1>}, {transform_indices = @transform_18, window_bounds = array<i64: 8, 1808>}]} {
    %c0 = arith.constant 0 : index
    %c0_0 = arith.constant 0 : index
    %0 = vector.load %arg5[%c0, %c0_0] : memref<8x1xi32, #tpu.memory_space<vmem>>, vector<8x1xi32>
    %1 = tpu.iota {dimensions = array<i32: 1>} : vector<8x16x1xi32>
    %2 = vector.shape_cast %0 : vector<8x1xi32> to vector<8x1x1xi32>
    %3 = vector.broadcast %2 : vector<8x1x1xi32> to vector<8x16x1xi32>
    %4 = arith.cmpi slt, %1, %3 : vector<8x16x1xi32>
    %c1_i32 = arith.constant 1 : i32
    %5 = vector.broadcast %c1_i32 : i32 to vector<8x1xi32>
    %6 = arith.maxsi %0, %5 : vector<8x1xi32>
    %7 = arith.sitofp %6 : vector<8x1xi32> to vector<8x1xf32>
    %cst = arith.constant 1.000000e+00 : f32
    %8 = vector.broadcast %cst : f32 to vector<8x1xf32>
    %9 = arith.divf %8, %7 : vector<8x1xf32>
    %c0_1 = arith.constant 0 : index
    %c0_2 = arith.constant 0 : index
    %c0_3 = arith.constant 0 : index
    %10 = vector.load %arg3[%c0_1, %c0_2, %c0_3] : memref<8x16x280xf32, #tpu.memory_space<vmem>>, vector<8x16x280xf32>
    %c0_4 = arith.constant 0 : index
    %c0_5 = arith.constant 0 : index
    %c0_6 = arith.constant 0 : index
    %11 = vector.load %arg4[%c0_4, %c0_5, %c0_6] : memref<8x16x280xf32, #tpu.memory_space<vmem>>, vector<8x16x280xf32>
    %cst_7 = arith.constant 0.000000e+00 : f32
    %12 = vector.shape_cast %4 : vector<8x16x1xi1> to vector<8x16x1xi1>
    %13 = vector.broadcast %12 : vector<8x16x1xi1> to vector<8x16x280xi1>
    %14 = vector.broadcast %cst_7 : f32 to vector<8x16x280xf32>
    %15 = arith.select %13, %10, %14 : vector<8x16x280xi1>, vector<8x16x280xf32>
    %cst_8 = arith.constant dense<0.000000e+00> : vector<8x280xf32>
    %16 = vector.multi_reduction <add>, %15, %cst_8 [1] : vector<8x16x280xf32> to vector<8x280xf32>
    %17 = vector.broadcast %9 : vector<8x1xf32> to vector<8x280xf32>
    %18 = arith.mulf %16, %17 : vector<8x280xf32>
    %cst_9 = arith.constant 0.000000e+00 : f32
    %19 = vector.shape_cast %4 : vector<8x16x1xi1> to vector<8x16x1xi1>
    %20 = vector.broadcast %19 : vector<8x16x1xi1> to vector<8x16x280xi1>
    %21 = vector.broadcast %cst_9 : f32 to vector<8x16x280xf32>
    %22 = arith.select %20, %11, %21 : vector<8x16x280xi1>, vector<8x16x280xf32>
    %cst_10 = arith.constant dense<0.000000e+00> : vector<8x280xf32>
    %23 = vector.multi_reduction <add>, %22, %cst_10 [1] : vector<8x16x280xf32> to vector<8x280xf32>
    %24 = vector.broadcast %9 : vector<8x1xf32> to vector<8x280xf32>
    %25 = arith.mulf %23, %24 : vector<8x280xf32>
    %c8_i32 = arith.constant 8 : i32
    %26 = arith.muli %arg0, %c8_i32 : i32
    %c0_i32 = arith.constant 0 : i32
    %27 = arith.addi %26, %c0_i32 : i32
    %28 = arith.index_cast %27 : i32 to index
    %29 = memref.load %arg1[%28] : memref<32xi32, #tpu.memory_space<smem>>
    %c0_i32_11 = arith.constant 0 : i32
    %c15_i32 = arith.constant 15 : i32
    %30 = arith.maxsi %c0_i32_11, %29 : i32
    %31 = arith.minsi %c15_i32, %30 : i32
    %c0_i32_12 = arith.constant 0 : i32
    %32 = arith.addi %26, %c0_i32_12 : i32
    %33 = arith.index_cast %32 : i32 to index
    %34 = memref.load %arg2[%33] : memref<32xi32, #tpu.memory_space<smem>>
    %c0_i32_13 = arith.constant 0 : i32
    %c15_i32_14 = arith.constant 15 : i32
    %35 = arith.maxsi %c0_i32_13, %34 : i32
    %36 = arith.minsi %c15_i32_14, %35 : i32
    %c0_15 = arith.constant 0 : index
    %37 = arith.index_cast %31 : i32 to index
    %c0_16 = arith.constant 0 : index
    %38 = vector.load %arg3[%c0_15, %37, %c0_16] : memref<8x16x280xf32, #tpu.memory_space<vmem>>, vector<1x1x280xf32>
    %39 = vector.shape_cast %38 : vector<1x1x280xf32> to vector<1x280xf32>
    %c0_17 = arith.constant 0 : index
    %40 = arith.index_cast %31 : i32 to index
    %c0_18 = arith.constant 0 : index
    %41 = vector.load %arg4[%c0_17, %40, %c0_18] : memref<8x16x280xf32, #tpu.memory_space<vmem>>, vector<1x1x280xf32>
    %42 = vector.shape_cast %41 : vector<1x1x280xf32> to vector<1x280xf32>
    %c0_19 = arith.constant 0 : index
    %43 = arith.index_cast %36 : i32 to index
    %c0_20 = arith.constant 0 : index
    %44 = vector.load %arg3[%c0_19, %43, %c0_20] : memref<8x16x280xf32, #tpu.memory_space<vmem>>, vector<1x1x280xf32>
    %45 = vector.shape_cast %44 : vector<1x1x280xf32> to vector<1x280xf32>
    %c0_21 = arith.constant 0 : index
    %46 = arith.index_cast %36 : i32 to index
    %c0_22 = arith.constant 0 : index
    %47 = vector.load %arg4[%c0_21, %46, %c0_22] : memref<8x16x280xf32, #tpu.memory_space<vmem>>, vector<1x1x280xf32>
    %48 = vector.shape_cast %47 : vector<1x1x280xf32> to vector<1x280xf32>
    %c1_i32_23 = arith.constant 1 : i32
    %49 = arith.addi %26, %c1_i32_23 : i32
    %50 = arith.index_cast %49 : i32 to index
    %51 = memref.load %arg1[%50] : memref<32xi32, #tpu.memory_space<smem>>
    %c0_i32_24 = arith.constant 0 : i32
    %c15_i32_25 = arith.constant 15 : i32
    %52 = arith.maxsi %c0_i32_24, %51 : i32
    %53 = arith.minsi %c15_i32_25, %52 : i32
    %c1_i32_26 = arith.constant 1 : i32
    %54 = arith.addi %26, %c1_i32_26 : i32
    %55 = arith.index_cast %54 : i32 to index
    %56 = memref.load %arg2[%55] : memref<32xi32, #tpu.memory_space<smem>>
    %c0_i32_27 = arith.constant 0 : i32
    %c15_i32_28 = arith.constant 15 : i32
    %57 = arith.maxsi %c0_i32_27, %56 : i32
    %58 = arith.minsi %c15_i32_28, %57 : i32
    %c1 = arith.constant 1 : index
    %59 = arith.index_cast %53 : i32 to index
    %c0_29 = arith.constant 0 : index
    %60 = vector.load %arg3[%c1, %59, %c0_29] : memref<8x16x280xf32, #tpu.memory_space<vmem>>, vector<1x1x280xf32>
    %61 = vector.shape_cast %60 : vector<1x1x280xf32> to vector<1x280xf32>
    %c1_30 = arith.constant 1 : index
    %62 = arith.index_cast %53 : i32 to index
    %c0_31 = arith.constant 0 : index
    %63 = vector.load %arg4[%c1_30, %62, %c0_31] : memref<8x16x280xf32, #tpu.memory_space<vmem>>, vector<1x1x280xf32>
    %64 = vector.shape_cast %63 : vector<1x1x280xf32> to vector<1x280xf32>
    %c1_32 = arith.constant 1 : index
    %65 = arith.index_cast %58 : i32 to index
    %c0_33 = arith.constant 0 : index
    %66 = vector.load %arg3[%c1_32, %65, %c0_33] : memref<8x16x280xf32, #tpu.memory_space<vmem>>, vector<1x1x280xf32>
    %67 = vector.shape_cast %66 : vector<1x1x280xf32> to vector<1x280xf32>
    %c1_34 = arith.constant 1 : index
    %68 = arith.index_cast %58 : i32 to index
    %c0_35 = arith.constant 0 : index
    %69 = vector.load %arg4[%c1_34, %68, %c0_35] : memref<8x16x280xf32, #tpu.memory_space<vmem>>, vector<1x1x280xf32>
    %70 = vector.shape_cast %69 : vector<1x1x280xf32> to vector<1x280xf32>
    %c2_i32 = arith.constant 2 : i32
    %71 = arith.addi %26, %c2_i32 : i32
    %72 = arith.index_cast %71 : i32 to index
    %73 = memref.load %arg1[%72] : memref<32xi32, #tpu.memory_space<smem>>
    %c0_i32_36 = arith.constant 0 : i32
    %c15_i32_37 = arith.constant 15 : i32
    %74 = arith.maxsi %c0_i32_36, %73 : i32
    %75 = arith.minsi %c15_i32_37, %74 : i32
    %c2_i32_38 = arith.constant 2 : i32
    %76 = arith.addi %26, %c2_i32_38 : i32
    %77 = arith.index_cast %76 : i32 to index
    %78 = memref.load %arg2[%77] : memref<32xi32, #tpu.memory_space<smem>>
    %c0_i32_39 = arith.constant 0 : i32
    %c15_i32_40 = arith.constant 15 : i32
    %79 = arith.maxsi %c0_i32_39, %78 : i32
    %80 = arith.minsi %c15_i32_40, %79 : i32
    %c2 = arith.constant 2 : index
    %81 = arith.index_cast %75 : i32 to index
    %c0_41 = arith.constant 0 : index
    %82 = vector.load %arg3[%c2, %81, %c0_41] : memref<8x16x280xf32, #tpu.memory_space<vmem>>, vector<1x1x280xf32>
    %83 = vector.shape_cast %82 : vector<1x1x280xf32> to vector<1x280xf32>
    %c2_42 = arith.constant 2 : index
    %84 = arith.index_cast %75 : i32 to index
    %c0_43 = arith.constant 0 : index
    %85 = vector.load %arg4[%c2_42, %84, %c0_43] : memref<8x16x280xf32, #tpu.memory_space<vmem>>, vector<1x1x280xf32>
    %86 = vector.shape_cast %85 : vector<1x1x280xf32> to vector<1x280xf32>
    %c2_44 = arith.constant 2 : index
    %87 = arith.index_cast %80 : i32 to index
    %c0_45 = arith.constant 0 : index
    %88 = vector.load %arg3[%c2_44, %87, %c0_45] : memref<8x16x280xf32, #tpu.memory_space<vmem>>, vector<1x1x280xf32>
    %89 = vector.shape_cast %88 : vector<1x1x280xf32> to vector<1x280xf32>
    %c2_46 = arith.constant 2 : index
    %90 = arith.index_cast %80 : i32 to index
    %c0_47 = arith.constant 0 : index
    %91 = vector.load %arg4[%c2_46, %90, %c0_47] : memref<8x16x280xf32, #tpu.memory_space<vmem>>, vector<1x1x280xf32>
    %92 = vector.shape_cast %91 : vector<1x1x280xf32> to vector<1x280xf32>
    %c3_i32 = arith.constant 3 : i32
    %93 = arith.addi %26, %c3_i32 : i32
    %94 = arith.index_cast %93 : i32 to index
    %95 = memref.load %arg1[%94] : memref<32xi32, #tpu.memory_space<smem>>
    %c0_i32_48 = arith.constant 0 : i32
    %c15_i32_49 = arith.constant 15 : i32
    %96 = arith.maxsi %c0_i32_48, %95 : i32
    %97 = arith.minsi %c15_i32_49, %96 : i32
    %c3_i32_50 = arith.constant 3 : i32
    %98 = arith.addi %26, %c3_i32_50 : i32
    %99 = arith.index_cast %98 : i32 to index
    %100 = memref.load %arg2[%99] : memref<32xi32, #tpu.memory_space<smem>>
    %c0_i32_51 = arith.constant 0 : i32
    %c15_i32_52 = arith.constant 15 : i32
    %101 = arith.maxsi %c0_i32_51, %100 : i32
    %102 = arith.minsi %c15_i32_52, %101 : i32
    %c3 = arith.constant 3 : index
    %103 = arith.index_cast %97 : i32 to index
    %c0_53 = arith.constant 0 : index
    %104 = vector.load %arg3[%c3, %103, %c0_53] : memref<8x16x280xf32, #tpu.memory_space<vmem>>, vector<1x1x280xf32>
    %105 = vector.shape_cast %104 : vector<1x1x280xf32> to vector<1x280xf32>
    %c3_54 = arith.constant 3 : index
    %106 = arith.index_cast %97 : i32 to index
    %c0_55 = arith.constant 0 : index
    %107 = vector.load %arg4[%c3_54, %106, %c0_55] : memref<8x16x280xf32, #tpu.memory_space<vmem>>, vector<1x1x280xf32>
    %108 = vector.shape_cast %107 : vector<1x1x280xf32> to vector<1x280xf32>
    %c3_56 = arith.constant 3 : index
    %109 = arith.index_cast %102 : i32 to index
    %c0_57 = arith.constant 0 : index
    %110 = vector.load %arg3[%c3_56, %109, %c0_57] : memref<8x16x280xf32, #tpu.memory_space<vmem>>, vector<1x1x280xf32>
    %111 = vector.shape_cast %110 : vector<1x1x280xf32> to vector<1x280xf32>
    %c3_58 = arith.constant 3 : index
    %112 = arith.index_cast %102 : i32 to index
    %c0_59 = arith.constant 0 : index
    %113 = vector.load %arg4[%c3_58, %112, %c0_59] : memref<8x16x280xf32, #tpu.memory_space<vmem>>, vector<1x1x280xf32>
    %114 = vector.shape_cast %113 : vector<1x1x280xf32> to vector<1x280xf32>
    %c4_i32 = arith.constant 4 : i32
    %115 = arith.addi %26, %c4_i32 : i32
    %116 = arith.index_cast %115 : i32 to index
    %117 = memref.load %arg1[%116] : memref<32xi32, #tpu.memory_space<smem>>
    %c0_i32_60 = arith.constant 0 : i32
    %c15_i32_61 = arith.constant 15 : i32
    %118 = arith.maxsi %c0_i32_60, %117 : i32
    %119 = arith.minsi %c15_i32_61, %118 : i32
    %c4_i32_62 = arith.constant 4 : i32
    %120 = arith.addi %26, %c4_i32_62 : i32
    %121 = arith.index_cast %120 : i32 to index
    %122 = memref.load %arg2[%121] : memref<32xi32, #tpu.memory_space<smem>>
    %c0_i32_63 = arith.constant 0 : i32
    %c15_i32_64 = arith.constant 15 : i32
    %123 = arith.maxsi %c0_i32_63, %122 : i32
    %124 = arith.minsi %c15_i32_64, %123 : i32
    %c4 = arith.constant 4 : index
    %125 = arith.index_cast %119 : i32 to index
    %c0_65 = arith.constant 0 : index
    %126 = vector.load %arg3[%c4, %125, %c0_65] : memref<8x16x280xf32, #tpu.memory_space<vmem>>, vector<1x1x280xf32>
    %127 = vector.shape_cast %126 : vector<1x1x280xf32> to vector<1x280xf32>
    %c4_66 = arith.constant 4 : index
    %128 = arith.index_cast %119 : i32 to index
    %c0_67 = arith.constant 0 : index
    %129 = vector.load %arg4[%c4_66, %128, %c0_67] : memref<8x16x280xf32, #tpu.memory_space<vmem>>, vector<1x1x280xf32>
    %130 = vector.shape_cast %129 : vector<1x1x280xf32> to vector<1x280xf32>
    %c4_68 = arith.constant 4 : index
    %131 = arith.index_cast %124 : i32 to index
    %c0_69 = arith.constant 0 : index
    %132 = vector.load %arg3[%c4_68, %131, %c0_69] : memref<8x16x280xf32, #tpu.memory_space<vmem>>, vector<1x1x280xf32>
    %133 = vector.shape_cast %132 : vector<1x1x280xf32> to vector<1x280xf32>
    %c4_70 = arith.constant 4 : index
    %134 = arith.index_cast %124 : i32 to index
    %c0_71 = arith.constant 0 : index
    %135 = vector.load %arg4[%c4_70, %134, %c0_71] : memref<8x16x280xf32, #tpu.memory_space<vmem>>, vector<1x1x280xf32>
    %136 = vector.shape_cast %135 : vector<1x1x280xf32> to vector<1x280xf32>
    %c5_i32 = arith.constant 5 : i32
    %137 = arith.addi %26, %c5_i32 : i32
    %138 = arith.index_cast %137 : i32 to index
    %139 = memref.load %arg1[%138] : memref<32xi32, #tpu.memory_space<smem>>
    %c0_i32_72 = arith.constant 0 : i32
    %c15_i32_73 = arith.constant 15 : i32
    %140 = arith.maxsi %c0_i32_72, %139 : i32
    %141 = arith.minsi %c15_i32_73, %140 : i32
    %c5_i32_74 = arith.constant 5 : i32
    %142 = arith.addi %26, %c5_i32_74 : i32
    %143 = arith.index_cast %142 : i32 to index
    %144 = memref.load %arg2[%143] : memref<32xi32, #tpu.memory_space<smem>>
    %c0_i32_75 = arith.constant 0 : i32
    %c15_i32_76 = arith.constant 15 : i32
    %145 = arith.maxsi %c0_i32_75, %144 : i32
    %146 = arith.minsi %c15_i32_76, %145 : i32
    %c5 = arith.constant 5 : index
    %147 = arith.index_cast %141 : i32 to index
    %c0_77 = arith.constant 0 : index
    %148 = vector.load %arg3[%c5, %147, %c0_77] : memref<8x16x280xf32, #tpu.memory_space<vmem>>, vector<1x1x280xf32>
    %149 = vector.shape_cast %148 : vector<1x1x280xf32> to vector<1x280xf32>
    %c5_78 = arith.constant 5 : index
    %150 = arith.index_cast %141 : i32 to index
    %c0_79 = arith.constant 0 : index
    %151 = vector.load %arg4[%c5_78, %150, %c0_79] : memref<8x16x280xf32, #tpu.memory_space<vmem>>, vector<1x1x280xf32>
    %152 = vector.shape_cast %151 : vector<1x1x280xf32> to vector<1x280xf32>
    %c5_80 = arith.constant 5 : index
    %153 = arith.index_cast %146 : i32 to index
    %c0_81 = arith.constant 0 : index
    %154 = vector.load %arg3[%c5_80, %153, %c0_81] : memref<8x16x280xf32, #tpu.memory_space<vmem>>, vector<1x1x280xf32>
    %155 = vector.shape_cast %154 : vector<1x1x280xf32> to vector<1x280xf32>
    %c5_82 = arith.constant 5 : index
    %156 = arith.index_cast %146 : i32 to index
    %c0_83 = arith.constant 0 : index
    %157 = vector.load %arg4[%c5_82, %156, %c0_83] : memref<8x16x280xf32, #tpu.memory_space<vmem>>, vector<1x1x280xf32>
    %158 = vector.shape_cast %157 : vector<1x1x280xf32> to vector<1x280xf32>
    %c6_i32 = arith.constant 6 : i32
    %159 = arith.addi %26, %c6_i32 : i32
    %160 = arith.index_cast %159 : i32 to index
    %161 = memref.load %arg1[%160] : memref<32xi32, #tpu.memory_space<smem>>
    %c0_i32_84 = arith.constant 0 : i32
    %c15_i32_85 = arith.constant 15 : i32
    %162 = arith.maxsi %c0_i32_84, %161 : i32
    %163 = arith.minsi %c15_i32_85, %162 : i32
    %c6_i32_86 = arith.constant 6 : i32
    %164 = arith.addi %26, %c6_i32_86 : i32
    %165 = arith.index_cast %164 : i32 to index
    %166 = memref.load %arg2[%165] : memref<32xi32, #tpu.memory_space<smem>>
    %c0_i32_87 = arith.constant 0 : i32
    %c15_i32_88 = arith.constant 15 : i32
    %167 = arith.maxsi %c0_i32_87, %166 : i32
    %168 = arith.minsi %c15_i32_88, %167 : i32
    %c6 = arith.constant 6 : index
    %169 = arith.index_cast %163 : i32 to index
    %c0_89 = arith.constant 0 : index
    %170 = vector.load %arg3[%c6, %169, %c0_89] : memref<8x16x280xf32, #tpu.memory_space<vmem>>, vector<1x1x280xf32>
    %171 = vector.shape_cast %170 : vector<1x1x280xf32> to vector<1x280xf32>
    %c6_90 = arith.constant 6 : index
    %172 = arith.index_cast %163 : i32 to index
    %c0_91 = arith.constant 0 : index
    %173 = vector.load %arg4[%c6_90, %172, %c0_91] : memref<8x16x280xf32, #tpu.memory_space<vmem>>, vector<1x1x280xf32>
    %174 = vector.shape_cast %173 : vector<1x1x280xf32> to vector<1x280xf32>
    %c6_92 = arith.constant 6 : index
    %175 = arith.index_cast %168 : i32 to index
    %c0_93 = arith.constant 0 : index
    %176 = vector.load %arg3[%c6_92, %175, %c0_93] : memref<8x16x280xf32, #tpu.memory_space<vmem>>, vector<1x1x280xf32>
    %177 = vector.shape_cast %176 : vector<1x1x280xf32> to vector<1x280xf32>
    %c6_94 = arith.constant 6 : index
    %178 = arith.index_cast %168 : i32 to index
    %c0_95 = arith.constant 0 : index
    %179 = vector.load %arg4[%c6_94, %178, %c0_95] : memref<8x16x280xf32, #tpu.memory_space<vmem>>, vector<1x1x280xf32>
    %180 = vector.shape_cast %179 : vector<1x1x280xf32> to vector<1x280xf32>
    %c7_i32 = arith.constant 7 : i32
    %181 = arith.addi %26, %c7_i32 : i32
    %182 = arith.index_cast %181 : i32 to index
    %183 = memref.load %arg1[%182] : memref<32xi32, #tpu.memory_space<smem>>
    %c0_i32_96 = arith.constant 0 : i32
    %c15_i32_97 = arith.constant 15 : i32
    %184 = arith.maxsi %c0_i32_96, %183 : i32
    %185 = arith.minsi %c15_i32_97, %184 : i32
    %c7_i32_98 = arith.constant 7 : i32
    %186 = arith.addi %26, %c7_i32_98 : i32
    %187 = arith.index_cast %186 : i32 to index
    %188 = memref.load %arg2[%187] : memref<32xi32, #tpu.memory_space<smem>>
    %c0_i32_99 = arith.constant 0 : i32
    %c15_i32_100 = arith.constant 15 : i32
    %189 = arith.maxsi %c0_i32_99, %188 : i32
    %190 = arith.minsi %c15_i32_100, %189 : i32
    %c7 = arith.constant 7 : index
    %191 = arith.index_cast %185 : i32 to index
    %c0_101 = arith.constant 0 : index
    %192 = vector.load %arg3[%c7, %191, %c0_101] : memref<8x16x280xf32, #tpu.memory_space<vmem>>, vector<1x1x280xf32>
    %193 = vector.shape_cast %192 : vector<1x1x280xf32> to vector<1x280xf32>
    %c7_102 = arith.constant 7 : index
    %194 = arith.index_cast %185 : i32 to index
    %c0_103 = arith.constant 0 : index
    %195 = vector.load %arg4[%c7_102, %194, %c0_103] : memref<8x16x280xf32, #tpu.memory_space<vmem>>, vector<1x1x280xf32>
    %196 = vector.shape_cast %195 : vector<1x1x280xf32> to vector<1x280xf32>
    %c7_104 = arith.constant 7 : index
    %197 = arith.index_cast %190 : i32 to index
    %c0_105 = arith.constant 0 : index
    %198 = vector.load %arg3[%c7_104, %197, %c0_105] : memref<8x16x280xf32, #tpu.memory_space<vmem>>, vector<1x1x280xf32>
    %199 = vector.shape_cast %198 : vector<1x1x280xf32> to vector<1x280xf32>
    %c7_106 = arith.constant 7 : index
    %200 = arith.index_cast %190 : i32 to index
    %c0_107 = arith.constant 0 : index
    %201 = vector.load %arg4[%c7_106, %200, %c0_107] : memref<8x16x280xf32, #tpu.memory_space<vmem>>, vector<1x1x280xf32>
    %202 = vector.shape_cast %201 : vector<1x1x280xf32> to vector<1x280xf32>
    %203 = tpu.concatenate %39, %61, %83, %105, %127, %149, %171, %193 in 0 : vector<1x280xf32>, vector<1x280xf32>, vector<1x280xf32>, vector<1x280xf32>, vector<1x280xf32>, vector<1x280xf32>, vector<1x280xf32>, vector<1x280xf32> -> vector<8x280xf32>
    %204 = tpu.concatenate %42, %64, %86, %108, %130, %152, %174, %196 in 0 : vector<1x280xf32>, vector<1x280xf32>, vector<1x280xf32>, vector<1x280xf32>, vector<1x280xf32>, vector<1x280xf32>, vector<1x280xf32>, vector<1x280xf32> -> vector<8x280xf32>
    %205 = tpu.concatenate %45, %67, %89, %111, %133, %155, %177, %199 in 0 : vector<1x280xf32>, vector<1x280xf32>, vector<1x280xf32>, vector<1x280xf32>, vector<1x280xf32>, vector<1x280xf32>, vector<1x280xf32>, vector<1x280xf32> -> vector<8x280xf32>
    %206 = tpu.concatenate %48, %70, %92, %114, %136, %158, %180, %202 in 0 : vector<1x280xf32>, vector<1x280xf32>, vector<1x280xf32>, vector<1x280xf32>, vector<1x280xf32>, vector<1x280xf32>, vector<1x280xf32>, vector<1x280xf32> -> vector<8x280xf32>
    %c0_108 = arith.constant 0 : index
    %c0_109 = arith.constant 0 : index
    %207 = vector.load %arg6[%c0_108, %c0_109] : memref<8x32xf32, #tpu.memory_space<vmem>>, vector<8x32xf32>
    %c0_110 = arith.constant 0 : index
    %c0_111 = arith.constant 0 : index
    %208 = vector.load %arg7[%c0_110, %c0_111] : memref<8x32xf32, #tpu.memory_space<vmem>>, vector<8x32xf32>
    %209 = tpu.concatenate %207, %208 in 0 : vector<8x32xf32>, vector<8x32xf32> -> vector<16x32xf32>
    %210 = arith.truncf %209 : vector<16x32xf32> to vector<16x32xbf16>
    %c0_112 = arith.constant 0 : index
    %c0_113 = arith.constant 0 : index
    %211 = vector.load %arg8[%c0_112, %c0_113] : memref<32x256xbf16, #tpu.memory_space<vmem>>, vector<32x256xbf16>
    %cst_114 = arith.constant dense<0.000000e+00> : vector<16x256xf32>
    %212 = tpu.matmul %210, %211, %cst_114 {dimension_numbers = #tpu.dot_dimension_numbers<[1], [0], [0], [1], [0, 0, 1, 1], [], []>} : vector<16x32xbf16>, vector<32x256xbf16>, vector<16x256xf32> -> vector<16x256xf32>
    %c0_115 = arith.constant 0 : index
    %c0_116 = arith.constant 0 : index
    %213 = vector.load %arg9[%c0_115, %c0_116] : memref<1x256xf32, #tpu.memory_space<vmem>>, vector<1x256xf32>
    %214 = vector.broadcast %213 : vector<1x256xf32> to vector<16x256xf32>
    %215 = arith.addf %212, %214 : vector<16x256xf32>
    %cst_117 = arith.constant 0.000000e+00 : f32
    %216 = vector.broadcast %cst_117 : f32 to vector<16x256xf32>
    %217 = arith.maximumf %215, %216 : vector<16x256xf32>
    %c0_118 = arith.constant 0 : index
    %c0_119 = arith.constant 0 : index
    %218 = vector.load %arg10[%c0_118, %c0_119] : memref<1x256xf32, #tpu.memory_space<vmem>>, vector<1x256xf32>
    %219 = vector.broadcast %218 : vector<1x256xf32> to vector<16x256xf32>
    %220 = arith.mulf %217, %219 : vector<16x256xf32>
    %c0_120 = arith.constant 0 : index
    %c0_121 = arith.constant 0 : index
    %221 = vector.load %arg11[%c0_120, %c0_121] : memref<1x256xf32, #tpu.memory_space<vmem>>, vector<1x256xf32>
    %222 = vector.broadcast %221 : vector<1x256xf32> to vector<16x256xf32>
    %223 = arith.addf %220, %222 : vector<16x256xf32>
    %224 = arith.truncf %223 : vector<16x256xf32> to vector<16x256xbf16>
    %c0_122 = arith.constant 0 : index
    %c0_123 = arith.constant 0 : index
    %225 = vector.load %arg12[%c0_122, %c0_123] : memref<256x64xbf16, #tpu.memory_space<vmem>>, vector<256x64xbf16>
    %cst_124 = arith.constant dense<0.000000e+00> : vector<16x64xf32>
    %226 = tpu.matmul %224, %225, %cst_124 {dimension_numbers = #tpu.dot_dimension_numbers<[1], [0], [0], [1], [0, 0, 1, 1], [], []>} : vector<16x256xbf16>, vector<256x64xbf16>, vector<16x64xf32> -> vector<16x64xf32>
    %c0_125 = arith.constant 0 : index
    %c0_126 = arith.constant 0 : index
    %227 = vector.load %arg13[%c0_125, %c0_126] : memref<1x64xf32, #tpu.memory_space<vmem>>, vector<1x64xf32>
    %228 = vector.broadcast %227 : vector<1x64xf32> to vector<16x64xf32>
    %229 = arith.addf %226, %228 : vector<16x64xf32>
    %230 = vector.extract_strided_slice %229 {offsets = [0, 0], sizes = [8, 64], strides = [1, 1]} : vector<16x64xf32> to vector<8x64xf32>
    %231 = vector.extract_strided_slice %229 {offsets = [8, 0], sizes = [8, 64], strides = [1, 1]} : vector<16x64xf32> to vector<8x64xf32>
    %232 = tpu.concatenate %230, %231 in 1 : vector<8x64xf32>, vector<8x64xf32> -> vector<8x128xf32>
    %233 = tpu.concatenate %18, %25, %203, %204, %205, %206, %232 in 1 : vector<8x280xf32>, vector<8x280xf32>, vector<8x280xf32>, vector<8x280xf32>, vector<8x280xf32>, vector<8x280xf32>, vector<8x128xf32> -> vector<8x1808xf32>
    %c0_127 = arith.constant 0 : index
    %c0_128 = arith.constant 0 : index
    %234 = vector.load %arg21[%c0_127, %c0_128] : memref<8x1808xf32, #tpu.memory_space<vmem>>, vector<8x1808xf32>
    tpu.vector_store %arg21[%c0_127, %c0_128], %233 {strides = array<i32>} : memref<8x1808xf32, #tpu.memory_space<vmem>>, vector<8x1808xf32>,
    %235 = arith.truncf %233 : vector<8x1808xf32> to vector<8x1808xbf16>
    %c0_129 = arith.constant 0 : index
    %c0_130 = arith.constant 0 : index
    %236 = vector.load %arg14[%c0_129, %c0_130] : memref<1808x512xbf16, #tpu.memory_space<vmem>>, vector<1808x512xbf16>
    %cst_131 = arith.constant dense<0.000000e+00> : vector<8x512xf32>
    %237 = tpu.matmul %235, %236, %cst_131 {dimension_numbers = #tpu.dot_dimension_numbers<[1], [0], [0], [1], [0, 0, 1, 1], [], []>} : vector<8x1808xbf16>, vector<1808x512xbf16>, vector<8x512xf32> -> vector<8x512xf32>
    %c0_132 = arith.constant 0 : index
    %c0_133 = arith.constant 0 : index
    %238 = vector.load %arg15[%c0_132, %c0_133] : memref<1x512xf32, #tpu.memory_space<vmem>>, vector<1x512xf32>
    %239 = vector.broadcast %238 : vector<1x512xf32> to vector<8x512xf32>
    %240 = arith.addf %237, %239 : vector<8x512xf32>
    %cst_134 = arith.constant 0.000000e+00 : f32
    %241 = vector.broadcast %cst_134 : f32 to vector<8x512xf32>
    %242 = arith.maximumf %240, %241 : vector<8x512xf32>
    %243 = arith.truncf %242 : vector<8x512xf32> to vector<8x512xbf16>
    %c0_135 = arith.constant 0 : index
    %c0_136 = arith.constant 0 : index
    %244 = vector.load %arg16[%c0_135, %c0_136] : memref<512x128xbf16, #tpu.memory_space<vmem>>, vector<512x128xbf16>
    %cst_137 = arith.constant dense<0.000000e+00> : vector<8x128xf32>
    %245 = tpu.matmul %243, %244, %cst_137 {dimension_numbers = #tpu.dot_dimension_numbers<[1], [0], [0], [1], [0, 0, 1, 1], [], []>} : vector<8x512xbf16>, vector<512x128xbf16>, vector<8x128xf32> -> vector<8x128xf32>
    %c0_138 = arith.constant 0 : index
    %c0_139 = arith.constant 0 : index
    %246 = vector.load %arg17[%c0_138, %c0_139] : memref<1x128xf32, #tpu.memory_space<vmem>>, vector<1x128xf32>
    %247 = vector.broadcast %246 : vector<1x128xf32> to vector<8x128xf32>
    %248 = arith.addf %245, %247 : vector<8x128xf32>
    %cst_140 = arith.constant 0.000000e+00 : f32
    %249 = vector.broadcast %cst_140 : f32 to vector<8x128xf32>
    %250 = arith.maximumf %248, %249 : vector<8x128xf32>
    %c0_141 = arith.constant 0 : index
    %c0_142 = arith.constant 0 : index
    %251 = vector.load %arg18[%c0_141, %c0_142] : memref<1x128xf32, #tpu.memory_space<vmem>>, vector<1x128xf32>
    %252 = vector.broadcast %251 : vector<1x128xf32> to vector<8x128xf32>
    %253 = arith.mulf %250, %252 : vector<8x128xf32>
    %cst_143 = arith.constant dense<0.000000e+00> : vector<8xf32>
    %254 = vector.multi_reduction <add>, %253, %cst_143 [1] : vector<8x128xf32> to vector<8xf32>
    %255 = vector.shape_cast %254 : vector<8xf32> to vector<8x1xf32>
    %c0_144 = arith.constant 0 : index
    %c0_145 = arith.constant 0 : index
    %256 = vector.load %arg19[%c0_144, %c0_145] : memref<1x1xf32, #tpu.memory_space<vmem>>, vector<1x1xf32>
    %257 = vector.broadcast %256 : vector<1x1xf32> to vector<8x1xf32>
    %258 = arith.addf %255, %257 : vector<8x1xf32>
    %c0_146 = arith.constant 0 : index
    %c0_147 = arith.constant 0 : index
    %259 = vector.load %arg20[%c0_146, %c0_147] : memref<8x1xf32, #tpu.memory_space<vmem>>, vector<8x1xf32>
    tpu.vector_store %arg20[%c0_146, %c0_147], %258 {strides = array<i32>} : memref<8x1xf32, #tpu.memory_space<vmem>>, vector<8x1xf32>,
    return
  }
  func.func @transform_0(%arg0: i32, %arg1: memref<32xi32, #tpu.memory_space<smem>>, %arg2: memref<32xi32, #tpu.memory_space<smem>>) -> (i32, i32, i32) {
    %c0_i32 = arith.constant 0 : i32
    %c0_i32_0 = arith.constant 0 : i32
    %c0_i32_1 = arith.constant 0 : i32
    return %arg0, %c0_i32, %c0_i32_0 : i32, i32, i32
  }
  func.func @transform_1(%arg0: i32, %arg1: memref<32xi32, #tpu.memory_space<smem>>, %arg2: memref<32xi32, #tpu.memory_space<smem>>) -> (i32, i32, i32) {
    %c0_i32 = arith.constant 0 : i32
    %c0_i32_0 = arith.constant 0 : i32
    %c0_i32_1 = arith.constant 0 : i32
    return %arg0, %c0_i32, %c0_i32_0 : i32, i32, i32
  }
  func.func @transform_2(%arg0: i32, %arg1: memref<32xi32, #tpu.memory_space<smem>>, %arg2: memref<32xi32, #tpu.memory_space<smem>>) -> (i32, i32) {
    %c0_i32 = arith.constant 0 : i32
    %c0_i32_0 = arith.constant 0 : i32
    return %arg0, %c0_i32 : i32, i32
  }
  func.func @transform_3(%arg0: i32, %arg1: memref<32xi32, #tpu.memory_space<smem>>, %arg2: memref<32xi32, #tpu.memory_space<smem>>) -> (i32, i32) {
    %c0_i32 = arith.constant 0 : i32
    %c0_i32_0 = arith.constant 0 : i32
    return %arg0, %c0_i32 : i32, i32
  }
  func.func @transform_4(%arg0: i32, %arg1: memref<32xi32, #tpu.memory_space<smem>>, %arg2: memref<32xi32, #tpu.memory_space<smem>>) -> (i32, i32) {
    %c0_i32 = arith.constant 0 : i32
    %c0_i32_0 = arith.constant 0 : i32
    return %arg0, %c0_i32 : i32, i32
  }
  func.func @transform_5(%arg0: i32, %arg1: memref<32xi32, #tpu.memory_space<smem>>, %arg2: memref<32xi32, #tpu.memory_space<smem>>) -> (i32, i32) {
    %c0_i32 = arith.constant 0 : i32
    %c0_i32_0 = arith.constant 0 : i32
    %c0_i32_1 = arith.constant 0 : i32
    return %c0_i32, %c0_i32_0 : i32, i32
  }
  func.func @transform_6(%arg0: i32, %arg1: memref<32xi32, #tpu.memory_space<smem>>, %arg2: memref<32xi32, #tpu.memory_space<smem>>) -> (i32, i32) {
    %c0_i32 = arith.constant 0 : i32
    %c0_i32_0 = arith.constant 0 : i32
    %c0_i32_1 = arith.constant 0 : i32
    return %c0_i32, %c0_i32_0 : i32, i32
  }
  func.func @transform_7(%arg0: i32, %arg1: memref<32xi32, #tpu.memory_space<smem>>, %arg2: memref<32xi32, #tpu.memory_space<smem>>) -> (i32, i32) {
    %c0_i32 = arith.constant 0 : i32
    %c0_i32_0 = arith.constant 0 : i32
    %c0_i32_1 = arith.constant 0 : i32
    return %c0_i32, %c0_i32_0 : i32, i32
  }
  func.func @transform_8(%arg0: i32, %arg1: memref<32xi32, #tpu.memory_space<smem>>, %arg2: memref<32xi32, #tpu.memory_space<smem>>) -> (i32, i32) {
    %c0_i32 = arith.constant 0 : i32
    %c0_i32_0 = arith.constant 0 : i32
    %c0_i32_1 = arith.constant 0 : i32
    return %c0_i32, %c0_i32_0 : i32, i32
  }
  func.func @transform_9(%arg0: i32, %arg1: memref<32xi32, #tpu.memory_space<smem>>, %arg2: memref<32xi32, #tpu.memory_space<smem>>) -> (i32, i32) {
    %c0_i32 = arith.constant 0 : i32
    %c0_i32_0 = arith.constant 0 : i32
    %c0_i32_1 = arith.constant 0 : i32
    return %c0_i32, %c0_i32_0 : i32, i32
  }
  func.func @transform_10(%arg0: i32, %arg1: memref<32xi32, #tpu.memory_space<smem>>, %arg2: memref<32xi32, #tpu.memory_space<smem>>) -> (i32, i32) {
    %c0_i32 = arith.constant 0 : i32
    %c0_i32_0 = arith.constant 0 : i32
    %c0_i32_1 = arith.constant 0 : i32
    return %c0_i32, %c0_i32_0 : i32, i32
  }
  func.func @transform_11(%arg0: i32, %arg1: memref<32xi32, #tpu.memory_space<smem>>, %arg2: memref<32xi32, #tpu.memory_space<smem>>) -> (i32, i32) {
    %c0_i32 = arith.constant 0 : i32
    %c0_i32_0 = arith.constant 0 : i32
    %c0_i32_1 = arith.constant 0 : i32
    return %c0_i32, %c0_i32_0 : i32, i32
  }
  func.func @transform_12(%arg0: i32, %arg1: memref<32xi32, #tpu.memory_space<smem>>, %arg2: memref<32xi32, #tpu.memory_space<smem>>) -> (i32, i32) {
    %c0_i32 = arith.constant 0 : i32
    %c0_i32_0 = arith.constant 0 : i32
    %c0_i32_1 = arith.constant 0 : i32
    return %c0_i32, %c0_i32_0 : i32, i32
  }
  func.func @transform_13(%arg0: i32, %arg1: memref<32xi32, #tpu.memory_space<smem>>, %arg2: memref<32xi32, #tpu.memory_space<smem>>) -> (i32, i32) {
    %c0_i32 = arith.constant 0 : i32
    %c0_i32_0 = arith.constant 0 : i32
    %c0_i32_1 = arith.constant 0 : i32
    return %c0_i32, %c0_i32_0 : i32, i32
  }
  func.func @transform_14(%arg0: i32, %arg1: memref<32xi32, #tpu.memory_space<smem>>, %arg2: memref<32xi32, #tpu.memory_space<smem>>) -> (i32, i32) {
    %c0_i32 = arith.constant 0 : i32
    %c0_i32_0 = arith.constant 0 : i32
    %c0_i32_1 = arith.constant 0 : i32
    return %c0_i32, %c0_i32_0 : i32, i32
  }
  func.func @transform_15(%arg0: i32, %arg1: memref<32xi32, #tpu.memory_space<smem>>, %arg2: memref<32xi32, #tpu.memory_space<smem>>) -> (i32, i32) {
    %c0_i32 = arith.constant 0 : i32
    %c0_i32_0 = arith.constant 0 : i32
    %c0_i32_1 = arith.constant 0 : i32
    return %c0_i32, %c0_i32_0 : i32, i32
  }
  func.func @transform_16(%arg0: i32, %arg1: memref<32xi32, #tpu.memory_space<smem>>, %arg2: memref<32xi32, #tpu.memory_space<smem>>) -> (i32, i32) {
    %c0_i32 = arith.constant 0 : i32
    %c0_i32_0 = arith.constant 0 : i32
    %c0_i32_1 = arith.constant 0 : i32
    return %c0_i32, %c0_i32_0 : i32, i32
  }
  func.func @transform_17(%arg0: i32, %arg1: memref<32xi32, #tpu.memory_space<smem>>, %arg2: memref<32xi32, #tpu.memory_space<smem>>) -> (i32, i32) {
    %c0_i32 = arith.constant 0 : i32
    %c0_i32_0 = arith.constant 0 : i32
    return %arg0, %c0_i32 : i32, i32
  }
  func.func @transform_18(%arg0: i32, %arg1: memref<32xi32, #tpu.memory_space<smem>>, %arg2: memref<32xi32, #tpu.memory_space<smem>>) -> (i32, i32) {
    %c0_i32 = arith.constant 0 : i32
    %c0_i32_0 = arith.constant 0 : i32
    return %arg0, %c0_i32 : i32, i32
  }
}

</mosaic_0001>

<llo_original>
// kernel: graph_classifier_forward.1
$region0: #{graph_classifier_forward.1}
  #allocation0 [shape = 'u32[]', space=smem, size = 0x4, offset = 0x4, fixed_abs, tag = 'smem constant byte address 0x4 - core index']
  #allocation1 [shape = 'u32[144,128]{1,0:T(1,128)}', space=vmem, size = 0x12000, scoped, tag = 'internal scratch']
  #allocation2 [shape = 's32[1]{0}', space=sflag, size = 0x4, scoped, tag = 'scoped memory for graph_classifier_forward.1']
  #allocation3 [shape = 'u8[512]{0}', space=smem, size = 0x200, scoped, tag = 'prefetched SMEM operand 0']
  #allocation4 [shape = 'u8[512]{0}', space=smem, size = 0x200, scoped, tag = 'prefetched SMEM operand 1']
  #allocation5 [shape = 'f32[1,1]{1,0:T(1,128)S(1)}', space=vmem, size = 0x200, scoped, tag = 'scoped memory for graph_classifier_forward.1']
  %s0 = inlined_call_operand.hbm [shape: s32[32], index: 0, kind: input, shape index: {}]
  %s1 = inlined_call_operand.hbm [shape: s32[32], index: 1, kind: input, shape index: {}]
  %s2 = inlined_call_operand.hbm [shape: f32[32,16,280], index: 2, kind: input, shape index: {}]
  %s3 = inlined_call_operand.hbm [shape: f32[32,16,280], index: 3, kind: input, shape index: {}]
  %s4 = inlined_call_operand.vmem [shape: s32[32,1], index: 4, kind: input, shape index: {}]
  %s5 = inlined_call_operand.hbm [shape: f32[32,32], index: 5, kind: input, shape index: {}]
  %s6 = inlined_call_operand.hbm [shape: f32[32,32], index: 6, kind: input, shape index: {}]
  %s7 = inlined_call_operand.hbm [shape: bf16[32,256], index: 7, kind: input, shape index: {}]
  %s8 = inlined_call_operand.hbm [shape: f32[1,256], index: 8, kind: input, shape index: {}]
  %s9 = inlined_call_operand.hbm [shape: f32[1,256], index: 9, kind: input, shape index: {}]
  %s10 = inlined_call_operand.hbm [shape: f32[1,256], index: 10, kind: input, shape index: {}]
  %s11 = inlined_call_operand.vmem [shape: bf16[256,64], index: 11, kind: input, shape index: {}]
  %s12 = inlined_call_operand.hbm [shape: f32[1,64], index: 12, kind: input, shape index: {}]
  %s13 = inlined_call_operand.hbm [shape: bf16[1808,512], index: 13, kind: input, shape index: {}]
  %s14 = inlined_call_operand.hbm [shape: f32[1,512], index: 14, kind: input, shape index: {}]
  %s15 = inlined_call_operand.hbm [shape: bf16[512,128], index: 15, kind: input, shape index: {}]
  %s16 = inlined_call_operand.hbm [shape: f32[1,128], index: 16, kind: input, shape index: {}]
  %s17 = inlined_call_operand.hbm [shape: f32[1,128], index: 17, kind: input, shape index: {}]
  %s18 = inlined_call_operand.<no memory space> [shape: f32[1,1], index: 18, kind: input, shape index: {}]
  %s19 = inlined_call_operand.vmem [shape: f32[32,1], index: 19, kind: output, shape index: {0}]
  %s20 = inlined_call_operand.hbm [shape: f32[32,1808], index: 20, kind: output, shape index: {1}]
  %21 = xla_tuple %s19, %s20
  %s22 = sld [smem:[#allocation0]]
  $region165: #{graph_classifier_forward.1} parent=0
    _
  %s24 = ssub.s32 1, %s22
  %s25 = scalar_select 0, %s24, %s22
  %27 = dma.hbm_to_smem %s0, 16, [#allocation3], [#allocation2]
  %29 = dma.hbm_to_smem %s1, 16, [#allocation4], [#allocation2]
  %v30 = vstv %s18
  %31 = vst [vmem:[#allocation5] sm:$0x1] %v30
  %32 = dma.done [#allocation2], 32
  %33 = sfence
  $region1: #{graph_classifier_forward.1} parent=0
    #allocation6 [shape = 'u8[393216]{0}', space=vmem, size = 0x60000, scoped, tag = 'input window, operand 2']
    #allocation7 [shape = 's32[2]{0}', space=sflag, size = 0x8, scoped, tag = 'scoped memory for graph_classifier_forward.1']
    #allocation8 [shape = 's32[2]{0}', space=sflag, size = 0x8, scoped, tag = 'scoped memory for graph_classifier_forward.1']
    #allocation9 [shape = 'u8[393216]{0}', space=vmem, size = 0x60000, scoped, tag = 'input window, operand 3']
    #allocation10 [shape = 's32[2]{0}', space=sflag, size = 0x8, scoped, tag = 'scoped memory for graph_classifier_forward.1']
    #allocation11 [shape = 'u8[8192]{0}', space=vmem, size = 0x2000, scoped, tag = 'input window, operand 5']
    #allocation12 [shape = 'u8[8192]{0}', space=vmem, size = 0x2000, scoped, tag = 'input window, operand 6']
    #allocation13 [shape = 's32[2]{0}', space=sflag, size = 0x8, scoped, tag = 'scoped memory for graph_classifier_forward.1']
    #allocation14 [shape = 'u8[16384]{0}', space=vmem, size = 0x4000, scoped, tag = 'input window, operand 7, single buffered']
    #allocation15 [shape = 'u8[1024]{0}', space=vmem, size = 0x400, scoped, tag = 'input window, operand 8, single buffered']
    #allocation16 [shape = 's32[1]{0}', space=sflag, size = 0x4, scoped, tag = 'scoped memory for graph_classifier_forward.1']
    #allocation17 [shape = 'u8[1024]{0}', space=vmem, size = 0x400, scoped, tag = 'input window, operand 9, single buffered']
    #allocation18 [shape = 'u8[1024]{0}', space=vmem, size = 0x400, scoped, tag = 'input window, operand 10, single buffered']
    #allocation19 [shape = 's32[1]{0}', space=sflag, size = 0x4, scoped, tag = 'scoped memory for graph_classifier_forward.1']
    #allocation20 [shape = 'u8[512]{0}', space=vmem, size = 0x400, scoped, tag = 'input window, operand 12, single buffered']
    #allocation21 [shape = 'u8[1851392]{0}', space=vmem, size = 0x1c4000, scoped, tag = 'input window, operand 13, single buffered']
    #allocation22 [shape = 's32[1]{0}', space=sflag, size = 0x4, scoped, tag = 'scoped memory for graph_classifier_forward.1']
    #allocation23 [shape = 'u8[2048]{0}', space=vmem, size = 0x800, scoped, tag = 'input window, operand 14, single buffered']
    #allocation24 [shape = 'u8[131072]{0}', space=vmem, size = 0x20000, scoped, tag = 'input window, operand 15, single buffered']
    #allocation25 [shape = 's32[1]{0}', space=sflag, size = 0x4, scoped, tag = 'scoped memory for graph_classifier_forward.1']
    #allocation26 [shape = 'u8[512]{0}', space=vmem, size = 0x400, scoped, tag = 'input window, operand 16, single buffered']
    #allocation27 [shape = 'u8[512]{0}', space=vmem, size = 0x400, scoped, tag = 'input window, operand 17, single buffered']
    #allocation28 [shape = 's32[1]{0}', space=sflag, size = 0x4, scoped, tag = 'scoped memory for graph_classifier_forward.1']
    #allocation29 [shape = 'u8[122880]{0}', space=vmem, size = 0x1e000, scoped, tag = 'output window, operand 1']
    %34 = vsyncpa [#allocation7], 0
    %s35 = scalar_lea.sflag [#allocation7], 1
    %36 = vsyncpa %s35, 0
    %37 = vsyncpa [#allocation10], 0
    %s38 = scalar_lea.sflag [#allocation10], 1
    %39 = vsyncpa %s38, 0
    %40 = vsyncpa [#allocation13], 0
    %s41 = scalar_lea.sflag [#allocation13], 1
    %42 = vsyncpa %s41, 0
    %43 = vsyncpa [#allocation16], 0
    %44 = vsyncpa [#allocation19], 0
    %45 = vsyncpa [#allocation22], 0
    %46 = vsyncpa [#allocation25], 0
    %47 = vsyncpa [#allocation28], 0
    %48 = vsyncpa [#allocation8], 0
    %s49 = scalar_lea.sflag [#allocation8], 1
    %50 = vsyncpa %s49, 0
    loop: start=0, step=1, limit=6
    $region2: #{graph_classifier_forward.1} parent=1 // loop_pre_header
      _
    $region3: #{graph_classifier_forward.1} parent=1 // loop_header
      %s52 = sphi 0, %s56
      %p53 = scmp.ge.s32.totalorder %s52, 6
      %s62 = sphi 0, %s64
      %s65 = sphi 0, %s62
      %s66 = sphi 0, %s65
      %s82 = sphi 0, %s66
      %s88 = sphi 0, %s90
      %s91 = sphi 0, %s88
      %s92 = sphi 0, %s91
      %s108 = sphi 0, %s92
      %s114 = sphi 0, %s116
      %s117 = sphi 0, %s114
      %s118 = sphi 0, %s117
      %s134 = sphi 0, %s118
      %s140 = sphi 0, %s142
      %s143 = sphi 0, %s140
      %s144 = sphi 0, %s143
      %s160 = sphi 0, %s144
      %s166 = sphi 0, %s168
      %s169 = sphi 0, %s166
      %s170 = sphi 0, %s169
      %s186 = sphi 0, %s170
      %s190 = sphi 0, %s190
      %s192 = sphi 0, %s190
      %s193 = sphi 0, %s192
      %s207 = sphi 0, %s193
      %s211 = sphi 0, %s211
      %s213 = sphi 0, %s211
      %s214 = sphi 0, %s213
      %s228 = sphi 0, %s214
      %s232 = sphi 0, %s232
      %s234 = sphi 0, %s232
      %s235 = sphi 0, %s234
      %s249 = sphi 0, %s235
      %s253 = sphi 0, %s253
      %s255 = sphi 0, %s253
      %s256 = sphi 0, %s255
      %s270 = sphi 0, %s256
      %s274 = sphi 0, %s274
      %s276 = sphi 0, %s274
      %s277 = sphi 0, %s276
      %s291 = sphi 0, %s277
      %s295 = sphi 0, %s295
      %s297 = sphi 0, %s295
      %s298 = sphi 0, %s297
      %s312 = sphi 0, %s298
      %s316 = sphi 0, %s316
      %s318 = sphi 0, %s316
      %s319 = sphi 0, %s318
      %s333 = sphi 0, %s319
      %s337 = sphi 0, %s337
      %s339 = sphi 0, %s337
      %s340 = sphi 0, %s339
      %s354 = sphi 0, %s340
      %s358 = sphi 0, %s358
      %s360 = sphi 0, %s358
      %s361 = sphi 0, %s360
      %s375 = sphi 0, %s361
      %s379 = sphi 0, %s379
      %s381 = sphi 0, %s379
      %s382 = sphi 0, %s381
      %s396 = sphi 0, %s382
      %s400 = sphi 0, %s400
      %s402 = sphi 0, %s400
      %s403 = sphi 0, %s402
      %s417 = sphi 0, %s403
      %s421 = sphi 0, %s421
      %s423 = sphi 0, %s421
      %s424 = sphi 0, %s423
      %s438 = sphi 0, %s424
      %s444 = sphi 0, %s446
      %s447 = sphi 0, %s444
      %s448 = sphi 0, %s447
      %s464 = sphi 0, %s448
      %s470 = sphi 0, %s472
      %s473 = sphi 0, %s470
      %s474 = sphi 0, %s473
      %s490 = sphi 0, %s474
    $region4: #{graph_classifier_forward.1} parent=1 // loop_header_branch
      %55 = sbr.rel (%p53) target = $region8
    $region5: #{graph_classifier_forward.1} parent=1 // loop_body
      %s57 = ssub.s32 %s52, 1
      %s58 = ssub.s32 %s52, 2
      %s59 = sadd.s32 %s52, 1
      %s60 = ssub.s32 %s52, %s59
      %p61 = scmp.eq.s32.totalorder %s60, 0
      %s63 = sadd.s32 %s62, 1
      %s64 = scalar_select %p61, %s62, %s63
      %p67 = pneg %p61
      %p68 = scmp.eq.s32.totalorder %s52, 3
      %p69 = por %p67, %p68
      %p70 = scmp.ne.s32.totalorder %s62, %s65
      %p71 = scmp.eq.s32.totalorder %s52, 0
      %p72 = por %p70, %p71
      %p73 = scmp.ne.s32.totalorder %s62, %s65
      %p74 = scmp.eq.s32.totalorder %s57, 3
      %p75 = por %p73, %p74
      %p76 = scmp.ne.s32.totalorder %s65, %s66
      %p77 = scmp.eq.s32.totalorder %s57, 0
      %p78 = por %p76, %p77
      %p79 = scmp.ne.s32.totalorder %s65, %s66
      %p80 = scmp.eq.s32.totalorder %s58, 3
      %p81 = por %p79, %p80
      %p83 = scmp.ne.s32.totalorder %s66, %s82
      %p84 = scmp.eq.s32.totalorder %s58, 0
      %p85 = por %p83, %p84
      %s86 = ssub.s32 %s52, %s59
      %p87 = scmp.eq.s32.totalorder %s86, 0
      %s89 = sadd.s32 %s88, 1
      %s90 = scalar_select %p87, %s88, %s89
      %p93 = pneg %p87
      %p94 = scmp.eq.s32.totalorder %s52, 3
      %p95 = por %p93, %p94
      %p96 = scmp.ne.s32.totalorder %s88, %s91
      %p97 = scmp.eq.s32.totalorder %s52, 0
      %p98 = por %p96, %p97
      %p99 = scmp.ne.s32.totalorder %s88, %s91
      %p100 = scmp.eq.s32.totalorder %s57, 3
      %p101 = por %p99, %p100
      %p102 = scmp.ne.s32.totalorder %s91, %s92
      %p103 = scmp.eq.s32.totalorder %s57, 0
      %p104 = por %p102, %p103
      %p105 = scmp.ne.s32.totalorder %s91, %s92
      %p106 = scmp.eq.s32.totalorder %s58, 3
      %p107 = por %p105, %p106
      %p109 = scmp.ne.s32.totalorder %s92, %s108
      %p110 = scmp.eq.s32.totalorder %s58, 0
      %p111 = por %p109, %p110
      %s112 = ssub.s32 %s52, %s59
      %p113 = scmp.eq.s32.totalorder %s112, 0
      %s115 = sadd.s32 %s114, 1
      %s116 = scalar_select %p113, %s114, %s115
      %p119 = pneg %p113
      %p120 = scmp.eq.s32.totalorder %s52, 3
      %p121 = por %p119, %p120
      %p122 = scmp.ne.s32.totalorder %s114, %s117
      %p123 = scmp.eq.s32.totalorder %s52, 0
      %p124 = por %p122, %p123
      %p125 = scmp.ne.s32.totalorder %s114, %s117
      %p126 = scmp.eq.s32.totalorder %s57, 3
      %p127 = por %p125, %p126
      %p128 = scmp.ne.s32.totalorder %s117, %s118
      %p129 = scmp.eq.s32.totalorder %s57, 0
      %p130 = por %p128, %p129
      %p131 = scmp.ne.s32.totalorder %s117, %s118
      %p132 = scmp.eq.s32.totalorder %s58, 3
      %p133 = por %p131, %p132
      %p135 = scmp.ne.s32.totalorder %s118, %s134
      %p136 = scmp.eq.s32.totalorder %s58, 0
      %p137 = por %p135, %p136
      %s138 = ssub.s32 %s52, %s59
      %p139 = scmp.eq.s32.totalorder %s138, 0
      %s141 = sadd.s32 %s140, 1
      %s142 = scalar_select %p139, %s140, %s141
      %p145 = pneg %p139
      %p146 = scmp.eq.s32.totalorder %s52, 3
      %p147 = por %p145, %p146
      %p148 = scmp.ne.s32.totalorder %s140, %s143
      %p149 = scmp.eq.s32.totalorder %s52, 0
      %p150 = por %p148, %p149
      %p151 = scmp.ne.s32.totalorder %s140, %s143
      %p152 = scmp.eq.s32.totalorder %s57, 3
      %p153 = por %p151, %p152
      %p154 = scmp.ne.s32.totalorder %s143, %s144
      %p155 = scmp.eq.s32.totalorder %s57, 0
      %p156 = por %p154, %p155
      %p157 = scmp.ne.s32.totalorder %s143, %s144
      %p158 = scmp.eq.s32.totalorder %s58, 3
      %p159 = por %p157, %p158
      %p161 = scmp.ne.s32.totalorder %s144, %s160
      %p162 = scmp.eq.s32.totalorder %s58, 0
      %p163 = por %p161, %p162
      %s164 = ssub.s32 %s52, %s59
      %p165 = scmp.eq.s32.totalorder %s164, 0
      %s167 = sadd.s32 %s166, 1
      %s168 = scalar_select %p165, %s166, %s167
      %p171 = pneg %p165
      %p172 = scmp.eq.s32.totalorder %s52, 3
      %p173 = por %p171, %p172
      %p174 = scmp.ne.s32.totalorder %s166, %s169
      %p175 = scmp.eq.s32.totalorder %s52, 0
      %p176 = por %p174, %p175
      %p177 = scmp.ne.s32.totalorder %s166, %s169
      %p178 = scmp.eq.s32.totalorder %s57, 3
      %p179 = por %p177, %p178
      %p180 = scmp.ne.s32.totalorder %s169, %s170
      %p181 = scmp.eq.s32.totalorder %s57, 0
      %p182 = por %p180, %p181
      %p183 = scmp.ne.s32.totalorder %s169, %s170
      %p184 = scmp.eq.s32.totalorder %s58, 3
      %p185 = por %p183, %p184
      %p187 = scmp.ne.s32.totalorder %s170, %s186
      %p188 = scmp.eq.s32.totalorder %s58, 0
      %p189 = por %p187, %p188
      %s191 = sadd.s32 %s190, 1
      %p194 = scmp.eq.s32.totalorder %s52, 3
      %p195 = scmp.ne.s32.totalorder %s190, %s192
      %p196 = scmp.eq.s32.totalorder %s52, 0
      %p197 = por %p195, %p196
      %p198 = scmp.ne.s32.totalorder %s190, %s192
      %p199 = scmp.eq.s32.totalorder %s57, 3
      %p200 = por %p198, %p199
      %p201 = scmp.ne.s32.totalorder %s192, %s193
      %p202 = scmp.eq.s32.totalorder %s57, 0
      %p203 = por %p201, %p202
      %p204 = scmp.ne.s32.totalorder %s192, %s193
      %p205 = scmp.eq.s32.totalorder %s58, 3
      %p206 = por %p204, %p205
      %p208 = scmp.ne.s32.totalorder %s193, %s207
      %p209 = scmp.eq.s32.totalorder %s58, 0
      %p210 = por %p208, %p209
      %s212 = sadd.s32 %s211, 1
      %p215 = scmp.eq.s32.totalorder %s52, 3
      %p216 = scmp.ne.s32.totalorder %s211, %s213
      %p217 = scmp.eq.s32.totalorder %s52, 0
      %p218 = por %p216, %p217
      %p219 = scmp.ne.s32.totalorder %s211, %s213
      %p220 = scmp.eq.s32.totalorder %s57, 3
      %p221 = por %p219, %p220
      %p222 = scmp.ne.s32.totalorder %s213, %s214
      %p223 = scmp.eq.s32.totalorder %s57, 0
      %p224 = por %p222, %p223
      %p225 = scmp.ne.s32.totalorder %s213, %s214
      %p226 = scmp.eq.s32.totalorder %s58, 3
      %p227 = por %p225, %p226
      %p229 = scmp.ne.s32.totalorder %s214, %s228
      %p230 = scmp.eq.s32.totalorder %s58, 0
      %p231 = por %p229, %p230
      %s233 = sadd.s32 %s232, 1
      %p236 = scmp.eq.s32.totalorder %s52, 3
      %p237 = scmp.ne.s32.totalorder %s232, %s234
      %p238 = scmp.eq.s32.totalorder %s52, 0
      %p239 = por %p237, %p238
      %p240 = scmp.ne.s32.totalorder %s232, %s234
      %p241 = scmp.eq.s32.totalorder %s57, 3
      %p242 = por %p240, %p241
      %p243 = scmp.ne.s32.totalorder %s234, %s235
      %p244 = scmp.eq.s32.totalorder %s57, 0
      %p245 = por %p243, %p244
      %p246 = scmp.ne.s32.totalorder %s234, %s235
      %p247 = scmp.eq.s32.totalorder %s58, 3
      %p248 = por %p246, %p247
      %p250 = scmp.ne.s32.totalorder %s235, %s249
      %p251 = scmp.eq.s32.totalorder %s58, 0
      %p252 = por %p250, %p251
      %s254 = sadd.s32 %s253, 1
      %p257 = scmp.eq.s32.totalorder %s52, 3
      %p258 = scmp.ne.s32.totalorder %s253, %s255
      %p259 = scmp.eq.s32.totalorder %s52, 0
      %p260 = por %p258, %p259
      %p261 = scmp.ne.s32.totalorder %s253, %s255
      %p262 = scmp.eq.s32.totalorder %s57, 3
      %p263 = por %p261, %p262
      %p264 = scmp.ne.s32.totalorder %s255, %s256
      %p265 = scmp.eq.s32.totalorder %s57, 0
      %p266 = por %p264, %p265
      %p267 = scmp.ne.s32.totalorder %s255, %s256
      %p268 = scmp.eq.s32.totalorder %s58, 3
      %p269 = por %p267, %p268
      %p271 = scmp.ne.s32.totalorder %s256, %s270
      %p272 = scmp.eq.s32.totalorder %s58, 0
      %p273 = por %p271, %p272
      %s275 = sadd.s32 %s274, 1
      %p278 = scmp.eq.s32.totalorder %s52, 3
      %p279 = scmp.ne.s32.totalorder %s274, %s276
      %p280 = scmp.eq.s32.totalorder %s52, 0
      %p281 = por %p279, %p280
      %p282 = scmp.ne.s32.totalorder %s274, %s276
      %p283 = scmp.eq.s32.totalorder %s57, 3
      %p284 = por %p282, %p283
      %p285 = scmp.ne.s32.totalorder %s276, %s277
      %p286 = scmp.eq.s32.totalorder %s57, 0
      %p287 = por %p285, %p286
      %p288 = scmp.ne.s32.totalorder %s276, %s277
      %p289 = scmp.eq.s32.totalorder %s58, 3
      %p290 = por %p288, %p289
      %p292 = scmp.ne.s32.totalorder %s277, %s291
      %p293 = scmp.eq.s32.totalorder %s58, 0
      %p294 = por %p292, %p293
      %s296 = sadd.s32 %s295, 1
      %p299 = scmp.eq.s32.totalorder %s52, 3
      %p300 = scmp.ne.s32.totalorder %s295, %s297
      %p301 = scmp.eq.s32.totalorder %s52, 0
      %p302 = por %p300, %p301
      %p303 = scmp.ne.s32.totalorder %s295, %s297
      %p304 = scmp.eq.s32.totalorder %s57, 3
      %p305 = por %p303, %p304
      %p306 = scmp.ne.s32.totalorder %s297, %s298
      %p307 = scmp.eq.s32.totalorder %s57, 0
      %p308 = por %p306, %p307
      %p309 = scmp.ne.s32.totalorder %s297, %s298
      %p310 = scmp.eq.s32.totalorder %s58, 3
      %p311 = por %p309, %p310
      %p313 = scmp.ne.s32.totalorder %s298, %s312
      %p314 = scmp.eq.s32.totalorder %s58, 0
      %p315 = por %p313, %p314
      %s317 = sadd.s32 %s316, 1
      %p320 = scmp.eq.s32.totalorder %s52, 3
      %p321 = scmp.ne.s32.totalorder %s316, %s318
      %p322 = scmp.eq.s32.totalorder %s52, 0
      %p323 = por %p321, %p322
      %p324 = scmp.ne.s32.totalorder %s316, %s318
      %p325 = scmp.eq.s32.totalorder %s57, 3
      %p326 = por %p324, %p325
      %p327 = scmp.ne.s32.totalorder %s318, %s319
      %p328 = scmp.eq.s32.totalorder %s57, 0
      %p329 = por %p327, %p328
      %p330 = scmp.ne.s32.totalorder %s318, %s319
      %p331 = scmp.eq.s32.totalorder %s58, 3
      %p332 = por %p330, %p331
      %p334 = scmp.ne.s32.totalorder %s319, %s333
      %p335 = scmp.eq.s32.totalorder %s58, 0
      %p336 = por %p334, %p335
      %s338 = sadd.s32 %s337, 1
      %p341 = scmp.eq.s32.totalorder %s52, 3
      %p342 = scmp.ne.s32.totalorder %s337, %s339
      %p343 = scmp.eq.s32.totalorder %s52, 0
      %p344 = por %p342, %p343
      %p345 = scmp.ne.s32.totalorder %s337, %s339
      %p346 = scmp.eq.s32.totalorder %s57, 3
      %p347 = por %p345, %p346
      %p348 = scmp.ne.s32.totalorder %s339, %s340
      %p349 = scmp.eq.s32.totalorder %s57, 0
      %p350 = por %p348, %p349
      %p351 = scmp.ne.s32.totalorder %s339, %s340
      %p352 = scmp.eq.s32.totalorder %s58, 3
      %p353 = por %p351, %p352
      %p355 = scmp.ne.s32.totalorder %s340, %s354
      %p356 = scmp.eq.s32.totalorder %s58, 0
      %p357 = por %p355, %p356
      %s359 = sadd.s32 %s358, 1
      %p362 = scmp.eq.s32.totalorder %s52, 3
      %p363 = scmp.ne.s32.totalorder %s358, %s360
      %p364 = scmp.eq.s32.totalorder %s52, 0
      %p365 = por %p363, %p364
      %p366 = scmp.ne.s32.totalorder %s358, %s360
      %p367 = scmp.eq.s32.totalorder %s57, 3
      %p368 = por %p366, %p367
      %p369 = scmp.ne.s32.totalorder %s360, %s361
      %p370 = scmp.eq.s32.totalorder %s57, 0
      %p371 = por %p369, %p370
      %p372 = scmp.ne.s32.totalorder %s360, %s361
      %p373 = scmp.eq.s32.totalorder %s58, 3
      %p374 = por %p372, %p373
      %p376 = scmp.ne.s32.totalorder %s361, %s375
      %p377 = scmp.eq.s32.totalorder %s58, 0
      %p378 = por %p376, %p377
      %s380 = sadd.s32 %s379, 1
      %p383 = scmp.eq.s32.totalorder %s52, 3
      %p384 = scmp.ne.s32.totalorder %s379, %s381
      %p385 = scmp.eq.s32.totalorder %s52, 0
      %p386 = por %p384, %p385
      %p387 = scmp.ne.s32.totalorder %s379, %s381
      %p388 = scmp.eq.s32.totalorder %s57, 3
      %p389 = por %p387, %p388
      %p390 = scmp.ne.s32.totalorder %s381, %s382
      %p391 = scmp.eq.s32.totalorder %s57, 0
      %p392 = por %p390, %p391
      %p393 = scmp.ne.s32.totalorder %s381, %s382
      %p394 = scmp.eq.s32.totalorder %s58, 3
      %p395 = por %p393, %p394
      %p397 = scmp.ne.s32.totalorder %s382, %s396
      %p398 = scmp.eq.s32.totalorder %s58, 0
      %p399 = por %p397, %p398
      %s401 = sadd.s32 %s400, 1
      %p404 = scmp.eq.s32.totalorder %s52, 3
      %p405 = scmp.ne.s32.totalorder %s400, %s402
      %p406 = scmp.eq.s32.totalorder %s52, 0
      %p407 = por %p405, %p406
      %p408 = scmp.ne.s32.totalorder %s400, %s402
      %p409 = scmp.eq.s32.totalorder %s57, 3
      %p410 = por %p408, %p409
      %p411 = scmp.ne.s32.totalorder %s402, %s403
      %p412 = scmp.eq.s32.totalorder %s57, 0
      %p413 = por %p411, %p412
      %p414 = scmp.ne.s32.totalorder %s402, %s403
      %p415 = scmp.eq.s32.totalorder %s58, 3
      %p416 = por %p414, %p415
      %p418 = scmp.ne.s32.totalorder %s403, %s417
      %p419 = scmp.eq.s32.totalorder %s58, 0
      %p420 = por %p418, %p419
      %s422 = sadd.s32 %s421, 1
      %p425 = scmp.eq.s32.totalorder %s52, 3
      %p426 = scmp.ne.s32.totalorder %s421, %s423
      %p427 = scmp.eq.s32.totalorder %s52, 0
      %p428 = por %p426, %p427
      %p429 = scmp.ne.s32.totalorder %s421, %s423
      %p430 = scmp.eq.s32.totalorder %s57, 3
      %p431 = por %p429, %p430
      %p432 = scmp.ne.s32.totalorder %s423, %s424
      %p433 = scmp.eq.s32.totalorder %s57, 0
      %p434 = por %p432, %p433
      %p435 = scmp.ne.s32.totalorder %s423, %s424
      %p436 = scmp.eq.s32.totalorder %s58, 3
      %p437 = por %p435, %p436
      %p439 = scmp.ne.s32.totalorder %s424, %s438
      %p440 = scmp.eq.s32.totalorder %s58, 0
      %p441 = por %p439, %p440
      %s442 = ssub.s32 %s52, %s59
      %p443 = scmp.eq.s32.totalorder %s442, 0
      %s445 = sadd.s32 %s444, 1
      %s446 = scalar_select %p443, %s444, %s445
      %p449 = pneg %p443
      %p450 = scmp.eq.s32.totalorder %s52, 3
      %p451 = por %p449, %p450
      %p452 = scmp.ne.s32.totalorder %s444, %s447
      %p453 = scmp.eq.s32.totalorder %s52, 0
      %p454 = por %p452, %p453
      %p455 = scmp.ne.s32.totalorder %s444, %s447
      %p456 = scmp.eq.s32.totalorder %s57, 3
      %p457 = por %p455, %p456
      %p458 = scmp.ne.s32.totalorder %s447, %s448
      %p459 = scmp.eq.s32.totalorder %s57, 0
      %p460 = por %p458, %p459
      %p461 = scmp.ne.s32.totalorder %s447, %s448
      %p462 = scmp.eq.s32.totalorder %s58, 3
      %p463 = por %p461, %p462
      %p465 = scmp.ne.s32.totalorder %s448, %s464
      %p466 = scmp.eq.s32.totalorder %s58, 0
      %p467 = por %p465, %p466
      %s468 = ssub.s32 %s52, %s59
      %p469 = scmp.eq.s32.totalorder %s468, 0
      %s471 = sadd.s32 %s470, 1
      %s472 = scalar_select %p469, %s470, %s471
      %p475 = pneg %p469
      %p476 = scmp.eq.s32.totalorder %s52, 3
      %p477 = por %p475, %p476
      %p478 = scmp.ne.s32.totalorder %s470, %s473
      %p479 = scmp.eq.s32.totalorder %s52, 0
      %p480 = por %p478, %p479
      %p481 = scmp.ne.s32.totalorder %s470, %s473
      %p482 = scmp.eq.s32.totalorder %s57, 3
      %p483 = por %p481, %p482
      %p484 = scmp.ne.s32.totalorder %s473, %s474
      %p485 = scmp.eq.s32.totalorder %s57, 0
      %p486 = por %p484, %p485
      %p487 = scmp.ne.s32.totalorder %s473, %s474
      %p488 = scmp.eq.s32.totalorder %s58, 3
      %p489 = por %p487, %p488
      %p491 = scmp.ne.s32.totalorder %s474, %s490
      %p492 = scmp.eq.s32.totalorder %s58, 0
      %p493 = por %p491, %p492
      %p494 = scmp.le.s32.totalorder 1, %s52
      %p495 = scmp.lt.s32.totalorder %s52, 5
      %p496 = pnand %p494, %p495
      %p497 = pneg %p496
      // Predicated region
      $region9: #{graph_classifier_forward.1} parent=5 // pred_check
        _
      $region10: #{graph_classifier_forward.1} parent=5 // pred_check_branch
        %499 = sbr.rel (%p496) target = $region12
      $region11: #{graph_classifier_forward.1} parent=5 // pred_region
        %s500 = ssub.s32 %s52, 1
        // Predicated region
        $region13: #{graph_classifier_forward.1} parent=11 // pred_check
          %p501 = pneg %p203
        $region14: #{graph_classifier_forward.1} parent=11 // pred_check_branch
          %503 = sbr.rel (%p501) target = $region16
        $region15: #{graph_classifier_forward.1} parent=11 // pred_region
          %s505 = ssub.s32 512, 512
          %506 = vsyncadd [#allocation13], %s505
          %s507 = sshll.u32 [#allocation14], 4
          %s508 = int_to_ptr.vmem [resolvable:$true] %s507
          %513 = dma.hbm_to_vmem [thread:$0]  %s7, 512, %s508, [#allocation13], 128, 128, 8
        $region16: #{graph_classifier_forward.1} parent=11 // pred_fallthru
          _
        // Predicated region
        $region17: #{graph_classifier_forward.1} parent=11 // pred_check
          %p514 = pneg %p224
        $region18: #{graph_classifier_forward.1} parent=11 // pred_check_branch
          %516 = sbr.rel (%p514) target = $region20
        $region19: #{graph_classifier_forward.1} parent=11 // pred_region
          %s518 = ssub.s32 32, 32
          %519 = vsyncadd [#allocation16], %s518
          %s521 = sshll.u32 [#allocation15], 4
          %s522 = int_to_ptr.vmem [resolvable:$true] %s521
          %524 = dma.hbm_to_vmem [thread:$0]  %s8, 32, %s522, [#allocation16]
        $region20: #{graph_classifier_forward.1} parent=11 // pred_fallthru
          _
        // Predicated region
        $region21: #{graph_classifier_forward.1} parent=11 // pred_check
          %p525 = pneg %p245
        $region22: #{graph_classifier_forward.1} parent=11 // pred_check_branch
          %527 = sbr.rel (%p525) target = $region24
        $region23: #{graph_classifier_forward.1} parent=11 // pred_region
          %s529 = ssub.s32 32, 32
          %530 = vsyncadd [#allocation16], %s529
          %s532 = sshll.u32 [#allocation17], 4
          %s533 = int_to_ptr.vmem [resolvable:$true] %s532
          %535 = dma.hbm_to_vmem [thread:$0]  %s9, 32, %s533, [#allocation16]
        $region24: #{graph_classifier_forward.1} parent=11 // pred_fallthru
          _
        // Predicated region
        $region25: #{graph_classifier_forward.1} parent=11 // pred_check
          %p536 = pneg %p266
        $region26: #{graph_classifier_forward.1} parent=11 // pred_check_branch
          %538 = sbr.rel (%p536) target = $region28
        $region27: #{graph_classifier_forward.1} parent=11 // pred_region
          %s540 = ssub.s32 32, 32
          %541 = vsyncadd [#allocation19], %s540
          %s543 = sshll.u32 [#allocation18], 4
          %s544 = int_to_ptr.vmem [resolvable:$true] %s543
          %546 = dma.hbm_to_vmem [thread:$0]  %s10, 32, %s544, [#allocation19]
        $region28: #{graph_classifier_forward.1} parent=11 // pred_fallthru
          _
        // Predicated region
        $region29: #{graph_classifier_forward.1} parent=11 // pred_check
          %p547 = pneg %p287
        $region30: #{graph_classifier_forward.1} parent=11 // pred_check_branch
          %549 = sbr.rel (%p547) target = $region32
        $region31: #{graph_classifier_forward.1} parent=11 // pred_region
          _
        $region32: #{graph_classifier_forward.1} parent=11 // pred_fallthru
          _
        // Predicated region
        $region33: #{graph_classifier_forward.1} parent=11 // pred_check
          %p550 = pneg %p308
        $region34: #{graph_classifier_forward.1} parent=11 // pred_check_branch
          %552 = sbr.rel (%p550) target = $region36
        $region35: #{graph_classifier_forward.1} parent=11 // pred_region
          %s554 = ssub.s32 16, 16
          %555 = vsyncadd [#allocation19], %s554
          %s557 = sshll.u32 [#allocation20], 4
          %s558 = int_to_ptr.vmem [resolvable:$true] %s557
          %560 = dma.hbm_to_vmem [thread:$0]  %s12, 16, %s558, [#allocation19]
        $region36: #{graph_classifier_forward.1} parent=11 // pred_fallthru
          _
        // Predicated region
        $region37: #{graph_classifier_forward.1} parent=11 // pred_check
          %p561 = pneg %p329
        $region38: #{graph_classifier_forward.1} parent=11 // pred_check_branch
          %563 = sbr.rel (%p561) target = $region40
        $region39: #{graph_classifier_forward.1} parent=11 // pred_region
          %s565 = ssub.s32 57856, 57856
          %566 = vsyncadd [#allocation22], %s565
          %s567 = sshll.u32 [#allocation21], 4
          %s568 = int_to_ptr.vmem [resolvable:$true] %s567
          %573 = dma.hbm_to_vmem [thread:$0]  %s13, 57856, %s568, [#allocation22], 256, 256, 16
        $region40: #{graph_classifier_forward.1} parent=11 // pred_fallthru
          _
        // Predicated region
        $region41: #{graph_classifier_forward.1} parent=11 // pred_check
          %p574 = pneg %p350
        $region42: #{graph_classifier_forward.1} parent=11 // pred_check_branch
          %576 = sbr.rel (%p574) target = $region44
        $region43: #{graph_classifier_forward.1} parent=11 // pred_region
          %s578 = ssub.s32 64, 64
          %579 = vsyncadd [#allocation22], %s578
          %s581 = sshll.u32 [#allocation23], 4
          %s582 = int_to_ptr.vmem [resolvable:$true] %s581
          %584 = dma.hbm_to_vmem [thread:$0]  %s14, 64, %s582, [#allocation22]
        $region44: #{graph_classifier_forward.1} parent=11 // pred_fallthru
          _
        // Predicated region
        $region45: #{graph_classifier_forward.1} parent=11 // pred_check
          %p585 = pneg %p371
        $region46: #{graph_classifier_forward.1} parent=11 // pred_check_branch
          %587 = sbr.rel (%p585) target = $region48
        $region47: #{graph_classifier_forward.1} parent=11 // pred_region
          %s589 = ssub.s32 4096, 4096
          %590 = vsyncadd [#allocation25], %s589
          %s591 = sshll.u32 [#allocation24], 4
          %s592 = int_to_ptr.vmem [resolvable:$true] %s591
          %597 = dma.hbm_to_vmem [thread:$0]  %s15, 4096, %s592, [#allocation25], 64, 64, 4
        $region48: #{graph_classifier_forward.1} parent=11 // pred_fallthru
          _
        // Predicated region
        $region49: #{graph_classifier_forward.1} parent=11 // pred_check
          %p598 = pneg %p392
        $region50: #{graph_classifier_forward.1} parent=11 // pred_check_branch
          %600 = sbr.rel (%p598) target = $region52
        $region51: #{graph_classifier_forward.1} parent=11 // pred_region
          %s602 = ssub.s32 16, 16
          %603 = vsyncadd [#allocation25], %s602
          %s605 = sshll.u32 [#allocation26], 4
          %s606 = int_to_ptr.vmem [resolvable:$true] %s605
          %608 = dma.hbm_to_vmem [thread:$0]  %s16, 16, %s606, [#allocation25]
        $region52: #{graph_classifier_forward.1} parent=11 // pred_fallthru
          _
        // Predicated region
        $region53: #{graph_classifier_forward.1} parent=11 // pred_check
          %p609 = pneg %p413
        $region54: #{graph_classifier_forward.1} parent=11 // pred_check_branch
          %611 = sbr.rel (%p609) target = $region56
        $region55: #{graph_classifier_forward.1} parent=11 // pred_region
          %s613 = ssub.s32 16, 16
          %614 = vsyncadd [#allocation28], %s613
          %s616 = sshll.u32 [#allocation27], 4
          %s617 = int_to_ptr.vmem [resolvable:$true] %s616
          %619 = dma.hbm_to_vmem [thread:$0]  %s17, 16, %s617, [#allocation28]
        $region56: #{graph_classifier_forward.1} parent=11 // pred_fallthru
          _
        // Predicated region
        $region57: #{graph_classifier_forward.1} parent=11 // pred_check
          %p620 = pneg %p434
        $region58: #{graph_classifier_forward.1} parent=11 // pred_check_branch
          %622 = sbr.rel (%p620) target = $region60
        $region59: #{graph_classifier_forward.1} parent=11 // pred_region
          _
        $region60: #{graph_classifier_forward.1} parent=11 // pred_fallthru
          _
      $region12: #{graph_classifier_forward.1} parent=5 // pred_fallthru
        _
      %p623 = scmp.lt.s32.totalorder %s52, 4
      // Predicated region
      $region61: #{graph_classifier_forward.1} parent=5 // pred_check
        %p624 = pneg %p623
      $region62: #{graph_classifier_forward.1} parent=5 // pred_check_branch
        %626 = sbr.rel (%p624) target = $region64
      $region63: #{graph_classifier_forward.1} parent=5 // pred_region
        // Predicated region
        $region65: #{graph_classifier_forward.1} parent=63 // pred_check
          %p627 = pneg %p72
        $region66: #{graph_classifier_forward.1} parent=63 // pred_check_branch
          %629 = sbr.rel (%p627) target = $region68
        $region67: #{graph_classifier_forward.1} parent=63 // pred_region
          %s630 = sand.u32 %s62, 1
          %s631 = scalar_lea.sflag [#allocation7], %s630
          %s632 = sand.u32 %s62, 1
          %s633 = smul.addr %s632, 384
          %s634 = scalar_lea.vmem [#allocation6], %s633
          %s635 = smul.u32 8, %s52
          %s637 = ssub.s32 6144, 6144
          %638 = vsyncadd %s631, %s637
          %s639 = smul.addr %s635, 6
          %s640 = smul.addr %s639, 128
          %s641 = scalar_lea.hbm %s2, %s640
          %s642 = sshll.u32 %s634, 4
          %s643 = int_to_ptr.vmem [resolvable:$true] %s642
          %648 = dma.hbm_to_vmem [thread:$0]  %s641, 6144, %s643, %s631, 384, 384, 24
        $region68: #{graph_classifier_forward.1} parent=63 // pred_fallthru
          _
        // Predicated region
        $region69: #{graph_classifier_forward.1} parent=63 // pred_check
          %p649 = pneg %p98
        $region70: #{graph_classifier_forward.1} parent=63 // pred_check_branch
          %651 = sbr.rel (%p649) target = $region72
        $region71: #{graph_classifier_forward.1} parent=63 // pred_region
          %s652 = sand.u32 %s52, 1
          %s653 = scalar_lea.sflag [#allocation10], %s652
          %s654 = sand.u32 %s88, 1
          %s655 = smul.addr %s654, 384
          %s656 = scalar_lea.vmem [#allocation9], %s655
          %s657 = smul.u32 8, %s52
          %s659 = ssub.s32 6144, 6144
          %660 = vsyncadd %s653, %s659
          %s661 = smul.addr %s657, 6
          %s662 = smul.addr %s661, 128
          %s663 = scalar_lea.hbm %s3, %s662
          %s664 = sshll.u32 %s656, 4
          %s665 = int_to_ptr.vmem [resolvable:$true] %s664
          %670 = dma.hbm_to_vmem [thread:$0]  %s663, 6144, %s665, %s653, 384, 384, 24
        $region72: #{graph_classifier_forward.1} parent=63 // pred_fallthru
          _
        // Predicated region
        $region73: #{graph_classifier_forward.1} parent=63 // pred_check
          %p671 = pneg %p124
        $region74: #{graph_classifier_forward.1} parent=63 // pred_check_branch
          %673 = sbr.rel (%p671) target = $region76
        $region75: #{graph_classifier_forward.1} parent=63 // pred_region
          %p674 = scmp.lt.s32.totalorder %s52, 3
          %s675 = scalar_select %p674, %s52, 3
          %s676 = smul.addr %s675, 8
          %s677 = scalar_lea.vmem %s4, %s676
        $region76: #{graph_classifier_forward.1} parent=63 // pred_fallthru
          _
        // Predicated region
        $region77: #{graph_classifier_forward.1} parent=63 // pred_check
          %p678 = pneg %p150
        $region78: #{graph_classifier_forward.1} parent=63 // pred_check_branch
          %680 = sbr.rel (%p678) target = $region80
        $region79: #{graph_classifier_forward.1} parent=63 // pred_region
          %s681 = sand.u32 %s52, 1
          %s682 = scalar_lea.sflag [#allocation10], %s681
          %s683 = sand.u32 %s140, 1
          %s684 = smul.addr %s683, 8
          %s685 = scalar_lea.vmem [#allocation11], %s684
          %s687 = ssub.s32 128, 128
          %688 = vsyncadd %s682, %s687
          %s689 = smul.addr %s52, 128
          %s690 = scalar_lea.hbm %s5, %s689
          %s692 = sshll.u32 %s685, 4
          %s693 = int_to_ptr.vmem [resolvable:$true] %s692
          %695 = dma.hbm_to_vmem [thread:$0]  %s690, 128, %s693, %s682
        $region80: #{graph_classifier_forward.1} parent=63 // pred_fallthru
          _
        // Predicated region
        $region81: #{graph_classifier_forward.1} parent=63 // pred_check
          %p696 = pneg %p176
        $region82: #{graph_classifier_forward.1} parent=63 // pred_check_branch
          %698 = sbr.rel (%p696) target = $region84
        $region83: #{graph_classifier_forward.1} parent=63 // pred_region
          %s699 = sand.u32 %s52, 1
          %s700 = scalar_lea.sflag [#allocation13], %s699
          %s701 = sand.u32 %s166, 1
          %s702 = smul.addr %s701, 8
          %s703 = scalar_lea.vmem [#allocation12], %s702
          %s705 = ssub.s32 128, 128
          %706 = vsyncadd %s700, %s705
          %s707 = smul.addr %s52, 128
          %s708 = scalar_lea.hbm %s6, %s707
          %s710 = sshll.u32 %s703, 4
          %s711 = int_to_ptr.vmem [resolvable:$true] %s710
          %713 = dma.hbm_to_vmem [thread:$0]  %s708, 128, %s711, %s700
        $region84: #{graph_classifier_forward.1} parent=63 // pred_fallthru
          _
      $region64: #{graph_classifier_forward.1} parent=5 // pred_fallthru
        _
      %p714 = scmp.le.s32.totalorder 1, %s52
      %p715 = scmp.lt.s32.totalorder %s52, 5
      %p716 = pnand %p714, %p715
      %p717 = pneg %p716
      // Predicated region
      $region85: #{graph_classifier_forward.1} parent=5 // pred_check
        _
      $region86: #{graph_classifier_forward.1} parent=5 // pred_check_branch
        %719 = sbr.rel (%p716) target = $region88
      $region87: #{graph_classifier_forward.1} parent=5 // pred_region
        %s720 = ssub.s32 %s52, 1
        %s721 = sand.u32 %s65, 1
        %s722 = scalar_lea.sflag [#allocation7], %s721
        %s723 = sand.u32 %s65, 1
        %s724 = smul.addr %s723, 384
        %s725 = scalar_lea.vmem [#allocation6], %s724
        // Predicated region
        $region89: #{graph_classifier_forward.1} parent=87 // pred_check
          %p726 = pneg %p78
        $region90: #{graph_classifier_forward.1} parent=87 // pred_check_branch
          %728 = sbr.rel (%p726) target = $region92
        $region91: #{graph_classifier_forward.1} parent=87 // pred_region
          %729 = dma.done %s722, 6144
        $region92: #{graph_classifier_forward.1} parent=87 // pred_fallthru
          _
        %s730 = sand.u32 %s57, 1
        %s731 = scalar_lea.sflag [#allocation10], %s730
        %s732 = sand.u32 %s91, 1
        %s733 = smul.addr %s732, 384
        %s734 = scalar_lea.vmem [#allocation9], %s733
        // Predicated region
        $region93: #{graph_classifier_forward.1} parent=87 // pred_check
          %p735 = pneg %p104
        $region94: #{graph_classifier_forward.1} parent=87 // pred_check_branch
          %737 = sbr.rel (%p735) target = $region96
        $region95: #{graph_classifier_forward.1} parent=87 // pred_region
          %738 = dma.done %s731, 6144
        $region96: #{graph_classifier_forward.1} parent=87 // pred_fallthru
          _
        %s739 = sand.u32 %s57, 1
        %s740 = scalar_lea.sflag [#allocation10], %s739
        %s741 = sand.u32 %s143, 1
        %s742 = smul.addr %s741, 8
        %s743 = scalar_lea.vmem [#allocation11], %s742
        // Predicated region
        $region97: #{graph_classifier_forward.1} parent=87 // pred_check
          %p744 = pneg %p156
        $region98: #{graph_classifier_forward.1} parent=87 // pred_check_branch
          %746 = sbr.rel (%p744) target = $region100
        $region99: #{graph_classifier_forward.1} parent=87 // pred_region
          %747 = dma.done %s740, 128
        $region100: #{graph_classifier_forward.1} parent=87 // pred_fallthru
          _
        %s748 = sand.u32 %s57, 1
        %s749 = scalar_lea.sflag [#allocation13], %s748
        %s750 = sand.u32 %s169, 1
        %s751 = smul.addr %s750, 8
        %s752 = scalar_lea.vmem [#allocation12], %s751
        // Predicated region
        $region101: #{graph_classifier_forward.1} parent=87 // pred_check
          %p753 = pneg %p182
        $region102: #{graph_classifier_forward.1} parent=87 // pred_check_branch
          %755 = sbr.rel (%p753) target = $region104
        $region103: #{graph_classifier_forward.1} parent=87 // pred_region
          %756 = dma.done %s749, 128
        $region104: #{graph_classifier_forward.1} parent=87 // pred_fallthru
          _
        // Predicated region
        $region105: #{graph_classifier_forward.1} parent=87 // pred_check
          %p757 = pneg %p203
        $region106: #{graph_classifier_forward.1} parent=87 // pred_check_branch
          %759 = sbr.rel (%p757) target = $region108
        $region107: #{graph_classifier_forward.1} parent=87 // pred_region
          %760 = dma.done [#allocation13], 512
        $region108: #{graph_classifier_forward.1} parent=87 // pred_fallthru
          _
        // Predicated region
        $region109: #{graph_classifier_forward.1} parent=87 // pred_check
          %p761 = pneg %p224
        $region110: #{graph_classifier_forward.1} parent=87 // pred_check_branch
          %763 = sbr.rel (%p761) target = $region112
        $region111: #{graph_classifier_forward.1} parent=87 // pred_region
          %764 = dma.done [#allocation16], 32
        $region112: #{graph_classifier_forward.1} parent=87 // pred_fallthru
          _
        // Predicated region
        $region113: #{graph_classifier_forward.1} parent=87 // pred_check
          %p765 = pneg %p245
        $region114: #{graph_classifier_forward.1} parent=87 // pred_check_branch
          %767 = sbr.rel (%p765) target = $region116
        $region115: #{graph_classifier_forward.1} parent=87 // pred_region
          %768 = dma.done [#allocation16], 32
        $region116: #{graph_classifier_forward.1} parent=87 // pred_fallthru
          _
        // Predicated region
        $region117: #{graph_classifier_forward.1} parent=87 // pred_check
          %p769 = pneg %p266
        $region118: #{graph_classifier_forward.1} parent=87 // pred_check_branch
          %771 = sbr.rel (%p769) target = $region120
        $region119: #{graph_classifier_forward.1} parent=87 // pred_region
          %772 = dma.done [#allocation19], 32
        $region120: #{graph_classifier_forward.1} parent=87 // pred_fallthru
          _
        // Predicated region
        $region121: #{graph_classifier_forward.1} parent=87 // pred_check
          %p773 = pneg %p308
        $region122: #{graph_classifier_forward.1} parent=87 // pred_check_branch
          %775 = sbr.rel (%p773) target = $region124
        $region123: #{graph_classifier_forward.1} parent=87 // pred_region
          %776 = dma.done [#allocation19], 16
        $region124: #{graph_classifier_forward.1} parent=87 // pred_fallthru
          _
        // Predicated region
        $region125: #{graph_classifier_forward.1} parent=87 // pred_check
          %p777 = pneg %p329
        $region126: #{graph_classifier_forward.1} parent=87 // pred_check_branch
          %779 = sbr.rel (%p777) target = $region128
        $region127: #{graph_classifier_forward.1} parent=87 // pred_region
          %780 = dma.done [#allocation22], 57856
        $region128: #{graph_classifier_forward.1} parent=87 // pred_fallthru
          _
        // Predicated region
        $region129: #{graph_classifier_forward.1} parent=87 // pred_check
          %p781 = pneg %p350
        $region130: #{graph_classifier_forward.1} parent=87 // pred_check_branch
          %783 = sbr.rel (%p781) target = $region132
        $region131: #{graph_classifier_forward.1} parent=87 // pred_region
          %784 = dma.done [#allocation22], 64
        $region132: #{graph_classifier_forward.1} parent=87 // pred_fallthru
          _
        // Predicated region
        $region133: #{graph_classifier_forward.1} parent=87 // pred_check
          %p785 = pneg %p371
        $region134: #{graph_classifier_forward.1} parent=87 // pred_check_branch
          %787 = sbr.rel (%p785) target = $region136
        $region135: #{graph_classifier_forward.1} parent=87 // pred_region
          %788 = dma.done [#allocation25], 4096
        $region136: #{graph_classifier_forward.1} parent=87 // pred_fallthru
          _
        // Predicated region
        $region137: #{graph_classifier_forward.1} parent=87 // pred_check
          %p789 = pneg %p392
        $region138: #{graph_classifier_forward.1} parent=87 // pred_check_branch
          %791 = sbr.rel (%p789) target = $region140
        $region139: #{graph_classifier_forward.1} parent=87 // pred_region
          %792 = dma.done [#allocation25], 16
        $region140: #{graph_classifier_forward.1} parent=87 // pred_fallthru
          _
        // Predicated region
        $region141: #{graph_classifier_forward.1} parent=87 // pred_check
          %p793 = pneg %p413
        $region142: #{graph_classifier_forward.1} parent=87 // pred_check_branch
          %795 = sbr.rel (%p793) target = $region144
        $region143: #{graph_classifier_forward.1} parent=87 // pred_region
          %796 = dma.done [#allocation28], 16
        $region144: #{graph_classifier_forward.1} parent=87 // pred_fallthru
          _
        %s797 = sand.u32 %s65, 1
        %s798 = scalar_lea.sflag [#allocation7], %s797
        %s799 = sand.u32 %s65, 1
        %s800 = smul.addr %s799, 384
        %s801 = scalar_lea.vmem [#allocation6], %s800
        %p802 = pneg %p78
        %p803 = pneg %p75
        %s804 = sand.u32 %s57, 1
        %s805 = scalar_lea.sflag [#allocation10], %s804
        %s806 = sand.u32 %s91, 1
        %s807 = smul.addr %s806, 384
        %s808 = scalar_lea.vmem [#allocation9], %s807
        %p809 = pneg %p104
        %p810 = pneg %p101
        %p811 = scmp.lt.s32.totalorder %s57, 3
        %s812 = scalar_select %p811, %s57, 3
        %s813 = smul.addr %s812, 8
        %s814 = scalar_lea.vmem %s4, %s813
        %p815 = pneg %p130
        %p816 = pneg %p127
        %s817 = sand.u32 %s57, 1
        %s818 = scalar_lea.sflag [#allocation10], %s817
        %s819 = sand.u32 %s143, 1
        %s820 = smul.addr %s819, 8
        %s821 = scalar_lea.vmem [#allocation11], %s820
        %p822 = pneg %p156
        %p823 = pneg %p153
        %s824 = sand.u32 %s57, 1
        %s825 = scalar_lea.sflag [#allocation13], %s824
        %s826 = sand.u32 %s169, 1
        %s827 = smul.addr %s826, 8
        %s828 = scalar_lea.vmem [#allocation12], %s827
        %p829 = pneg %p182
        %p830 = pneg %p179
        %p831 = pneg %p203
        %p832 = pneg %p200
        %p833 = pneg %p224
        %p834 = pneg %p221
        %p835 = pneg %p245
        %p836 = pneg %p242
        %p837 = pneg %p266
        %p838 = pneg %p263
        %p839 = pneg %p287
        %p840 = pneg %p284
        %p841 = pneg %p308
        %p842 = pneg %p305
        %p843 = pneg %p329
        %p844 = pneg %p326
        %p845 = pneg %p350
        %p846 = pneg %p347
        %p847 = pneg %p371
        %p848 = pneg %p368
        %p849 = pneg %p392
        %p850 = pneg %p389
        %p851 = pneg %p413
        %p852 = pneg %p410
        %p853 = pneg %p434
        %p854 = pneg %p431
        %p855 = pneg %p460
        %p856 = pneg %p457
        %p857 = scmp.lt.s32.totalorder %s57, 3
        %s858 = scalar_select %p857, %s57, 3
        %s859 = smul.addr %s858, 8
        %s860 = scalar_lea.vmem %s19, %s859
        %p861 = pneg %p486
        %p862 = pneg %p483
        %s863 = sand.u32 %s473, 1
        %s864 = scalar_lea.sflag [#allocation8], %s863
        %s865 = sand.u32 %s473, 1
        %s866 = smul.addr %s865, 120
        %s867 = scalar_lea.vmem [#allocation29], %s866
        %s868 = smul.u32 8, %s57
        %s869 = smul.u32 8, %s57
        %p870 = scmp.lt.s32.totalorder %s57, 3
        %s871 = scalar_select %p870, %s57, 3
        %s872 = smul.addr %s871, 8
        %s873 = scalar_lea.vmem %s4, %s872
        %p874 = scmp.lt.s32.totalorder %s57, 3
        %s875 = scalar_select %p874, %s57, 3
        %s876 = smul.addr %s875, 8
        %s877 = scalar_lea.vmem %s19, %s876
        %v879 = vld [vmem:[%s873] sm:$0xff]
        %v880 = vlaneseq
        %v881 = vshrl.u32 %v880, 7
        %v882 = vadd.s32 %v881, 8
        %v883 = vcombine.high %v879, %v879
        %v885 = vunpack.c.l.s4 1966171168
        %v886 = vunpack.c.0.s8 %v885
        %v887 = vlaneseq
        %v888 = vshrl.u32 %v887, 7
        %v889 = vsub.s32 %v886, %v888
        %v890 = vrot.slane %v879, %v889
        %v892 = vunpack.c.l.s4 1966171168
        %v893 = vunpack.c.0.s8 %v892
        %v894 = vlaneseq
        %v895 = vshrl.u32 %v894, 7
        %v896 = vsub.s32 %v893, %v895
        %v897 = vrot.slane %v883, %v896
        %v898 = vcombine.high %v890, %v890
        %v899 = vcombine.high %v897, %v897
        %v901 = vunpack.c.l.s4 1966171168
        %v902 = vunpack.c.0.s8 %v901
        %v903 = vlaneseq
        %v904 = vshrl.u32 %v903, 7
        %v905 = vsub.s32 %v902, %v904
        %v906 = vrot.slane %v890, %v905
        %v908 = vunpack.c.l.s4 1966171168
        %v909 = vunpack.c.0.s8 %v908
        %v910 = vlaneseq
        %v911 = vshrl.u32 %v910, 7
        %v912 = vsub.s32 %v909, %v911
        %v913 = vrot.slane %v897, %v912
        %v915 = vunpack.c.l.s4 1966171168
        %v916 = vunpack.c.0.s8 %v915
        %v917 = vlaneseq
        %v918 = vshrl.u32 %v917, 7
        %v919 = vsub.s32 %v916, %v918
        %v920 = vrot.slane %v898, %v919
        %v922 = vunpack.c.l.s4 1966171168
        %v923 = vunpack.c.0.s8 %v922
        %v924 = vlaneseq
        %v925 = vshrl.u32 %v924, 7
        %v926 = vsub.s32 %v923, %v925
        %v927 = vrot.slane %v899, %v926
        %v928 = vcombine.high %v906, %v906
        %v929 = vcombine.high %v913, %v913
        %v930 = vcombine.high %v920, %v920
        %v931 = vcombine.high %v927, %v927
        %v932 = vlaneseq
        %v933 = vshrl.u32 %v932, 7
        %v934 = vsub.s32 0, %v933
        %v935 = vrot.slane %v906, %v934
        %v936 = vlaneseq
        %v937 = vshrl.u32 %v936, 7
        %v938 = vsub.s32 0, %v937
        %v939 = vrot.slane %v920, %v938
        %v940 = vlaneseq
        %v941 = vshrl.u32 %v940, 7
        %v942 = vsub.s32 0, %v941
        %v943 = vrot.slane %v928, %v942
        %v944 = vlaneseq
        %v945 = vshrl.u32 %v944, 7
        %v946 = vsub.s32 0, %v945
        %v947 = vrot.slane %v930, %v946
        %v948 = vlaneseq
        %v949 = vshrl.u32 %v948, 7
        %v950 = vsub.s32 0, %v949
        %v951 = vrot.slane %v913, %v950
        %v952 = vlaneseq
        %v953 = vshrl.u32 %v952, 7
        %v954 = vsub.s32 0, %v953
        %v955 = vrot.slane %v927, %v954
        %v956 = vlaneseq
        %v957 = vshrl.u32 %v956, 7
        %v958 = vsub.s32 0, %v957
        %v959 = vrot.slane %v929, %v958
        %v960 = vlaneseq
        %v961 = vshrl.u32 %v960, 7
        %v962 = vsub.s32 0, %v961
        %v963 = vrot.slane %v931, %v962
        %vm964 = vcmp.lt.s32.totalorder %v881, %v935
        %vm965 = vcmp.lt.s32.totalorder %v882, %v935
        %vm966 = vcmp.lt.s32.totalorder %v881, %v939
        %vm967 = vcmp.lt.s32.totalorder %v882, %v939
        %vm968 = vcmp.lt.s32.totalorder %v881, %v943
        %vm969 = vcmp.lt.s32.totalorder %v882, %v943
        %vm970 = vcmp.lt.s32.totalorder %v881, %v947
        %vm971 = vcmp.lt.s32.totalorder %v882, %v947
        %vm972 = vcmp.lt.s32.totalorder %v881, %v951
        %vm973 = vcmp.lt.s32.totalorder %v882, %v951
        %vm974 = vcmp.lt.s32.totalorder %v881, %v955
        %vm975 = vcmp.lt.s32.totalorder %v882, %v955
        %vm976 = vcmp.lt.s32.totalorder %v881, %v959
        %vm977 = vcmp.lt.s32.totalorder %v882, %v959
        %vm978 = vcmp.lt.s32.totalorder %v881, %v963
        %vm979 = vcmp.lt.s32.totalorder %v882, %v963
        %vm980 = vcmp.gt.s32.totalorder %v879, 1
        %v981 = vsel %vm980, %v879, 1
        %v982 = vcvt.s32.f32 %v981
        %v983 = vrcp.pop %v982
        %v984 = vmul.f32 1.0, %v983
        %v985 = vld [vmem:[%s725] sm:$0xff]
        %v986 = vld [vmem:[%s725 + $0x8] sm:$0xff]
        %v987 = vld [vmem:[%s725 + $0x10] sm:$0xff]
        %v988 = vld [vmem:[%s725 + $0x18] sm:$0xff]
        %v989 = vld [vmem:[%s725 + $0x20] sm:$0xff]
        %v990 = vld [vmem:[%s725 + $0x28] sm:$0xff]
        %v991 = vld [vmem:[%s725 + $0x30] sm:$0xff]
        %v992 = vld [vmem:[%s725 + $0x38] sm:$0xff]
        %v993 = vld [vmem:[%s725 + $0x40] sm:$0xff]
        %v994 = vld [vmem:[%s725 + $0x48] sm:$0xff]
        %v995 = vld [vmem:[%s725 + $0x50] sm:$0xff]
        %v996 = vld [vmem:[%s725 + $0x58] sm:$0xff]
        %v997 = vld [vmem:[%s725 + $0x60] sm:$0xff]
        %v998 = vld [vmem:[%s725 + $0x68] sm:$0xff]
        %v999 = vld [vmem:[%s725 + $0x70] sm:$0xff]
        %v1000 = vld [vmem:[%s725 + $0x78] sm:$0xff]
        %v1001 = vld [vmem:[%s725 + $0x80] sm:$0xff]
        %v1002 = vld [vmem:[%s725 + $0x88] sm:$0xff]
        %v1003 = vld [vmem:[%s725 + $0x90] sm:$0xff]
        %v1004 = vld [vmem:[%s725 + $0x98] sm:$0xff]
        %v1005 = vld [vmem:[%s725 + $0xa0] sm:$0xff]
        %v1006 = vld [vmem:[%s725 + $0xa8] sm:$0xff]
        %v1007 = vld [vmem:[%s725 + $0xb0] sm:$0xff]
        %v1008 = vld [vmem:[%s725 + $0xb8] sm:$0xff]
        %v1009 = vld [vmem:[%s725 + $0xc0] sm:$0xff]
        %v1010 = vld [vmem:[%s725 + $0xc8] sm:$0xff]
        %v1011 = vld [vmem:[%s725 + $0xd0] sm:$0xff]
        %v1012 = vld [vmem:[%s725 + $0xd8] sm:$0xff]
        %v1013 = vld [vmem:[%s725 + $0xe0] sm:$0xff]
        %v1014 = vld [vmem:[%s725 + $0xe8] sm:$0xff]
        %v1015 = vld [vmem:[%s725 + $0xf0] sm:$0xff]
        %v1016 = vld [vmem:[%s725 + $0xf8] sm:$0xff]
        %v1017 = vld [vmem:[%s725 + $0x100] sm:$0xff]
        %v1018 = vld [vmem:[%s725 + $0x108] sm:$0xff]
        %v1019 = vld [vmem:[%s725 + $0x110] sm:$0xff]
        %v1020 = vld [vmem:[%s725 + $0x118] sm:$0xff]
        %v1021 = vld [vmem:[%s725 + $0x120] sm:$0xff]
        %v1022 = vld [vmem:[%s725 + $0x128] sm:$0xff]
        %v1023 = vld [vmem:[%s725 + $0x130] sm:$0xff]
        %v1024 = vld [vmem:[%s725 + $0x138] sm:$0xff]
        %v1025 = vld [vmem:[%s725 + $0x140] sm:$0xff]
        %v1026 = vld [vmem:[%s725 + $0x148] sm:$0xff]
        %v1027 = vld [vmem:[%s725 + $0x150] sm:$0xff]
        %v1028 = vld [vmem:[%s725 + $0x158] sm:$0xff]
        %v1029 = vld [vmem:[%s725 + $0x160] sm:$0xff]
        %v1030 = vld [vmem:[%s725 + $0x168] sm:$0xff]
        %v1031 = vld [vmem:[%s725 + $0x170] sm:$0xff]
        %v1032 = vld [vmem:[%s725 + $0x178] sm:$0xff]
        %v1033 = vld [vmem:[%s734] sm:$0xff]
        %v1034 = vld [vmem:[%s734 + $0x8] sm:$0xff]
        %v1035 = vld [vmem:[%s734 + $0x10] sm:$0xff]
        %v1036 = vld [vmem:[%s734 + $0x18] sm:$0xff]
        %v1037 = vld [vmem:[%s734 + $0x20] sm:$0xff]
        %v1038 = vld [vmem:[%s734 + $0x28] sm:$0xff]
        %v1039 = vld [vmem:[%s734 + $0x30] sm:$0xff]
        %v1040 = vld [vmem:[%s734 + $0x38] sm:$0xff]
        %v1041 = vld [vmem:[%s734 + $0x40] sm:$0xff]
        %v1042 = vld [vmem:[%s734 + $0x48] sm:$0xff]
        %v1043 = vld [vmem:[%s734 + $0x50] sm:$0xff]
        %v1044 = vld [vmem:[%s734 + $0x58] sm:$0xff]
        %v1045 = vld [vmem:[%s734 + $0x60] sm:$0xff]
        %v1046 = vld [vmem:[%s734 + $0x68] sm:$0xff]
        %v1047 = vld [vmem:[%s734 + $0x70] sm:$0xff]
        %v1048 = vld [vmem:[%s734 + $0x78] sm:$0xff]
        %v1049 = vld [vmem:[%s734 + $0x80] sm:$0xff]
        %v1050 = vld [vmem:[%s734 + $0x88] sm:$0xff]
        %v1051 = vld [vmem:[%s734 + $0x90] sm:$0xff]
        %v1052 = vld [vmem:[%s734 + $0x98] sm:$0xff]
        %v1053 = vld [vmem:[%s734 + $0xa0] sm:$0xff]
        %v1054 = vld [vmem:[%s734 + $0xa8] sm:$0xff]
        %v1055 = vld [vmem:[%s734 + $0xb0] sm:$0xff]
        %v1056 = vld [vmem:[%s734 + $0xb8] sm:$0xff]
        %v1057 = vld [vmem:[%s734 + $0xc0] sm:$0xff]
        %v1058 = vld [vmem:[%s734 + $0xc8] sm:$0xff]
        %v1059 = vld [vmem:[%s734 + $0xd0] sm:$0xff]
        %v1060 = vld [vmem:[%s734 + $0xd8] sm:$0xff]
        %v1061 = vld [vmem:[%s734 + $0xe0] sm:$0xff]
        %v1062 = vld [vmem:[%s734 + $0xe8] sm:$0xff]
        %v1063 = vld [vmem:[%s734 + $0xf0] sm:$0xff]
        %v1064 = vld [vmem:[%s734 + $0xf8] sm:$0xff]
        %v1065 = vld [vmem:[%s734 + $0x100] sm:$0xff]
        %v1066 = vld [vmem:[%s734 + $0x108] sm:$0xff]
        %v1067 = vld [vmem:[%s734 + $0x110] sm:$0xff]
        %v1068 = vld [vmem:[%s734 + $0x118] sm:$0xff]
        %v1069 = vld [vmem:[%s734 + $0x120] sm:$0xff]
        %v1070 = vld [vmem:[%s734 + $0x128] sm:$0xff]
        %v1071 = vld [vmem:[%s734 + $0x130] sm:$0xff]
        %v1072 = vld [vmem:[%s734 + $0x138] sm:$0xff]
        %v1073 = vld [vmem:[%s734 + $0x140] sm:$0xff]
        %v1074 = vld [vmem:[%s734 + $0x148] sm:$0xff]
        %v1075 = vld [vmem:[%s734 + $0x150] sm:$0xff]
        %v1076 = vld [vmem:[%s734 + $0x158] sm:$0xff]
        %v1077 = vld [vmem:[%s734 + $0x160] sm:$0xff]
        %v1078 = vld [vmem:[%s734 + $0x168] sm:$0xff]
        %v1079 = vld [vmem:[%s734 + $0x170] sm:$0xff]
        %v1080 = vld [vmem:[%s734 + $0x178] sm:$0xff]
        %v1081 = vsel %vm964, 1, 0
        %v1082 = vsel %vm965, 1, 0
        %v1083 = vsel %vm966, 1, 0
        %v1084 = vsel %vm967, 1, 0
        %v1085 = vsel %vm968, 1, 0
        %v1086 = vsel %vm969, 1, 0
        %v1087 = vsel %vm970, 1, 0
        %v1088 = vsel %vm971, 1, 0
        %v1089 = vsel %vm972, 1, 0
        %v1090 = vsel %vm973, 1, 0
        %v1091 = vsel %vm974, 1, 0
        %v1092 = vsel %vm975, 1, 0
        %v1093 = vsel %vm976, 1, 0
        %v1094 = vsel %vm977, 1, 0
        %v1095 = vsel %vm978, 1, 0
        %v1096 = vsel %vm979, 1, 0
        %1097 = vset.pattern.permute.xlu0 0
        %1098 = vperm.xlu0 %1097, %v1081
        %v1099 = vpop.permute.xlu0 %1098
        %1100 = vset.pattern.permute.xlu0 0
        %1101 = vperm.xlu0 %1100, %v1082
        %v1102 = vpop.permute.xlu0 %1101
        %1103 = vset.pattern.permute.xlu0 0
        %1104 = vperm.xlu0 %1103, %v1083
        %v1105 = vpop.permute.xlu0 %1104
        %1106 = vset.pattern.permute.xlu0 0
        %1107 = vperm.xlu0 %1106, %v1084
        %v1108 = vpop.permute.xlu0 %1107
        %1109 = vset.pattern.permute.xlu0 0
        %1110 = vperm.xlu0 %1109, %v1085
        %v1111 = vpop.permute.xlu0 %1110
        %1112 = vset.pattern.permute.xlu0 0
        %1113 = vperm.xlu0 %1112, %v1086
        %v1114 = vpop.permute.xlu0 %1113
        %1115 = vset.pattern.permute.xlu0 0
        %1116 = vperm.xlu0 %1115, %v1087
        %v1117 = vpop.permute.xlu0 %1116
        %1118 = vset.pattern.permute.xlu0 0
        %1119 = vperm.xlu0 %1118, %v1088
        %v1120 = vpop.permute.xlu0 %1119
        %1121 = vset.pattern.permute.xlu0 0
        %1122 = vperm.xlu0 %1121, %v1089
        %v1123 = vpop.permute.xlu0 %1122
        %1124 = vset.pattern.permute.xlu0 0
        %1125 = vperm.xlu0 %1124, %v1090
        %v1126 = vpop.permute.xlu0 %1125
        %1127 = vset.pattern.permute.xlu0 0
        %1128 = vperm.xlu0 %1127, %v1091
        %v1129 = vpop.permute.xlu0 %1128
        %1130 = vset.pattern.permute.xlu0 0
        %1131 = vperm.xlu0 %1130, %v1092
        %v1132 = vpop.permute.xlu0 %1131
        %1133 = vset.pattern.permute.xlu0 0
        %1134 = vperm.xlu0 %1133, %v1093
        %v1135 = vpop.permute.xlu0 %1134
        %1136 = vset.pattern.permute.xlu0 0
        %1137 = vperm.xlu0 %1136, %v1094
        %v1138 = vpop.permute.xlu0 %1137
        %1139 = vset.pattern.permute.xlu0 0
        %1140 = vperm.xlu0 %1139, %v1095
        %v1141 = vpop.permute.xlu0 %1140
        %1142 = vset.pattern.permute.xlu0 0
        %1143 = vperm.xlu0 %1142, %v1096
        %v1144 = vpop.permute.xlu0 %1143
        %vm1145 = vcmp.eq.s32.totalorder %v1099, 1
        %vm1146 = vcmp.eq.s32.totalorder %v1102, 1
        %vm1147 = vcmp.eq.s32.totalorder %v1105, 1
        %vm1148 = vcmp.eq.s32.totalorder %v1108, 1
        %vm1149 = vcmp.eq.s32.totalorder %v1111, 1
        %vm1150 = vcmp.eq.s32.totalorder %v1114, 1
        %vm1151 = vcmp.eq.s32.totalorder %v1117, 1
        %vm1152 = vcmp.eq.s32.totalorder %v1120, 1
        %vm1153 = vcmp.eq.s32.totalorder %v1123, 1
        %vm1154 = vcmp.eq.s32.totalorder %v1126, 1
        %vm1155 = vcmp.eq.s32.totalorder %v1129, 1
        %vm1156 = vcmp.eq.s32.totalorder %v1132, 1
        %vm1157 = vcmp.eq.s32.totalorder %v1135, 1
        %vm1158 = vcmp.eq.s32.totalorder %v1138, 1
        %vm1159 = vcmp.eq.s32.totalorder %v1141, 1
        %vm1160 = vcmp.eq.s32.totalorder %v1144, 1
        %v1161 = vsel %vm1145, %v985, 0.0
        %v1162 = vsel %vm1145, %v986, 0.0
        %v1163 = vsel %vm1145, %v987, 0.0
        %v1164 = vsel %vm1146, %v988, 0.0
        %v1165 = vsel %vm1146, %v989, 0.0
        %v1166 = vsel %vm1146, %v990, 0.0
        %v1167 = vsel %vm1147, %v991, 0.0
        %v1168 = vsel %vm1147, %v992, 0.0
        %v1169 = vsel %vm1147, %v993, 0.0
        %v1170 = vsel %vm1148, %v994, 0.0
        %v1171 = vsel %vm1148, %v995, 0.0
        %v1172 = vsel %vm1148, %v996, 0.0
        %v1173 = vsel %vm1149, %v997, 0.0
        %v1174 = vsel %vm1149, %v998, 0.0
        %v1175 = vsel %vm1149, %v999, 0.0
        %v1176 = vsel %vm1150, %v1000, 0.0
        %v1177 = vsel %vm1150, %v1001, 0.0
        %v1178 = vsel %vm1150, %v1002, 0.0
        %v1179 = vsel %vm1151, %v1003, 0.0
        %v1180 = vsel %vm1151, %v1004, 0.0
        %v1181 = vsel %vm1151, %v1005, 0.0
        %v1182 = vsel %vm1152, %v1006, 0.0
        %v1183 = vsel %vm1152, %v1007, 0.0
        %v1184 = vsel %vm1152, %v1008, 0.0
        %v1185 = vsel %vm1153, %v1009, 0.0
        %v1186 = vsel %vm1153, %v1010, 0.0
        %v1187 = vsel %vm1153, %v1011, 0.0
        %v1188 = vsel %vm1154, %v1012, 0.0
        %v1189 = vsel %vm1154, %v1013, 0.0
        %v1190 = vsel %vm1154, %v1014, 0.0
        %v1191 = vsel %vm1155, %v1015, 0.0
        %v1192 = vsel %vm1155, %v1016, 0.0
        %v1193 = vsel %vm1155, %v1017, 0.0
        %v1194 = vsel %vm1156, %v1018, 0.0
        %v1195 = vsel %vm1156, %v1019, 0.0
        %v1196 = vsel %vm1156, %v1020, 0.0
        %v1197 = vsel %vm1157, %v1021, 0.0
        %v1198 = vsel %vm1157, %v1022, 0.0
        %v1199 = vsel %vm1157, %v1023, 0.0
        %v1200 = vsel %vm1158, %v1024, 0.0
        %v1201 = vsel %vm1158, %v1025, 0.0
        %v1202 = vsel %vm1158, %v1026, 0.0
        %v1203 = vsel %vm1159, %v1027, 0.0
        %v1204 = vsel %vm1159, %v1028, 0.0
        %v1205 = vsel %vm1159, %v1029, 0.0
        %v1206 = vsel %vm1160, %v1030, 0.0
        %v1207 = vsel %vm1160, %v1031, 0.0
        %v1208 = vsel %vm1160, %v1032, 0.0
        %v1209 = vadd.f32 %v1161, %v1164
        %v1210 = vrot.slane %v1209, 4
        %v1211 = vadd.f32 %v1209, %v1210
        %v1212 = vrot.slane %v1211, 2
        %v1213 = vadd.f32 %v1211, %v1212
        %v1214 = vrot.slane %v1213, 1
        %v1215 = vadd.f32 %v1213, %v1214
        %v1216 = vadd.f32 %v1162, %v1165
        %v1217 = vrot.slane %v1216, 4
        %v1218 = vadd.f32 %v1216, %v1217
        %v1219 = vrot.slane %v1218, 2
        %v1220 = vadd.f32 %v1218, %v1219
        %v1221 = vrot.slane %v1220, 1
        %v1222 = vadd.f32 %v1220, %v1221
        %vm1223 = vcmask 195584
        %v1224 = vsel %vm1223, %v1163, 0.0
        %v1225 = vsel %vm1223, %v1166, 0.0
        %v1226 = vadd.f32 %v1224, %v1225
        %v1227 = vrot.slane %v1226, 4
        %v1228 = vadd.f32 %v1226, %v1227
        %v1229 = vrot.slane %v1228, 2
        %v1230 = vadd.f32 %v1228, %v1229
        %v1231 = vrot.slane %v1230, 1
        %v1232 = vadd.f32 %v1230, %v1231
        %v1233 = vadd.f32 %v1167, %v1170
        %v1234 = vrot.slane %v1233, 4
        %v1235 = vadd.f32 %v1233, %v1234
        %v1236 = vrot.slane %v1235, 2
        %v1237 = vadd.f32 %v1235, %v1236
        %v1238 = vrot.slane %v1237, 1
        %v1239 = vadd.f32 %v1237, %v1238
        %v1240 = vadd.f32 %v1168, %v1171
        %v1241 = vrot.slane %v1240, 4
        %v1242 = vadd.f32 %v1240, %v1241
        %v1243 = vrot.slane %v1242, 2
        %v1244 = vadd.f32 %v1242, %v1243
        %v1245 = vrot.slane %v1244, 1
        %v1246 = vadd.f32 %v1244, %v1245
        %v1247 = vsel %vm1223, %v1169, 0.0
        %v1248 = vsel %vm1223, %v1172, 0.0
        %v1249 = vadd.f32 %v1247, %v1248
        %v1250 = vrot.slane %v1249, 4
        %v1251 = vadd.f32 %v1249, %v1250
        %v1252 = vrot.slane %v1251, 2
        %v1253 = vadd.f32 %v1251, %v1252
        %v1254 = vrot.slane %v1253, 1
        %v1255 = vadd.f32 %v1253, %v1254
        %v1256 = vadd.f32 %v1173, %v1176
        %v1257 = vrot.slane %v1256, 4
        %v1258 = vadd.f32 %v1256, %v1257
        %v1259 = vrot.slane %v1258, 2
        %v1260 = vadd.f32 %v1258, %v1259
        %v1261 = vrot.slane %v1260, 1
        %v1262 = vadd.f32 %v1260, %v1261
        %v1263 = vadd.f32 %v1174, %v1177
        %v1264 = vrot.slane %v1263, 4
        %v1265 = vadd.f32 %v1263, %v1264
        %v1266 = vrot.slane %v1265, 2
        %v1267 = vadd.f32 %v1265, %v1266
        %v1268 = vrot.slane %v1267, 1
        %v1269 = vadd.f32 %v1267, %v1268
        %v1270 = vsel %vm1223, %v1175, 0.0
        %v1271 = vsel %vm1223, %v1178, 0.0
        %v1272 = vadd.f32 %v1270, %v1271
        %v1273 = vrot.slane %v1272, 4
        %v1274 = vadd.f32 %v1272, %v1273
        %v1275 = vrot.slane %v1274, 2
        %v1276 = vadd.f32 %v1274, %v1275
        %v1277 = vrot.slane %v1276, 1
        %v1278 = vadd.f32 %v1276, %v1277
        %v1279 = vadd.f32 %v1179, %v1182
        %v1280 = vrot.slane %v1279, 4
        %v1281 = vadd.f32 %v1279, %v1280
        %v1282 = vrot.slane %v1281, 2
        %v1283 = vadd.f32 %v1281, %v1282
        %v1284 = vrot.slane %v1283, 1
        %v1285 = vadd.f32 %v1283, %v1284
        %v1286 = vadd.f32 %v1180, %v1183
        %v1287 = vrot.slane %v1286, 4
        %v1288 = vadd.f32 %v1286, %v1287
        %v1289 = vrot.slane %v1288, 2
        %v1290 = vadd.f32 %v1288, %v1289
        %v1291 = vrot.slane %v1290, 1
        %v1292 = vadd.f32 %v1290, %v1291
        %v1293 = vsel %vm1223, %v1181, 0.0
        %v1294 = vsel %vm1223, %v1184, 0.0
        %v1295 = vadd.f32 %v1293, %v1294
        %v1296 = vrot.slane %v1295, 4
        %v1297 = vadd.f32 %v1295, %v1296
        %v1298 = vrot.slane %v1297, 2
        %v1299 = vadd.f32 %v1297, %v1298
        %v1300 = vrot.slane %v1299, 1
        %v1301 = vadd.f32 %v1299, %v1300
        %v1302 = vadd.f32 %v1185, %v1188
        %v1303 = vrot.slane %v1302, 4
        %v1304 = vadd.f32 %v1302, %v1303
        %v1305 = vrot.slane %v1304, 2
        %v1306 = vadd.f32 %v1304, %v1305
        %v1307 = vrot.slane %v1306, 1
        %v1308 = vadd.f32 %v1306, %v1307
        %v1309 = vadd.f32 %v1186, %v1189
        %v1310 = vrot.slane %v1309, 4
        %v1311 = vadd.f32 %v1309, %v1310
        %v1312 = vrot.slane %v1311, 2
        %v1313 = vadd.f32 %v1311, %v1312
        %v1314 = vrot.slane %v1313, 1
        %v1315 = vadd.f32 %v1313, %v1314
        %v1316 = vsel %vm1223, %v1187, 0.0
        %v1317 = vsel %vm1223, %v1190, 0.0
        %v1318 = vadd.f32 %v1316, %v1317
        %v1319 = vrot.slane %v1318, 4
        %v1320 = vadd.f32 %v1318, %v1319
        %v1321 = vrot.slane %v1320, 2
        %v1322 = vadd.f32 %v1320, %v1321
        %v1323 = vrot.slane %v1322, 1
        %v1324 = vadd.f32 %v1322, %v1323
        %v1325 = vadd.f32 %v1191, %v1194
        %v1326 = vrot.slane %v1325, 4
        %v1327 = vadd.f32 %v1325, %v1326
        %v1328 = vrot.slane %v1327, 2
        %v1329 = vadd.f32 %v1327, %v1328
        %v1330 = vrot.slane %v1329, 1
        %v1331 = vadd.f32 %v1329, %v1330
        %v1332 = vadd.f32 %v1192, %v1195
        %v1333 = vrot.slane %v1332, 4
        %v1334 = vadd.f32 %v1332, %v1333
        %v1335 = vrot.slane %v1334, 2
        %v1336 = vadd.f32 %v1334, %v1335
        %v1337 = vrot.slane %v1336, 1
        %v1338 = vadd.f32 %v1336, %v1337
        %v1339 = vsel %vm1223, %v1193, 0.0
        %v1340 = vsel %vm1223, %v1196, 0.0
        %v1341 = vadd.f32 %v1339, %v1340
        %v1342 = vrot.slane %v1341, 4
        %v1343 = vadd.f32 %v1341, %v1342
        %v1344 = vrot.slane %v1343, 2
        %v1345 = vadd.f32 %v1343, %v1344
        %v1346 = vrot.slane %v1345, 1
        %v1347 = vadd.f32 %v1345, %v1346
        %v1348 = vadd.f32 %v1197, %v1200
        %v1349 = vrot.slane %v1348, 4
        %v1350 = vadd.f32 %v1348, %v1349
        %v1351 = vrot.slane %v1350, 2
        %v1352 = vadd.f32 %v1350, %v1351
        %v1353 = vrot.slane %v1352, 1
        %v1354 = vadd.f32 %v1352, %v1353
        %v1355 = vadd.f32 %v1198, %v1201
        %v1356 = vrot.slane %v1355, 4
        %v1357 = vadd.f32 %v1355, %v1356
        %v1358 = vrot.slane %v1357, 2
        %v1359 = vadd.f32 %v1357, %v1358
        %v1360 = vrot.slane %v1359, 1
        %v1361 = vadd.f32 %v1359, %v1360
        %v1362 = vsel %vm1223, %v1199, 0.0
        %v1363 = vsel %vm1223, %v1202, 0.0
        %v1364 = vadd.f32 %v1362, %v1363
        %v1365 = vrot.slane %v1364, 4
        %v1366 = vadd.f32 %v1364, %v1365
        %v1367 = vrot.slane %v1366, 2
        %v1368 = vadd.f32 %v1366, %v1367
        %v1369 = vrot.slane %v1368, 1
        %v1370 = vadd.f32 %v1368, %v1369
        %v1371 = vadd.f32 %v1203, %v1206
        %v1372 = vrot.slane %v1371, 4
        %v1373 = vadd.f32 %v1371, %v1372
        %v1374 = vrot.slane %v1373, 2
        %v1375 = vadd.f32 %v1373, %v1374
        %v1376 = vrot.slane %v1375, 1
        %v1377 = vadd.f32 %v1375, %v1376
        %v1378 = vadd.f32 %v1204, %v1207
        %v1379 = vrot.slane %v1378, 4
        %v1380 = vadd.f32 %v1378, %v1379
        %v1381 = vrot.slane %v1380, 2
        %v1382 = vadd.f32 %v1380, %v1381
        %v1383 = vrot.slane %v1382, 1
        %v1384 = vadd.f32 %v1382, %v1383
        %v1385 = vsel %vm1223, %v1205, 0.0
        %v1386 = vsel %vm1223, %v1208, 0.0
        %v1387 = vadd.f32 %v1385, %v1386
        %v1388 = vrot.slane %v1387, 4
        %v1389 = vadd.f32 %v1387, %v1388
        %v1390 = vrot.slane %v1389, 2
        %v1391 = vadd.f32 %v1389, %v1390
        %v1392 = vrot.slane %v1391, 1
        %v1393 = vadd.f32 %v1391, %v1392
        %1395 = vset.pattern.permute.xlu0 0
        %1396 = vperm.xlu0 %1395, %v984
        %v1397 = vpop.permute.xlu0 %1396
        %v1398 = vrot.slane %v1397, 1
        %v1399 = vrot.slane %v1397, 2
        %v1400 = vrot.slane %v1397, 3
        %v1401 = vrot.slane %v1397, 4
        %v1402 = vrot.slane %v1397, 5
        %v1403 = vrot.slane %v1397, 6
        %v1404 = vrot.slane %v1397, 7
        %v1413 = vmul.f32 %v1215, %v1397
        %v1414 = vmul.f32 %v1222, %v1397
        %v1415 = vmul.f32 %v1232, %v1397
        %v1416 = vmul.f32 %v1239, %v1398
        %v1417 = vmul.f32 %v1246, %v1398
        %v1418 = vmul.f32 %v1255, %v1398
        %v1419 = vmul.f32 %v1262, %v1399
        %v1420 = vmul.f32 %v1269, %v1399
        %v1421 = vmul.f32 %v1278, %v1399
        %v1422 = vmul.f32 %v1285, %v1400
        %v1423 = vmul.f32 %v1292, %v1400
        %v1424 = vmul.f32 %v1301, %v1400
        %v1425 = vmul.f32 %v1308, %v1401
        %v1426 = vmul.f32 %v1315, %v1401
        %v1427 = vmul.f32 %v1324, %v1401
        %v1428 = vmul.f32 %v1331, %v1402
        %v1429 = vmul.f32 %v1338, %v1402
        %v1430 = vmul.f32 %v1347, %v1402
        %v1431 = vmul.f32 %v1354, %v1403
        %v1432 = vmul.f32 %v1361, %v1403
        %v1433 = vmul.f32 %v1370, %v1403
        %v1434 = vmul.f32 %v1377, %v1404
        %v1435 = vmul.f32 %v1384, %v1404
        %v1436 = vmul.f32 %v1393, %v1404
        %v1437 = vsel %vm1145, %v1033, 0.0
        %v1438 = vsel %vm1145, %v1034, 0.0
        %v1439 = vsel %vm1145, %v1035, 0.0
        %v1440 = vsel %vm1146, %v1036, 0.0
        %v1441 = vsel %vm1146, %v1037, 0.0
        %v1442 = vsel %vm1146, %v1038, 0.0
        %v1443 = vsel %vm1147, %v1039, 0.0
        %v1444 = vsel %vm1147, %v1040, 0.0
        %v1445 = vsel %vm1147, %v1041, 0.0
        %v1446 = vsel %vm1148, %v1042, 0.0
        %v1447 = vsel %vm1148, %v1043, 0.0
        %v1448 = vsel %vm1148, %v1044, 0.0
        %v1449 = vsel %vm1149, %v1045, 0.0
        %v1450 = vsel %vm1149, %v1046, 0.0
        %v1451 = vsel %vm1149, %v1047, 0.0
        %v1452 = vsel %vm1150, %v1048, 0.0
        %v1453 = vsel %vm1150, %v1049, 0.0
        %v1454 = vsel %vm1150, %v1050, 0.0
        %v1455 = vsel %vm1151, %v1051, 0.0
        %v1456 = vsel %vm1151, %v1052, 0.0
        %v1457 = vsel %vm1151, %v1053, 0.0
        %v1458 = vsel %vm1152, %v1054, 0.0
        %v1459 = vsel %vm1152, %v1055, 0.0
        %v1460 = vsel %vm1152, %v1056, 0.0
        %v1461 = vsel %vm1153, %v1057, 0.0
        %v1462 = vsel %vm1153, %v1058, 0.0
        %v1463 = vsel %vm1153, %v1059, 0.0
        %v1464 = vsel %vm1154, %v1060, 0.0
        %v1465 = vsel %vm1154, %v1061, 0.0
        %v1466 = vsel %vm1154, %v1062, 0.0
        %v1467 = vsel %vm1155, %v1063, 0.0
        %v1468 = vsel %vm1155, %v1064, 0.0
        %v1469 = vsel %vm1155, %v1065, 0.0
        %v1470 = vsel %vm1156, %v1066, 0.0
        %v1471 = vsel %vm1156, %v1067, 0.0
        %v1472 = vsel %vm1156, %v1068, 0.0
        %v1473 = vsel %vm1157, %v1069, 0.0
        %v1474 = vsel %vm1157, %v1070, 0.0
        %v1475 = vsel %vm1157, %v1071, 0.0
        %v1476 = vsel %vm1158, %v1072, 0.0
        %v1477 = vsel %vm1158, %v1073, 0.0
        %v1478 = vsel %vm1158, %v1074, 0.0
        %v1479 = vsel %vm1159, %v1075, 0.0
        %v1480 = vsel %vm1159, %v1076, 0.0
        %v1481 = vsel %vm1159, %v1077, 0.0
        %v1482 = vsel %vm1160, %v1078, 0.0
        %v1483 = vsel %vm1160, %v1079, 0.0
        %v1484 = vsel %vm1160, %v1080, 0.0
        %v1485 = vadd.f32 %v1437, %v1440
        %v1486 = vrot.slane %v1485, 4
        %v1487 = vadd.f32 %v1485, %v1486
        %v1488 = vrot.slane %v1487, 2
        %v1489 = vadd.f32 %v1487, %v1488
        %v1490 = vrot.slane %v1489, 1
        %v1491 = vadd.f32 %v1489, %v1490
        %v1492 = vadd.f32 %v1438, %v1441
        %v1493 = vrot.slane %v1492, 4
        %v1494 = vadd.f32 %v1492, %v1493
        %v1495 = vrot.slane %v1494, 2
        %v1496 = vadd.f32 %v1494, %v1495
        %v1497 = vrot.slane %v1496, 1
        %v1498 = vadd.f32 %v1496, %v1497
        %v1499 = vsel %vm1223, %v1439, 0.0
        %v1500 = vsel %vm1223, %v1442, 0.0
        %v1501 = vadd.f32 %v1499, %v1500
        %v1502 = vrot.slane %v1501, 4
        %v1503 = vadd.f32 %v1501, %v1502
        %v1504 = vrot.slane %v1503, 2
        %v1505 = vadd.f32 %v1503, %v1504
        %v1506 = vrot.slane %v1505, 1
        %v1507 = vadd.f32 %v1505, %v1506
        %v1508 = vadd.f32 %v1443, %v1446
        %v1509 = vrot.slane %v1508, 4
        %v1510 = vadd.f32 %v1508, %v1509
        %v1511 = vrot.slane %v1510, 2
        %v1512 = vadd.f32 %v1510, %v1511
        %v1513 = vrot.slane %v1512, 1
        %v1514 = vadd.f32 %v1512, %v1513
        %v1515 = vadd.f32 %v1444, %v1447
        %v1516 = vrot.slane %v1515, 4
        %v1517 = vadd.f32 %v1515, %v1516
        %v1518 = vrot.slane %v1517, 2
        %v1519 = vadd.f32 %v1517, %v1518
        %v1520 = vrot.slane %v1519, 1
        %v1521 = vadd.f32 %v1519, %v1520
        %v1522 = vsel %vm1223, %v1445, 0.0
        %v1523 = vsel %vm1223, %v1448, 0.0
        %v1524 = vadd.f32 %v1522, %v1523
        %v1525 = vrot.slane %v1524, 4
        %v1526 = vadd.f32 %v1524, %v1525
        %v1527 = vrot.slane %v1526, 2
        %v1528 = vadd.f32 %v1526, %v1527
        %v1529 = vrot.slane %v1528, 1
        %v1530 = vadd.f32 %v1528, %v1529
        %v1531 = vadd.f32 %v1449, %v1452
        %v1532 = vrot.slane %v1531, 4
        %v1533 = vadd.f32 %v1531, %v1532
        %v1534 = vrot.slane %v1533, 2
        %v1535 = vadd.f32 %v1533, %v1534
        %v1536 = vrot.slane %v1535, 1
        %v1537 = vadd.f32 %v1535, %v1536
        %v1538 = vadd.f32 %v1450, %v1453
        %v1539 = vrot.slane %v1538, 4
        %v1540 = vadd.f32 %v1538, %v1539
        %v1541 = vrot.slane %v1540, 2
        %v1542 = vadd.f32 %v1540, %v1541
        %v1543 = vrot.slane %v1542, 1
        %v1544 = vadd.f32 %v1542, %v1543
        %v1545 = vsel %vm1223, %v1451, 0.0
        %v1546 = vsel %vm1223, %v1454, 0.0
        %v1547 = vadd.f32 %v1545, %v1546
        %v1548 = vrot.slane %v1547, 4
        %v1549 = vadd.f32 %v1547, %v1548
        %v1550 = vrot.slane %v1549, 2
        %v1551 = vadd.f32 %v1549, %v1550
        %v1552 = vrot.slane %v1551, 1
        %v1553 = vadd.f32 %v1551, %v1552
        %v1554 = vadd.f32 %v1455, %v1458
        %v1555 = vrot.slane %v1554, 4
        %v1556 = vadd.f32 %v1554, %v1555
        %v1557 = vrot.slane %v1556, 2
        %v1558 = vadd.f32 %v1556, %v1557
        %v1559 = vrot.slane %v1558, 1
        %v1560 = vadd.f32 %v1558, %v1559
        %v1561 = vadd.f32 %v1456, %v1459
        %v1562 = vrot.slane %v1561, 4
        %v1563 = vadd.f32 %v1561, %v1562
        %v1564 = vrot.slane %v1563, 2
        %v1565 = vadd.f32 %v1563, %v1564
        %v1566 = vrot.slane %v1565, 1
        %v1567 = vadd.f32 %v1565, %v1566
        %v1568 = vsel %vm1223, %v1457, 0.0
        %v1569 = vsel %vm1223, %v1460, 0.0
        %v1570 = vadd.f32 %v1568, %v1569
        %v1571 = vrot.slane %v1570, 4
        %v1572 = vadd.f32 %v1570, %v1571
        %v1573 = vrot.slane %v1572, 2
        %v1574 = vadd.f32 %v1572, %v1573
        %v1575 = vrot.slane %v1574, 1
        %v1576 = vadd.f32 %v1574, %v1575
        %v1577 = vadd.f32 %v1461, %v1464
        %v1578 = vrot.slane %v1577, 4
        %v1579 = vadd.f32 %v1577, %v1578
        %v1580 = vrot.slane %v1579, 2
        %v1581 = vadd.f32 %v1579, %v1580
        %v1582 = vrot.slane %v1581, 1
        %v1583 = vadd.f32 %v1581, %v1582
        %v1584 = vadd.f32 %v1462, %v1465
        %v1585 = vrot.slane %v1584, 4
        %v1586 = vadd.f32 %v1584, %v1585
        %v1587 = vrot.slane %v1586, 2
        %v1588 = vadd.f32 %v1586, %v1587
        %v1589 = vrot.slane %v1588, 1
        %v1590 = vadd.f32 %v1588, %v1589
        %v1591 = vsel %vm1223, %v1463, 0.0
        %v1592 = vsel %vm1223, %v1466, 0.0
        %v1593 = vadd.f32 %v1591, %v1592
        %v1594 = vrot.slane %v1593, 4
        %v1595 = vadd.f32 %v1593, %v1594
        %v1596 = vrot.slane %v1595, 2
        %v1597 = vadd.f32 %v1595, %v1596
        %v1598 = vrot.slane %v1597, 1
        %v1599 = vadd.f32 %v1597, %v1598
        %v1600 = vadd.f32 %v1467, %v1470
        %v1601 = vrot.slane %v1600, 4
        %v1602 = vadd.f32 %v1600, %v1601
        %v1603 = vrot.slane %v1602, 2
        %v1604 = vadd.f32 %v1602, %v1603
        %v1605 = vrot.slane %v1604, 1
        %v1606 = vadd.f32 %v1604, %v1605
        %v1607 = vadd.f32 %v1468, %v1471
        %v1608 = vrot.slane %v1607, 4
        %v1609 = vadd.f32 %v1607, %v1608
        %v1610 = vrot.slane %v1609, 2
        %v1611 = vadd.f32 %v1609, %v1610
        %v1612 = vrot.slane %v1611, 1
        %v1613 = vadd.f32 %v1611, %v1612
        %v1614 = vsel %vm1223, %v1469, 0.0
        %v1615 = vsel %vm1223, %v1472, 0.0
        %v1616 = vadd.f32 %v1614, %v1615
        %v1617 = vrot.slane %v1616, 4
        %v1618 = vadd.f32 %v1616, %v1617
        %v1619 = vrot.slane %v1618, 2
        %v1620 = vadd.f32 %v1618, %v1619
        %v1621 = vrot.slane %v1620, 1
        %v1622 = vadd.f32 %v1620, %v1621
        %v1623 = vadd.f32 %v1473, %v1476
        %v1624 = vrot.slane %v1623, 4
        %v1625 = vadd.f32 %v1623, %v1624
        %v1626 = vrot.slane %v1625, 2
        %v1627 = vadd.f32 %v1625, %v1626
        %v1628 = vrot.slane %v1627, 1
        %v1629 = vadd.f32 %v1627, %v1628
        %v1630 = vadd.f32 %v1474, %v1477
        %v1631 = vrot.slane %v1630, 4
        %v1632 = vadd.f32 %v1630, %v1631
        %v1633 = vrot.slane %v1632, 2
        %v1634 = vadd.f32 %v1632, %v1633
        %v1635 = vrot.slane %v1634, 1
        %v1636 = vadd.f32 %v1634, %v1635
        %v1637 = vsel %vm1223, %v1475, 0.0
        %v1638 = vsel %vm1223, %v1478, 0.0
        %v1639 = vadd.f32 %v1637, %v1638
        %v1640 = vrot.slane %v1639, 4
        %v1641 = vadd.f32 %v1639, %v1640
        %v1642 = vrot.slane %v1641, 2
        %v1643 = vadd.f32 %v1641, %v1642
        %v1644 = vrot.slane %v1643, 1
        %v1645 = vadd.f32 %v1643, %v1644
        %v1646 = vadd.f32 %v1479, %v1482
        %v1647 = vrot.slane %v1646, 4
        %v1648 = vadd.f32 %v1646, %v1647
        %v1649 = vrot.slane %v1648, 2
        %v1650 = vadd.f32 %v1648, %v1649
        %v1651 = vrot.slane %v1650, 1
        %v1652 = vadd.f32 %v1650, %v1651
        %v1653 = vadd.f32 %v1480, %v1483
        %v1654 = vrot.slane %v1653, 4
        %v1655 = vadd.f32 %v1653, %v1654
        %v1656 = vrot.slane %v1655, 2
        %v1657 = vadd.f32 %v1655, %v1656
        %v1658 = vrot.slane %v1657, 1
        %v1659 = vadd.f32 %v1657, %v1658
        %v1660 = vsel %vm1223, %v1481, 0.0
        %v1661 = vsel %vm1223, %v1484, 0.0
        %v1662 = vadd.f32 %v1660, %v1661
        %v1663 = vrot.slane %v1662, 4
        %v1664 = vadd.f32 %v1662, %v1663
        %v1665 = vrot.slane %v1664, 2
        %v1666 = vadd.f32 %v1664, %v1665
        %v1667 = vrot.slane %v1666, 1
        %v1668 = vadd.f32 %v1666, %v1667
        %v1669 = vmul.f32 %v1491, %v1397
        %v1670 = vmul.f32 %v1498, %v1397
        %v1671 = vmul.f32 %v1507, %v1397
        %v1672 = vmul.f32 %v1514, %v1398
        %v1673 = vmul.f32 %v1521, %v1398
        %v1674 = vmul.f32 %v1530, %v1398
        %v1675 = vmul.f32 %v1537, %v1399
        %v1676 = vmul.f32 %v1544, %v1399
        %v1677 = vmul.f32 %v1553, %v1399
        %v1678 = vmul.f32 %v1560, %v1400
        %v1679 = vmul.f32 %v1567, %v1400
        %v1680 = vmul.f32 %v1576, %v1400
        %v1681 = vmul.f32 %v1583, %v1401
        %v1682 = vmul.f32 %v1590, %v1401
        %v1683 = vmul.f32 %v1599, %v1401
        %v1684 = vmul.f32 %v1606, %v1402
        %v1685 = vmul.f32 %v1613, %v1402
        %v1686 = vmul.f32 %v1622, %v1402
        %v1687 = vmul.f32 %v1629, %v1403
        %v1688 = vmul.f32 %v1636, %v1403
        %v1689 = vmul.f32 %v1645, %v1403
        %v1690 = vmul.f32 %v1652, %v1404
        %v1691 = vmul.f32 %v1659, %v1404
        %v1692 = vmul.f32 %v1668, %v1404
        %s1693 = smul.u32 %s57, 8
        %s1694 = sld [smem:[#allocation3 + %s1693]]
        %p1695 = scmp.gt.s32.totalorder %s1694, 0
        %s1696 = scalar_select %p1695, %s1694, 0
        %p1697 = scmp.lt.s32.totalorder %s1696, 15
        %s1698 = scalar_select %p1697, %s1696, 15
        %s1699 = sld [smem:[#allocation4 + %s1693]]
        %p1700 = scmp.gt.s32.totalorder %s1699, 0
        %s1701 = scalar_select %p1700, %s1699, 0
        %p1702 = scmp.lt.s32.totalorder %s1701, 15
        %s1703 = scalar_select %p1702, %s1701, 15
        %s1704 = sshra.s32 %s1698, 3
        %s1705 = sand.u32 %s1698, 7
        %s1706 = sshra.s32 %s1698, 3
        %s1707 = sand.u32 %s1698, 7
        %s1708 = smul.u32 %s1704, 3
        %s1709 = smul.u32 %s1708, 8
        %s1710 = sadd.s32 %s1709, %s1707
        %s1711 = scalar_lea.vmem %s725, %s1710 [#allocation6]
        %v1712 = vld [vmem:[%s1711] ss:$8 sm:$0x7]
        %s1713 = scalar_lea.vmem %s734, %s1710 [#allocation9]
        %v1714 = vld [vmem:[%s1713] ss:$8 sm:$0x7]
        %s1715 = sshra.s32 %s1703, 3
        %s1716 = sand.u32 %s1703, 7
        %s1717 = sshra.s32 %s1703, 3
        %s1718 = sand.u32 %s1703, 7
        %s1719 = smul.u32 %s1715, 3
        %s1720 = smul.u32 %s1719, 8
        %s1721 = sadd.s32 %s1720, %s1718
        %s1722 = scalar_lea.vmem %s725, %s1721 [#allocation6]
        %v1723 = vld [vmem:[%s1722] ss:$8 sm:$0x7]
        %s1724 = scalar_lea.vmem %s734, %s1721 [#allocation9]
        %v1725 = vld [vmem:[%s1724] ss:$8 sm:$0x7]
        %s1726 = sadd.s32 %s1693, 1
        %s1727 = sld [smem:[#allocation3 + %s1726]]
        %p1728 = scmp.gt.s32.totalorder %s1727, 0
        %s1729 = scalar_select %p1728, %s1727, 0
        %p1730 = scmp.lt.s32.totalorder %s1729, 15
        %s1731 = scalar_select %p1730, %s1729, 15
        %s1732 = sld [smem:[#allocation4 + %s1726]]
        %p1733 = scmp.gt.s32.totalorder %s1732, 0
        %s1734 = scalar_select %p1733, %s1732, 0
        %p1735 = scmp.lt.s32.totalorder %s1734, 15
        %s1736 = scalar_select %p1735, %s1734, 15
        %s1737 = sshra.s32 %s1731, 3
        %s1738 = sand.u32 %s1731, 7
        %s1739 = sshra.s32 %s1731, 3
        %s1740 = sand.u32 %s1731, 7
        %s1741 = smul.u32 %s1737, 3
        %s1742 = smul.u32 %s1741, 8
        %s1743 = sadd.s32 %s1742, %s1740
        %s1744 = sadd.s32 48, %s1743
        %s1745 = scalar_lea.vmem %s725, %s1744 [#allocation6]
        %v1746 = vld [vmem:[%s1745] ss:$8 sm:$0x7]
        %s1747 = scalar_lea.vmem %s734, %s1744 [#allocation9]
        %v1748 = vld [vmem:[%s1747] ss:$8 sm:$0x7]
        %s1749 = sshra.s32 %s1736, 3
        %s1750 = sand.u32 %s1736, 7
        %s1751 = sshra.s32 %s1736, 3
        %s1752 = sand.u32 %s1736, 7
        %s1753 = smul.u32 %s1749, 3
        %s1754 = smul.u32 %s1753, 8
        %s1755 = sadd.s32 %s1754, %s1752
        %s1756 = sadd.s32 48, %s1755
        %s1757 = scalar_lea.vmem %s725, %s1756 [#allocation6]
        %v1758 = vld [vmem:[%s1757] ss:$8 sm:$0x7]
        %s1759 = scalar_lea.vmem %s734, %s1756 [#allocation9]
        %v1760 = vld [vmem:[%s1759] ss:$8 sm:$0x7]
        %s1761 = sadd.s32 %s1693, 2
        %s1762 = sld [smem:[#allocation3 + %s1761]]
        %p1763 = scmp.gt.s32.totalorder %s1762, 0
        %s1764 = scalar_select %p1763, %s1762, 0
        %p1765 = scmp.lt.s32.totalorder %s1764, 15
        %s1766 = scalar_select %p1765, %s1764, 15
        %s1767 = sld [smem:[#allocation4 + %s1761]]
        %p1768 = scmp.gt.s32.totalorder %s1767, 0
        %s1769 = scalar_select %p1768, %s1767, 0
        %p1770 = scmp.lt.s32.totalorder %s1769, 15
        %s1771 = scalar_select %p1770, %s1769, 15
        %s1772 = sshra.s32 %s1766, 3
        %s1773 = sand.u32 %s1766, 7
        %s1774 = sshra.s32 %s1766, 3
        %s1775 = sand.u32 %s1766, 7
        %s1776 = smul.u32 %s1772, 3
        %s1777 = smul.u32 %s1776, 8
        %s1778 = sadd.s32 %s1777, %s1775
        %s1779 = sadd.s32 96, %s1778
        %s1780 = scalar_lea.vmem %s725, %s1779 [#allocation6]
        %v1781 = vld [vmem:[%s1780] ss:$8 sm:$0x7]
        %s1782 = scalar_lea.vmem %s734, %s1779 [#allocation9]
        %v1783 = vld [vmem:[%s1782] ss:$8 sm:$0x7]
        %s1784 = sshra.s32 %s1771, 3
        %s1785 = sand.u32 %s1771, 7
        %s1786 = sshra.s32 %s1771, 3
        %s1787 = sand.u32 %s1771, 7
        %s1788 = smul.u32 %s1784, 3
        %s1789 = smul.u32 %s1788, 8
        %s1790 = sadd.s32 %s1789, %s1787
        %s1791 = sadd.s32 96, %s1790
        %s1792 = scalar_lea.vmem %s725, %s1791 [#allocation6]
        %v1793 = vld [vmem:[%s1792] ss:$8 sm:$0x7]
        %s1794 = scalar_lea.vmem %s734, %s1791 [#allocation9]
        %v1795 = vld [vmem:[%s1794] ss:$8 sm:$0x7]
        %s1796 = sadd.s32 %s1693, 3
        %s1797 = sld [smem:[#allocation3 + %s1796]]
        %p1798 = scmp.gt.s32.totalorder %s1797, 0
        %s1799 = scalar_select %p1798, %s1797, 0
        %p1800 = scmp.lt.s32.totalorder %s1799, 15
        %s1801 = scalar_select %p1800, %s1799, 15
        %s1802 = sld [smem:[#allocation4 + %s1796]]
        %p1803 = scmp.gt.s32.totalorder %s1802, 0
        %s1804 = scalar_select %p1803, %s1802, 0
        %p1805 = scmp.lt.s32.totalorder %s1804, 15
        %s1806 = scalar_select %p1805, %s1804, 15
        %s1807 = sshra.s32 %s1801, 3
        %s1808 = sand.u32 %s1801, 7
        %s1809 = sshra.s32 %s1801, 3
        %s1810 = sand.u32 %s1801, 7
        %s1811 = smul.u32 %s1807, 3
        %s1812 = smul.u32 %s1811, 8
        %s1813 = sadd.s32 %s1812, %s1810
        %s1814 = sadd.s32 144, %s1813
        %s1815 = scalar_lea.vmem %s725, %s1814 [#allocation6]
        %v1816 = vld [vmem:[%s1815] ss:$8 sm:$0x7]
        %s1817 = scalar_lea.vmem %s734, %s1814 [#allocation9]
        %v1818 = vld [vmem:[%s1817] ss:$8 sm:$0x7]
        %s1819 = sshra.s32 %s1806, 3
        %s1820 = sand.u32 %s1806, 7
        %s1821 = sshra.s32 %s1806, 3
        %s1822 = sand.u32 %s1806, 7
        %s1823 = smul.u32 %s1819, 3
        %s1824 = smul.u32 %s1823, 8
        %s1825 = sadd.s32 %s1824, %s1822
        %s1826 = sadd.s32 144, %s1825
        %s1827 = scalar_lea.vmem %s725, %s1826 [#allocation6]
        %v1828 = vld [vmem:[%s1827] ss:$8 sm:$0x7]
        %s1829 = scalar_lea.vmem %s734, %s1826 [#allocation9]
        %v1830 = vld [vmem:[%s1829] ss:$8 sm:$0x7]
        %s1831 = sadd.s32 %s1693, 4
        %s1832 = sld [smem:[#allocation3 + %s1831]]
        %p1833 = scmp.gt.s32.totalorder %s1832, 0
        %s1834 = scalar_select %p1833, %s1832, 0
        %p1835 = scmp.lt.s32.totalorder %s1834, 15
        %s1836 = scalar_select %p1835, %s1834, 15
        %s1837 = sld [smem:[#allocation4 + %s1831]]
        %p1838 = scmp.gt.s32.totalorder %s1837, 0
        %s1839 = scalar_select %p1838, %s1837, 0
        %p1840 = scmp.lt.s32.totalorder %s1839, 15
        %s1841 = scalar_select %p1840, %s1839, 15
        %s1842 = sshra.s32 %s1836, 3
        %s1843 = sand.u32 %s1836, 7
        %s1844 = sshra.s32 %s1836, 3
        %s1845 = sand.u32 %s1836, 7
        %s1846 = smul.u32 %s1842, 3
        %s1847 = smul.u32 %s1846, 8
        %s1848 = sadd.s32 %s1847, %s1845
        %s1849 = sadd.s32 192, %s1848
        %s1850 = scalar_lea.vmem %s725, %s1849 [#allocation6]
        %v1851 = vld [vmem:[%s1850] ss:$8 sm:$0x7]
        %s1852 = scalar_lea.vmem %s734, %s1849 [#allocation9]
        %v1853 = vld [vmem:[%s1852] ss:$8 sm:$0x7]
        %s1854 = sshra.s32 %s1841, 3
        %s1855 = sand.u32 %s1841, 7
        %s1856 = sshra.s32 %s1841, 3
        %s1857 = sand.u32 %s1841, 7
        %s1858 = smul.u32 %s1854, 3
        %s1859 = smul.u32 %s1858, 8
        %s1860 = sadd.s32 %s1859, %s1857
        %s1861 = sadd.s32 192, %s1860
        %s1862 = scalar_lea.vmem %s725, %s1861 [#allocation6]
        %v1863 = vld [vmem:[%s1862] ss:$8 sm:$0x7]
        %s1864 = scalar_lea.vmem %s734, %s1861 [#allocation9]
        %v1865 = vld [vmem:[%s1864] ss:$8 sm:$0x7]
        %s1866 = sadd.s32 %s1693, 5
        %s1867 = sld [smem:[#allocation3 + %s1866]]
        %p1868 = scmp.gt.s32.totalorder %s1867, 0
        %s1869 = scalar_select %p1868, %s1867, 0
        %p1870 = scmp.lt.s32.totalorder %s1869, 15
        %s1871 = scalar_select %p1870, %s1869, 15
        %s1872 = sld [smem:[#allocation4 + %s1866]]
        %p1873 = scmp.gt.s32.totalorder %s1872, 0
        %s1874 = scalar_select %p1873, %s1872, 0
        %p1875 = scmp.lt.s32.totalorder %s1874, 15
        %s1876 = scalar_select %p1875, %s1874, 15
        %s1877 = sshra.s32 %s1871, 3
        %s1878 = sand.u32 %s1871, 7
        %s1879 = sshra.s32 %s1871, 3
        %s1880 = sand.u32 %s1871, 7
        %s1881 = smul.u32 %s1877, 3
        %s1882 = smul.u32 %s1881, 8
        %s1883 = sadd.s32 %s1882, %s1880
        %s1884 = sadd.s32 240, %s1883
        %s1885 = scalar_lea.vmem %s725, %s1884 [#allocation6]
        %v1886 = vld [vmem:[%s1885] ss:$8 sm:$0x7]
        %s1887 = scalar_lea.vmem %s734, %s1884 [#allocation9]
        %v1888 = vld [vmem:[%s1887] ss:$8 sm:$0x7]
        %s1889 = sshra.s32 %s1876, 3
        %s1890 = sand.u32 %s1876, 7
        %s1891 = sshra.s32 %s1876, 3
        %s1892 = sand.u32 %s1876, 7
        %s1893 = smul.u32 %s1889, 3
        %s1894 = smul.u32 %s1893, 8
        %s1895 = sadd.s32 %s1894, %s1892
        %s1896 = sadd.s32 240, %s1895
        %s1897 = scalar_lea.vmem %s725, %s1896 [#allocation6]
        %v1898 = vld [vmem:[%s1897] ss:$8 sm:$0x7]
        %s1899 = scalar_lea.vmem %s734, %s1896 [#allocation9]
        %v1900 = vld [vmem:[%s1899] ss:$8 sm:$0x7]
        %s1901 = sadd.s32 %s1693, 6
        %s1902 = sld [smem:[#allocation3 + %s1901]]
        %p1903 = scmp.gt.s32.totalorder %s1902, 0
        %s1904 = scalar_select %p1903, %s1902, 0
        %p1905 = scmp.lt.s32.totalorder %s1904, 15
        %s1906 = scalar_select %p1905, %s1904, 15
        %s1907 = sld [smem:[#allocation4 + %s1901]]
        %p1908 = scmp.gt.s32.totalorder %s1907, 0
        %s1909 = scalar_select %p1908, %s1907, 0
        %p1910 = scmp.lt.s32.totalorder %s1909, 15
        %s1911 = scalar_select %p1910, %s1909, 15
        %s1912 = sshra.s32 %s1906, 3
        %s1913 = sand.u32 %s1906, 7
        %s1914 = sshra.s32 %s1906, 3
        %s1915 = sand.u32 %s1906, 7
        %s1916 = smul.u32 %s1912, 3
        %s1917 = smul.u32 %s1916, 8
        %s1918 = sadd.s32 %s1917, %s1915
        %s1919 = sadd.s32 288, %s1918
        %s1920 = scalar_lea.vmem %s725, %s1919 [#allocation6]
        %v1921 = vld [vmem:[%s1920] ss:$8 sm:$0x7]
        %s1922 = scalar_lea.vmem %s734, %s1919 [#allocation9]
        %v1923 = vld [vmem:[%s1922] ss:$8 sm:$0x7]
        %s1924 = sshra.s32 %s1911, 3
        %s1925 = sand.u32 %s1911, 7
        %s1926 = sshra.s32 %s1911, 3
        %s1927 = sand.u32 %s1911, 7
        %s1928 = smul.u32 %s1924, 3
        %s1929 = smul.u32 %s1928, 8
        %s1930 = sadd.s32 %s1929, %s1927
        %s1931 = sadd.s32 288, %s1930
        %s1932 = scalar_lea.vmem %s725, %s1931 [#allocation6]
        %v1933 = vld [vmem:[%s1932] ss:$8 sm:$0x7]
        %s1934 = scalar_lea.vmem %s734, %s1931 [#allocation9]
        %v1935 = vld [vmem:[%s1934] ss:$8 sm:$0x7]
        %s1936 = sadd.s32 %s1693, 7
        %s1937 = sld [smem:[#allocation3 + %s1936]]
        %p1938 = scmp.gt.s32.totalorder %s1937, 0
        %s1939 = scalar_select %p1938, %s1937, 0
        %p1940 = scmp.lt.s32.totalorder %s1939, 15
        %s1941 = scalar_select %p1940, %s1939, 15
        %s1942 = sld [smem:[#allocation4 + %s1936]]
        %p1943 = scmp.gt.s32.totalorder %s1942, 0
        %s1944 = scalar_select %p1943, %s1942, 0
        %p1945 = scmp.lt.s32.totalorder %s1944, 15
        %s1946 = scalar_select %p1945, %s1944, 15
        %s1947 = sshra.s32 %s1941, 3
        %s1948 = sand.u32 %s1941, 7
        %s1949 = sshra.s32 %s1941, 3
        %s1950 = sand.u32 %s1941, 7
        %s1951 = smul.u32 %s1947, 3
        %s1952 = smul.u32 %s1951, 8
        %s1953 = sadd.s32 %s1952, %s1950
        %s1954 = sadd.s32 336, %s1953
        %s1955 = scalar_lea.vmem %s725, %s1954 [#allocation6]
        %v1956 = vld [vmem:[%s1955] ss:$8 sm:$0x7]
        %s1957 = scalar_lea.vmem %s734, %s1954 [#allocation9]
        %v1958 = vld [vmem:[%s1957] ss:$8 sm:$0x7]
        %s1959 = sshra.s32 %s1946, 3
        %s1960 = sand.u32 %s1946, 7
        %s1961 = sshra.s32 %s1946, 3
        %s1962 = sand.u32 %s1946, 7
        %s1963 = smul.u32 %s1959, 3
        %s1964 = smul.u32 %s1963, 8
        %s1965 = sadd.s32 %s1964, %s1962
        %s1966 = sadd.s32 336, %s1965
        %s1967 = scalar_lea.vmem %s725, %s1966 [#allocation6]
        %v1968 = vld [vmem:[%s1967] ss:$8 sm:$0x7]
        %s1969 = scalar_lea.vmem %s734, %s1966 [#allocation9]
        %v1970 = vld [vmem:[%s1969] ss:$8 sm:$0x7]
        %v1972 = vlaneseq
        %v1973 = vshrl.u32 %v1972, 7
        %v1974 = vsub.s32 0, %v1973
        %v1975 = vrot.slane %v1712, %v1974
        %v1976 = vlaneseq
        %v1977 = vshrl.u32 %v1976, 7
        %v1978 = vsub.s32 1, %v1977
        %v1979 = vrot.slane %v1712, %v1978
        %v1980 = vlaneseq
        %v1981 = vshrl.u32 %v1980, 7
        %v1982 = vsub.s32 2, %v1981
        %v1983 = vrot.slane %v1712, %v1982
        %v1988 = vlaneseq
        %v1989 = vshrl.u32 %v1988, 7
        %v1990 = vsub.s32 0, %v1989
        %v1991 = vrot.slane %v1746, %v1990
        %v1992 = vlaneseq
        %v1993 = vshrl.u32 %v1992, 7
        %v1994 = vsub.s32 1, %v1993
        %v1995 = vrot.slane %v1746, %v1994
        %v1996 = vlaneseq
        %v1997 = vshrl.u32 %v1996, 7
        %v1998 = vsub.s32 2, %v1997
        %v1999 = vrot.slane %v1746, %v1998
        %v2004 = vlaneseq
        %v2005 = vshrl.u32 %v2004, 7
        %v2006 = vsub.s32 0, %v2005
        %v2007 = vrot.slane %v1781, %v2006
        %v2008 = vlaneseq
        %v2009 = vshrl.u32 %v2008, 7
        %v2010 = vsub.s32 1, %v2009
        %v2011 = vrot.slane %v1781, %v2010
        %v2012 = vlaneseq
        %v2013 = vshrl.u32 %v2012, 7
        %v2014 = vsub.s32 2, %v2013
        %v2015 = vrot.slane %v1781, %v2014
        %v2020 = vlaneseq
        %v2021 = vshrl.u32 %v2020, 7
        %v2022 = vsub.s32 0, %v2021
        %v2023 = vrot.slane %v1816, %v2022
        %v2024 = vlaneseq
        %v2025 = vshrl.u32 %v2024, 7
        %v2026 = vsub.s32 1, %v2025
        %v2027 = vrot.slane %v1816, %v2026
        %v2028 = vlaneseq
        %v2029 = vshrl.u32 %v2028, 7
        %v2030 = vsub.s32 2, %v2029
        %v2031 = vrot.slane %v1816, %v2030
        %v2036 = vlaneseq
        %v2037 = vshrl.u32 %v2036, 7
        %v2038 = vsub.s32 0, %v2037
        %v2039 = vrot.slane %v1851, %v2038
        %v2040 = vlaneseq
        %v2041 = vshrl.u32 %v2040, 7
        %v2042 = vsub.s32 1, %v2041
        %v2043 = vrot.slane %v1851, %v2042
        %v2044 = vlaneseq
        %v2045 = vshrl.u32 %v2044, 7
        %v2046 = vsub.s32 2, %v2045
        %v2047 = vrot.slane %v1851, %v2046
        %v2052 = vlaneseq
        %v2053 = vshrl.u32 %v2052, 7
        %v2054 = vsub.s32 0, %v2053
        %v2055 = vrot.slane %v1886, %v2054
        %v2056 = vlaneseq
        %v2057 = vshrl.u32 %v2056, 7
        %v2058 = vsub.s32 1, %v2057
        %v2059 = vrot.slane %v1886, %v2058
        %v2060 = vlaneseq
        %v2061 = vshrl.u32 %v2060, 7
        %v2062 = vsub.s32 2, %v2061
        %v2063 = vrot.slane %v1886, %v2062
        %v2068 = vlaneseq
        %v2069 = vshrl.u32 %v2068, 7
        %v2070 = vsub.s32 0, %v2069
        %v2071 = vrot.slane %v1921, %v2070
        %v2072 = vlaneseq
        %v2073 = vshrl.u32 %v2072, 7
        %v2074 = vsub.s32 1, %v2073
        %v2075 = vrot.slane %v1921, %v2074
        %v2076 = vlaneseq
        %v2077 = vshrl.u32 %v2076, 7
        %v2078 = vsub.s32 2, %v2077
        %v2079 = vrot.slane %v1921, %v2078
        %v2084 = vlaneseq
        %v2085 = vshrl.u32 %v2084, 7
        %v2086 = vsub.s32 0, %v2085
        %v2087 = vrot.slane %v1956, %v2086
        %v2088 = vlaneseq
        %v2089 = vshrl.u32 %v2088, 7
        %v2090 = vsub.s32 1, %v2089
        %v2091 = vrot.slane %v1956, %v2090
        %v2092 = vlaneseq
        %v2093 = vshrl.u32 %v2092, 7
        %v2094 = vsub.s32 2, %v2093
        %v2095 = vrot.slane %v1956, %v2094
        %vm2099 = vcmask 1040384
        %v2100 = vsel %vm2099, %v1975, %v1991
        %v2101 = vsel %vm2099, %v1979, %v1995
        %v2102 = vsel %vm2099, %v1983, %v1999
        %vm2103 = vcmask 1041408
        %v2104 = vsel %vm2103, %v2100, %v2007
        %v2105 = vsel %vm2103, %v2101, %v2011
        %v2106 = vsel %vm2103, %v2102, %v2015
        %vm2107 = vcmask 1042432
        %v2108 = vsel %vm2107, %v2104, %v2023
        %v2109 = vsel %vm2107, %v2105, %v2027
        %v2110 = vsel %vm2107, %v2106, %v2031
        %vm2111 = vcmask 1043456
        %v2112 = vsel %vm2111, %v2108, %v2039
        %v2113 = vsel %vm2111, %v2109, %v2043
        %v2114 = vsel %vm2111, %v2110, %v2047
        %vm2115 = vcmask 1044480
        %v2116 = vsel %vm2115, %v2112, %v2055
        %v2117 = vsel %vm2115, %v2113, %v2059
        %v2118 = vsel %vm2115, %v2114, %v2063
        %vm2119 = vcmask 1045504
        %v2120 = vsel %vm2119, %v2116, %v2071
        %v2121 = vsel %vm2119, %v2117, %v2075
        %v2122 = vsel %vm2119, %v2118, %v2079
        %vm2123 = vcmask 1046528
        %v2124 = vsel %vm2123, %v2120, %v2087
        %v2125 = vsel %vm2123, %v2121, %v2091
        %v2126 = vsel %vm2123, %v2122, %v2095
        %v2128 = vlaneseq
        %v2129 = vshrl.u32 %v2128, 7
        %v2130 = vsub.s32 0, %v2129
        %v2131 = vrot.slane %v1714, %v2130
        %v2132 = vlaneseq
        %v2133 = vshrl.u32 %v2132, 7
        %v2134 = vsub.s32 1, %v2133
        %v2135 = vrot.slane %v1714, %v2134
        %v2136 = vlaneseq
        %v2137 = vshrl.u32 %v2136, 7
        %v2138 = vsub.s32 2, %v2137
        %v2139 = vrot.slane %v1714, %v2138
        %v2144 = vlaneseq
        %v2145 = vshrl.u32 %v2144, 7
        %v2146 = vsub.s32 0, %v2145
        %v2147 = vrot.slane %v1748, %v2146
        %v2148 = vlaneseq
        %v2149 = vshrl.u32 %v2148, 7
        %v2150 = vsub.s32 1, %v2149
        %v2151 = vrot.slane %v1748, %v2150
        %v2152 = vlaneseq
        %v2153 = vshrl.u32 %v2152, 7
        %v2154 = vsub.s32 2, %v2153
        %v2155 = vrot.slane %v1748, %v2154
        %v2160 = vlaneseq
        %v2161 = vshrl.u32 %v2160, 7
        %v2162 = vsub.s32 0, %v2161
        %v2163 = vrot.slane %v1783, %v2162
        %v2164 = vlaneseq
        %v2165 = vshrl.u32 %v2164, 7
        %v2166 = vsub.s32 1, %v2165
        %v2167 = vrot.slane %v1783, %v2166
        %v2168 = vlaneseq
        %v2169 = vshrl.u32 %v2168, 7
        %v2170 = vsub.s32 2, %v2169
        %v2171 = vrot.slane %v1783, %v2170
        %v2176 = vlaneseq
        %v2177 = vshrl.u32 %v2176, 7
        %v2178 = vsub.s32 0, %v2177
        %v2179 = vrot.slane %v1818, %v2178
        %v2180 = vlaneseq
        %v2181 = vshrl.u32 %v2180, 7
        %v2182 = vsub.s32 1, %v2181
        %v2183 = vrot.slane %v1818, %v2182
        %v2184 = vlaneseq
        %v2185 = vshrl.u32 %v2184, 7
        %v2186 = vsub.s32 2, %v2185
        %v2187 = vrot.slane %v1818, %v2186
        %v2192 = vlaneseq
        %v2193 = vshrl.u32 %v2192, 7
        %v2194 = vsub.s32 0, %v2193
        %v2195 = vrot.slane %v1853, %v2194
        %v2196 = vlaneseq
        %v2197 = vshrl.u32 %v2196, 7
        %v2198 = vsub.s32 1, %v2197
        %v2199 = vrot.slane %v1853, %v2198
        %v2200 = vlaneseq
        %v2201 = vshrl.u32 %v2200, 7
        %v2202 = vsub.s32 2, %v2201
        %v2203 = vrot.slane %v1853, %v2202
        %v2208 = vlaneseq
        %v2209 = vshrl.u32 %v2208, 7
        %v2210 = vsub.s32 0, %v2209
        %v2211 = vrot.slane %v1888, %v2210
        %v2212 = vlaneseq
        %v2213 = vshrl.u32 %v2212, 7
        %v2214 = vsub.s32 1, %v2213
        %v2215 = vrot.slane %v1888, %v2214
        %v2216 = vlaneseq
        %v2217 = vshrl.u32 %v2216, 7
        %v2218 = vsub.s32 2, %v2217
        %v2219 = vrot.slane %v1888, %v2218
        %v2224 = vlaneseq
        %v2225 = vshrl.u32 %v2224, 7
        %v2226 = vsub.s32 0, %v2225
        %v2227 = vrot.slane %v1923, %v2226
        %v2228 = vlaneseq
        %v2229 = vshrl.u32 %v2228, 7
        %v2230 = vsub.s32 1, %v2229
        %v2231 = vrot.slane %v1923, %v2230
        %v2232 = vlaneseq
        %v2233 = vshrl.u32 %v2232, 7
        %v2234 = vsub.s32 2, %v2233
        %v2235 = vrot.slane %v1923, %v2234
        %v2240 = vlaneseq
        %v2241 = vshrl.u32 %v2240, 7
        %v2242 = vsub.s32 0, %v2241
        %v2243 = vrot.slane %v1958, %v2242
        %v2244 = vlaneseq
        %v2245 = vshrl.u32 %v2244, 7
        %v2246 = vsub.s32 1, %v2245
        %v2247 = vrot.slane %v1958, %v2246
        %v2248 = vlaneseq
        %v2249 = vshrl.u32 %v2248, 7
        %v2250 = vsub.s32 2, %v2249
        %v2251 = vrot.slane %v1958, %v2250
        %v2255 = vsel %vm2099, %v2131, %v2147
        %v2256 = vsel %vm2099, %v2135, %v2151
        %v2257 = vsel %vm2099, %v2139, %v2155
        %v2258 = vsel %vm2103, %v2255, %v2163
        %v2259 = vsel %vm2103, %v2256, %v2167
        %v2260 = vsel %vm2103, %v2257, %v2171
        %v2261 = vsel %vm2107, %v2258, %v2179
        %v2262 = vsel %vm2107, %v2259, %v2183
        %v2263 = vsel %vm2107, %v2260, %v2187
        %v2264 = vsel %vm2111, %v2261, %v2195
        %v2265 = vsel %vm2111, %v2262, %v2199
        %v2266 = vsel %vm2111, %v2263, %v2203
        %v2267 = vsel %vm2115, %v2264, %v2211
        %v2268 = vsel %vm2115, %v2265, %v2215
        %v2269 = vsel %vm2115, %v2266, %v2219
        %v2270 = vsel %vm2119, %v2267, %v2227
        %v2271 = vsel %vm2119, %v2268, %v2231
        %v2272 = vsel %vm2119, %v2269, %v2235
        %v2273 = vsel %vm2123, %v2270, %v2243
        %v2274 = vsel %vm2123, %v2271, %v2247
        %v2275 = vsel %vm2123, %v2272, %v2251
        %v2277 = vlaneseq
        %v2278 = vshrl.u32 %v2277, 7
        %v2279 = vsub.s32 0, %v2278
        %v2280 = vrot.slane %v1723, %v2279
        %v2281 = vlaneseq
        %v2282 = vshrl.u32 %v2281, 7
        %v2283 = vsub.s32 1, %v2282
        %v2284 = vrot.slane %v1723, %v2283
        %v2285 = vlaneseq
        %v2286 = vshrl.u32 %v2285, 7
        %v2287 = vsub.s32 2, %v2286
        %v2288 = vrot.slane %v1723, %v2287
        %v2293 = vlaneseq
        %v2294 = vshrl.u32 %v2293, 7
        %v2295 = vsub.s32 0, %v2294
        %v2296 = vrot.slane %v1758, %v2295
        %v2297 = vlaneseq
        %v2298 = vshrl.u32 %v2297, 7
        %v2299 = vsub.s32 1, %v2298
        %v2300 = vrot.slane %v1758, %v2299
        %v2301 = vlaneseq
        %v2302 = vshrl.u32 %v2301, 7
        %v2303 = vsub.s32 2, %v2302
        %v2304 = vrot.slane %v1758, %v2303
        %v2309 = vlaneseq
        %v2310 = vshrl.u32 %v2309, 7
        %v2311 = vsub.s32 0, %v2310
        %v2312 = vrot.slane %v1793, %v2311
        %v2313 = vlaneseq
        %v2314 = vshrl.u32 %v2313, 7
        %v2315 = vsub.s32 1, %v2314
        %v2316 = vrot.slane %v1793, %v2315
        %v2317 = vlaneseq
        %v2318 = vshrl.u32 %v2317, 7
        %v2319 = vsub.s32 2, %v2318
        %v2320 = vrot.slane %v1793, %v2319
        %v2325 = vlaneseq
        %v2326 = vshrl.u32 %v2325, 7
        %v2327 = vsub.s32 0, %v2326
        %v2328 = vrot.slane %v1828, %v2327
        %v2329 = vlaneseq
        %v2330 = vshrl.u32 %v2329, 7
        %v2331 = vsub.s32 1, %v2330
        %v2332 = vrot.slane %v1828, %v2331
        %v2333 = vlaneseq
        %v2334 = vshrl.u32 %v2333, 7
        %v2335 = vsub.s32 2, %v2334
        %v2336 = vrot.slane %v1828, %v2335
        %v2341 = vlaneseq
        %v2342 = vshrl.u32 %v2341, 7
        %v2343 = vsub.s32 0, %v2342
        %v2344 = vrot.slane %v1863, %v2343
        %v2345 = vlaneseq
        %v2346 = vshrl.u32 %v2345, 7
        %v2347 = vsub.s32 1, %v2346
        %v2348 = vrot.slane %v1863, %v2347
        %v2349 = vlaneseq
        %v2350 = vshrl.u32 %v2349, 7
        %v2351 = vsub.s32 2, %v2350
        %v2352 = vrot.slane %v1863, %v2351
        %v2357 = vlaneseq
        %v2358 = vshrl.u32 %v2357, 7
        %v2359 = vsub.s32 0, %v2358
        %v2360 = vrot.slane %v1898, %v2359
        %v2361 = vlaneseq
        %v2362 = vshrl.u32 %v2361, 7
        %v2363 = vsub.s32 1, %v2362
        %v2364 = vrot.slane %v1898, %v2363
        %v2365 = vlaneseq
        %v2366 = vshrl.u32 %v2365, 7
        %v2367 = vsub.s32 2, %v2366
        %v2368 = vrot.slane %v1898, %v2367
        %v2373 = vlaneseq
        %v2374 = vshrl.u32 %v2373, 7
        %v2375 = vsub.s32 0, %v2374
        %v2376 = vrot.slane %v1933, %v2375
        %v2377 = vlaneseq
        %v2378 = vshrl.u32 %v2377, 7
        %v2379 = vsub.s32 1, %v2378
        %v2380 = vrot.slane %v1933, %v2379
        %v2381 = vlaneseq
        %v2382 = vshrl.u32 %v2381, 7
        %v2383 = vsub.s32 2, %v2382
        %v2384 = vrot.slane %v1933, %v2383
        %v2389 = vlaneseq
        %v2390 = vshrl.u32 %v2389, 7
        %v2391 = vsub.s32 0, %v2390
        %v2392 = vrot.slane %v1968, %v2391
        %v2393 = vlaneseq
        %v2394 = vshrl.u32 %v2393, 7
        %v2395 = vsub.s32 1, %v2394
        %v2396 = vrot.slane %v1968, %v2395
        %v2397 = vlaneseq
        %v2398 = vshrl.u32 %v2397, 7
        %v2399 = vsub.s32 2, %v2398
        %v2400 = vrot.slane %v1968, %v2399
        %v2404 = vsel %vm2099, %v2280, %v2296
        %v2405 = vsel %vm2099, %v2284, %v2300
        %v2406 = vsel %vm2099, %v2288, %v2304
        %v2407 = vsel %vm2103, %v2404, %v2312
        %v2408 = vsel %vm2103, %v2405, %v2316
        %v2409 = vsel %vm2103, %v2406, %v2320
        %v2410 = vsel %vm2107, %v2407, %v2328
        %v2411 = vsel %vm2107, %v2408, %v2332
        %v2412 = vsel %vm2107, %v2409, %v2336
        %v2413 = vsel %vm2111, %v2410, %v2344
        %v2414 = vsel %vm2111, %v2411, %v2348
        %v2415 = vsel %vm2111, %v2412, %v2352
        %v2416 = vsel %vm2115, %v2413, %v2360
        %v2417 = vsel %vm2115, %v2414, %v2364
        %v2418 = vsel %vm2115, %v2415, %v2368
        %v2419 = vsel %vm2119, %v2416, %v2376
        %v2420 = vsel %vm2119, %v2417, %v2380
        %v2421 = vsel %vm2119, %v2418, %v2384
        %v2422 = vsel %vm2123, %v2419, %v2392
        %v2423 = vsel %vm2123, %v2420, %v2396
        %v2424 = vsel %vm2123, %v2421, %v2400
        %v2426 = vlaneseq
        %v2427 = vshrl.u32 %v2426, 7
        %v2428 = vsub.s32 0, %v2427
        %v2429 = vrot.slane %v1725, %v2428
        %v2430 = vlaneseq
        %v2431 = vshrl.u32 %v2430, 7
        %v2432 = vsub.s32 1, %v2431
        %v2433 = vrot.slane %v1725, %v2432
        %v2434 = vlaneseq
        %v2435 = vshrl.u32 %v2434, 7
        %v2436 = vsub.s32 2, %v2435
        %v2437 = vrot.slane %v1725, %v2436
        %v2442 = vlaneseq
        %v2443 = vshrl.u32 %v2442, 7
        %v2444 = vsub.s32 0, %v2443
        %v2445 = vrot.slane %v1760, %v2444
        %v2446 = vlaneseq
        %v2447 = vshrl.u32 %v2446, 7
        %v2448 = vsub.s32 1, %v2447
        %v2449 = vrot.slane %v1760, %v2448
        %v2450 = vlaneseq
        %v2451 = vshrl.u32 %v2450, 7
        %v2452 = vsub.s32 2, %v2451
        %v2453 = vrot.slane %v1760, %v2452
        %v2458 = vlaneseq
        %v2459 = vshrl.u32 %v2458, 7
        %v2460 = vsub.s32 0, %v2459
        %v2461 = vrot.slane %v1795, %v2460
        %v2462 = vlaneseq
        %v2463 = vshrl.u32 %v2462, 7
        %v2464 = vsub.s32 1, %v2463
        %v2465 = vrot.slane %v1795, %v2464
        %v2466 = vlaneseq
        %v2467 = vshrl.u32 %v2466, 7
        %v2468 = vsub.s32 2, %v2467
        %v2469 = vrot.slane %v1795, %v2468
        %v2474 = vlaneseq
        %v2475 = vshrl.u32 %v2474, 7
        %v2476 = vsub.s32 0, %v2475
        %v2477 = vrot.slane %v1830, %v2476
        %v2478 = vlaneseq
        %v2479 = vshrl.u32 %v2478, 7
        %v2480 = vsub.s32 1, %v2479
        %v2481 = vrot.slane %v1830, %v2480
        %v2482 = vlaneseq
        %v2483 = vshrl.u32 %v2482, 7
        %v2484 = vsub.s32 2, %v2483
        %v2485 = vrot.slane %v1830, %v2484
        %v2490 = vlaneseq
        %v2491 = vshrl.u32 %v2490, 7
        %v2492 = vsub.s32 0, %v2491
        %v2493 = vrot.slane %v1865, %v2492
        %v2494 = vlaneseq
        %v2495 = vshrl.u32 %v2494, 7
        %v2496 = vsub.s32 1, %v2495
        %v2497 = vrot.slane %v1865, %v2496
        %v2498 = vlaneseq
        %v2499 = vshrl.u32 %v2498, 7
        %v2500 = vsub.s32 2, %v2499
        %v2501 = vrot.slane %v1865, %v2500
        %v2506 = vlaneseq
        %v2507 = vshrl.u32 %v2506, 7
        %v2508 = vsub.s32 0, %v2507
        %v2509 = vrot.slane %v1900, %v2508
        %v2510 = vlaneseq
        %v2511 = vshrl.u32 %v2510, 7
        %v2512 = vsub.s32 1, %v2511
        %v2513 = vrot.slane %v1900, %v2512
        %v2514 = vlaneseq
        %v2515 = vshrl.u32 %v2514, 7
        %v2516 = vsub.s32 2, %v2515
        %v2517 = vrot.slane %v1900, %v2516
        %v2522 = vlaneseq
        %v2523 = vshrl.u32 %v2522, 7
        %v2524 = vsub.s32 0, %v2523
        %v2525 = vrot.slane %v1935, %v2524
        %v2526 = vlaneseq
        %v2527 = vshrl.u32 %v2526, 7
        %v2528 = vsub.s32 1, %v2527
        %v2529 = vrot.slane %v1935, %v2528
        %v2530 = vlaneseq
        %v2531 = vshrl.u32 %v2530, 7
        %v2532 = vsub.s32 2, %v2531
        %v2533 = vrot.slane %v1935, %v2532
        %v2538 = vlaneseq
        %v2539 = vshrl.u32 %v2538, 7
        %v2540 = vsub.s32 0, %v2539
        %v2541 = vrot.slane %v1970, %v2540
        %v2542 = vlaneseq
        %v2543 = vshrl.u32 %v2542, 7
        %v2544 = vsub.s32 1, %v2543
        %v2545 = vrot.slane %v1970, %v2544
        %v2546 = vlaneseq
        %v2547 = vshrl.u32 %v2546, 7
        %v2548 = vsub.s32 2, %v2547
        %v2549 = vrot.slane %v1970, %v2548
        %v2553 = vsel %vm2099, %v2429, %v2445
        %v2554 = vsel %vm2099, %v2433, %v2449
        %v2555 = vsel %vm2099, %v2437, %v2453
        %v2556 = vsel %vm2103, %v2553, %v2461
        %v2557 = vsel %vm2103, %v2554, %v2465
        %v2558 = vsel %vm2103, %v2555, %v2469
        %v2559 = vsel %vm2107, %v2556, %v2477
        %v2560 = vsel %vm2107, %v2557, %v2481
        %v2561 = vsel %vm2107, %v2558, %v2485
        %v2562 = vsel %vm2111, %v2559, %v2493
        %v2563 = vsel %vm2111, %v2560, %v2497
        %v2564 = vsel %vm2111, %v2561, %v2501
        %v2565 = vsel %vm2115, %v2562, %v2509
        %v2566 = vsel %vm2115, %v2563, %v2513
        %v2567 = vsel %vm2115, %v2564, %v2517
        %v2568 = vsel %vm2119, %v2565, %v2525
        %v2569 = vsel %vm2119, %v2566, %v2529
        %v2570 = vsel %vm2119, %v2567, %v2533
        %v2571 = vsel %vm2123, %v2568, %v2541
        %v2572 = vsel %vm2123, %v2569, %v2545
        %v2573 = vsel %vm2123, %v2570, %v2549
        %v2574 = vld [vmem:[%s743] sm:$0xff]
        %v2575 = vld [vmem:[%s752] sm:$0xff]
        %v2576 = vpack.c.bf16 %v2575, %v2574
        %v2577 = vld [vmem:[#allocation14] sm:$0xff]
        %v2578 = vld [vmem:[#allocation14 + $0x8] sm:$0xff]
        %v2579 = vld [vmem:[#allocation14 + $0x10] sm:$0xff]
        %v2580 = vld [vmem:[#allocation14 + $0x18] sm:$0xff]
        %v2581 = vld [vmem:[#allocation15] sm:$0x3]
        %v2583 = vlaneseq
        %v2584 = vshrl.u32 %v2583, 7
        %v2585 = vsub.s32 0, %v2584
        %v2586 = vrot.slane %v2581, %v2585
        %v2587 = vlaneseq
        %v2588 = vshrl.u32 %v2587, 7
        %v2589 = vsub.s32 1, %v2588
        %v2590 = vrot.slane %v2581, %v2589
        %v2597 = vunpack.c.l.b16 %v2577
        %v2598 = vunpack.c.h.b16 %v2577
        %v2599 = vunpack.c.l.b16 %v2578
        %v2600 = vunpack.c.h.b16 %v2578
        %v2601 = vunpack.c.l.b16 %v2579
        %v2602 = vunpack.c.h.b16 %v2579
        %v2603 = vunpack.c.l.b16 %v2580
        %v2604 = vunpack.c.h.b16 %v2580
        %v2605 = vpack.c.b16 %v2599, %v2597
        %v2606 = vpack.c.b16 %v2600, %v2598
        %v2607 = vpack.c.b16 %v2603, %v2601
        %v2608 = vpack.c.b16 %v2604, %v2602
        %vm2613 = vcmask 261120
        %v2615 = vsel %vm2613, %v2576, 0
        %2617 = vmatprep.subr.bf16.mxu0 0
        %2618 = vmatpush1.bf16.msra.mxu0 0
        %2619 = vmatprep.subr.bf16.mxu0 0
        %2620 = vmatpush1.bf16.msra.mxu0 0
        %2621 = vmatprep.subr.bf16.mxu0 0
        %2622 = vmatpush1.bf16.msra.mxu0 0
        %2623 = vmatprep.subr.bf16.mxu0 0
        %2624 = vmatpush1.bf16.msra.mxu0 0
        %2625 = vmatprep.subr.bf16.mxu0 0
        %2626 = vmatpush1.bf16.msra.mxu0 0
        %2627 = vmatprep.subr.bf16.mxu0 0
        %2628 = vmatpush1.bf16.msra.mxu0 0
        %2629 = vmatprep.subr.bf16.mxu0 %v2608
        %2630 = vmatpush1.bf16.msra.mxu0 %v2607
        %2631 = vmatprep.subr.bf16.mxu0 %v2606
        %2632 = vmatpush1.bf16.msra.mxu0 %v2605
        %2633 = vmatprep.subr.bf16.mxu0 0
        %2634 = vmatpush2.bf16.msra.mxu0 0
        %2635 = vmatprep.subr.bf16.mxu0 0
        %2636 = vmatpush2.bf16.msra.mxu0 0
        %2637 = vmatprep.subr.bf16.mxu0 0
        %2638 = vmatpush2.bf16.msra.mxu0 0
        %2639 = vmatprep.subr.bf16.mxu0 0
        %2640 = vmatpush2.bf16.msra.mxu0 0
        %2641 = vmatprep.subr.bf16.mxu0 0
        %2642 = vmatpush2.bf16.msra.mxu0 0
        %2643 = vmatprep.subr.bf16.mxu0 0
        %2644 = vmatpush2.bf16.msra.mxu0 0
        %2645 = vmatprep.subr.bf16.mxu0 0
        %2646 = vmatpush2.bf16.msra.mxu0 0
        %2647 = vmatprep.subr.bf16.mxu0 0
        %2648 = vmatpush2.bf16.msra.mxu0 0
        %2649 = vmatprep.mubr.bf16.mxu0 0
        %2650 = vmatmul.mubr.bf16.gmra.mxu0 %v2615
        %v2651 = vpop.f32.mrf.mxu0
        %v2652 = vadd.f32 %v2586, %v2651
        %v2653 = vpop.f32.mrf.mxu0
        %v2654 = vadd.f32 %v2590, %v2653
        %v2655 = vpop.f32.mrf.mxu0
        %v2656 = vadd.f32 %v2586, %v2655
        %v2657 = vpop.f32.mrf.mxu0
        %v2658 = vadd.f32 %v2590, %v2657
        %2659 = vdwg.mxu0
        %v2660 = vmax.f32 %v2652, 0.0
        %v2661 = vmax.f32 %v2654, 0.0
        %v2662 = vmax.f32 %v2656, 0.0
        %v2663 = vmax.f32 %v2658, 0.0
        %v2664 = vld [vmem:[#allocation17] sm:$0x3]
        %v2666 = vlaneseq
        %v2667 = vshrl.u32 %v2666, 7
        %v2668 = vsub.s32 0, %v2667
        %v2669 = vrot.slane %v2664, %v2668
        %v2670 = vlaneseq
        %v2671 = vshrl.u32 %v2670, 7
        %v2672 = vsub.s32 1, %v2671
        %v2673 = vrot.slane %v2664, %v2672
        %v2676 = vmul.f32 %v2660, %v2669
        %v2677 = vmul.f32 %v2661, %v2673
        %v2678 = vmul.f32 %v2662, %v2669
        %v2679 = vmul.f32 %v2663, %v2673
        %v2680 = vld [vmem:[#allocation18] sm:$0x3]
        %v2682 = vlaneseq
        %v2683 = vshrl.u32 %v2682, 7
        %v2684 = vsub.s32 0, %v2683
        %v2685 = vrot.slane %v2680, %v2684
        %v2686 = vlaneseq
        %v2687 = vshrl.u32 %v2686, 7
        %v2688 = vsub.s32 1, %v2687
        %v2689 = vrot.slane %v2680, %v2688
        %v2692 = vadd.f32 %v2676, %v2685
        %v2693 = vadd.f32 %v2677, %v2689
        %v2694 = vadd.f32 %v2678, %v2685
        %v2695 = vadd.f32 %v2679, %v2689
        %v2696 = vpack.c.bf16 %v2694, %v2692
        %v2697 = vpack.c.bf16 %v2695, %v2693
        %v2698 = vld [vmem:[%s11] sm:$0xf]
        %v2699 = vld [vmem:[%s11 + $0x4] sm:$0xf]
        %v2700 = vld [vmem:[%s11 + $0x8] sm:$0xf]
        %v2701 = vld [vmem:[%s11 + $0xc] sm:$0xf]
        %v2702 = vld [vmem:[%s11 + $0x10] sm:$0xf]
        %v2703 = vld [vmem:[%s11 + $0x14] sm:$0xf]
        %v2704 = vld [vmem:[%s11 + $0x18] sm:$0xf]
        %v2705 = vld [vmem:[%s11 + $0x1c] sm:$0xf]
        %v2706 = vld [vmem:[%s11 + $0x20] sm:$0xf]
        %v2707 = vld [vmem:[%s11 + $0x24] sm:$0xf]
        %v2708 = vld [vmem:[%s11 + $0x28] sm:$0xf]
        %v2709 = vld [vmem:[%s11 + $0x2c] sm:$0xf]
        %v2710 = vld [vmem:[%s11 + $0x30] sm:$0xf]
        %v2711 = vld [vmem:[%s11 + $0x34] sm:$0xf]
        %v2712 = vld [vmem:[%s11 + $0x38] sm:$0xf]
        %v2713 = vld [vmem:[%s11 + $0x3c] sm:$0xf]
        %v2714 = vld [vmem:[%s11 + $0x40] sm:$0xf]
        %v2715 = vld [vmem:[%s11 + $0x44] sm:$0xf]
        %v2716 = vld [vmem:[%s11 + $0x48] sm:$0xf]
        %v2717 = vld [vmem:[%s11 + $0x4c] sm:$0xf]
        %v2718 = vld [vmem:[%s11 + $0x50] sm:$0xf]
        %v2719 = vld [vmem:[%s11 + $0x54] sm:$0xf]
        %v2720 = vld [vmem:[%s11 + $0x58] sm:$0xf]
        %v2721 = vld [vmem:[%s11 + $0x5c] sm:$0xf]
        %v2722 = vld [vmem:[%s11 + $0x60] sm:$0xf]
        %v2723 = vld [vmem:[%s11 + $0x64] sm:$0xf]
        %v2724 = vld [vmem:[%s11 + $0x68] sm:$0xf]
        %v2725 = vld [vmem:[%s11 + $0x6c] sm:$0xf]
        %v2726 = vld [vmem:[%s11 + $0x70] sm:$0xf]
        %v2727 = vld [vmem:[%s11 + $0x74] sm:$0xf]
        %v2728 = vld [vmem:[%s11 + $0x78] sm:$0xf]
        %v2729 = vld [vmem:[%s11 + $0x7c] sm:$0xf]
        %v2730 = vld [vmem:[#allocation20] sm:$0x1]
        %v2732 = vlaneseq
        %v2733 = vshrl.u32 %v2732, 7
        %v2734 = vsub.s32 0, %v2733
        %v2735 = vrot.slane %v2730, %v2734
        %v2769 = vunpack.c.l.b16 %v2698
        %v2770 = vunpack.c.l.b16 %v2699
        %v2771 = vunpack.c.l.b16 %v2700
        %v2772 = vunpack.c.l.b16 %v2701
        %v2773 = vunpack.c.l.b16 %v2702
        %v2774 = vunpack.c.l.b16 %v2703
        %v2775 = vunpack.c.l.b16 %v2704
        %v2776 = vunpack.c.l.b16 %v2705
        %v2777 = vunpack.c.l.b16 %v2706
        %v2778 = vunpack.c.l.b16 %v2707
        %v2779 = vunpack.c.l.b16 %v2708
        %v2780 = vunpack.c.l.b16 %v2709
        %v2781 = vunpack.c.l.b16 %v2710
        %v2782 = vunpack.c.l.b16 %v2711
        %v2783 = vunpack.c.l.b16 %v2712
        %v2784 = vunpack.c.l.b16 %v2713
        %v2785 = vunpack.c.l.b16 %v2714
        %v2786 = vunpack.c.l.b16 %v2715
        %v2787 = vunpack.c.l.b16 %v2716
        %v2788 = vunpack.c.l.b16 %v2717
        %v2789 = vunpack.c.l.b16 %v2718
        %v2790 = vunpack.c.l.b16 %v2719
        %v2791 = vunpack.c.l.b16 %v2720
        %v2792 = vunpack.c.l.b16 %v2721
        %v2793 = vunpack.c.l.b16 %v2722
        %v2794 = vunpack.c.l.b16 %v2723
        %v2795 = vunpack.c.l.b16 %v2724
        %v2796 = vunpack.c.l.b16 %v2725
        %v2797 = vunpack.c.l.b16 %v2726
        %v2798 = vunpack.c.l.b16 %v2727
        %v2799 = vunpack.c.l.b16 %v2728
        %v2800 = vunpack.c.l.b16 %v2729
        %v2801 = vpack.c.b16 %v2770, %v2769
        %v2802 = vpack.c.b16 %v2772, %v2771
        %v2803 = vpack.c.b16 %v2774, %v2773
        %v2804 = vpack.c.b16 %v2776, %v2775
        %v2805 = vpack.c.b16 %v2778, %v2777
        %v2806 = vpack.c.b16 %v2780, %v2779
        %v2807 = vpack.c.b16 %v2782, %v2781
        %v2808 = vpack.c.b16 %v2784, %v2783
        %v2809 = vpack.c.b16 %v2786, %v2785
        %v2810 = vpack.c.b16 %v2788, %v2787
        %v2811 = vpack.c.b16 %v2790, %v2789
        %v2812 = vpack.c.b16 %v2792, %v2791
        %v2813 = vpack.c.b16 %v2794, %v2793
        %v2814 = vpack.c.b16 %v2796, %v2795
        %v2815 = vpack.c.b16 %v2798, %v2797
        %v2816 = vpack.c.b16 %v2800, %v2799
        %2833 = vmatprep.subr.bf16.mxu0 0
        %2834 = vmatpush1.bf16.msra.mxu0 %v2808
        %2835 = vmatprep.subr.bf16.mxu0 0
        %2836 = vmatpush1.bf16.msra.mxu0 %v2807
        %2837 = vmatprep.subr.bf16.mxu0 0
        %2838 = vmatpush1.bf16.msra.mxu0 %v2806
        %2839 = vmatprep.subr.bf16.mxu0 0
        %2840 = vmatpush1.bf16.msra.mxu0 %v2805
        %2841 = vmatprep.subr.bf16.mxu0 0
        %2842 = vmatpush1.bf16.msra.mxu0 %v2804
        %2843 = vmatprep.subr.bf16.mxu0 0
        %2844 = vmatpush1.bf16.msra.mxu0 %v2803
        %2845 = vmatprep.subr.bf16.mxu0 0
        %2846 = vmatpush1.bf16.msra.mxu0 %v2802
        %2847 = vmatprep.subr.bf16.mxu0 0
        %2848 = vmatpush1.bf16.msra.mxu0 %v2801
        %2849 = vmatprep.subr.bf16.mxu0 0
        %2850 = vmatpush2.bf16.msra.mxu0 %v2816
        %2851 = vmatprep.subr.bf16.mxu0 0
        %2852 = vmatpush2.bf16.msra.mxu0 %v2815
        %2853 = vmatprep.subr.bf16.mxu0 0
        %2854 = vmatpush2.bf16.msra.mxu0 %v2814
        %2855 = vmatprep.subr.bf16.mxu0 0
        %2856 = vmatpush2.bf16.msra.mxu0 %v2813
        %2857 = vmatprep.subr.bf16.mxu0 0
        %2858 = vmatpush2.bf16.msra.mxu0 %v2812
        %2859 = vmatprep.subr.bf16.mxu0 0
        %2860 = vmatpush2.bf16.msra.mxu0 %v2811
        %2861 = vmatprep.subr.bf16.mxu0 0
        %2862 = vmatpush2.bf16.msra.mxu0 %v2810
        %2863 = vmatprep.subr.bf16.mxu0 0
        %2864 = vmatpush2.bf16.msra.mxu0 %v2809
        %2865 = vmatprep.mubr.bf16.mxu0 %v2697
        %2866 = vmatmul.mubr.bf16.gmra.mxu0 %v2696
        %v2867 = vpop.f32.mrf.mxu0
        %v2868 = vadd.f32 %v2735, %v2867
        %v2869 = vpop.f32.mrf.mxu0
        %v2870 = vpop.f32.mrf.mxu0
        %v2871 = vadd.f32 %v2735, %v2870
        %v2872 = vpop.f32.mrf.mxu0
        %2873 = vdwg.mxu0
        %2875 = vrot.lane.b32.xlu0 %v2871, 64
        %v2876 = vpop.permute.xlu0 %2875
        %vm2878 = vcmask 523264
        %v2879 = vsel %vm2878, %v2868, %v2876
        %v2904 = vrot.slane %v1416, 7
        %vm2905 = vcmask 1041409
        %v2906 = vsel %vm2905, %v2904, %v1413
        %v2907 = vrot.slane %v1419, 6
        %vm2908 = vcmask 1042434
        %v2909 = vsel %vm2908, %v2907, %v2906
        %v2910 = vrot.slane %v1422, 5
        %vm2911 = vcmask 1043459
        %v2912 = vsel %vm2911, %v2910, %v2909
        %v2913 = vrot.slane %v1425, 4
        %vm2914 = vcmask 1044484
        %v2915 = vsel %vm2914, %v2913, %v2912
        %v2916 = vrot.slane %v1428, 3
        %vm2917 = vcmask 1045509
        %v2918 = vsel %vm2917, %v2916, %v2915
        %v2919 = vrot.slane %v1431, 2
        %vm2920 = vcmask 1046534
        %v2921 = vsel %vm2920, %v2919, %v2918
        %v2922 = vrot.slane %v1434, 1
        %vm2923 = vcmask 1047559
        %v2924 = vsel %vm2923, %v2922, %v2921
        %v2925 = vrot.slane %v1417, 7
        %v2926 = vsel %vm2905, %v2925, %v1414
        %v2927 = vrot.slane %v1420, 6
        %v2928 = vsel %vm2908, %v2927, %v2926
        %v2929 = vrot.slane %v1423, 5
        %v2930 = vsel %vm2911, %v2929, %v2928
        %v2931 = vrot.slane %v1426, 4
        %v2932 = vsel %vm2914, %v2931, %v2930
        %v2933 = vrot.slane %v1429, 3
        %v2934 = vsel %vm2917, %v2933, %v2932
        %v2935 = vrot.slane %v1432, 2
        %v2936 = vsel %vm2920, %v2935, %v2934
        %v2937 = vrot.slane %v1435, 1
        %v2938 = vsel %vm2923, %v2937, %v2936
        %v2939 = vrot.slane %v1418, 7
        %v2940 = vsel %vm2905, %v2939, %v1415
        %v2941 = vrot.slane %v1421, 6
        %v2942 = vsel %vm2908, %v2941, %v2940
        %v2943 = vrot.slane %v1424, 5
        %v2944 = vsel %vm2911, %v2943, %v2942
        %v2945 = vrot.slane %v1427, 4
        %v2946 = vsel %vm2914, %v2945, %v2944
        %v2947 = vrot.slane %v1430, 3
        %v2948 = vsel %vm2917, %v2947, %v2946
        %v2949 = vrot.slane %v1433, 2
        %v2950 = vsel %vm2920, %v2949, %v2948
        %v2951 = vrot.slane %v1436, 1
        %v2952 = vsel %vm2923, %v2951, %v2950
        %v2980 = vrot.slane %v1672, 7
        %v2981 = vsel %vm2905, %v2980, %v1669
        %v2982 = vrot.slane %v1675, 6
        %v2983 = vsel %vm2908, %v2982, %v2981
        %v2984 = vrot.slane %v1678, 5
        %v2985 = vsel %vm2911, %v2984, %v2983
        %v2986 = vrot.slane %v1681, 4
        %v2987 = vsel %vm2914, %v2986, %v2985
        %v2988 = vrot.slane %v1684, 3
        %v2989 = vsel %vm2917, %v2988, %v2987
        %v2990 = vrot.slane %v1687, 2
        %v2991 = vsel %vm2920, %v2990, %v2989
        %v2992 = vrot.slane %v1690, 1
        %v2993 = vsel %vm2923, %v2992, %v2991
        %v2994 = vrot.slane %v1673, 7
        %v2995 = vsel %vm2905, %v2994, %v1670
        %v2996 = vrot.slane %v1676, 6
        %v2997 = vsel %vm2908, %v2996, %v2995
        %v2998 = vrot.slane %v1679, 5
        %v2999 = vsel %vm2911, %v2998, %v2997
        %v3000 = vrot.slane %v1682, 4
        %v3001 = vsel %vm2914, %v3000, %v2999
        %v3002 = vrot.slane %v1685, 3
        %v3003 = vsel %vm2917, %v3002, %v3001
        %v3004 = vrot.slane %v1688, 2
        %v3005 = vsel %vm2920, %v3004, %v3003
        %v3006 = vrot.slane %v1691, 1
        %v3007 = vsel %vm2923, %v3006, %v3005
        %v3008 = vrot.slane %v1674, 7
        %v3009 = vsel %vm2905, %v3008, %v1671
        %v3010 = vrot.slane %v1677, 6
        %v3011 = vsel %vm2908, %v3010, %v3009
        %v3012 = vrot.slane %v1680, 5
        %v3013 = vsel %vm2911, %v3012, %v3011
        %v3014 = vrot.slane %v1683, 4
        %v3015 = vsel %vm2914, %v3014, %v3013
        %v3016 = vrot.slane %v1686, 3
        %v3017 = vsel %vm2917, %v3016, %v3015
        %v3018 = vrot.slane %v1689, 2
        %v3019 = vsel %vm2920, %v3018, %v3017
        %v3020 = vrot.slane %v1692, 1
        %v3021 = vsel %vm2923, %v3020, %v3019
        %3022 = vrot.lane.b32.xlu0 %v2993, 24
        %v3023 = vpop.permute.xlu0 %3022
        %3024 = vrot.lane.b32.xlu0 %v3007, 24
        %v3025 = vpop.permute.xlu0 %3024
        %3026 = vrot.lane.b32.xlu0 %v3021, 24
        %v3027 = vpop.permute.xlu0 %3026
        %v3028 = vsel %vm1223, %v3023, %v3025
        %v3029 = vsel %vm1223, %v3025, %v3027
        %3036 = vrot.lane.b32.xlu0 %v2124, 48
        %v3037 = vpop.permute.xlu0 %3036
        %3038 = vrot.lane.b32.xlu0 %v2125, 48
        %v3039 = vpop.permute.xlu0 %3038
        %3040 = vrot.lane.b32.xlu0 %v2126, 48
        %v3041 = vpop.permute.xlu0 %3040
        %vm3042 = vcmask 392192
        %v3043 = vsel %vm3042, %v3037, %v3039
        %v3044 = vsel %vm3042, %v3039, %v3041
        %3051 = vrot.lane.b32.xlu0 %v2273, 72
        %v3052 = vpop.permute.xlu0 %3051
        %3053 = vrot.lane.b32.xlu0 %v2274, 72
        %v3054 = vpop.permute.xlu0 %3053
        %3055 = vrot.lane.b32.xlu0 %v2275, 72
        %v3056 = vpop.permute.xlu0 %3055
        %vm3057 = vcmask 588800
        %v3058 = vsel %vm3057, %v3052, %v3054
        %v3059 = vsel %vm3057, %v3054, %v3056
        %3066 = vrot.lane.b32.xlu0 %v2422, 96
        %v3067 = vpop.permute.xlu0 %3066
        %3068 = vrot.lane.b32.xlu0 %v2423, 96
        %v3069 = vpop.permute.xlu0 %3068
        %3070 = vrot.lane.b32.xlu0 %v2424, 96
        %v3071 = vpop.permute.xlu0 %3070
        %vm3072 = vcmask 785408
        %v3073 = vsel %vm3072, %v3067, %v3069
        %v3074 = vsel %vm3072, %v3069, %v3071
        %3081 = vrot.lane.b32.xlu0 %v2571, 120
        %v3082 = vpop.permute.xlu0 %3081
        %3083 = vrot.lane.b32.xlu0 %v2572, 120
        %v3084 = vpop.permute.xlu0 %3083
        %3085 = vrot.lane.b32.xlu0 %v2573, 120
        %v3086 = vpop.permute.xlu0 %3085
        %vm3087 = vcmask 982016
        %v3088 = vsel %vm3087, %v3082, %v3084
        %v3089 = vsel %vm3087, %v3084, %v3086
        %3095 = vrot.lane.b32.xlu0 %v2879, 16
        %v3096 = vpop.permute.xlu0 %3095
        %v3098 = vsel %vm1223, %v2952, %v3023
        %v3099 = vsel %vm3042, %v3029, %v3037
        %v3100 = vsel %vm3057, %v3044, %v3052
        %v3101 = vsel %vm3072, %v3059, %v3067
        %v3102 = vsel %vm3087, %v3074, %v3082
        %vm3103 = vcmask 130048
        %v3104 = vsel %vm3103, %v3086, %v3096
        %3105 = vst [vmem:[%s867] sm:$0xff] %v2924
        %3106 = vst [vmem:[%s867 + $0x8] sm:$0xff] %v2938
        %3107 = vst [vmem:[%s867 + $0x10] sm:$0xff] %v3098
        %3108 = vst [vmem:[%s867 + $0x18] sm:$0xff] %v3028
        %3109 = vst [vmem:[%s867 + $0x20] sm:$0xff] %v3099
        %3110 = vst [vmem:[%s867 + $0x28] sm:$0xff] %v3043
        %3111 = vst [vmem:[%s867 + $0x30] sm:$0xff] %v3100
        %3112 = vst [vmem:[%s867 + $0x38] sm:$0xff] %v3058
        %3113 = vst [vmem:[%s867 + $0x40] sm:$0xff] %v3101
        %3114 = vst [vmem:[%s867 + $0x48] sm:$0xff] %v3073
        %3115 = vst [vmem:[%s867 + $0x50] sm:$0xff] %v3102
        %3116 = vst [vmem:[%s867 + $0x58] sm:$0xff] %v3088
        %3117 = vst [vmem:[%s867 + $0x60] sm:$0xff] %v3089
        %3118 = vst [vmem:[%s867 + $0x68] sm:$0xff] %v3104
        %3119 = vst.msk [vmem:[%s867 + $0x70] sm:$0xff] %vm3103, %v3096
        %v3120 = vpack.c.bf16 %v2924, %v2924
        %v3121 = vpack.c.bf16 %v2938, %v2938
        %v3122 = vpack.c.bf16 %v3098, %v3098
        %v3123 = vpack.c.bf16 %v3028, %v3028
        %v3124 = vpack.c.bf16 %v3099, %v3099
        %v3125 = vpack.c.bf16 %v3043, %v3043
        %v3126 = vpack.c.bf16 %v3100, %v3100
        %v3127 = vpack.c.bf16 %v3058, %v3058
        %v3128 = vpack.c.bf16 %v3101, %v3101
        %v3129 = vpack.c.bf16 %v3073, %v3073
        %v3130 = vpack.c.bf16 %v3102, %v3102
        %v3131 = vpack.c.bf16 %v3088, %v3088
        %v3132 = vpack.c.bf16 %v3089, %v3089
        %v3133 = vpack.c.bf16 %v3104, %v3104
        %v3134 = vpack.c.bf16 %v3096, %v3096
        %v3135 = vld [vmem:[#allocation21] sm:$0xff]
        %v3136 = vld [vmem:[#allocation21 + $0x8] sm:$0xff]
        %v3137 = vld [vmem:[#allocation21 + $0x10] sm:$0xff]
        %v3138 = vld [vmem:[#allocation21 + $0x18] sm:$0xff]
        %v3139 = vld [vmem:[#allocation21 + $0x20] sm:$0xff]
        %v3140 = vld [vmem:[#allocation21 + $0x28] sm:$0xff]
        %v3141 = vld [vmem:[#allocation21 + $0x30] sm:$0xff]
        %v3142 = vld [vmem:[#allocation21 + $0x38] sm:$0xff]
        %v3143 = vld [vmem:[#allocation21 + $0x40] sm:$0xff]
        %v3144 = vld [vmem:[#allocation21 + $0x48] sm:$0xff]
        %v3145 = vld [vmem:[#allocation21 + $0x50] sm:$0xff]
        %v3146 = vld [vmem:[#allocation21 + $0x58] sm:$0xff]
        %v3147 = vld [vmem:[#allocation21 + $0x60] sm:$0xff]
        %v3148 = vld [vmem:[#allocation21 + $0x68] sm:$0xff]
        %v3149 = vld [vmem:[#allocation21 + $0x70] sm:$0xff]
        %v3150 = vld [vmem:[#allocation21 + $0x78] sm:$0xff]
        %v3151 = vld [vmem:[#allocation21 + $0x80] sm:$0xff]
        %v3152 = vld [vmem:[#allocation21 + $0x88] sm:$0xff]
        %v3153 = vld [vmem:[#allocation21 + $0x90] sm:$0xff]
        %v3154 = vld [vmem:[#allocation21 + $0x98] sm:$0xff]
        %v3155 = vld [vmem:[#allocation21 + $0xa0] sm:$0xff]
        %v3156 = vld [vmem:[#allocation21 + $0xa8] sm:$0xff]
        %v3157 = vld [vmem:[#allocation21 + $0xb0] sm:$0xff]
        %v3158 = vld [vmem:[#allocation21 + $0xb8] sm:$0xff]
        %v3159 = vld [vmem:[#allocation21 + $0xc0] sm:$0xff]
        %v3160 = vld [vmem:[#allocation21 + $0xc8] sm:$0xff]
        %v3161 = vld [vmem:[#allocation21 + $0xd0] sm:$0xff]
        %v3162 = vld [vmem:[#allocation21 + $0xd8] sm:$0xff]
        %v3163 = vld [vmem:[#allocation21 + $0xe0] sm:$0xff]
        %v3164 = vld [vmem:[#allocation21 + $0xe8] sm:$0xff]
        %v3165 = vld [vmem:[#allocation21 + $0xf0] sm:$0xff]
        %v3166 = vld [vmem:[#allocation21 + $0xf8] sm:$0xff]
        %v3167 = vld [vmem:[#allocation21 + $0x100] sm:$0xff]
        %v3168 = vld [vmem:[#allocation21 + $0x108] sm:$0xff]
        %v3169 = vld [vmem:[#allocation21 + $0x110] sm:$0xff]
        %v3170 = vld [vmem:[#allocation21 + $0x118] sm:$0xff]
        %v3171 = vld [vmem:[#allocation21 + $0x120] sm:$0xff]
        %v3172 = vld [vmem:[#allocation21 + $0x128] sm:$0xff]
        %v3173 = vld [vmem:[#allocation21 + $0x130] sm:$0xff]
        %v3174 = vld [vmem:[#allocation21 + $0x138] sm:$0xff]
        %v3175 = vld [vmem:[#allocation21 + $0x140] sm:$0xff]
        %v3176 = vld [vmem:[#allocation21 + $0x148] sm:$0xff]
        %v3177 = vld [vmem:[#allocation21 + $0x150] sm:$0xff]
        %v3178 = vld [vmem:[#allocation21 + $0x158] sm:$0xff]
        %v3179 = vld [vmem:[#allocation21 + $0x160] sm:$0xff]
        %v3180 = vld [vmem:[#allocation21 + $0x168] sm:$0xff]
        %v3181 = vld [vmem:[#allocation21 + $0x170] sm:$0xff]
        %v3182 = vld [vmem:[#allocation21 + $0x178] sm:$0xff]
        %v3183 = vld [vmem:[#allocation21 + $0x180] sm:$0xff]
        %v3184 = vld [vmem:[#allocation21 + $0x188] sm:$0xff]
        %v3185 = vld [vmem:[#allocation21 + $0x190] sm:$0xff]
        %v3186 = vld [vmem:[#allocation21 + $0x198] sm:$0xff]
        %v3187 = vld [vmem:[#allocation21 + $0x1a0] sm:$0xff]
        %v3188 = vld [vmem:[#allocation21 + $0x1a8] sm:$0xff]
        %v3189 = vld [vmem:[#allocation21 + $0x1b0] sm:$0xff]
        %v3190 = vld [vmem:[#allocation21 + $0x1b8] sm:$0xff]
        %v3191 = vld [vmem:[#allocation21 + $0x1c0] sm:$0xff]
        %v3192 = vld [vmem:[#allocation21 + $0x1c8] sm:$0xff]
        %v3193 = vld [vmem:[#allocation21 + $0x1d0] sm:$0xff]
        %v3194 = vld [vmem:[#allocation21 + $0x1d8] sm:$0xff]
        %v3195 = vld [vmem:[#allocation21 + $0x1e0] sm:$0xff]
        %v3196 = vld [vmem:[#allocation21 + $0x1e8] sm:$0xff]
        %v3197 = vld [vmem:[#allocation21 + $0x1f0] sm:$0xff]
        %v3198 = vld [vmem:[#allocation21 + $0x1f8] sm:$0xff]
        %v3199 = vld [vmem:[#allocation21 + $0x200] sm:$0xff]
        %v3200 = vld [vmem:[#allocation21 + $0x208] sm:$0xff]
        %v3201 = vld [vmem:[#allocation21 + $0x210] sm:$0xff]
        %v3202 = vld [vmem:[#allocation21 + $0x218] sm:$0xff]
        %v3203 = vld [vmem:[#allocation21 + $0x220] sm:$0xff]
        %v3204 = vld [vmem:[#allocation21 + $0x228] sm:$0xff]
        %v3205 = vld [vmem:[#allocation21 + $0x230] sm:$0xff]
        %v3206 = vld [vmem:[#allocation21 + $0x238] sm:$0xff]
        %v3207 = vld [vmem:[#allocation21 + $0x240] sm:$0xff]
        %v3208 = vld [vmem:[#allocation21 + $0x248] sm:$0xff]
        %v3209 = vld [vmem:[#allocation21 + $0x250] sm:$0xff]
        %v3210 = vld [vmem:[#allocation21 + $0x258] sm:$0xff]
        %v3211 = vld [vmem:[#allocation21 + $0x260] sm:$0xff]
        %v3212 = vld [vmem:[#allocation21 + $0x268] sm:$0xff]
        %v3213 = vld [vmem:[#allocation21 + $0x270] sm:$0xff]
        %v3214 = vld [vmem:[#allocation21 + $0x278] sm:$0xff]
        %v3215 = vld [vmem:[#allocation21 + $0x280] sm:$0xff]
        %v3216 = vld [vmem:[#allocation21 + $0x288] sm:$0xff]
        %v3217 = vld [vmem:[#allocation21 + $0x290] sm:$0xff]
        %v3218 = vld [vmem:[#allocation21 + $0x298] sm:$0xff]
        %v3219 = vld [vmem:[#allocation21 + $0x2a0] sm:$0xff]
        %v3220 = vld [vmem:[#allocation21 + $0x2a8] sm:$0xff]
        %v3221 = vld [vmem:[#allocation21 + $0x2b0] sm:$0xff]
        %v3222 = vld [vmem:[#allocation21 + $0x2b8] sm:$0xff]
        %v3223 = vld [vmem:[#allocation21 + $0x2c0] sm:$0xff]
        %v3224 = vld [vmem:[#allocation21 + $0x2c8] sm:$0xff]
        %v3225 = vld [vmem:[#allocation21 + $0x2d0] sm:$0xff]
        %v3226 = vld [vmem:[#allocation21 + $0x2d8] sm:$0xff]
        %v3227 = vld [vmem:[#allocation21 + $0x2e0] sm:$0xff]
        %v3228 = vld [vmem:[#allocation21 + $0x2e8] sm:$0xff]
        %v3229 = vld [vmem:[#allocation21 + $0x2f0] sm:$0xff]
        %v3230 = vld [vmem:[#allocation21 + $0x2f8] sm:$0xff]
        %v3231 = vld [vmem:[#allocation21 + $0x300] sm:$0xff]
        %v3232 = vld [vmem:[#allocation21 + $0x308] sm:$0xff]
        %v3233 = vld [vmem:[#allocation21 + $0x310] sm:$0xff]
        %v3234 = vld [vmem:[#allocation21 + $0x318] sm:$0xff]
        %v3235 = vld [vmem:[#allocation21 + $0x320] sm:$0xff]
        %v3236 = vld [vmem:[#allocation21 + $0x328] sm:$0xff]
        %v3237 = vld [vmem:[#allocation21 + $0x330] sm:$0xff]
        %v3238 = vld [vmem:[#allocation21 + $0x338] sm:$0xff]
        %v3239 = vld [vmem:[#allocation21 + $0x340] sm:$0xff]
        %v3240 = vld [vmem:[#allocation21 + $0x348] sm:$0xff]
        %v3241 = vld [vmem:[#allocation21 + $0x350] sm:$0xff]
        %v3242 = vld [vmem:[#allocation21 + $0x358] sm:$0xff]
        %v3243 = vld [vmem:[#allocation21 + $0x360] sm:$0xff]
        %v3244 = vld [vmem:[#allocation21 + $0x368] sm:$0xff]
        %v3245 = vld [vmem:[#allocation21 + $0x370] sm:$0xff]
        %v3246 = vld [vmem:[#allocation21 + $0x378] sm:$0xff]
        %v3247 = vld [vmem:[#allocation21 + $0x380] sm:$0xff]
        %v3248 = vld [vmem:[#allocation21 + $0x388] sm:$0xff]
        %v3249 = vld [vmem:[#allocation21 + $0x390] sm:$0xff]
        %v3250 = vld [vmem:[#allocation21 + $0x398] sm:$0xff]
        %v3251 = vld [vmem:[#allocation21 + $0x3a0] sm:$0xff]
        %v3252 = vld [vmem:[#allocation21 + $0x3a8] sm:$0xff]
        %v3253 = vld [vmem:[#allocation21 + $0x3b0] sm:$0xff]
        %v3254 = vld [vmem:[#allocation21 + $0x3b8] sm:$0xff]
        %v3255 = vld [vmem:[#allocation21 + $0x3c0] sm:$0xff]
        %v3256 = vld [vmem:[#allocation21 + $0x3c8] sm:$0xff]
        %v3257 = vld [vmem:[#allocation21 + $0x3d0] sm:$0xff]
        %v3258 = vld [vmem:[#allocation21 + $0x3d8] sm:$0xff]
        %v3259 = vld [vmem:[#allocation21 + $0x3e0] sm:$0xff]
        %v3260 = vld [vmem:[#allocation21 + $0x3e8] sm:$0xff]
        %v3261 = vld [vmem:[#allocation21 + $0x3f0] sm:$0xff]
        %v3262 = vld [vmem:[#allocation21 + $0x3f8] sm:$0xff]
        %v3263 = vld [vmem:[#allocation21 + $0x400] sm:$0xff]
        %v3264 = vld [vmem:[#allocation21 + $0x408] sm:$0xff]
        %v3265 = vld [vmem:[#allocation21 + $0x410] sm:$0xff]
        %v3266 = vld [vmem:[#allocation21 + $0x418] sm:$0xff]
        %v3267 = vld [vmem:[#allocation21 + $0x420] sm:$0xff]
        %v3268 = vld [vmem:[#allocation21 + $0x428] sm:$0xff]
        %v3269 = vld [vmem:[#allocation21 + $0x430] sm:$0xff]
        %v3270 = vld [vmem:[#allocation21 + $0x438] sm:$0xff]
        %v3271 = vld [vmem:[#allocation21 + $0x440] sm:$0xff]
        %v3272 = vld [vmem:[#allocation21 + $0x448] sm:$0xff]
        %v3273 = vld [vmem:[#allocation21 + $0x450] sm:$0xff]
        %v3274 = vld [vmem:[#allocation21 + $0x458] sm:$0xff]
        %v3275 = vld [vmem:[#allocation21 + $0x460] sm:$0xff]
        %v3276 = vld [vmem:[#allocation21 + $0x468] sm:$0xff]
        %v3277 = vld [vmem:[#allocation21 + $0x470] sm:$0xff]
        %v3278 = vld [vmem:[#allocation21 + $0x478] sm:$0xff]
        %v3279 = vld [vmem:[#allocation21 + $0x480] sm:$0xff]
        %v3280 = vld [vmem:[#allocation21 + $0x488] sm:$0xff]
        %v3281 = vld [vmem:[#allocation21 + $0x490] sm:$0xff]
        %v3282 = vld [vmem:[#allocation21 + $0x498] sm:$0xff]
        %v3283 = vld [vmem:[#allocation21 + $0x4a0] sm:$0xff]
        %v3284 = vld [vmem:[#allocation21 + $0x4a8] sm:$0xff]
        %v3285 = vld [vmem:[#allocation21 + $0x4b0] sm:$0xff]
        %v3286 = vld [vmem:[#allocation21 + $0x4b8] sm:$0xff]
        %v3287 = vld [vmem:[#allocation21 + $0x4c0] sm:$0xff]
        %v3288 = vld [vmem:[#allocation21 + $0x4c8] sm:$0xff]
        %v3289 = vld [vmem:[#allocation21 + $0x4d0] sm:$0xff]
        %v3290 = vld [vmem:[#allocation21 + $0x4d8] sm:$0xff]
        %v3291 = vld [vmem:[#allocation21 + $0x4e0] sm:$0xff]
        %v3292 = vld [vmem:[#allocation21 + $0x4e8] sm:$0xff]
        %v3293 = vld [vmem:[#allocation21 + $0x4f0] sm:$0xff]
        %v3294 = vld [vmem:[#allocation21 + $0x4f8] sm:$0xff]
        %v3295 = vld [vmem:[#allocation21 + $0x500] sm:$0xff]
        %v3296 = vld [vmem:[#allocation21 + $0x508] sm:$0xff]
        %v3297 = vld [vmem:[#allocation21 + $0x510] sm:$0xff]
        %v3298 = vld [vmem:[#allocation21 + $0x518] sm:$0xff]
        %v3299 = vld [vmem:[#allocation21 + $0x520] sm:$0xff]
        %v3300 = vld [vmem:[#allocation21 + $0x528] sm:$0xff]
        %v3301 = vld [vmem:[#allocation21 + $0x530] sm:$0xff]
        %v3302 = vld [vmem:[#allocation21 + $0x538] sm:$0xff]
        %v3303 = vld [vmem:[#allocation21 + $0x540] sm:$0xff]
        %v3304 = vld [vmem:[#allocation21 + $0x548] sm:$0xff]
        %v3305 = vld [vmem:[#allocation21 + $0x550] sm:$0xff]
        %v3306 = vld [vmem:[#allocation21 + $0x558] sm:$0xff]
        %v3307 = vld [vmem:[#allocation21 + $0x560] sm:$0xff]
        %v3308 = vld [vmem:[#allocation21 + $0x568] sm:$0xff]
        %v3309 = vld [vmem:[#allocation21 + $0x570] sm:$0xff]
        %v3310 = vld [vmem:[#allocation21 + $0x578] sm:$0xff]
        %v3311 = vld [vmem:[#allocation21 + $0x580] sm:$0xff]
        %v3312 = vld [vmem:[#allocation21 + $0x588] sm:$0xff]
        %v3313 = vld [vmem:[#allocation21 + $0x590] sm:$0xff]
        %v3314 = vld [vmem:[#allocation21 + $0x598] sm:$0xff]
        %v3315 = vld [vmem:[#allocation21 + $0x5a0] sm:$0xff]
        %v3316 = vld [vmem:[#allocation21 + $0x5a8] sm:$0xff]
        %v3317 = vld [vmem:[#allocation21 + $0x5b0] sm:$0xff]
        %v3318 = vld [vmem:[#allocation21 + $0x5b8] sm:$0xff]
        %v3319 = vld [vmem:[#allocation21 + $0x5c0] sm:$0xff]
        %v3320 = vld [vmem:[#allocation21 + $0x5c8] sm:$0xff]
        %v3321 = vld [vmem:[#allocation21 + $0x5d0] sm:$0xff]
        %v3322 = vld [vmem:[#allocation21 + $0x5d8] sm:$0xff]
        %v3323 = vld [vmem:[#allocation21 + $0x5e0] sm:$0xff]
        %v3324 = vld [vmem:[#allocation21 + $0x5e8] sm:$0xff]
        %v3325 = vld [vmem:[#allocation21 + $0x5f0] sm:$0xff]
        %v3326 = vld [vmem:[#allocation21 + $0x5f8] sm:$0xff]
        %v3327 = vld [vmem:[#allocation21 + $0x600] sm:$0xff]
        %v3328 = vld [vmem:[#allocation21 + $0x608] sm:$0xff]
        %v3329 = vld [vmem:[#allocation21 + $0x610] sm:$0xff]
        %v3330 = vld [vmem:[#allocation21 + $0x618] sm:$0xff]
        %v3331 = vld [vmem:[#allocation21 + $0x620] sm:$0xff]
        %v3332 = vld [vmem:[#allocation21 + $0x628] sm:$0xff]
        %v3333 = vld [vmem:[#allocation21 + $0x630] sm:$0xff]
        %v3334 = vld [vmem:[#allocation21 + $0x638] sm:$0xff]
        %v3335 = vld [vmem:[#allocation21 + $0x640] sm:$0xff]
        %v3336 = vld [vmem:[#allocation21 + $0x648] sm:$0xff]
        %v3337 = vld [vmem:[#allocation21 + $0x650] sm:$0xff]
        %v3338 = vld [vmem:[#allocation21 + $0x658] sm:$0xff]
        %v3339 = vld [vmem:[#allocation21 + $0x660] sm:$0xff]
        %v3340 = vld [vmem:[#allocation21 + $0x668] sm:$0xff]
        %v3341 = vld [vmem:[#allocation21 + $0x670] sm:$0xff]
        %v3342 = vld [vmem:[#allocation21 + $0x678] sm:$0xff]
        %v3343 = vld [vmem:[#allocation21 + $0x680] sm:$0xff]
        %v3344 = vld [vmem:[#allocation21 + $0x688] sm:$0xff]
        %v3345 = vld [vmem:[#allocation21 + $0x690] sm:$0xff]
        %v3346 = vld [vmem:[#allocation21 + $0x698] sm:$0xff]
        %v3347 = vld [vmem:[#allocation21 + $0x6a0] sm:$0xff]
        %v3348 = vld [vmem:[#allocation21 + $0x6a8] sm:$0xff]
        %v3349 = vld [vmem:[#allocation21 + $0x6b0] sm:$0xff]
        %v3350 = vld [vmem:[#allocation21 + $0x6b8] sm:$0xff]
        %v3351 = vld [vmem:[#allocation21 + $0x6c0] sm:$0xff]
        %v3352 = vld [vmem:[#allocation21 + $0x6c8] sm:$0xff]
        %v3353 = vld [vmem:[#allocation21 + $0x6d0] sm:$0xff]
        %v3354 = vld [vmem:[#allocation21 + $0x6d8] sm:$0xff]
        %v3355 = vld [vmem:[#allocation21 + $0x6e0] sm:$0xff]
        %v3356 = vld [vmem:[#allocation21 + $0x6e8] sm:$0xff]
        %v3357 = vld [vmem:[#allocation21 + $0x6f0] sm:$0xff]
        %v3358 = vld [vmem:[#allocation21 + $0x6f8] sm:$0xff]
        %v3359 = vld [vmem:[#allocation21 + $0x700] sm:$0xff]
        %v3360 = vld [vmem:[#allocation21 + $0x708] sm:$0xff]
        %v3361 = vld [vmem:[#allocation21 + $0x710] sm:$0xff]
        %v3362 = vld [vmem:[#allocation21 + $0x718] sm:$0xff]
        %v3363 = vld [vmem:[#allocation21 + $0x720] sm:$0xff]
        %v3364 = vld [vmem:[#allocation21 + $0x728] sm:$0xff]
        %v3365 = vld [vmem:[#allocation21 + $0x730] sm:$0xff]
        %v3366 = vld [vmem:[#allocation21 + $0x738] sm:$0xff]
        %v3367 = vld [vmem:[#allocation21 + $0x740] sm:$0xff]
        %v3368 = vld [vmem:[#allocation21 + $0x748] sm:$0xff]
        %v3369 = vld [vmem:[#allocation21 + $0x750] sm:$0xff]
        %v3370 = vld [vmem:[#allocation21 + $0x758] sm:$0xff]
        %v3371 = vld [vmem:[#allocation21 + $0x760] sm:$0xff]
        %v3372 = vld [vmem:[#allocation21 + $0x768] sm:$0xff]
        %v3373 = vld [vmem:[#allocation21 + $0x770] sm:$0xff]
        %v3374 = vld [vmem:[#allocation21 + $0x778] sm:$0xff]
        %v3375 = vld [vmem:[#allocation21 + $0x780] sm:$0xff]
        %v3376 = vld [vmem:[#allocation21 + $0x788] sm:$0xff]
        %v3377 = vld [vmem:[#allocation21 + $0x790] sm:$0xff]
        %v3378 = vld [vmem:[#allocation21 + $0x798] sm:$0xff]
        %v3379 = vld [vmem:[#allocation21 + $0x7a0] sm:$0xff]
        %v3380 = vld [vmem:[#allocation21 + $0x7a8] sm:$0xff]
        %v3381 = vld [vmem:[#allocation21 + $0x7b0] sm:$0xff]
        %v3382 = vld [vmem:[#allocation21 + $0x7b8] sm:$0xff]
        %v3383 = vld [vmem:[#allocation21 + $0x7c0] sm:$0xff]
        %v3384 = vld [vmem:[#allocation21 + $0x7c8] sm:$0xff]
        %v3385 = vld [vmem:[#allocation21 + $0x7d0] sm:$0xff]
        %v3386 = vld [vmem:[#allocation21 + $0x7d8] sm:$0xff]
        %v3387 = vld [vmem:[#allocation21 + $0x7e0] sm:$0xff]
        %v3388 = vld [vmem:[#allocation21 + $0x7e8] sm:$0xff]
        %v3389 = vld [vmem:[#allocation21 + $0x7f0] sm:$0xff]
        %v3390 = vld [vmem:[#allocation21 + $0x7f8] sm:$0xff]
        %v3391 = vld [vmem:[#allocation21 + $0x800] sm:$0xff]
        %v3392 = vld [vmem:[#allocation21 + $0x808] sm:$0xff]
        %v3393 = vld [vmem:[#allocation21 + $0x810] sm:$0xff]
        %v3394 = vld [vmem:[#allocation21 + $0x818] sm:$0xff]
        %v3395 = vld [vmem:[#allocation21 + $0x820] sm:$0xff]
        %v3396 = vld [vmem:[#allocation21 + $0x828] sm:$0xff]
        %v3397 = vld [vmem:[#allocation21 + $0x830] sm:$0xff]
        %v3398 = vld [vmem:[#allocation21 + $0x838] sm:$0xff]
        %v3399 = vld [vmem:[#allocation21 + $0x840] sm:$0xff]
        %v3400 = vld [vmem:[#allocation21 + $0x848] sm:$0xff]
        %v3401 = vld [vmem:[#allocation21 + $0x850] sm:$0xff]
        %v3402 = vld [vmem:[#allocation21 + $0x858] sm:$0xff]
        %v3403 = vld [vmem:[#allocation21 + $0x860] sm:$0xff]
        %v3404 = vld [vmem:[#allocation21 + $0x868] sm:$0xff]
        %v3405 = vld [vmem:[#allocation21 + $0x870] sm:$0xff]
        %v3406 = vld [vmem:[#allocation21 + $0x878] sm:$0xff]
        %v3407 = vld [vmem:[#allocation21 + $0x880] sm:$0xff]
        %v3408 = vld [vmem:[#allocation21 + $0x888] sm:$0xff]
        %v3409 = vld [vmem:[#allocation21 + $0x890] sm:$0xff]
        %v3410 = vld [vmem:[#allocation21 + $0x898] sm:$0xff]
        %v3411 = vld [vmem:[#allocation21 + $0x8a0] sm:$0xff]
        %v3412 = vld [vmem:[#allocation21 + $0x8a8] sm:$0xff]
        %v3413 = vld [vmem:[#allocation21 + $0x8b0] sm:$0xff]
        %v3414 = vld [vmem:[#allocation21 + $0x8b8] sm:$0xff]
        %v3415 = vld [vmem:[#allocation21 + $0x8c0] sm:$0xff]
        %v3416 = vld [vmem:[#allocation21 + $0x8c8] sm:$0xff]
        %v3417 = vld [vmem:[#allocation21 + $0x8d0] sm:$0xff]
        %v3418 = vld [vmem:[#allocation21 + $0x8d8] sm:$0xff]
        %v3419 = vld [vmem:[#allocation21 + $0x8e0] sm:$0xff]
        %v3420 = vld [vmem:[#allocation21 + $0x8e8] sm:$0xff]
        %v3421 = vld [vmem:[#allocation21 + $0x8f0] sm:$0xff]
        %v3422 = vld [vmem:[#allocation21 + $0x8f8] sm:$0xff]
        %v3423 = vld [vmem:[#allocation21 + $0x900] sm:$0xff]
        %v3424 = vld [vmem:[#allocation21 + $0x908] sm:$0xff]
        %v3425 = vld [vmem:[#allocation21 + $0x910] sm:$0xff]
        %v3426 = vld [vmem:[#allocation21 + $0x918] sm:$0xff]
        %v3427 = vld [vmem:[#allocation21 + $0x920] sm:$0xff]
        %v3428 = vld [vmem:[#allocation21 + $0x928] sm:$0xff]
        %v3429 = vld [vmem:[#allocation21 + $0x930] sm:$0xff]
        %v3430 = vld [vmem:[#allocation21 + $0x938] sm:$0xff]
        %v3431 = vld [vmem:[#allocation21 + $0x940] sm:$0xff]
        %v3432 = vld [vmem:[#allocation21 + $0x948] sm:$0xff]
        %v3433 = vld [vmem:[#allocation21 + $0x950] sm:$0xff]
        %v3434 = vld [vmem:[#allocation21 + $0x958] sm:$0xff]
        %v3435 = vld [vmem:[#allocation21 + $0x960] sm:$0xff]
        %v3436 = vld [vmem:[#allocation21 + $0x968] sm:$0xff]
        %v3437 = vld [vmem:[#allocation21 + $0x970] sm:$0xff]
        %v3438 = vld [vmem:[#allocation21 + $0x978] sm:$0xff]
        %v3439 = vld [vmem:[#allocation21 + $0x980] sm:$0xff]
        %v3440 = vld [vmem:[#allocation21 + $0x988] sm:$0xff]
        %v3441 = vld [vmem:[#allocation21 + $0x990] sm:$0xff]
        %v3442 = vld [vmem:[#allocation21 + $0x998] sm:$0xff]
        %v3443 = vld [vmem:[#allocation21 + $0x9a0] sm:$0xff]
        %v3444 = vld [vmem:[#allocation21 + $0x9a8] sm:$0xff]
        %v3445 = vld [vmem:[#allocation21 + $0x9b0] sm:$0xff]
        %v3446 = vld [vmem:[#allocation21 + $0x9b8] sm:$0xff]
        %v3447 = vld [vmem:[#allocation21 + $0x9c0] sm:$0xff]
        %v3448 = vld [vmem:[#allocation21 + $0x9c8] sm:$0xff]
        %v3449 = vld [vmem:[#allocation21 + $0x9d0] sm:$0xff]
        %v3450 = vld [vmem:[#allocation21 + $0x9d8] sm:$0xff]
        %v3451 = vld [vmem:[#allocation21 + $0x9e0] sm:$0xff]
        %v3452 = vld [vmem:[#allocation21 + $0x9e8] sm:$0xff]
        %v3453 = vld [vmem:[#allocation21 + $0x9f0] sm:$0xff]
        %v3454 = vld [vmem:[#allocation21 + $0x9f8] sm:$0xff]
        %v3455 = vld [vmem:[#allocation21 + $0xa00] sm:$0xff]
        %v3456 = vld [vmem:[#allocation21 + $0xa08] sm:$0xff]
        %v3457 = vld [vmem:[#allocation21 + $0xa10] sm:$0xff]
        %v3458 = vld [vmem:[#allocation21 + $0xa18] sm:$0xff]
        %v3459 = vld [vmem:[#allocation21 + $0xa20] sm:$0xff]
        %v3460 = vld [vmem:[#allocation21 + $0xa28] sm:$0xff]
        %v3461 = vld [vmem:[#allocation21 + $0xa30] sm:$0xff]
        %v3462 = vld [vmem:[#allocation21 + $0xa38] sm:$0xff]
        %v3463 = vld [vmem:[#allocation21 + $0xa40] sm:$0xff]
        %v3464 = vld [vmem:[#allocation21 + $0xa48] sm:$0xff]
        %v3465 = vld [vmem:[#allocation21 + $0xa50] sm:$0xff]
        %v3466 = vld [vmem:[#allocation21 + $0xa58] sm:$0xff]
        %v3467 = vld [vmem:[#allocation21 + $0xa60] sm:$0xff]
        %v3468 = vld [vmem:[#allocation21 + $0xa68] sm:$0xff]
        %v3469 = vld [vmem:[#allocation21 + $0xa70] sm:$0xff]
        %v3470 = vld [vmem:[#allocation21 + $0xa78] sm:$0xff]
        %v3471 = vld [vmem:[#allocation21 + $0xa80] sm:$0xff]
        %v3472 = vld [vmem:[#allocation21 + $0xa88] sm:$0xff]
        %v3473 = vld [vmem:[#allocation21 + $0xa90] sm:$0xff]
        %v3474 = vld [vmem:[#allocation21 + $0xa98] sm:$0xff]
        %v3475 = vld [vmem:[#allocation21 + $0xaa0] sm:$0xff]
        %v3476 = vld [vmem:[#allocation21 + $0xaa8] sm:$0xff]
        %v3477 = vld [vmem:[#allocation21 + $0xab0] sm:$0xff]
        %v3478 = vld [vmem:[#allocation21 + $0xab8] sm:$0xff]
        %v3479 = vld [vmem:[#allocation21 + $0xac0] sm:$0xff]
        %v3480 = vld [vmem:[#allocation21 + $0xac8] sm:$0xff]
        %v3481 = vld [vmem:[#allocation21 + $0xad0] sm:$0xff]
        %v3482 = vld [vmem:[#allocation21 + $0xad8] sm:$0xff]
        %v3483 = vld [vmem:[#allocation21 + $0xae0] sm:$0xff]
        %v3484 = vld [vmem:[#allocation21 + $0xae8] sm:$0xff]
        %v3485 = vld [vmem:[#allocation21 + $0xaf0] sm:$0xff]
        %v3486 = vld [vmem:[#allocation21 + $0xaf8] sm:$0xff]
        %v3487 = vld [vmem:[#allocation21 + $0xb00] sm:$0xff]
        %v3488 = vld [vmem:[#allocation21 + $0xb08] sm:$0xff]
        %v3489 = vld [vmem:[#allocation21 + $0xb10] sm:$0xff]
        %v3490 = vld [vmem:[#allocation21 + $0xb18] sm:$0xff]
        %v3491 = vld [vmem:[#allocation21 + $0xb20] sm:$0xff]
        %v3492 = vld [vmem:[#allocation21 + $0xb28] sm:$0xff]
        %v3493 = vld [vmem:[#allocation21 + $0xb30] sm:$0xff]
        %v3494 = vld [vmem:[#allocation21 + $0xb38] sm:$0xff]
        %v3495 = vld [vmem:[#allocation21 + $0xb40] sm:$0xff]
        %v3496 = vld [vmem:[#allocation21 + $0xb48] sm:$0xff]
        %v3497 = vld [vmem:[#allocation21 + $0xb50] sm:$0xff]
        %v3498 = vld [vmem:[#allocation21 + $0xb58] sm:$0xff]
        %v3499 = vld [vmem:[#allocation21 + $0xb60] sm:$0xff]
        %v3500 = vld [vmem:[#allocation21 + $0xb68] sm:$0xff]
        %v3501 = vld [vmem:[#allocation21 + $0xb70] sm:$0xff]
        %v3502 = vld [vmem:[#allocation21 + $0xb78] sm:$0xff]
        %v3503 = vld [vmem:[#allocation21 + $0xb80] sm:$0xff]
        %v3504 = vld [vmem:[#allocation21 + $0xb88] sm:$0xff]
        %v3505 = vld [vmem:[#allocation21 + $0xb90] sm:$0xff]
        %v3506 = vld [vmem:[#allocation21 + $0xb98] sm:$0xff]
        %v3507 = vld [vmem:[#allocation21 + $0xba0] sm:$0xff]
        %v3508 = vld [vmem:[#allocation21 + $0xba8] sm:$0xff]
        %v3509 = vld [vmem:[#allocation21 + $0xbb0] sm:$0xff]
        %v3510 = vld [vmem:[#allocation21 + $0xbb8] sm:$0xff]
        %v3511 = vld [vmem:[#allocation21 + $0xbc0] sm:$0xff]
        %v3512 = vld [vmem:[#allocation21 + $0xbc8] sm:$0xff]
        %v3513 = vld [vmem:[#allocation21 + $0xbd0] sm:$0xff]
        %v3514 = vld [vmem:[#allocation21 + $0xbd8] sm:$0xff]
        %v3515 = vld [vmem:[#allocation21 + $0xbe0] sm:$0xff]
        %v3516 = vld [vmem:[#allocation21 + $0xbe8] sm:$0xff]
        %v3517 = vld [vmem:[#allocation21 + $0xbf0] sm:$0xff]
        %v3518 = vld [vmem:[#allocation21 + $0xbf8] sm:$0xff]
        %v3519 = vld [vmem:[#allocation21 + $0xc00] sm:$0xff]
        %v3520 = vld [vmem:[#allocation21 + $0xc08] sm:$0xff]
        %v3521 = vld [vmem:[#allocation21 + $0xc10] sm:$0xff]
        %v3522 = vld [vmem:[#allocation21 + $0xc18] sm:$0xff]
        %v3523 = vld [vmem:[#allocation21 + $0xc20] sm:$0xff]
        %v3524 = vld [vmem:[#allocation21 + $0xc28] sm:$0xff]
        %v3525 = vld [vmem:[#allocation21 + $0xc30] sm:$0xff]
        %v3526 = vld [vmem:[#allocation21 + $0xc38] sm:$0xff]
        %v3527 = vld [vmem:[#allocation21 + $0xc40] sm:$0xff]
        %v3528 = vld [vmem:[#allocation21 + $0xc48] sm:$0xff]
        %v3529 = vld [vmem:[#allocation21 + $0xc50] sm:$0xff]
        %v3530 = vld [vmem:[#allocation21 + $0xc58] sm:$0xff]
        %v3531 = vld [vmem:[#allocation21 + $0xc60] sm:$0xff]
        %v3532 = vld [vmem:[#allocation21 + $0xc68] sm:$0xff]
        %v3533 = vld [vmem:[#allocation21 + $0xc70] sm:$0xff]
        %v3534 = vld [vmem:[#allocation21 + $0xc78] sm:$0xff]
        %v3535 = vld [vmem:[#allocation21 + $0xc80] sm:$0xff]
        %v3536 = vld [vmem:[#allocation21 + $0xc88] sm:$0xff]
        %v3537 = vld [vmem:[#allocation21 + $0xc90] sm:$0xff]
        %v3538 = vld [vmem:[#allocation21 + $0xc98] sm:$0xff]
        %v3539 = vld [vmem:[#allocation21 + $0xca0] sm:$0xff]
        %v3540 = vld [vmem:[#allocation21 + $0xca8] sm:$0xff]
        %v3541 = vld [vmem:[#allocation21 + $0xcb0] sm:$0xff]
        %v3542 = vld [vmem:[#allocation21 + $0xcb8] sm:$0xff]
        %v3543 = vld [vmem:[#allocation21 + $0xcc0] sm:$0xff]
        %v3544 = vld [vmem:[#allocation21 + $0xcc8] sm:$0xff]
        %v3545 = vld [vmem:[#allocation21 + $0xcd0] sm:$0xff]
        %v3546 = vld [vmem:[#allocation21 + $0xcd8] sm:$0xff]
        %v3547 = vld [vmem:[#allocation21 + $0xce0] sm:$0xff]
        %v3548 = vld [vmem:[#allocation21 + $0xce8] sm:$0xff]
        %v3549 = vld [vmem:[#allocation21 + $0xcf0] sm:$0xff]
        %v3550 = vld [vmem:[#allocation21 + $0xcf8] sm:$0xff]
        %v3551 = vld [vmem:[#allocation21 + $0xd00] sm:$0xff]
        %v3552 = vld [vmem:[#allocation21 + $0xd08] sm:$0xff]
        %v3553 = vld [vmem:[#allocation21 + $0xd10] sm:$0xff]
        %v3554 = vld [vmem:[#allocation21 + $0xd18] sm:$0xff]
        %v3555 = vld [vmem:[#allocation21 + $0xd20] sm:$0xff]
        %v3556 = vld [vmem:[#allocation21 + $0xd28] sm:$0xff]
        %v3557 = vld [vmem:[#allocation21 + $0xd30] sm:$0xff]
        %v3558 = vld [vmem:[#allocation21 + $0xd38] sm:$0xff]
        %v3559 = vld [vmem:[#allocation21 + $0xd40] sm:$0xff]
        %v3560 = vld [vmem:[#allocation21 + $0xd48] sm:$0xff]
        %v3561 = vld [vmem:[#allocation21 + $0xd50] sm:$0xff]
        %v3562 = vld [vmem:[#allocation21 + $0xd58] sm:$0xff]
        %v3563 = vld [vmem:[#allocation21 + $0xd60] sm:$0xff]
        %v3564 = vld [vmem:[#allocation21 + $0xd68] sm:$0xff]
        %v3565 = vld [vmem:[#allocation21 + $0xd70] sm:$0xff]
        %v3566 = vld [vmem:[#allocation21 + $0xd78] sm:$0xff]
        %v3567 = vld [vmem:[#allocation21 + $0xd80] sm:$0xff]
        %v3568 = vld [vmem:[#allocation21 + $0xd88] sm:$0xff]
        %v3569 = vld [vmem:[#allocation21 + $0xd90] sm:$0xff]
        %v3570 = vld [vmem:[#allocation21 + $0xd98] sm:$0xff]
        %v3571 = vld [vmem:[#allocation21 + $0xda0] sm:$0xff]
        %v3572 = vld [vmem:[#allocation21 + $0xda8] sm:$0xff]
        %v3573 = vld [vmem:[#allocation21 + $0xdb0] sm:$0xff]
        %v3574 = vld [vmem:[#allocation21 + $0xdb8] sm:$0xff]
        %v3575 = vld [vmem:[#allocation21 + $0xdc0] sm:$0xff]
        %v3576 = vld [vmem:[#allocation21 + $0xdc8] sm:$0xff]
        %v3577 = vld [vmem:[#allocation21 + $0xdd0] sm:$0xff]
        %v3578 = vld [vmem:[#allocation21 + $0xdd8] sm:$0xff]
        %v3579 = vld [vmem:[#allocation21 + $0xde0] sm:$0xff]
        %v3580 = vld [vmem:[#allocation21 + $0xde8] sm:$0xff]
        %v3581 = vld [vmem:[#allocation21 + $0xdf0] sm:$0xff]
        %v3582 = vld [vmem:[#allocation21 + $0xdf8] sm:$0xff]
        %v3583 = vld [vmem:[#allocation21 + $0xe00] sm:$0xff]
        %v3584 = vld [vmem:[#allocation21 + $0xe08] sm:$0xff]
        %v3585 = vld [vmem:[#allocation21 + $0xe10] sm:$0xff]
        %v3586 = vld [vmem:[#allocation21 + $0xe18] sm:$0xff]
        %v3587 = vld [vmem:[#allocation23] sm:$0xf]
        %v3589 = vlaneseq
        %v3590 = vshrl.u32 %v3589, 7
        %v3591 = vsub.s32 0, %v3590
        %v3592 = vrot.slane %v3587, %v3591
        %v3593 = vlaneseq
        %v3594 = vshrl.u32 %v3593, 7
        %v3595 = vsub.s32 1, %v3594
        %v3596 = vrot.slane %v3587, %v3595
        %v3597 = vlaneseq
        %v3598 = vshrl.u32 %v3597, 7
        %v3599 = vsub.s32 2, %v3598
        %v3600 = vrot.slane %v3587, %v3599
        %v3601 = vlaneseq
        %v3602 = vshrl.u32 %v3601, 7
        %v3603 = vsub.s32 3, %v3602
        %v3604 = vrot.slane %v3587, %v3603
        %v4061 = vunpack.c.l.b16 %v3135
        %v4062 = vunpack.c.h.b16 %v3135
        %v4063 = vunpack.c.l.b16 %v3136
        %v4064 = vunpack.c.h.b16 %v3136
        %v4065 = vunpack.c.l.b16 %v3137
        %v4066 = vunpack.c.h.b16 %v3137
        %v4067 = vunpack.c.l.b16 %v3138
        %v4068 = vunpack.c.h.b16 %v3138
        %v4069 = vunpack.c.l.b16 %v3139
        %v4070 = vunpack.c.h.b16 %v3139
        %v4071 = vunpack.c.l.b16 %v3140
        %v4072 = vunpack.c.h.b16 %v3140
        %v4073 = vunpack.c.l.b16 %v3141
        %v4074 = vunpack.c.h.b16 %v3141
        %v4075 = vunpack.c.l.b16 %v3142
        %v4076 = vunpack.c.h.b16 %v3142
        %v4077 = vunpack.c.l.b16 %v3143
        %v4078 = vunpack.c.h.b16 %v3143
        %v4079 = vunpack.c.l.b16 %v3144
        %v4080 = vunpack.c.h.b16 %v3144
        %v4081 = vunpack.c.l.b16 %v3145
        %v4082 = vunpack.c.h.b16 %v3145
        %v4083 = vunpack.c.l.b16 %v3146
        %v4084 = vunpack.c.h.b16 %v3146
        %v4085 = vunpack.c.l.b16 %v3147
        %v4086 = vunpack.c.h.b16 %v3147
        %v4087 = vunpack.c.l.b16 %v3148
        %v4088 = vunpack.c.h.b16 %v3148
        %v4089 = vunpack.c.l.b16 %v3149
        %v4090 = vunpack.c.h.b16 %v3149
        %v4091 = vunpack.c.l.b16 %v3150
        %v4092 = vunpack.c.h.b16 %v3150
        %v4093 = vunpack.c.l.b16 %v3151
        %v4094 = vunpack.c.h.b16 %v3151
        %v4095 = vunpack.c.l.b16 %v3152
        %v4096 = vunpack.c.h.b16 %v3152
        %v4097 = vunpack.c.l.b16 %v3153
        %v4098 = vunpack.c.h.b16 %v3153
        %v4099 = vunpack.c.l.b16 %v3154
        %v4100 = vunpack.c.h.b16 %v3154
        %v4101 = vunpack.c.l.b16 %v3155
        %v4102 = vunpack.c.h.b16 %v3155
        %v4103 = vunpack.c.l.b16 %v3156
        %v4104 = vunpack.c.h.b16 %v3156
        %v4105 = vunpack.c.l.b16 %v3157
        %v4106 = vunpack.c.h.b16 %v3157
        %v4107 = vunpack.c.l.b16 %v3158
        %v4108 = vunpack.c.h.b16 %v3158
        %v4109 = vunpack.c.l.b16 %v3159
        %v4110 = vunpack.c.h.b16 %v3159
        %v4111 = vunpack.c.l.b16 %v3160
        %v4112 = vunpack.c.h.b16 %v3160
        %v4113 = vunpack.c.l.b16 %v3161
        %v4114 = vunpack.c.h.b16 %v3161
        %v4115 = vunpack.c.l.b16 %v3162
        %v4116 = vunpack.c.h.b16 %v3162
        %v4117 = vunpack.c.l.b16 %v3163
        %v4118 = vunpack.c.h.b16 %v3163
        %v4119 = vunpack.c.l.b16 %v3164
        %v4120 = vunpack.c.h.b16 %v3164
        %v4121 = vunpack.c.l.b16 %v3165
        %v4122 = vunpack.c.h.b16 %v3165
        %v4123 = vunpack.c.l.b16 %v3166
        %v4124 = vunpack.c.h.b16 %v3166
        %v4125 = vunpack.c.l.b16 %v3167
        %v4126 = vunpack.c.h.b16 %v3167
        %v4127 = vunpack.c.l.b16 %v3168
        %v4128 = vunpack.c.h.b16 %v3168
        %v4129 = vunpack.c.l.b16 %v3169
        %v4130 = vunpack.c.h.b16 %v3169
        %v4131 = vunpack.c.l.b16 %v3170
        %v4132 = vunpack.c.h.b16 %v3170
        %v4133 = vunpack.c.l.b16 %v3171
        %v4134 = vunpack.c.h.b16 %v3171
        %v4135 = vunpack.c.l.b16 %v3172
        %v4136 = vunpack.c.h.b16 %v3172
        %v4137 = vunpack.c.l.b16 %v3173
        %v4138 = vunpack.c.h.b16 %v3173
        %v4139 = vunpack.c.l.b16 %v3174
        %v4140 = vunpack.c.h.b16 %v3174
        %v4141 = vunpack.c.l.b16 %v3175
        %v4142 = vunpack.c.h.b16 %v3175
        %v4143 = vunpack.c.l.b16 %v3176
        %v4144 = vunpack.c.h.b16 %v3176
        %v4145 = vunpack.c.l.b16 %v3177
        %v4146 = vunpack.c.h.b16 %v3177
        %v4147 = vunpack.c.l.b16 %v3178
        %v4148 = vunpack.c.h.b16 %v3178
        %v4149 = vunpack.c.l.b16 %v3179
        %v4150 = vunpack.c.h.b16 %v3179
        %v4151 = vunpack.c.l.b16 %v3180
        %v4152 = vunpack.c.h.b16 %v3180
        %v4153 = vunpack.c.l.b16 %v3181
        %v4154 = vunpack.c.h.b16 %v3181
        %v4155 = vunpack.c.l.b16 %v3182
        %v4156 = vunpack.c.h.b16 %v3182
        %v4157 = vunpack.c.l.b16 %v3183
        %v4158 = vunpack.c.h.b16 %v3183
        %v4159 = vunpack.c.l.b16 %v3184
        %v4160 = vunpack.c.h.b16 %v3184
        %v4161 = vunpack.c.l.b16 %v3185
        %v4162 = vunpack.c.h.b16 %v3185
        %v4163 = vunpack.c.l.b16 %v3186
        %v4164 = vunpack.c.h.b16 %v3186
        %v4165 = vunpack.c.l.b16 %v3187
        %v4166 = vunpack.c.h.b16 %v3187
        %v4167 = vunpack.c.l.b16 %v3188
        %v4168 = vunpack.c.h.b16 %v3188
        %v4169 = vunpack.c.l.b16 %v3189
        %v4170 = vunpack.c.h.b16 %v3189
        %v4171 = vunpack.c.l.b16 %v3190
        %v4172 = vunpack.c.h.b16 %v3190
        %v4173 = vunpack.c.l.b16 %v3191
        %v4174 = vunpack.c.h.b16 %v3191
        %v4175 = vunpack.c.l.b16 %v3192
        %v4176 = vunpack.c.h.b16 %v3192
        %v4177 = vunpack.c.l.b16 %v3193
        %v4178 = vunpack.c.h.b16 %v3193
        %v4179 = vunpack.c.l.b16 %v3194
        %v4180 = vunpack.c.h.b16 %v3194
        %v4181 = vunpack.c.l.b16 %v3195
        %v4182 = vunpack.c.h.b16 %v3195
        %v4183 = vunpack.c.l.b16 %v3196
        %v4184 = vunpack.c.h.b16 %v3196
        %v4185 = vunpack.c.l.b16 %v3197
        %v4186 = vunpack.c.h.b16 %v3197
        %v4187 = vunpack.c.l.b16 %v3198
        %v4188 = vunpack.c.h.b16 %v3198
        %v4189 = vunpack.c.l.b16 %v3199
        %v4190 = vunpack.c.h.b16 %v3199
        %v4191 = vunpack.c.l.b16 %v3200
        %v4192 = vunpack.c.h.b16 %v3200
        %v4193 = vunpack.c.l.b16 %v3201
        %v4194 = vunpack.c.h.b16 %v3201
        %v4195 = vunpack.c.l.b16 %v3202
        %v4196 = vunpack.c.h.b16 %v3202
        %v4197 = vunpack.c.l.b16 %v3203
        %v4198 = vunpack.c.h.b16 %v3203
        %v4199 = vunpack.c.l.b16 %v3204
        %v4200 = vunpack.c.h.b16 %v3204
        %v4201 = vunpack.c.l.b16 %v3205
        %v4202 = vunpack.c.h.b16 %v3205
        %v4203 = vunpack.c.l.b16 %v3206
        %v4204 = vunpack.c.h.b16 %v3206
        %v4205 = vunpack.c.l.b16 %v3207
        %v4206 = vunpack.c.h.b16 %v3207
        %v4207 = vunpack.c.l.b16 %v3208
        %v4208 = vunpack.c.h.b16 %v3208
        %v4209 = vunpack.c.l.b16 %v3209
        %v4210 = vunpack.c.h.b16 %v3209
        %v4211 = vunpack.c.l.b16 %v3210
        %v4212 = vunpack.c.h.b16 %v3210
        %v4213 = vunpack.c.l.b16 %v3211
        %v4214 = vunpack.c.h.b16 %v3211
        %v4215 = vunpack.c.l.b16 %v3212
        %v4216 = vunpack.c.h.b16 %v3212
        %v4217 = vunpack.c.l.b16 %v3213
        %v4218 = vunpack.c.h.b16 %v3213
        %v4219 = vunpack.c.l.b16 %v3214
        %v4220 = vunpack.c.h.b16 %v3214
        %v4221 = vunpack.c.l.b16 %v3215
        %v4222 = vunpack.c.h.b16 %v3215
        %v4223 = vunpack.c.l.b16 %v3216
        %v4224 = vunpack.c.h.b16 %v3216
        %v4225 = vunpack.c.l.b16 %v3217
        %v4226 = vunpack.c.h.b16 %v3217
        %v4227 = vunpack.c.l.b16 %v3218
        %v4228 = vunpack.c.h.b16 %v3218
        %v4229 = vunpack.c.l.b16 %v3219
        %v4230 = vunpack.c.h.b16 %v3219
        %v4231 = vunpack.c.l.b16 %v3220
        %v4232 = vunpack.c.h.b16 %v3220
        %v4233 = vunpack.c.l.b16 %v3221
        %v4234 = vunpack.c.h.b16 %v3221
        %v4235 = vunpack.c.l.b16 %v3222
        %v4236 = vunpack.c.h.b16 %v3222
        %v4237 = vunpack.c.l.b16 %v3223
        %v4238 = vunpack.c.h.b16 %v3223
        %v4239 = vunpack.c.l.b16 %v3224
        %v4240 = vunpack.c.h.b16 %v3224
        %v4241 = vunpack.c.l.b16 %v3225
        %v4242 = vunpack.c.h.b16 %v3225
        %v4243 = vunpack.c.l.b16 %v3226
        %v4244 = vunpack.c.h.b16 %v3226
        %v4245 = vunpack.c.l.b16 %v3227
        %v4246 = vunpack.c.h.b16 %v3227
        %v4247 = vunpack.c.l.b16 %v3228
        %v4248 = vunpack.c.h.b16 %v3228
        %v4249 = vunpack.c.l.b16 %v3229
        %v4250 = vunpack.c.h.b16 %v3229
        %v4251 = vunpack.c.l.b16 %v3230
        %v4252 = vunpack.c.h.b16 %v3230
        %v4253 = vunpack.c.l.b16 %v3231
        %v4254 = vunpack.c.h.b16 %v3231
        %v4255 = vunpack.c.l.b16 %v3232
        %v4256 = vunpack.c.h.b16 %v3232
        %v4257 = vunpack.c.l.b16 %v3233
        %v4258 = vunpack.c.h.b16 %v3233
        %v4259 = vunpack.c.l.b16 %v3234
        %v4260 = vunpack.c.h.b16 %v3234
        %v4261 = vunpack.c.l.b16 %v3235
        %v4262 = vunpack.c.h.b16 %v3235
        %v4263 = vunpack.c.l.b16 %v3236
        %v4264 = vunpack.c.h.b16 %v3236
        %v4265 = vunpack.c.l.b16 %v3237
        %v4266 = vunpack.c.h.b16 %v3237
        %v4267 = vunpack.c.l.b16 %v3238
        %v4268 = vunpack.c.h.b16 %v3238
        %v4269 = vunpack.c.l.b16 %v3239
        %v4270 = vunpack.c.h.b16 %v3239
        %v4271 = vunpack.c.l.b16 %v3240
        %v4272 = vunpack.c.h.b16 %v3240
        %v4273 = vunpack.c.l.b16 %v3241
        %v4274 = vunpack.c.h.b16 %v3241
        %v4275 = vunpack.c.l.b16 %v3242
        %v4276 = vunpack.c.h.b16 %v3242
        %v4277 = vunpack.c.l.b16 %v3243
        %v4278 = vunpack.c.h.b16 %v3243
        %v4279 = vunpack.c.l.b16 %v3244
        %v4280 = vunpack.c.h.b16 %v3244
        %v4281 = vunpack.c.l.b16 %v3245
        %v4282 = vunpack.c.h.b16 %v3245
        %v4283 = vunpack.c.l.b16 %v3246
        %v4284 = vunpack.c.h.b16 %v3246
        %v4285 = vunpack.c.l.b16 %v3247
        %v4286 = vunpack.c.h.b16 %v3247
        %v4287 = vunpack.c.l.b16 %v3248
        %v4288 = vunpack.c.h.b16 %v3248
        %v4289 = vunpack.c.l.b16 %v3249
        %v4290 = vunpack.c.h.b16 %v3249
        %v4291 = vunpack.c.l.b16 %v3250
        %v4292 = vunpack.c.h.b16 %v3250
        %v4293 = vunpack.c.l.b16 %v3251
        %v4294 = vunpack.c.h.b16 %v3251
        %v4295 = vunpack.c.l.b16 %v3252
        %v4296 = vunpack.c.h.b16 %v3252
        %v4297 = vunpack.c.l.b16 %v3253
        %v4298 = vunpack.c.h.b16 %v3253
        %v4299 = vunpack.c.l.b16 %v3254
        %v4300 = vunpack.c.h.b16 %v3254
        %v4301 = vunpack.c.l.b16 %v3255
        %v4302 = vunpack.c.h.b16 %v3255
        %v4303 = vunpack.c.l.b16 %v3256
        %v4304 = vunpack.c.h.b16 %v3256
        %v4305 = vunpack.c.l.b16 %v3257
        %v4306 = vunpack.c.h.b16 %v3257
        %v4307 = vunpack.c.l.b16 %v3258
        %v4308 = vunpack.c.h.b16 %v3258
        %v4309 = vunpack.c.l.b16 %v3259
        %v4310 = vunpack.c.h.b16 %v3259
        %v4311 = vunpack.c.l.b16 %v3260
        %v4312 = vunpack.c.h.b16 %v3260
        %v4313 = vunpack.c.l.b16 %v3261
        %v4314 = vunpack.c.h.b16 %v3261
        %v4315 = vunpack.c.l.b16 %v3262
        %v4316 = vunpack.c.h.b16 %v3262
        %v4317 = vunpack.c.l.b16 %v3263
        %v4318 = vunpack.c.h.b16 %v3263
        %v4319 = vunpack.c.l.b16 %v3264
        %v4320 = vunpack.c.h.b16 %v3264
        %v4321 = vunpack.c.l.b16 %v3265
        %v4322 = vunpack.c.h.b16 %v3265
        %v4323 = vunpack.c.l.b16 %v3266
        %v4324 = vunpack.c.h.b16 %v3266
        %v4325 = vunpack.c.l.b16 %v3267
        %v4326 = vunpack.c.h.b16 %v3267
        %v4327 = vunpack.c.l.b16 %v3268
        %v4328 = vunpack.c.h.b16 %v3268
        %v4329 = vunpack.c.l.b16 %v3269
        %v4330 = vunpack.c.h.b16 %v3269
        %v4331 = vunpack.c.l.b16 %v3270
        %v4332 = vunpack.c.h.b16 %v3270
        %v4333 = vunpack.c.l.b16 %v3271
        %v4334 = vunpack.c.h.b16 %v3271
        %v4335 = vunpack.c.l.b16 %v3272
        %v4336 = vunpack.c.h.b16 %v3272
        %v4337 = vunpack.c.l.b16 %v3273
        %v4338 = vunpack.c.h.b16 %v3273
        %v4339 = vunpack.c.l.b16 %v3274
        %v4340 = vunpack.c.h.b16 %v3274
        %v4341 = vunpack.c.l.b16 %v3275
        %v4342 = vunpack.c.h.b16 %v3275
        %v4343 = vunpack.c.l.b16 %v3276
        %v4344 = vunpack.c.h.b16 %v3276
        %v4345 = vunpack.c.l.b16 %v3277
        %v4346 = vunpack.c.h.b16 %v3277
        %v4347 = vunpack.c.l.b16 %v3278
        %v4348 = vunpack.c.h.b16 %v3278
        %v4349 = vunpack.c.l.b16 %v3279
        %v4350 = vunpack.c.h.b16 %v3279
        %v4351 = vunpack.c.l.b16 %v3280
        %v4352 = vunpack.c.h.b16 %v3280
        %v4353 = vunpack.c.l.b16 %v3281
        %v4354 = vunpack.c.h.b16 %v3281
        %v4355 = vunpack.c.l.b16 %v3282
        %v4356 = vunpack.c.h.b16 %v3282
        %v4357 = vunpack.c.l.b16 %v3283
        %v4358 = vunpack.c.h.b16 %v3283
        %v4359 = vunpack.c.l.b16 %v3284
        %v4360 = vunpack.c.h.b16 %v3284
        %v4361 = vunpack.c.l.b16 %v3285
        %v4362 = vunpack.c.h.b16 %v3285
        %v4363 = vunpack.c.l.b16 %v3286
        %v4364 = vunpack.c.h.b16 %v3286
        %v4365 = vunpack.c.l.b16 %v3287
        %v4366 = vunpack.c.h.b16 %v3287
        %v4367 = vunpack.c.l.b16 %v3288
        %v4368 = vunpack.c.h.b16 %v3288
        %v4369 = vunpack.c.l.b16 %v3289
        %v4370 = vunpack.c.h.b16 %v3289
        %v4371 = vunpack.c.l.b16 %v3290
        %v4372 = vunpack.c.h.b16 %v3290
        %v4373 = vunpack.c.l.b16 %v3291
        %v4374 = vunpack.c.h.b16 %v3291
        %v4375 = vunpack.c.l.b16 %v3292
        %v4376 = vunpack.c.h.b16 %v3292
        %v4377 = vunpack.c.l.b16 %v3293
        %v4378 = vunpack.c.h.b16 %v3293
        %v4379 = vunpack.c.l.b16 %v3294
        %v4380 = vunpack.c.h.b16 %v3294
        %v4381 = vunpack.c.l.b16 %v3295
        %v4382 = vunpack.c.h.b16 %v3295
        %v4383 = vunpack.c.l.b16 %v3296
        %v4384 = vunpack.c.h.b16 %v3296
        %v4385 = vunpack.c.l.b16 %v3297
        %v4386 = vunpack.c.h.b16 %v3297
        %v4387 = vunpack.c.l.b16 %v3298
        %v4388 = vunpack.c.h.b16 %v3298
        %v4389 = vunpack.c.l.b16 %v3299
        %v4390 = vunpack.c.h.b16 %v3299
        %v4391 = vunpack.c.l.b16 %v3300
        %v4392 = vunpack.c.h.b16 %v3300
        %v4393 = vunpack.c.l.b16 %v3301
        %v4394 = vunpack.c.h.b16 %v3301
        %v4395 = vunpack.c.l.b16 %v3302
        %v4396 = vunpack.c.h.b16 %v3302
        %v4397 = vunpack.c.l.b16 %v3303
        %v4398 = vunpack.c.h.b16 %v3303
        %v4399 = vunpack.c.l.b16 %v3304
        %v4400 = vunpack.c.h.b16 %v3304
        %v4401 = vunpack.c.l.b16 %v3305
        %v4402 = vunpack.c.h.b16 %v3305
        %v4403 = vunpack.c.l.b16 %v3306
        %v4404 = vunpack.c.h.b16 %v3306
        %v4405 = vunpack.c.l.b16 %v3307
        %v4406 = vunpack.c.h.b16 %v3307
        %v4407 = vunpack.c.l.b16 %v3308
        %v4408 = vunpack.c.h.b16 %v3308
        %v4409 = vunpack.c.l.b16 %v3309
        %v4410 = vunpack.c.h.b16 %v3309
        %v4411 = vunpack.c.l.b16 %v3310
        %v4412 = vunpack.c.h.b16 %v3310
        %v4413 = vunpack.c.l.b16 %v3311
        %v4414 = vunpack.c.h.b16 %v3311
        %v4415 = vunpack.c.l.b16 %v3312
        %v4416 = vunpack.c.h.b16 %v3312
        %v4417 = vunpack.c.l.b16 %v3313
        %v4418 = vunpack.c.h.b16 %v3313
        %v4419 = vunpack.c.l.b16 %v3314
        %v4420 = vunpack.c.h.b16 %v3314
        %v4421 = vunpack.c.l.b16 %v3315
        %v4422 = vunpack.c.h.b16 %v3315
        %v4423 = vunpack.c.l.b16 %v3316
        %v4424 = vunpack.c.h.b16 %v3316
        %v4425 = vunpack.c.l.b16 %v3317
        %v4426 = vunpack.c.h.b16 %v3317
        %v4427 = vunpack.c.l.b16 %v3318
        %v4428 = vunpack.c.h.b16 %v3318
        %v4429 = vunpack.c.l.b16 %v3319
        %v4430 = vunpack.c.h.b16 %v3319
        %v4431 = vunpack.c.l.b16 %v3320
        %v4432 = vunpack.c.h.b16 %v3320
        %v4433 = vunpack.c.l.b16 %v3321
        %v4434 = vunpack.c.h.b16 %v3321
        %v4435 = vunpack.c.l.b16 %v3322
        %v4436 = vunpack.c.h.b16 %v3322
        %v4437 = vunpack.c.l.b16 %v3323
        %v4438 = vunpack.c.h.b16 %v3323
        %v4439 = vunpack.c.l.b16 %v3324
        %v4440 = vunpack.c.h.b16 %v3324
        %v4441 = vunpack.c.l.b16 %v3325
        %v4442 = vunpack.c.h.b16 %v3325
        %v4443 = vunpack.c.l.b16 %v3326
        %v4444 = vunpack.c.h.b16 %v3326
        %v4445 = vunpack.c.l.b16 %v3327
        %v4446 = vunpack.c.h.b16 %v3327
        %v4447 = vunpack.c.l.b16 %v3328
        %v4448 = vunpack.c.h.b16 %v3328
        %v4449 = vunpack.c.l.b16 %v3329
        %v4450 = vunpack.c.h.b16 %v3329
        %v4451 = vunpack.c.l.b16 %v3330
        %v4452 = vunpack.c.h.b16 %v3330
        %v4453 = vunpack.c.l.b16 %v3331
        %v4454 = vunpack.c.h.b16 %v3331
        %v4455 = vunpack.c.l.b16 %v3332
        %v4456 = vunpack.c.h.b16 %v3332
        %v4457 = vunpack.c.l.b16 %v3333
        %v4458 = vunpack.c.h.b16 %v3333
        %v4459 = vunpack.c.l.b16 %v3334
        %v4460 = vunpack.c.h.b16 %v3334
        %v4461 = vunpack.c.l.b16 %v3335
        %v4462 = vunpack.c.h.b16 %v3335
        %v4463 = vunpack.c.l.b16 %v3336
        %v4464 = vunpack.c.h.b16 %v3336
        %v4465 = vunpack.c.l.b16 %v3337
        %v4466 = vunpack.c.h.b16 %v3337
        %v4467 = vunpack.c.l.b16 %v3338
        %v4468 = vunpack.c.h.b16 %v3338
        %v4469 = vunpack.c.l.b16 %v3339
        %v4470 = vunpack.c.h.b16 %v3339
        %v4471 = vunpack.c.l.b16 %v3340
        %v4472 = vunpack.c.h.b16 %v3340
        %v4473 = vunpack.c.l.b16 %v3341
        %v4474 = vunpack.c.h.b16 %v3341
        %v4475 = vunpack.c.l.b16 %v3342
        %v4476 = vunpack.c.h.b16 %v3342
        %v4477 = vunpack.c.l.b16 %v3343
        %v4478 = vunpack.c.h.b16 %v3343
        %v4479 = vunpack.c.l.b16 %v3344
        %v4480 = vunpack.c.h.b16 %v3344
        %v4481 = vunpack.c.l.b16 %v3345
        %v4482 = vunpack.c.h.b16 %v3345
        %v4483 = vunpack.c.l.b16 %v3346
        %v4484 = vunpack.c.h.b16 %v3346
        %v4485 = vunpack.c.l.b16 %v3347
        %v4486 = vunpack.c.h.b16 %v3347
        %v4487 = vunpack.c.l.b16 %v3348
        %v4488 = vunpack.c.h.b16 %v3348
        %v4489 = vunpack.c.l.b16 %v3349
        %v4490 = vunpack.c.h.b16 %v3349
        %v4491 = vunpack.c.l.b16 %v3350
        %v4492 = vunpack.c.h.b16 %v3350
        %v4493 = vunpack.c.l.b16 %v3351
        %v4494 = vunpack.c.h.b16 %v3351
        %v4495 = vunpack.c.l.b16 %v3352
        %v4496 = vunpack.c.h.b16 %v3352
        %v4497 = vunpack.c.l.b16 %v3353
        %v4498 = vunpack.c.h.b16 %v3353
        %v4499 = vunpack.c.l.b16 %v3354
        %v4500 = vunpack.c.h.b16 %v3354
        %v4501 = vunpack.c.l.b16 %v3355
        %v4502 = vunpack.c.h.b16 %v3355
        %v4503 = vunpack.c.l.b16 %v3356
        %v4504 = vunpack.c.h.b16 %v3356
        %v4505 = vunpack.c.l.b16 %v3357
        %v4506 = vunpack.c.h.b16 %v3357
        %v4507 = vunpack.c.l.b16 %v3358
        %v4508 = vunpack.c.h.b16 %v3358
        %v4509 = vunpack.c.l.b16 %v3359
        %v4510 = vunpack.c.h.b16 %v3359
        %v4511 = vunpack.c.l.b16 %v3360
        %v4512 = vunpack.c.h.b16 %v3360
        %v4513 = vunpack.c.l.b16 %v3361
        %v4514 = vunpack.c.h.b16 %v3361
        %v4515 = vunpack.c.l.b16 %v3362
        %v4516 = vunpack.c.h.b16 %v3362
        %v4517 = vunpack.c.l.b16 %v3363
        %v4518 = vunpack.c.h.b16 %v3363
        %v4519 = vunpack.c.l.b16 %v3364
        %v4520 = vunpack.c.h.b16 %v3364
        %v4521 = vunpack.c.l.b16 %v3365
        %v4522 = vunpack.c.h.b16 %v3365
        %v4523 = vunpack.c.l.b16 %v3366
        %v4524 = vunpack.c.h.b16 %v3366
        %v4525 = vunpack.c.l.b16 %v3367
        %v4526 = vunpack.c.h.b16 %v3367
        %v4527 = vunpack.c.l.b16 %v3368
        %v4528 = vunpack.c.h.b16 %v3368
        %v4529 = vunpack.c.l.b16 %v3369
        %v4530 = vunpack.c.h.b16 %v3369
        %v4531 = vunpack.c.l.b16 %v3370
        %v4532 = vunpack.c.h.b16 %v3370
        %v4533 = vunpack.c.l.b16 %v3371
        %v4534 = vunpack.c.h.b16 %v3371
        %v4535 = vunpack.c.l.b16 %v3372
        %v4536 = vunpack.c.h.b16 %v3372
        %v4537 = vunpack.c.l.b16 %v3373
        %v4538 = vunpack.c.h.b16 %v3373
        %v4539 = vunpack.c.l.b16 %v3374
        %v4540 = vunpack.c.h.b16 %v3374
        %v4541 = vunpack.c.l.b16 %v3375
        %v4542 = vunpack.c.h.b16 %v3375
        %v4543 = vunpack.c.l.b16 %v3376
        %v4544 = vunpack.c.h.b16 %v3376
        %v4545 = vunpack.c.l.b16 %v3377
        %v4546 = vunpack.c.h.b16 %v3377
        %v4547 = vunpack.c.l.b16 %v3378
        %v4548 = vunpack.c.h.b16 %v3378
        %v4549 = vunpack.c.l.b16 %v3379
        %v4550 = vunpack.c.h.b16 %v3379
        %v4551 = vunpack.c.l.b16 %v3380
        %v4552 = vunpack.c.h.b16 %v3380
        %v4553 = vunpack.c.l.b16 %v3381
        %v4554 = vunpack.c.h.b16 %v3381
        %v4555 = vunpack.c.l.b16 %v3382
        %v4556 = vunpack.c.h.b16 %v3382
        %v4557 = vunpack.c.l.b16 %v3383
        %v4558 = vunpack.c.h.b16 %v3383
        %v4559 = vunpack.c.l.b16 %v3384
        %v4560 = vunpack.c.h.b16 %v3384
        %v4561 = vunpack.c.l.b16 %v3385
        %v4562 = vunpack.c.h.b16 %v3385
        %v4563 = vunpack.c.l.b16 %v3386
        %v4564 = vunpack.c.h.b16 %v3386
        %v4565 = vunpack.c.l.b16 %v3387
        %v4566 = vunpack.c.h.b16 %v3387
        %v4567 = vunpack.c.l.b16 %v3388
        %v4568 = vunpack.c.h.b16 %v3388
        %v4569 = vunpack.c.l.b16 %v3389
        %v4570 = vunpack.c.h.b16 %v3389
        %v4571 = vunpack.c.l.b16 %v3390
        %v4572 = vunpack.c.h.b16 %v3390
        %v4573 = vunpack.c.l.b16 %v3391
        %v4574 = vunpack.c.h.b16 %v3391
        %v4575 = vunpack.c.l.b16 %v3392
        %v4576 = vunpack.c.h.b16 %v3392
        %v4577 = vunpack.c.l.b16 %v3393
        %v4578 = vunpack.c.h.b16 %v3393
        %v4579 = vunpack.c.l.b16 %v3394
        %v4580 = vunpack.c.h.b16 %v3394
        %v4581 = vunpack.c.l.b16 %v3395
        %v4582 = vunpack.c.h.b16 %v3395
        %v4583 = vunpack.c.l.b16 %v3396
        %v4584 = vunpack.c.h.b16 %v3396
        %v4585 = vunpack.c.l.b16 %v3397
        %v4586 = vunpack.c.h.b16 %v3397
        %v4587 = vunpack.c.l.b16 %v3398
        %v4588 = vunpack.c.h.b16 %v3398
        %v4589 = vunpack.c.l.b16 %v3399
        %v4590 = vunpack.c.h.b16 %v3399
        %v4591 = vunpack.c.l.b16 %v3400
        %v4592 = vunpack.c.h.b16 %v3400
        %v4593 = vunpack.c.l.b16 %v3401
        %v4594 = vunpack.c.h.b16 %v3401
        %v4595 = vunpack.c.l.b16 %v3402
        %v4596 = vunpack.c.h.b16 %v3402
        %v4597 = vunpack.c.l.b16 %v3403
        %v4598 = vunpack.c.h.b16 %v3403
        %v4599 = vunpack.c.l.b16 %v3404
        %v4600 = vunpack.c.h.b16 %v3404
        %v4601 = vunpack.c.l.b16 %v3405
        %v4602 = vunpack.c.h.b16 %v3405
        %v4603 = vunpack.c.l.b16 %v3406
        %v4604 = vunpack.c.h.b16 %v3406
        %v4605 = vunpack.c.l.b16 %v3407
        %v4606 = vunpack.c.h.b16 %v3407
        %v4607 = vunpack.c.l.b16 %v3408
        %v4608 = vunpack.c.h.b16 %v3408
        %v4609 = vunpack.c.l.b16 %v3409
        %v4610 = vunpack.c.h.b16 %v3409
        %v4611 = vunpack.c.l.b16 %v3410
        %v4612 = vunpack.c.h.b16 %v3410
        %v4613 = vunpack.c.l.b16 %v3411
        %v4614 = vunpack.c.h.b16 %v3411
        %v4615 = vunpack.c.l.b16 %v3412
        %v4616 = vunpack.c.h.b16 %v3412
        %v4617 = vunpack.c.l.b16 %v3413
        %v4618 = vunpack.c.h.b16 %v3413
        %v4619 = vunpack.c.l.b16 %v3414
        %v4620 = vunpack.c.h.b16 %v3414
        %v4621 = vunpack.c.l.b16 %v3415
        %v4622 = vunpack.c.h.b16 %v3415
        %v4623 = vunpack.c.l.b16 %v3416
        %v4624 = vunpack.c.h.b16 %v3416
        %v4625 = vunpack.c.l.b16 %v3417
        %v4626 = vunpack.c.h.b16 %v3417
        %v4627 = vunpack.c.l.b16 %v3418
        %v4628 = vunpack.c.h.b16 %v3418
        %v4629 = vunpack.c.l.b16 %v3419
        %v4630 = vunpack.c.h.b16 %v3419
        %v4631 = vunpack.c.l.b16 %v3420
        %v4632 = vunpack.c.h.b16 %v3420
        %v4633 = vunpack.c.l.b16 %v3421
        %v4634 = vunpack.c.h.b16 %v3421
        %v4635 = vunpack.c.l.b16 %v3422
        %v4636 = vunpack.c.h.b16 %v3422
        %v4637 = vunpack.c.l.b16 %v3423
        %v4638 = vunpack.c.h.b16 %v3423
        %v4639 = vunpack.c.l.b16 %v3424
        %v4640 = vunpack.c.h.b16 %v3424
        %v4641 = vunpack.c.l.b16 %v3425
        %v4642 = vunpack.c.h.b16 %v3425
        %v4643 = vunpack.c.l.b16 %v3426
        %v4644 = vunpack.c.h.b16 %v3426
        %v4645 = vunpack.c.l.b16 %v3427
        %v4646 = vunpack.c.h.b16 %v3427
        %v4647 = vunpack.c.l.b16 %v3428
        %v4648 = vunpack.c.h.b16 %v3428
        %v4649 = vunpack.c.l.b16 %v3429
        %v4650 = vunpack.c.h.b16 %v3429
        %v4651 = vunpack.c.l.b16 %v3430
        %v4652 = vunpack.c.h.b16 %v3430
        %v4653 = vunpack.c.l.b16 %v3431
        %v4654 = vunpack.c.h.b16 %v3431
        %v4655 = vunpack.c.l.b16 %v3432
        %v4656 = vunpack.c.h.b16 %v3432
        %v4657 = vunpack.c.l.b16 %v3433
        %v4658 = vunpack.c.h.b16 %v3433
        %v4659 = vunpack.c.l.b16 %v3434
        %v4660 = vunpack.c.h.b16 %v3434
        %v4661 = vunpack.c.l.b16 %v3435
        %v4662 = vunpack.c.h.b16 %v3435
        %v4663 = vunpack.c.l.b16 %v3436
        %v4664 = vunpack.c.h.b16 %v3436
        %v4665 = vunpack.c.l.b16 %v3437
        %v4666 = vunpack.c.h.b16 %v3437
        %v4667 = vunpack.c.l.b16 %v3438
        %v4668 = vunpack.c.h.b16 %v3438
        %v4669 = vunpack.c.l.b16 %v3439
        %v4670 = vunpack.c.h.b16 %v3439
        %v4671 = vunpack.c.l.b16 %v3440
        %v4672 = vunpack.c.h.b16 %v3440
        %v4673 = vunpack.c.l.b16 %v3441
        %v4674 = vunpack.c.h.b16 %v3441
        %v4675 = vunpack.c.l.b16 %v3442
        %v4676 = vunpack.c.h.b16 %v3442
        %v4677 = vunpack.c.l.b16 %v3443
        %v4678 = vunpack.c.h.b16 %v3443
        %v4679 = vunpack.c.l.b16 %v3444
        %v4680 = vunpack.c.h.b16 %v3444
        %v4681 = vunpack.c.l.b16 %v3445
        %v4682 = vunpack.c.h.b16 %v3445
        %v4683 = vunpack.c.l.b16 %v3446
        %v4684 = vunpack.c.h.b16 %v3446
        %v4685 = vunpack.c.l.b16 %v3447
        %v4686 = vunpack.c.h.b16 %v3447
        %v4687 = vunpack.c.l.b16 %v3448
        %v4688 = vunpack.c.h.b16 %v3448
        %v4689 = vunpack.c.l.b16 %v3449
        %v4690 = vunpack.c.h.b16 %v3449
        %v4691 = vunpack.c.l.b16 %v3450
        %v4692 = vunpack.c.h.b16 %v3450
        %v4693 = vunpack.c.l.b16 %v3451
        %v4694 = vunpack.c.h.b16 %v3451
        %v4695 = vunpack.c.l.b16 %v3452
        %v4696 = vunpack.c.h.b16 %v3452
        %v4697 = vunpack.c.l.b16 %v3453
        %v4698 = vunpack.c.h.b16 %v3453
        %v4699 = vunpack.c.l.b16 %v3454
        %v4700 = vunpack.c.h.b16 %v3454
        %v4701 = vunpack.c.l.b16 %v3455
        %v4702 = vunpack.c.h.b16 %v3455
        %v4703 = vunpack.c.l.b16 %v3456
        %v4704 = vunpack.c.h.b16 %v3456
        %v4705 = vunpack.c.l.b16 %v3457
        %v4706 = vunpack.c.h.b16 %v3457
        %v4707 = vunpack.c.l.b16 %v3458
        %v4708 = vunpack.c.h.b16 %v3458
        %v4709 = vunpack.c.l.b16 %v3459
        %v4710 = vunpack.c.h.b16 %v3459
        %v4711 = vunpack.c.l.b16 %v3460
        %v4712 = vunpack.c.h.b16 %v3460
        %v4713 = vunpack.c.l.b16 %v3461
        %v4714 = vunpack.c.h.b16 %v3461
        %v4715 = vunpack.c.l.b16 %v3462
        %v4716 = vunpack.c.h.b16 %v3462
        %v4717 = vunpack.c.l.b16 %v3463
        %v4718 = vunpack.c.h.b16 %v3463
        %v4719 = vunpack.c.l.b16 %v3464
        %v4720 = vunpack.c.h.b16 %v3464
        %v4721 = vunpack.c.l.b16 %v3465
        %v4722 = vunpack.c.h.b16 %v3465
        %v4723 = vunpack.c.l.b16 %v3466
        %v4724 = vunpack.c.h.b16 %v3466
        %v4725 = vunpack.c.l.b16 %v3467
        %v4726 = vunpack.c.h.b16 %v3467
        %v4727 = vunpack.c.l.b16 %v3468
        %v4728 = vunpack.c.h.b16 %v3468
        %v4729 = vunpack.c.l.b16 %v3469
        %v4730 = vunpack.c.h.b16 %v3469
        %v4731 = vunpack.c.l.b16 %v3470
        %v4732 = vunpack.c.h.b16 %v3470
        %v4733 = vunpack.c.l.b16 %v3471
        %v4734 = vunpack.c.h.b16 %v3471
        %v4735 = vunpack.c.l.b16 %v3472
        %v4736 = vunpack.c.h.b16 %v3472
        %v4737 = vunpack.c.l.b16 %v3473
        %v4738 = vunpack.c.h.b16 %v3473
        %v4739 = vunpack.c.l.b16 %v3474
        %v4740 = vunpack.c.h.b16 %v3474
        %v4741 = vunpack.c.l.b16 %v3475
        %v4742 = vunpack.c.h.b16 %v3475
        %v4743 = vunpack.c.l.b16 %v3476
        %v4744 = vunpack.c.h.b16 %v3476
        %v4745 = vunpack.c.l.b16 %v3477
        %v4746 = vunpack.c.h.b16 %v3477
        %v4747 = vunpack.c.l.b16 %v3478
        %v4748 = vunpack.c.h.b16 %v3478
        %v4749 = vunpack.c.l.b16 %v3479
        %v4750 = vunpack.c.h.b16 %v3479
        %v4751 = vunpack.c.l.b16 %v3480
        %v4752 = vunpack.c.h.b16 %v3480
        %v4753 = vunpack.c.l.b16 %v3481
        %v4754 = vunpack.c.h.b16 %v3481
        %v4755 = vunpack.c.l.b16 %v3482
        %v4756 = vunpack.c.h.b16 %v3482
        %v4757 = vunpack.c.l.b16 %v3483
        %v4758 = vunpack.c.h.b16 %v3483
        %v4759 = vunpack.c.l.b16 %v3484
        %v4760 = vunpack.c.h.b16 %v3484
        %v4761 = vunpack.c.l.b16 %v3485
        %v4762 = vunpack.c.h.b16 %v3485
        %v4763 = vunpack.c.l.b16 %v3486
        %v4764 = vunpack.c.h.b16 %v3486
        %v4765 = vunpack.c.l.b16 %v3487
        %v4766 = vunpack.c.h.b16 %v3487
        %v4767 = vunpack.c.l.b16 %v3488
        %v4768 = vunpack.c.h.b16 %v3488
        %v4769 = vunpack.c.l.b16 %v3489
        %v4770 = vunpack.c.h.b16 %v3489
        %v4771 = vunpack.c.l.b16 %v3490
        %v4772 = vunpack.c.h.b16 %v3490
        %v4773 = vunpack.c.l.b16 %v3491
        %v4774 = vunpack.c.h.b16 %v3491
        %v4775 = vunpack.c.l.b16 %v3492
        %v4776 = vunpack.c.h.b16 %v3492
        %v4777 = vunpack.c.l.b16 %v3493
        %v4778 = vunpack.c.h.b16 %v3493
        %v4779 = vunpack.c.l.b16 %v3494
        %v4780 = vunpack.c.h.b16 %v3494
        %v4781 = vunpack.c.l.b16 %v3495
        %v4782 = vunpack.c.h.b16 %v3495
        %v4783 = vunpack.c.l.b16 %v3496
        %v4784 = vunpack.c.h.b16 %v3496
        %v4785 = vunpack.c.l.b16 %v3497
        %v4786 = vunpack.c.h.b16 %v3497
        %v4787 = vunpack.c.l.b16 %v3498
        %v4788 = vunpack.c.h.b16 %v3498
        %v4789 = vunpack.c.l.b16 %v3499
        %v4790 = vunpack.c.h.b16 %v3499
        %v4791 = vunpack.c.l.b16 %v3500
        %v4792 = vunpack.c.h.b16 %v3500
        %v4793 = vunpack.c.l.b16 %v3501
        %v4794 = vunpack.c.h.b16 %v3501
        %v4795 = vunpack.c.l.b16 %v3502
        %v4796 = vunpack.c.h.b16 %v3502
        %v4797 = vunpack.c.l.b16 %v3503
        %v4798 = vunpack.c.h.b16 %v3503
        %v4799 = vunpack.c.l.b16 %v3504
        %v4800 = vunpack.c.h.b16 %v3504
        %v4801 = vunpack.c.l.b16 %v3505
        %v4802 = vunpack.c.h.b16 %v3505
        %v4803 = vunpack.c.l.b16 %v3506
        %v4804 = vunpack.c.h.b16 %v3506
        %v4805 = vunpack.c.l.b16 %v3507
        %v4806 = vunpack.c.h.b16 %v3507
        %v4807 = vunpack.c.l.b16 %v3508
        %v4808 = vunpack.c.h.b16 %v3508
        %v4809 = vunpack.c.l.b16 %v3509
        %v4810 = vunpack.c.h.b16 %v3509
        %v4811 = vunpack.c.l.b16 %v3510
        %v4812 = vunpack.c.h.b16 %v3510
        %v4813 = vunpack.c.l.b16 %v3511
        %v4814 = vunpack.c.h.b16 %v3511
        %v4815 = vunpack.c.l.b16 %v3512
        %v4816 = vunpack.c.h.b16 %v3512
        %v4817 = vunpack.c.l.b16 %v3513
        %v4818 = vunpack.c.h.b16 %v3513
        %v4819 = vunpack.c.l.b16 %v3514
        %v4820 = vunpack.c.h.b16 %v3514
        %v4821 = vunpack.c.l.b16 %v3515
        %v4822 = vunpack.c.h.b16 %v3515
        %v4823 = vunpack.c.l.b16 %v3516
        %v4824 = vunpack.c.h.b16 %v3516
        %v4825 = vunpack.c.l.b16 %v3517
        %v4826 = vunpack.c.h.b16 %v3517
        %v4827 = vunpack.c.l.b16 %v3518
        %v4828 = vunpack.c.h.b16 %v3518
        %v4829 = vunpack.c.l.b16 %v3519
        %v4830 = vunpack.c.h.b16 %v3519
        %v4831 = vunpack.c.l.b16 %v3520
        %v4832 = vunpack.c.h.b16 %v3520
        %v4833 = vunpack.c.l.b16 %v3521
        %v4834 = vunpack.c.h.b16 %v3521
        %v4835 = vunpack.c.l.b16 %v3522
        %v4836 = vunpack.c.h.b16 %v3522
        %v4837 = vunpack.c.l.b16 %v3523
        %v4838 = vunpack.c.h.b16 %v3523
        %v4839 = vunpack.c.l.b16 %v3524
        %v4840 = vunpack.c.h.b16 %v3524
        %v4841 = vunpack.c.l.b16 %v3525
        %v4842 = vunpack.c.h.b16 %v3525
        %v4843 = vunpack.c.l.b16 %v3526
        %v4844 = vunpack.c.h.b16 %v3526
        %v4845 = vunpack.c.l.b16 %v3527
        %v4846 = vunpack.c.h.b16 %v3527
        %v4847 = vunpack.c.l.b16 %v3528
        %v4848 = vunpack.c.h.b16 %v3528
        %v4849 = vunpack.c.l.b16 %v3529
        %v4850 = vunpack.c.h.b16 %v3529
        %v4851 = vunpack.c.l.b16 %v3530
        %v4852 = vunpack.c.h.b16 %v3530
        %v4853 = vunpack.c.l.b16 %v3531
        %v4854 = vunpack.c.h.b16 %v3531
        %v4855 = vunpack.c.l.b16 %v3532
        %v4856 = vunpack.c.h.b16 %v3532
        %v4857 = vunpack.c.l.b16 %v3533
        %v4858 = vunpack.c.h.b16 %v3533
        %v4859 = vunpack.c.l.b16 %v3534
        %v4860 = vunpack.c.h.b16 %v3534
        %v4861 = vunpack.c.l.b16 %v3535
        %v4862 = vunpack.c.h.b16 %v3535
        %v4863 = vunpack.c.l.b16 %v3536
        %v4864 = vunpack.c.h.b16 %v3536
        %v4865 = vunpack.c.l.b16 %v3537
        %v4866 = vunpack.c.h.b16 %v3537
        %v4867 = vunpack.c.l.b16 %v3538
        %v4868 = vunpack.c.h.b16 %v3538
        %v4869 = vunpack.c.l.b16 %v3539
        %v4870 = vunpack.c.h.b16 %v3539
        %v4871 = vunpack.c.l.b16 %v3540
        %v4872 = vunpack.c.h.b16 %v3540
        %v4873 = vunpack.c.l.b16 %v3541
        %v4874 = vunpack.c.h.b16 %v3541
        %v4875 = vunpack.c.l.b16 %v3542
        %v4876 = vunpack.c.h.b16 %v3542
        %v4877 = vunpack.c.l.b16 %v3543
        %v4878 = vunpack.c.h.b16 %v3543
        %v4879 = vunpack.c.l.b16 %v3544
        %v4880 = vunpack.c.h.b16 %v3544
        %v4881 = vunpack.c.l.b16 %v3545
        %v4882 = vunpack.c.h.b16 %v3545
        %v4883 = vunpack.c.l.b16 %v3546
        %v4884 = vunpack.c.h.b16 %v3546
        %v4885 = vunpack.c.l.b16 %v3547
        %v4886 = vunpack.c.h.b16 %v3547
        %v4887 = vunpack.c.l.b16 %v3548
        %v4888 = vunpack.c.h.b16 %v3548
        %v4889 = vunpack.c.l.b16 %v3549
        %v4890 = vunpack.c.h.b16 %v3549
        %v4891 = vunpack.c.l.b16 %v3550
        %v4892 = vunpack.c.h.b16 %v3550
        %v4893 = vunpack.c.l.b16 %v3551
        %v4894 = vunpack.c.h.b16 %v3551
        %v4895 = vunpack.c.l.b16 %v3552
        %v4896 = vunpack.c.h.b16 %v3552
        %v4897 = vunpack.c.l.b16 %v3553
        %v4898 = vunpack.c.h.b16 %v3553
        %v4899 = vunpack.c.l.b16 %v3554
        %v4900 = vunpack.c.h.b16 %v3554
        %v4901 = vunpack.c.l.b16 %v3555
        %v4902 = vunpack.c.h.b16 %v3555
        %v4903 = vunpack.c.l.b16 %v3556
        %v4904 = vunpack.c.h.b16 %v3556
        %v4905 = vunpack.c.l.b16 %v3557
        %v4906 = vunpack.c.h.b16 %v3557
        %v4907 = vunpack.c.l.b16 %v3558
        %v4908 = vunpack.c.h.b16 %v3558
        %v4909 = vunpack.c.l.b16 %v3559
        %v4910 = vunpack.c.h.b16 %v3559
        %v4911 = vunpack.c.l.b16 %v3560
        %v4912 = vunpack.c.h.b16 %v3560
        %v4913 = vunpack.c.l.b16 %v3561
        %v4914 = vunpack.c.h.b16 %v3561
        %v4915 = vunpack.c.l.b16 %v3562
        %v4916 = vunpack.c.h.b16 %v3562
        %v4917 = vunpack.c.l.b16 %v3563
        %v4918 = vunpack.c.h.b16 %v3563
        %v4919 = vunpack.c.l.b16 %v3564
        %v4920 = vunpack.c.h.b16 %v3564
        %v4921 = vunpack.c.l.b16 %v3565
        %v4922 = vunpack.c.h.b16 %v3565
        %v4923 = vunpack.c.l.b16 %v3566
        %v4924 = vunpack.c.h.b16 %v3566
        %v4925 = vunpack.c.l.b16 %v3567
        %v4926 = vunpack.c.h.b16 %v3567
        %v4927 = vunpack.c.l.b16 %v3568
        %v4928 = vunpack.c.h.b16 %v3568
        %v4929 = vunpack.c.l.b16 %v3569
        %v4930 = vunpack.c.h.b16 %v3569
        %v4931 = vunpack.c.l.b16 %v3570
        %v4932 = vunpack.c.h.b16 %v3570
        %v4933 = vunpack.c.l.b16 %v3571
        %v4934 = vunpack.c.h.b16 %v3571
        %v4935 = vunpack.c.l.b16 %v3572
        %v4936 = vunpack.c.h.b16 %v3572
        %v4937 = vunpack.c.l.b16 %v3573
        %v4938 = vunpack.c.h.b16 %v3573
        %v4939 = vunpack.c.l.b16 %v3574
        %v4940 = vunpack.c.h.b16 %v3574
        %v4941 = vunpack.c.l.b16 %v3575
        %v4942 = vunpack.c.h.b16 %v3575
        %v4943 = vunpack.c.l.b16 %v3576
        %v4944 = vunpack.c.h.b16 %v3576
        %v4945 = vunpack.c.l.b16 %v3577
        %v4946 = vunpack.c.h.b16 %v3577
        %v4947 = vunpack.c.l.b16 %v3578
        %v4948 = vunpack.c.h.b16 %v3578
        %v4949 = vunpack.c.l.b16 %v3579
        %v4950 = vunpack.c.h.b16 %v3579
        %v4951 = vunpack.c.l.b16 %v3580
        %v4952 = vunpack.c.h.b16 %v3580
        %v4953 = vunpack.c.l.b16 %v3581
        %v4954 = vunpack.c.h.b16 %v3581
        %v4955 = vunpack.c.l.b16 %v3582
        %v4956 = vunpack.c.h.b16 %v3582
        %v4957 = vunpack.c.l.b16 %v3583
        %v4958 = vunpack.c.h.b16 %v3583
        %v4959 = vunpack.c.l.b16 %v3584
        %v4960 = vunpack.c.h.b16 %v3584
        %v4961 = vunpack.c.l.b16 %v3585
        %v4962 = vunpack.c.h.b16 %v3585
        %v4963 = vunpack.c.l.b16 %v3586
        %v4964 = vunpack.c.h.b16 %v3586
        %v4965 = vpack.c.b16 %v4065, %v4061
        %v4966 = vpack.c.b16 %v4066, %v4062
        %v4967 = vpack.c.b16 %v4067, %v4063
        %v4968 = vpack.c.b16 %v4068, %v4064
        %v4969 = vpack.c.b16 %v4073, %v4069
        %v4970 = vpack.c.b16 %v4074, %v4070
        %v4971 = vpack.c.b16 %v4075, %v4071
        %v4972 = vpack.c.b16 %v4076, %v4072
        %v4973 = vpack.c.b16 %v4081, %v4077
        %v4974 = vpack.c.b16 %v4082, %v4078
        %v4975 = vpack.c.b16 %v4083, %v4079
        %v4976 = vpack.c.b16 %v4084, %v4080
        %v4977 = vpack.c.b16 %v4089, %v4085
        %v4978 = vpack.c.b16 %v4090, %v4086
        %v4979 = vpack.c.b16 %v4091, %v4087
        %v4980 = vpack.c.b16 %v4092, %v4088
        %v4981 = vpack.c.b16 %v4097, %v4093
        %v4982 = vpack.c.b16 %v4098, %v4094
        %v4983 = vpack.c.b16 %v4099, %v4095
        %v4984 = vpack.c.b16 %v4100, %v4096
        %v4985 = vpack.c.b16 %v4105, %v4101
        %v4986 = vpack.c.b16 %v4106, %v4102
        %v4987 = vpack.c.b16 %v4107, %v4103
        %v4988 = vpack.c.b16 %v4108, %v4104
        %v4989 = vpack.c.b16 %v4113, %v4109
        %v4990 = vpack.c.b16 %v4114, %v4110
        %v4991 = vpack.c.b16 %v4115, %v4111
        %v4992 = vpack.c.b16 %v4116, %v4112
        %v4993 = vpack.c.b16 %v4121, %v4117
        %v4994 = vpack.c.b16 %v4122, %v4118
        %v4995 = vpack.c.b16 %v4123, %v4119
        %v4996 = vpack.c.b16 %v4124, %v4120
        %v4997 = vpack.c.b16 %v4129, %v4125
        %v4998 = vpack.c.b16 %v4130, %v4126
        %v4999 = vpack.c.b16 %v4131, %v4127
        %v5000 = vpack.c.b16 %v4132, %v4128
        %v5001 = vpack.c.b16 %v4137, %v4133
        %v5002 = vpack.c.b16 %v4138, %v4134
        %v5003 = vpack.c.b16 %v4139, %v4135
        %v5004 = vpack.c.b16 %v4140, %v4136
        %v5005 = vpack.c.b16 %v4145, %v4141
        %v5006 = vpack.c.b16 %v4146, %v4142
        %v5007 = vpack.c.b16 %v4147, %v4143
        %v5008 = vpack.c.b16 %v4148, %v4144
        %v5009 = vpack.c.b16 %v4153, %v4149
        %v5010 = vpack.c.b16 %v4154, %v4150
        %v5011 = vpack.c.b16 %v4155, %v4151
        %v5012 = vpack.c.b16 %v4156, %v4152
        %v5013 = vpack.c.b16 %v4161, %v4157
        %v5014 = vpack.c.b16 %v4162, %v4158
        %v5015 = vpack.c.b16 %v4163, %v4159
        %v5016 = vpack.c.b16 %v4164, %v4160
        %v5017 = vpack.c.b16 %v4169, %v4165
        %v5018 = vpack.c.b16 %v4170, %v4166
        %v5019 = vpack.c.b16 %v4171, %v4167
        %v5020 = vpack.c.b16 %v4172, %v4168
        %v5021 = vpack.c.b16 %v4177, %v4173
        %v5022 = vpack.c.b16 %v4178, %v4174
        %v5023 = vpack.c.b16 %v4179, %v4175
        %v5024 = vpack.c.b16 %v4180, %v4176
        %v5025 = vpack.c.b16 %v4185, %v4181
        %v5026 = vpack.c.b16 %v4186, %v4182
        %v5027 = vpack.c.b16 %v4187, %v4183
        %v5028 = vpack.c.b16 %v4188, %v4184
        %v5029 = vpack.c.b16 %v4193, %v4189
        %v5030 = vpack.c.b16 %v4194, %v4190
        %v5031 = vpack.c.b16 %v4195, %v4191
        %v5032 = vpack.c.b16 %v4196, %v4192
        %v5033 = vpack.c.b16 %v4201, %v4197
        %v5034 = vpack.c.b16 %v4202, %v4198
        %v5035 = vpack.c.b16 %v4203, %v4199
        %v5036 = vpack.c.b16 %v4204, %v4200
        %v5037 = vpack.c.b16 %v4209, %v4205
        %v5038 = vpack.c.b16 %v4210, %v4206
        %v5039 = vpack.c.b16 %v4211, %v4207
        %v5040 = vpack.c.b16 %v4212, %v4208
        %v5041 = vpack.c.b16 %v4217, %v4213
        %v5042 = vpack.c.b16 %v4218, %v4214
        %v5043 = vpack.c.b16 %v4219, %v4215
        %v5044 = vpack.c.b16 %v4220, %v4216
        %v5045 = vpack.c.b16 %v4225, %v4221
        %v5046 = vpack.c.b16 %v4226, %v4222
        %v5047 = vpack.c.b16 %v4227, %v4223
        %v5048 = vpack.c.b16 %v4228, %v4224
        %v5049 = vpack.c.b16 %v4233, %v4229
        %v5050 = vpack.c.b16 %v4234, %v4230
        %v5051 = vpack.c.b16 %v4235, %v4231
        %v5052 = vpack.c.b16 %v4236, %v4232
        %v5053 = vpack.c.b16 %v4241, %v4237
        %v5054 = vpack.c.b16 %v4242, %v4238
        %v5055 = vpack.c.b16 %v4243, %v4239
        %v5056 = vpack.c.b16 %v4244, %v4240
        %v5057 = vpack.c.b16 %v4249, %v4245
        %v5058 = vpack.c.b16 %v4250, %v4246
        %v5059 = vpack.c.b16 %v4251, %v4247
        %v5060 = vpack.c.b16 %v4252, %v4248
        %v5061 = vpack.c.b16 %v4257, %v4253
        %v5062 = vpack.c.b16 %v4258, %v4254
        %v5063 = vpack.c.b16 %v4259, %v4255
        %v5064 = vpack.c.b16 %v4260, %v4256
        %v5065 = vpack.c.b16 %v4265, %v4261
        %v5066 = vpack.c.b16 %v4266, %v4262
        %v5067 = vpack.c.b16 %v4267, %v4263
        %v5068 = vpack.c.b16 %v4268, %v4264
        %v5069 = vpack.c.b16 %v4273, %v4269
        %v5070 = vpack.c.b16 %v4274, %v4270
        %v5071 = vpack.c.b16 %v4275, %v4271
        %v5072 = vpack.c.b16 %v4276, %v4272
        %v5073 = vpack.c.b16 %v4281, %v4277
        %v5074 = vpack.c.b16 %v4282, %v4278
        %v5075 = vpack.c.b16 %v4283, %v4279
        %v5076 = vpack.c.b16 %v4284, %v4280
        %v5077 = vpack.c.b16 %v4289, %v4285
        %v5078 = vpack.c.b16 %v4290, %v4286
        %v5079 = vpack.c.b16 %v4291, %v4287
        %v5080 = vpack.c.b16 %v4292, %v4288
        %v5081 = vpack.c.b16 %v4297, %v4293
        %v5082 = vpack.c.b16 %v4298, %v4294
        %v5083 = vpack.c.b16 %v4299, %v4295
        %v5084 = vpack.c.b16 %v4300, %v4296
        %v5085 = vpack.c.b16 %v4305, %v4301
        %v5086 = vpack.c.b16 %v4306, %v4302
        %v5087 = vpack.c.b16 %v4307, %v4303
        %v5088 = vpack.c.b16 %v4308, %v4304
        %v5089 = vpack.c.b16 %v4313, %v4309
        %v5090 = vpack.c.b16 %v4314, %v4310
        %v5091 = vpack.c.b16 %v4315, %v4311
        %v5092 = vpack.c.b16 %v4316, %v4312
        %v5093 = vpack.c.b16 %v4321, %v4317
        %v5094 = vpack.c.b16 %v4322, %v4318
        %v5095 = vpack.c.b16 %v4323, %v4319
        %v5096 = vpack.c.b16 %v4324, %v4320
        %v5097 = vpack.c.b16 %v4329, %v4325
        %v5098 = vpack.c.b16 %v4330, %v4326
        %v5099 = vpack.c.b16 %v4331, %v4327
        %v5100 = vpack.c.b16 %v4332, %v4328
        %v5101 = vpack.c.b16 %v4337, %v4333
        %v5102 = vpack.c.b16 %v4338, %v4334
        %v5103 = vpack.c.b16 %v4339, %v4335
        %v5104 = vpack.c.b16 %v4340, %v4336
        %v5105 = vpack.c.b16 %v4345, %v4341
        %v5106 = vpack.c.b16 %v4346, %v4342
        %v5107 = vpack.c.b16 %v4347, %v4343
        %v5108 = vpack.c.b16 %v4348, %v4344
        %v5109 = vpack.c.b16 %v4353, %v4349
        %v5110 = vpack.c.b16 %v4354, %v4350
        %v5111 = vpack.c.b16 %v4355, %v4351
        %v5112 = vpack.c.b16 %v4356, %v4352
        %v5113 = vpack.c.b16 %v4361, %v4357
        %v5114 = vpack.c.b16 %v4362, %v4358
        %v5115 = vpack.c.b16 %v4363, %v4359
        %v5116 = vpack.c.b16 %v4364, %v4360
        %v5117 = vpack.c.b16 %v4369, %v4365
        %v5118 = vpack.c.b16 %v4370, %v4366
        %v5119 = vpack.c.b16 %v4371, %v4367
        %v5120 = vpack.c.b16 %v4372, %v4368
        %v5121 = vpack.c.b16 %v4377, %v4373
        %v5122 = vpack.c.b16 %v4378, %v4374
        %v5123 = vpack.c.b16 %v4379, %v4375
        %v5124 = vpack.c.b16 %v4380, %v4376
        %v5125 = vpack.c.b16 %v4385, %v4381
        %v5126 = vpack.c.b16 %v4386, %v4382
        %v5127 = vpack.c.b16 %v4387, %v4383
        %v5128 = vpack.c.b16 %v4388, %v4384
        %v5129 = vpack.c.b16 %v4393, %v4389
        %v5130 = vpack.c.b16 %v4394, %v4390
        %v5131 = vpack.c.b16 %v4395, %v4391
        %v5132 = vpack.c.b16 %v4396, %v4392
        %v5133 = vpack.c.b16 %v4401, %v4397
        %v5134 = vpack.c.b16 %v4402, %v4398
        %v5135 = vpack.c.b16 %v4403, %v4399
        %v5136 = vpack.c.b16 %v4404, %v4400
        %v5137 = vpack.c.b16 %v4409, %v4405
        %v5138 = vpack.c.b16 %v4410, %v4406
        %v5139 = vpack.c.b16 %v4411, %v4407
        %v5140 = vpack.c.b16 %v4412, %v4408
        %v5141 = vpack.c.b16 %v4417, %v4413
        %v5142 = vpack.c.b16 %v4418, %v4414
        %v5143 = vpack.c.b16 %v4419, %v4415
        %v5144 = vpack.c.b16 %v4420, %v4416
        %v5145 = vpack.c.b16 %v4425, %v4421
        %v5146 = vpack.c.b16 %v4426, %v4422
        %v5147 = vpack.c.b16 %v4427, %v4423
        %v5148 = vpack.c.b16 %v4428, %v4424
        %v5149 = vpack.c.b16 %v4433, %v4429
        %v5150 = vpack.c.b16 %v4434, %v4430
        %v5151 = vpack.c.b16 %v4435, %v4431
        %v5152 = vpack.c.b16 %v4436, %v4432
        %v5153 = vpack.c.b16 %v4441, %v4437
        %v5154 = vpack.c.b16 %v4442, %v4438
        %v5155 = vpack.c.b16 %v4443, %v4439
        %v5156 = vpack.c.b16 %v4444, %v4440
        %v5157 = vpack.c.b16 %v4449, %v4445
        %v5158 = vpack.c.b16 %v4450, %v4446
        %v5159 = vpack.c.b16 %v4451, %v4447
        %v5160 = vpack.c.b16 %v4452, %v4448
        %v5161 = vpack.c.b16 %v4457, %v4453
        %v5162 = vpack.c.b16 %v4458, %v4454
        %v5163 = vpack.c.b16 %v4459, %v4455
        %v5164 = vpack.c.b16 %v4460, %v4456
        %v5165 = vpack.c.b16 %v4465, %v4461
        %v5166 = vpack.c.b16 %v4466, %v4462
        %v5167 = vpack.c.b16 %v4467, %v4463
        %v5168 = vpack.c.b16 %v4468, %v4464
        %v5169 = vpack.c.b16 %v4473, %v4469
        %v5170 = vpack.c.b16 %v4474, %v4470
        %v5171 = vpack.c.b16 %v4475, %v4471
        %v5172 = vpack.c.b16 %v4476, %v4472
        %v5173 = vpack.c.b16 %v4481, %v4477
        %v5174 = vpack.c.b16 %v4482, %v4478
        %v5175 = vpack.c.b16 %v4483, %v4479
        %v5176 = vpack.c.b16 %v4484, %v4480
        %v5177 = vpack.c.b16 %v4489, %v4485
        %v5178 = vpack.c.b16 %v4490, %v4486
        %v5179 = vpack.c.b16 %v4491, %v4487
        %v5180 = vpack.c.b16 %v4492, %v4488
        %v5181 = vpack.c.b16 %v4497, %v4493
        %v5182 = vpack.c.b16 %v4498, %v4494
        %v5183 = vpack.c.b16 %v4499, %v4495
        %v5184 = vpack.c.b16 %v4500, %v4496
        %v5185 = vpack.c.b16 %v4505, %v4501
        %v5186 = vpack.c.b16 %v4506, %v4502
        %v5187 = vpack.c.b16 %v4507, %v4503
        %v5188 = vpack.c.b16 %v4508, %v4504
        %v5189 = vpack.c.b16 %v4513, %v4509
        %v5190 = vpack.c.b16 %v4514, %v4510
        %v5191 = vpack.c.b16 %v4515, %v4511
        %v5192 = vpack.c.b16 %v4516, %v4512
        %v5193 = vpack.c.b16 %v4521, %v4517
        %v5194 = vpack.c.b16 %v4522, %v4518
        %v5195 = vpack.c.b16 %v4523, %v4519
        %v5196 = vpack.c.b16 %v4524, %v4520
        %v5197 = vpack.c.b16 %v4529, %v4525
        %v5198 = vpack.c.b16 %v4530, %v4526
        %v5199 = vpack.c.b16 %v4531, %v4527
        %v5200 = vpack.c.b16 %v4532, %v4528
        %v5201 = vpack.c.b16 %v4537, %v4533
        %v5202 = vpack.c.b16 %v4538, %v4534
        %v5203 = vpack.c.b16 %v4539, %v4535
        %v5204 = vpack.c.b16 %v4540, %v4536
        %v5205 = vpack.c.b16 %v4545, %v4541
        %v5206 = vpack.c.b16 %v4546, %v4542
        %v5207 = vpack.c.b16 %v4547, %v4543
        %v5208 = vpack.c.b16 %v4548, %v4544
        %v5209 = vpack.c.b16 %v4553, %v4549
        %v5210 = vpack.c.b16 %v4554, %v4550
        %v5211 = vpack.c.b16 %v4555, %v4551
        %v5212 = vpack.c.b16 %v4556, %v4552
        %v5213 = vpack.c.b16 %v4561, %v4557
        %v5214 = vpack.c.b16 %v4562, %v4558
        %v5215 = vpack.c.b16 %v4563, %v4559
        %v5216 = vpack.c.b16 %v4564, %v4560
        %v5217 = vpack.c.b16 %v4569, %v4565
        %v5218 = vpack.c.b16 %v4570, %v4566
        %v5219 = vpack.c.b16 %v4571, %v4567
        %v5220 = vpack.c.b16 %v4572, %v4568
        %v5221 = vpack.c.b16 %v4577, %v4573
        %v5222 = vpack.c.b16 %v4578, %v4574
        %v5223 = vpack.c.b16 %v4579, %v4575
        %v5224 = vpack.c.b16 %v4580, %v4576
        %v5225 = vpack.c.b16 %v4585, %v4581
        %v5226 = vpack.c.b16 %v4586, %v4582
        %v5227 = vpack.c.b16 %v4587, %v4583
        %v5228 = vpack.c.b16 %v4588, %v4584
        %v5229 = vpack.c.b16 %v4593, %v4589
        %v5230 = vpack.c.b16 %v4594, %v4590
        %v5231 = vpack.c.b16 %v4595, %v4591
        %v5232 = vpack.c.b16 %v4596, %v4592
        %v5233 = vpack.c.b16 %v4601, %v4597
        %v5234 = vpack.c.b16 %v4602, %v4598
        %v5235 = vpack.c.b16 %v4603, %v4599
        %v5236 = vpack.c.b16 %v4604, %v4600
        %v5237 = vpack.c.b16 %v4609, %v4605
        %v5238 = vpack.c.b16 %v4610, %v4606
        %v5239 = vpack.c.b16 %v4611, %v4607
        %v5240 = vpack.c.b16 %v4612, %v4608
        %v5241 = vpack.c.b16 %v4617, %v4613
        %v5242 = vpack.c.b16 %v4618, %v4614
        %v5243 = vpack.c.b16 %v4619, %v4615
        %v5244 = vpack.c.b16 %v4620, %v4616
        %v5245 = vpack.c.b16 %v4625, %v4621
        %v5246 = vpack.c.b16 %v4626, %v4622
        %v5247 = vpack.c.b16 %v4627, %v4623
        %v5248 = vpack.c.b16 %v4628, %v4624
        %v5249 = vpack.c.b16 %v4633, %v4629
        %v5250 = vpack.c.b16 %v4634, %v4630
        %v5251 = vpack.c.b16 %v4635, %v4631
        %v5252 = vpack.c.b16 %v4636, %v4632
        %v5253 = vpack.c.b16 %v4641, %v4637
        %v5254 = vpack.c.b16 %v4642, %v4638
        %v5255 = vpack.c.b16 %v4643, %v4639
        %v5256 = vpack.c.b16 %v4644, %v4640
        %v5257 = vpack.c.b16 %v4649, %v4645
        %v5258 = vpack.c.b16 %v4650, %v4646
        %v5259 = vpack.c.b16 %v4651, %v4647
        %v5260 = vpack.c.b16 %v4652, %v4648
        %v5261 = vpack.c.b16 %v4657, %v4653
        %v5262 = vpack.c.b16 %v4658, %v4654
        %v5263 = vpack.c.b16 %v4659, %v4655
        %v5264 = vpack.c.b16 %v4660, %v4656
        %v5265 = vpack.c.b16 %v4665, %v4661
        %v5266 = vpack.c.b16 %v4666, %v4662
        %v5267 = vpack.c.b16 %v4667, %v4663
        %v5268 = vpack.c.b16 %v4668, %v4664
        %v5269 = vpack.c.b16 %v4673, %v4669
        %v5270 = vpack.c.b16 %v4674, %v4670
        %v5271 = vpack.c.b16 %v4675, %v4671
        %v5272 = vpack.c.b16 %v4676, %v4672
        %v5273 = vpack.c.b16 %v4681, %v4677
        %v5274 = vpack.c.b16 %v4682, %v4678
        %v5275 = vpack.c.b16 %v4683, %v4679
        %v5276 = vpack.c.b16 %v4684, %v4680
        %v5277 = vpack.c.b16 %v4689, %v4685
        %v5278 = vpack.c.b16 %v4690, %v4686
        %v5279 = vpack.c.b16 %v4691, %v4687
        %v5280 = vpack.c.b16 %v4692, %v4688
        %v5281 = vpack.c.b16 %v4697, %v4693
        %v5282 = vpack.c.b16 %v4698, %v4694
        %v5283 = vpack.c.b16 %v4699, %v4695
        %v5284 = vpack.c.b16 %v4700, %v4696
        %v5285 = vpack.c.b16 %v4705, %v4701
        %v5286 = vpack.c.b16 %v4706, %v4702
        %v5287 = vpack.c.b16 %v4707, %v4703
        %v5288 = vpack.c.b16 %v4708, %v4704
        %v5289 = vpack.c.b16 %v4713, %v4709
        %v5290 = vpack.c.b16 %v4714, %v4710
        %v5291 = vpack.c.b16 %v4715, %v4711
        %v5292 = vpack.c.b16 %v4716, %v4712
        %v5293 = vpack.c.b16 %v4721, %v4717
        %v5294 = vpack.c.b16 %v4722, %v4718
        %v5295 = vpack.c.b16 %v4723, %v4719
        %v5296 = vpack.c.b16 %v4724, %v4720
        %v5297 = vpack.c.b16 %v4729, %v4725
        %v5298 = vpack.c.b16 %v4730, %v4726
        %v5299 = vpack.c.b16 %v4731, %v4727
        %v5300 = vpack.c.b16 %v4732, %v4728
        %v5301 = vpack.c.b16 %v4737, %v4733
        %v5302 = vpack.c.b16 %v4738, %v4734
        %v5303 = vpack.c.b16 %v4739, %v4735
        %v5304 = vpack.c.b16 %v4740, %v4736
        %v5305 = vpack.c.b16 %v4745, %v4741
        %v5306 = vpack.c.b16 %v4746, %v4742
        %v5307 = vpack.c.b16 %v4747, %v4743
        %v5308 = vpack.c.b16 %v4748, %v4744
        %v5309 = vpack.c.b16 %v4753, %v4749
        %v5310 = vpack.c.b16 %v4754, %v4750
        %v5311 = vpack.c.b16 %v4755, %v4751
        %v5312 = vpack.c.b16 %v4756, %v4752
        %v5313 = vpack.c.b16 %v4761, %v4757
        %v5314 = vpack.c.b16 %v4762, %v4758
        %v5315 = vpack.c.b16 %v4763, %v4759
        %v5316 = vpack.c.b16 %v4764, %v4760
        %v5317 = vpack.c.b16 %v4769, %v4765
        %v5318 = vpack.c.b16 %v4770, %v4766
        %v5319 = vpack.c.b16 %v4771, %v4767
        %v5320 = vpack.c.b16 %v4772, %v4768
        %v5321 = vpack.c.b16 %v4777, %v4773
        %v5322 = vpack.c.b16 %v4778, %v4774
        %v5323 = vpack.c.b16 %v4779, %v4775
        %v5324 = vpack.c.b16 %v4780, %v4776
        %v5325 = vpack.c.b16 %v4785, %v4781
        %v5326 = vpack.c.b16 %v4786, %v4782
        %v5327 = vpack.c.b16 %v4787, %v4783
        %v5328 = vpack.c.b16 %v4788, %v4784
        %v5329 = vpack.c.b16 %v4793, %v4789
        %v5330 = vpack.c.b16 %v4794, %v4790
        %v5331 = vpack.c.b16 %v4795, %v4791
        %v5332 = vpack.c.b16 %v4796, %v4792
        %v5333 = vpack.c.b16 %v4801, %v4797
        %v5334 = vpack.c.b16 %v4802, %v4798
        %v5335 = vpack.c.b16 %v4803, %v4799
        %v5336 = vpack.c.b16 %v4804, %v4800
        %v5337 = vpack.c.b16 %v4809, %v4805
        %v5338 = vpack.c.b16 %v4810, %v4806
        %v5339 = vpack.c.b16 %v4811, %v4807
        %v5340 = vpack.c.b16 %v4812, %v4808
        %v5341 = vpack.c.b16 %v4817, %v4813
        %v5342 = vpack.c.b16 %v4818, %v4814
        %v5343 = vpack.c.b16 %v4819, %v4815
        %v5344 = vpack.c.b16 %v4820, %v4816
        %v5345 = vpack.c.b16 %v4825, %v4821
        %v5346 = vpack.c.b16 %v4826, %v4822
        %v5347 = vpack.c.b16 %v4827, %v4823
        %v5348 = vpack.c.b16 %v4828, %v4824
        %v5349 = vpack.c.b16 %v4833, %v4829
        %v5350 = vpack.c.b16 %v4834, %v4830
        %v5351 = vpack.c.b16 %v4835, %v4831
        %v5352 = vpack.c.b16 %v4836, %v4832
        %v5353 = vpack.c.b16 %v4841, %v4837
        %v5354 = vpack.c.b16 %v4842, %v4838
        %v5355 = vpack.c.b16 %v4843, %v4839
        %v5356 = vpack.c.b16 %v4844, %v4840
        %v5357 = vpack.c.b16 %v4849, %v4845
        %v5358 = vpack.c.b16 %v4850, %v4846
        %v5359 = vpack.c.b16 %v4851, %v4847
        %v5360 = vpack.c.b16 %v4852, %v4848
        %v5361 = vpack.c.b16 %v4857, %v4853
        %v5362 = vpack.c.b16 %v4858, %v4854
        %v5363 = vpack.c.b16 %v4859, %v4855
        %v5364 = vpack.c.b16 %v4860, %v4856
        %v5365 = vpack.c.b16 %v4865, %v4861
        %v5366 = vpack.c.b16 %v4866, %v4862
        %v5367 = vpack.c.b16 %v4867, %v4863
        %v5368 = vpack.c.b16 %v4868, %v4864
        %v5369 = vpack.c.b16 %v4873, %v4869
        %v5370 = vpack.c.b16 %v4874, %v4870
        %v5371 = vpack.c.b16 %v4875, %v4871
        %v5372 = vpack.c.b16 %v4876, %v4872
        %v5373 = vpack.c.b16 %v4881, %v4877
        %v5374 = vpack.c.b16 %v4882, %v4878
        %v5375 = vpack.c.b16 %v4883, %v4879
        %v5376 = vpack.c.b16 %v4884, %v4880
        %v5377 = vpack.c.b16 %v4889, %v4885
        %v5378 = vpack.c.b16 %v4890, %v4886
        %v5379 = vpack.c.b16 %v4891, %v4887
        %v5380 = vpack.c.b16 %v4892, %v4888
        %v5381 = vpack.c.b16 %v4897, %v4893
        %v5382 = vpack.c.b16 %v4898, %v4894
        %v5383 = vpack.c.b16 %v4899, %v4895
        %v5384 = vpack.c.b16 %v4900, %v4896
        %v5385 = vpack.c.b16 %v4905, %v4901
        %v5386 = vpack.c.b16 %v4906, %v4902
        %v5387 = vpack.c.b16 %v4907, %v4903
        %v5388 = vpack.c.b16 %v4908, %v4904
        %v5389 = vpack.c.b16 %v4913, %v4909
        %v5390 = vpack.c.b16 %v4914, %v4910
        %v5391 = vpack.c.b16 %v4915, %v4911
        %v5392 = vpack.c.b16 %v4916, %v4912
        %v5393 = vpack.c.b16 %v4921, %v4917
        %v5394 = vpack.c.b16 %v4922, %v4918
        %v5395 = vpack.c.b16 %v4923, %v4919
        %v5396 = vpack.c.b16 %v4924, %v4920
        %v5397 = vpack.c.b16 %v4929, %v4925
        %v5398 = vpack.c.b16 %v4930, %v4926
        %v5399 = vpack.c.b16 %v4931, %v4927
        %v5400 = vpack.c.b16 %v4932, %v4928
        %v5401 = vpack.c.b16 %v4937, %v4933
        %v5402 = vpack.c.b16 %v4938, %v4934
        %v5403 = vpack.c.b16 %v4939, %v4935
        %v5404 = vpack.c.b16 %v4940, %v4936
        %v5405 = vpack.c.b16 %v4945, %v4941
        %v5406 = vpack.c.b16 %v4946, %v4942
        %v5407 = vpack.c.b16 %v4947, %v4943
        %v5408 = vpack.c.b16 %v4948, %v4944
        %v5409 = vpack.c.b16 %v4953, %v4949
        %v5410 = vpack.c.b16 %v4954, %v4950
        %v5411 = vpack.c.b16 %v4955, %v4951
        %v5412 = vpack.c.b16 %v4956, %v4952
        %v5413 = vpack.c.b16 %v4961, %v4957
        %v5414 = vpack.c.b16 %v4962, %v4958
        %v5415 = vpack.c.b16 %v4963, %v4959
        %v5416 = vpack.c.b16 %v4964, %v4960
        %v5870 = vsel %vm3103, %v3134, 0
        %5872 = vmatprep.subr.bf16.mxu0 %v4994
        %5873 = vmatpush1.bf16.msra.mxu0 %v4993
        %5874 = vmatprep.subr.bf16.mxu0 %v4990
        %5875 = vmatpush1.bf16.msra.mxu0 %v4989
        %5876 = vmatprep.subr.bf16.mxu0 %v4986
        %5877 = vmatpush1.bf16.msra.mxu0 %v4985
        %5878 = vmatprep.subr.bf16.mxu0 %v4982
        %5879 = vmatpush1.bf16.msra.mxu0 %v4981
        %5880 = vmatprep.subr.bf16.mxu0 %v4978
        %5881 = vmatpush1.bf16.msra.mxu0 %v4977
        %5882 = vmatprep.subr.bf16.mxu0 %v4974
        %5883 = vmatpush1.bf16.msra.mxu0 %v4973
        %5884 = vmatprep.subr.bf16.mxu0 %v4970
        %5885 = vmatpush1.bf16.msra.mxu0 %v4969
        %5886 = vmatprep.subr.bf16.mxu0 %v4966
        %5887 = vmatpush1.bf16.msra.mxu0 %v4965
        %5888 = vmatprep.subr.bf16.mxu0 %v5026
        %5889 = vmatpush2.bf16.msra.mxu0 %v5025
        %5890 = vmatprep.subr.bf16.mxu0 %v5022
        %5891 = vmatpush2.bf16.msra.mxu0 %v5021
        %5892 = vmatprep.subr.bf16.mxu0 %v5018
        %5893 = vmatpush2.bf16.msra.mxu0 %v5017
        %5894 = vmatprep.subr.bf16.mxu0 %v5014
        %5895 = vmatpush2.bf16.msra.mxu0 %v5013
        %5896 = vmatprep.subr.bf16.mxu0 %v5010
        %5897 = vmatpush2.bf16.msra.mxu0 %v5009
        %5898 = vmatprep.subr.bf16.mxu0 %v5006
        %5899 = vmatpush2.bf16.msra.mxu0 %v5005
        %5900 = vmatprep.subr.bf16.mxu0 %v5002
        %5901 = vmatpush2.bf16.msra.mxu0 %v5001
        %5902 = vmatprep.subr.bf16.mxu0 %v4998
        %5903 = vmatpush2.bf16.msra.mxu0 %v4997
        %5904 = vmatprep.mubr.bf16.mxu0 %v3121
        %5905 = vmatmul.mubr.bf16.gmra.mxu0 %v3120
        %v5906 = vpop.f32.mrf.mxu0
        %v5907 = vadd.f32 %v3592, %v5906
        %v5908 = vpop.f32.mrf.mxu0
        %v5909 = vadd.f32 %v3596, %v5908
        %v5910 = vpop.f32.mrf.mxu0
        %v5911 = vpop.f32.mrf.mxu0
        %5912 = vdwg.mxu0
        %5913 = vmatprep.subr.bf16.mxu0 %v5058
        %5914 = vmatpush1.bf16.msra.mxu0 %v5057
        %5915 = vmatprep.subr.bf16.mxu0 %v5054
        %5916 = vmatpush1.bf16.msra.mxu0 %v5053
        %5917 = vmatprep.subr.bf16.mxu0 %v5050
        %5918 = vmatpush1.bf16.msra.mxu0 %v5049
        %5919 = vmatprep.subr.bf16.mxu0 %v5046
        %5920 = vmatpush1.bf16.msra.mxu0 %v5045
        %5921 = vmatprep.subr.bf16.mxu0 %v5042
        %5922 = vmatpush1.bf16.msra.mxu0 %v5041
        %5923 = vmatprep.subr.bf16.mxu0 %v5038
        %5924 = vmatpush1.bf16.msra.mxu0 %v5037
        %5925 = vmatprep.subr.bf16.mxu0 %v5034
        %5926 = vmatpush1.bf16.msra.mxu0 %v5033
        %5927 = vmatprep.subr.bf16.mxu0 %v5030
        %5928 = vmatpush1.bf16.msra.mxu0 %v5029
        %5929 = vmatprep.subr.bf16.mxu0 %v5090
        %5930 = vmatpush2.bf16.msra.mxu0 %v5089
        %5931 = vmatprep.subr.bf16.mxu0 %v5086
        %5932 = vmatpush2.bf16.msra.mxu0 %v5085
        %5933 = vmatprep.subr.bf16.mxu0 %v5082
        %5934 = vmatpush2.bf16.msra.mxu0 %v5081
        %5935 = vmatprep.subr.bf16.mxu0 %v5078
        %5936 = vmatpush2.bf16.msra.mxu0 %v5077
        %5937 = vmatprep.subr.bf16.mxu0 %v5074
        %5938 = vmatpush2.bf16.msra.mxu0 %v5073
        %5939 = vmatprep.subr.bf16.mxu0 %v5070
        %5940 = vmatpush2.bf16.msra.mxu0 %v5069
        %5941 = vmatprep.subr.bf16.mxu0 %v5066
        %5942 = vmatpush2.bf16.msra.mxu0 %v5065
        %5943 = vmatprep.subr.bf16.mxu0 %v5062
        %5944 = vmatpush2.bf16.msra.mxu0 %v5061
        %5945 = vmatprep.mubr.bf16.mxu0 %v3123
        %5946 = vmatmul.mubr.bf16.gmra.mxu0 %v3122
        %v5947 = vpop.f32.mrf.mxu0
        %v5948 = vadd.f32 %v5907, %v5947
        %v5949 = vpop.f32.mrf.mxu0
        %v5950 = vadd.f32 %v5909, %v5949
        %v5951 = vpop.f32.mrf.mxu0
        %v5952 = vpop.f32.mrf.mxu0
        %5953 = vdwg.mxu0
        %5954 = vmatprep.subr.bf16.mxu0 %v5122
        %5955 = vmatpush1.bf16.msra.mxu0 %v5121
        %5956 = vmatprep.subr.bf16.mxu0 %v5118
        %5957 = vmatpush1.bf16.msra.mxu0 %v5117
        %5958 = vmatprep.subr.bf16.mxu0 %v5114
        %5959 = vmatpush1.bf16.msra.mxu0 %v5113
        %5960 = vmatprep.subr.bf16.mxu0 %v5110
        %5961 = vmatpush1.bf16.msra.mxu0 %v5109
        %5962 = vmatprep.subr.bf16.mxu0 %v5106
        %5963 = vmatpush1.bf16.msra.mxu0 %v5105
        %5964 = vmatprep.subr.bf16.mxu0 %v5102
        %5965 = vmatpush1.bf16.msra.mxu0 %v5101
        %5966 = vmatprep.subr.bf16.mxu0 %v5098
        %5967 = vmatpush1.bf16.msra.mxu0 %v5097
        %5968 = vmatprep.subr.bf16.mxu0 %v5094
        %5969 = vmatpush1.bf16.msra.mxu0 %v5093
        %5970 = vmatprep.subr.bf16.mxu0 %v5154
        %5971 = vmatpush2.bf16.msra.mxu0 %v5153
        %5972 = vmatprep.subr.bf16.mxu0 %v5150
        %5973 = vmatpush2.bf16.msra.mxu0 %v5149
        %5974 = vmatprep.subr.bf16.mxu0 %v5146
        %5975 = vmatpush2.bf16.msra.mxu0 %v5145
        %5976 = vmatprep.subr.bf16.mxu0 %v5142
        %5977 = vmatpush2.bf16.msra.mxu0 %v5141
        %5978 = vmatprep.subr.bf16.mxu0 %v5138
        %5979 = vmatpush2.bf16.msra.mxu0 %v5137
        %5980 = vmatprep.subr.bf16.mxu0 %v5134
        %5981 = vmatpush2.bf16.msra.mxu0 %v5133
        %5982 = vmatprep.subr.bf16.mxu0 %v5130
        %5983 = vmatpush2.bf16.msra.mxu0 %v5129
        %5984 = vmatprep.subr.bf16.mxu0 %v5126
        %5985 = vmatpush2.bf16.msra.mxu0 %v5125
        %5986 = vmatprep.mubr.bf16.mxu0 %v3125
        %5987 = vmatmul.mubr.bf16.gmra.mxu0 %v3124
        %v5988 = vpop.f32.mrf.mxu0
        %v5989 = vadd.f32 %v5948, %v5988
        %v5990 = vpop.f32.mrf.mxu0
        %v5991 = vadd.f32 %v5950, %v5990
        %v5992 = vpop.f32.mrf.mxu0
        %v5993 = vpop.f32.mrf.mxu0
        %5994 = vdwg.mxu0
        %5995 = vmatprep.subr.bf16.mxu0 %v5186
        %5996 = vmatpush1.bf16.msra.mxu0 %v5185
        %5997 = vmatprep.subr.bf16.mxu0 %v5182
        %5998 = vmatpush1.bf16.msra.mxu0 %v5181
        %5999 = vmatprep.subr.bf16.mxu0 %v5178
        %6000 = vmatpush1.bf16.msra.mxu0 %v5177
        %6001 = vmatprep.subr.bf16.mxu0 %v5174
        %6002 = vmatpush1.bf16.msra.mxu0 %v5173
        %6003 = vmatprep.subr.bf16.mxu0 %v5170
        %6004 = vmatpush1.bf16.msra.mxu0 %v5169
        %6005 = vmatprep.subr.bf16.mxu0 %v5166
        %6006 = vmatpush1.bf16.msra.mxu0 %v5165
        %6007 = vmatprep.subr.bf16.mxu0 %v5162
        %6008 = vmatpush1.bf16.msra.mxu0 %v5161
        %6009 = vmatprep.subr.bf16.mxu0 %v5158
        %6010 = vmatpush1.bf16.msra.mxu0 %v5157
        %6011 = vmatprep.subr.bf16.mxu0 %v5218
        %6012 = vmatpush2.bf16.msra.mxu0 %v5217
        %6013 = vmatprep.subr.bf16.mxu0 %v5214
        %6014 = vmatpush2.bf16.msra.mxu0 %v5213
        %6015 = vmatprep.subr.bf16.mxu0 %v5210
        %6016 = vmatpush2.bf16.msra.mxu0 %v5209
        %6017 = vmatprep.subr.bf16.mxu0 %v5206
        %6018 = vmatpush2.bf16.msra.mxu0 %v5205
        %6019 = vmatprep.subr.bf16.mxu0 %v5202
        %6020 = vmatpush2.bf16.msra.mxu0 %v5201
        %6021 = vmatprep.subr.bf16.mxu0 %v5198
        %6022 = vmatpush2.bf16.msra.mxu0 %v5197
        %6023 = vmatprep.subr.bf16.mxu0 %v5194
        %6024 = vmatpush2.bf16.msra.mxu0 %v5193
        %6025 = vmatprep.subr.bf16.mxu0 %v5190
        %6026 = vmatpush2.bf16.msra.mxu0 %v5189
        %6027 = vmatprep.mubr.bf16.mxu0 %v3127
        %6028 = vmatmul.mubr.bf16.gmra.mxu0 %v3126
        %v6029 = vpop.f32.mrf.mxu0
        %v6030 = vadd.f32 %v5989, %v6029
        %v6031 = vpop.f32.mrf.mxu0
        %v6032 = vadd.f32 %v5991, %v6031
        %v6033 = vpop.f32.mrf.mxu0
        %v6034 = vpop.f32.mrf.mxu0
        %6035 = vdwg.mxu0
        %6036 = vmatprep.subr.bf16.mxu0 %v5250
        %6037 = vmatpush1.bf16.msra.mxu0 %v5249
        %6038 = vmatprep.subr.bf16.mxu0 %v5246
        %6039 = vmatpush1.bf16.msra.mxu0 %v5245
        %6040 = vmatprep.subr.bf16.mxu0 %v5242
        %6041 = vmatpush1.bf16.msra.mxu0 %v5241
        %6042 = vmatprep.subr.bf16.mxu0 %v5238
        %6043 = vmatpush1.bf16.msra.mxu0 %v5237
        %6044 = vmatprep.subr.bf16.mxu0 %v5234
        %6045 = vmatpush1.bf16.msra.mxu0 %v5233
        %6046 = vmatprep.subr.bf16.mxu0 %v5230
        %6047 = vmatpush1.bf16.msra.mxu0 %v5229
        %6048 = vmatprep.subr.bf16.mxu0 %v5226
        %6049 = vmatpush1.bf16.msra.mxu0 %v5225
        %6050 = vmatprep.subr.bf16.mxu0 %v5222
        %6051 = vmatpush1.bf16.msra.mxu0 %v5221
        %6052 = vmatprep.subr.bf16.mxu0 %v5282
        %6053 = vmatpush2.bf16.msra.mxu0 %v5281
        %6054 = vmatprep.subr.bf16.mxu0 %v5278
        %6055 = vmatpush2.bf16.msra.mxu0 %v5277
        %6056 = vmatprep.subr.bf16.mxu0 %v5274
        %6057 = vmatpush2.bf16.msra.mxu0 %v5273
        %6058 = vmatprep.subr.bf16.mxu0 %v5270
        %6059 = vmatpush2.bf16.msra.mxu0 %v5269
        %6060 = vmatprep.subr.bf16.mxu0 %v5266
        %6061 = vmatpush2.bf16.msra.mxu0 %v5265
        %6062 = vmatprep.subr.bf16.mxu0 %v5262
        %6063 = vmatpush2.bf16.msra.mxu0 %v5261
        %6064 = vmatprep.subr.bf16.mxu0 %v5258
        %6065 = vmatpush2.bf16.msra.mxu0 %v5257
        %6066 = vmatprep.subr.bf16.mxu0 %v5254
        %6067 = vmatpush2.bf16.msra.mxu0 %v5253
        %6068 = vmatprep.mubr.bf16.mxu0 %v3129
        %6069 = vmatmul.mubr.bf16.gmra.mxu0 %v3128
        %v6070 = vpop.f32.mrf.mxu0
        %v6071 = vadd.f32 %v6030, %v6070
        %v6072 = vpop.f32.mrf.mxu0
        %v6073 = vadd.f32 %v6032, %v6072
        %v6074 = vpop.f32.mrf.mxu0
        %v6075 = vpop.f32.mrf.mxu0
        %6076 = vdwg.mxu0
        %6077 = vmatprep.subr.bf16.mxu0 %v5314
        %6078 = vmatpush1.bf16.msra.mxu0 %v5313
        %6079 = vmatprep.subr.bf16.mxu0 %v5310
        %6080 = vmatpush1.bf16.msra.mxu0 %v5309
        %6081 = vmatprep.subr.bf16.mxu0 %v5306
        %6082 = vmatpush1.bf16.msra.mxu0 %v5305
        %6083 = vmatprep.subr.bf16.mxu0 %v5302
        %6084 = vmatpush1.bf16.msra.mxu0 %v5301
        %6085 = vmatprep.subr.bf16.mxu0 %v5298
        %6086 = vmatpush1.bf16.msra.mxu0 %v5297
        %6087 = vmatprep.subr.bf16.mxu0 %v5294
        %6088 = vmatpush1.bf16.msra.mxu0 %v5293
        %6089 = vmatprep.subr.bf16.mxu0 %v5290
        %6090 = vmatpush1.bf16.msra.mxu0 %v5289
        %6091 = vmatprep.subr.bf16.mxu0 %v5286
        %6092 = vmatpush1.bf16.msra.mxu0 %v5285
        %6093 = vmatprep.subr.bf16.mxu0 %v5346
        %6094 = vmatpush2.bf16.msra.mxu0 %v5345
        %6095 = vmatprep.subr.bf16.mxu0 %v5342
        %6096 = vmatpush2.bf16.msra.mxu0 %v5341
        %6097 = vmatprep.subr.bf16.mxu0 %v5338
        %6098 = vmatpush2.bf16.msra.mxu0 %v5337
        %6099 = vmatprep.subr.bf16.mxu0 %v5334
        %6100 = vmatpush2.bf16.msra.mxu0 %v5333
        %6101 = vmatprep.subr.bf16.mxu0 %v5330
        %6102 = vmatpush2.bf16.msra.mxu0 %v5329
        %6103 = vmatprep.subr.bf16.mxu0 %v5326
        %6104 = vmatpush2.bf16.msra.mxu0 %v5325
        %6105 = vmatprep.subr.bf16.mxu0 %v5322
        %6106 = vmatpush2.bf16.msra.mxu0 %v5321
        %6107 = vmatprep.subr.bf16.mxu0 %v5318
        %6108 = vmatpush2.bf16.msra.mxu0 %v5317
        %6109 = vmatprep.mubr.bf16.mxu0 %v3131
        %6110 = vmatmul.mubr.bf16.gmra.mxu0 %v3130
        %v6111 = vpop.f32.mrf.mxu0
        %v6112 = vadd.f32 %v6071, %v6111
        %v6113 = vpop.f32.mrf.mxu0
        %v6114 = vadd.f32 %v6073, %v6113
        %v6115 = vpop.f32.mrf.mxu0
        %v6116 = vpop.f32.mrf.mxu0
        %6117 = vdwg.mxu0
        %6118 = vmatprep.subr.bf16.mxu0 %v5378
        %6119 = vmatpush1.bf16.msra.mxu0 %v5377
        %6120 = vmatprep.subr.bf16.mxu0 %v5374
        %6121 = vmatpush1.bf16.msra.mxu0 %v5373
        %6122 = vmatprep.subr.bf16.mxu0 %v5370
        %6123 = vmatpush1.bf16.msra.mxu0 %v5369
        %6124 = vmatprep.subr.bf16.mxu0 %v5366
        %6125 = vmatpush1.bf16.msra.mxu0 %v5365
        %6126 = vmatprep.subr.bf16.mxu0 %v5362
        %6127 = vmatpush1.bf16.msra.mxu0 %v5361
        %6128 = vmatprep.subr.bf16.mxu0 %v5358
        %6129 = vmatpush1.bf16.msra.mxu0 %v5357
        %6130 = vmatprep.subr.bf16.mxu0 %v5354
        %6131 = vmatpush1.bf16.msra.mxu0 %v5353
        %6132 = vmatprep.subr.bf16.mxu0 %v5350
        %6133 = vmatpush1.bf16.msra.mxu0 %v5349
        %6134 = vmatprep.subr.bf16.mxu0 %v5410
        %6135 = vmatpush2.bf16.msra.mxu0 %v5409
        %6136 = vmatprep.subr.bf16.mxu0 %v5406
        %6137 = vmatpush2.bf16.msra.mxu0 %v5405
        %6138 = vmatprep.subr.bf16.mxu0 %v5402
        %6139 = vmatpush2.bf16.msra.mxu0 %v5401
        %6140 = vmatprep.subr.bf16.mxu0 %v5398
        %6141 = vmatpush2.bf16.msra.mxu0 %v5397
        %6142 = vmatprep.subr.bf16.mxu0 %v5394
        %6143 = vmatpush2.bf16.msra.mxu0 %v5393
        %6144 = vmatprep.subr.bf16.mxu0 %v5390
        %6145 = vmatpush2.bf16.msra.mxu0 %v5389
        %6146 = vmatprep.subr.bf16.mxu0 %v5386
        %6147 = vmatpush2.bf16.msra.mxu0 %v5385
        %6148 = vmatprep.subr.bf16.mxu0 %v5382
        %6149 = vmatpush2.bf16.msra.mxu0 %v5381
        %6150 = vmatprep.mubr.bf16.mxu0 %v3133
        %6151 = vmatmul.mubr.bf16.gmra.mxu0 %v3132
        %v6152 = vpop.f32.mrf.mxu0
        %v6153 = vadd.f32 %v6112, %v6152
        %v6154 = vpop.f32.mrf.mxu0
        %v6155 = vadd.f32 %v6114, %v6154
        %v6156 = vpop.f32.mrf.mxu0
        %v6157 = vpop.f32.mrf.mxu0
        %6158 = vdwg.mxu0
        %6159 = vmatprep.subr.bf16.mxu0 0
        %6160 = vmatpush1.bf16.msra.mxu0 0
        %6161 = vmatprep.subr.bf16.mxu0 0
        %6162 = vmatpush1.bf16.msra.mxu0 0
        %6163 = vmatprep.subr.bf16.mxu0 0
        %6164 = vmatpush1.bf16.msra.mxu0 0
        %6165 = vmatprep.subr.bf16.mxu0 0
        %6166 = vmatpush1.bf16.msra.mxu0 0
        %6167 = vmatprep.subr.bf16.mxu0 0
        %6168 = vmatpush1.bf16.msra.mxu0 0
        %6169 = vmatprep.subr.bf16.mxu0 0
        %6170 = vmatpush1.bf16.msra.mxu0 0
        %6171 = vmatprep.subr.bf16.mxu0 0
        %6172 = vmatpush1.bf16.msra.mxu0 0
        %6173 = vmatprep.subr.bf16.mxu0 %v5414
        %6174 = vmatpush1.bf16.msra.mxu0 %v5413
        %6175 = vmatprep.subr.bf16.mxu0 0
        %6176 = vmatpush2.bf16.msra.mxu0 0
        %6177 = vmatprep.subr.bf16.mxu0 0
        %6178 = vmatpush2.bf16.msra.mxu0 0
        %6179 = vmatprep.subr.bf16.mxu0 0
        %6180 = vmatpush2.bf16.msra.mxu0 0
        %6181 = vmatprep.subr.bf16.mxu0 0
        %6182 = vmatpush2.bf16.msra.mxu0 0
        %6183 = vmatprep.subr.bf16.mxu0 0
        %6184 = vmatpush2.bf16.msra.mxu0 0
        %6185 = vmatprep.subr.bf16.mxu0 0
        %6186 = vmatpush2.bf16.msra.mxu0 0
        %6187 = vmatprep.subr.bf16.mxu0 0
        %6188 = vmatpush2.bf16.msra.mxu0 0
        %6189 = vmatprep.subr.bf16.mxu0 0
        %6190 = vmatpush2.bf16.msra.mxu0 0
        %6191 = vmatprep.mubr.bf16.mxu0 0
        %6192 = vmatmul.mubr.bf16.gmra.mxu0 %v5870
        %v6193 = vpop.f32.mrf.mxu0
        %v6194 = vadd.f32 %v6153, %v6193
        %v6195 = vpop.f32.mrf.mxu0
        %v6196 = vadd.f32 %v6155, %v6195
        %v6197 = vpop.f32.mrf.mxu0
        %v6198 = vpop.f32.mrf.mxu0
        %6199 = vdwg.mxu0
        %6200 = vmatprep.subr.bf16.mxu0 %v4996
        %6201 = vmatpush1.bf16.msra.mxu0 %v4995
        %6202 = vmatprep.subr.bf16.mxu0 %v4992
        %6203 = vmatpush1.bf16.msra.mxu0 %v4991
        %6204 = vmatprep.subr.bf16.mxu0 %v4988
        %6205 = vmatpush1.bf16.msra.mxu0 %v4987
        %6206 = vmatprep.subr.bf16.mxu0 %v4984
        %6207 = vmatpush1.bf16.msra.mxu0 %v4983
        %6208 = vmatprep.subr.bf16.mxu0 %v4980
        %6209 = vmatpush1.bf16.msra.mxu0 %v4979
        %6210 = vmatprep.subr.bf16.mxu0 %v4976
        %6211 = vmatpush1.bf16.msra.mxu0 %v4975
        %6212 = vmatprep.subr.bf16.mxu0 %v4972
        %6213 = vmatpush1.bf16.msra.mxu0 %v4971
        %6214 = vmatprep.subr.bf16.mxu0 %v4968
        %6215 = vmatpush1.bf16.msra.mxu0 %v4967
        %6216 = vmatprep.subr.bf16.mxu0 %v5028
        %6217 = vmatpush2.bf16.msra.mxu0 %v5027
        %6218 = vmatprep.subr.bf16.mxu0 %v5024
        %6219 = vmatpush2.bf16.msra.mxu0 %v5023
        %6220 = vmatprep.subr.bf16.mxu0 %v5020
        %6221 = vmatpush2.bf16.msra.mxu0 %v5019
        %6222 = vmatprep.subr.bf16.mxu0 %v5016
        %6223 = vmatpush2.bf16.msra.mxu0 %v5015
        %6224 = vmatprep.subr.bf16.mxu0 %v5012
        %6225 = vmatpush2.bf16.msra.mxu0 %v5011
        %6226 = vmatprep.subr.bf16.mxu0 %v5008
        %6227 = vmatpush2.bf16.msra.mxu0 %v5007
        %6228 = vmatprep.subr.bf16.mxu0 %v5004
        %6229 = vmatpush2.bf16.msra.mxu0 %v5003
        %6230 = vmatprep.subr.bf16.mxu0 %v5000
        %6231 = vmatpush2.bf16.msra.mxu0 %v4999
        %6232 = vmatprep.mubr.bf16.mxu0 %v3121
        %6233 = vmatmul.mubr.bf16.gmra.mxu0 %v3120
        %v6234 = vpop.f32.mrf.mxu0
        %v6235 = vadd.f32 %v3600, %v6234
        %v6236 = vpop.f32.mrf.mxu0
        %v6237 = vadd.f32 %v3604, %v6236
        %v6238 = vpop.f32.mrf.mxu0
        %v6239 = vpop.f32.mrf.mxu0
        %6240 = vdwg.mxu0
        %6241 = vmatprep.subr.bf16.mxu0 %v5060
        %6242 = vmatpush1.bf16.msra.mxu0 %v5059
        %6243 = vmatprep.subr.bf16.mxu0 %v5056
        %6244 = vmatpush1.bf16.msra.mxu0 %v5055
        %6245 = vmatprep.subr.bf16.mxu0 %v5052
        %6246 = vmatpush1.bf16.msra.mxu0 %v5051
        %6247 = vmatprep.subr.bf16.mxu0 %v5048
        %6248 = vmatpush1.bf16.msra.mxu0 %v5047
        %6249 = vmatprep.subr.bf16.mxu0 %v5044
        %6250 = vmatpush1.bf16.msra.mxu0 %v5043
        %6251 = vmatprep.subr.bf16.mxu0 %v5040
        %6252 = vmatpush1.bf16.msra.mxu0 %v5039
        %6253 = vmatprep.subr.bf16.mxu0 %v5036
        %6254 = vmatpush1.bf16.msra.mxu0 %v5035
        %6255 = vmatprep.subr.bf16.mxu0 %v5032
        %6256 = vmatpush1.bf16.msra.mxu0 %v5031
        %6257 = vmatprep.subr.bf16.mxu0 %v5092
        %6258 = vmatpush2.bf16.msra.mxu0 %v5091
        %6259 = vmatprep.subr.bf16.mxu0 %v5088
        %6260 = vmatpush2.bf16.msra.mxu0 %v5087
        %6261 = vmatprep.subr.bf16.mxu0 %v5084
        %6262 = vmatpush2.bf16.msra.mxu0 %v5083
        %6263 = vmatprep.subr.bf16.mxu0 %v5080
        %6264 = vmatpush2.bf16.msra.mxu0 %v5079
        %6265 = vmatprep.subr.bf16.mxu0 %v5076
        %6266 = vmatpush2.bf16.msra.mxu0 %v5075
        %6267 = vmatprep.subr.bf16.mxu0 %v5072
        %6268 = vmatpush2.bf16.msra.mxu0 %v5071
        %6269 = vmatprep.subr.bf16.mxu0 %v5068
        %6270 = vmatpush2.bf16.msra.mxu0 %v5067
        %6271 = vmatprep.subr.bf16.mxu0 %v5064
        %6272 = vmatpush2.bf16.msra.mxu0 %v5063
        %6273 = vmatprep.mubr.bf16.mxu0 %v3123
        %6274 = vmatmul.mubr.bf16.gmra.mxu0 %v3122
        %v6275 = vpop.f32.mrf.mxu0
        %v6276 = vadd.f32 %v6235, %v6275
        %v6277 = vpop.f32.mrf.mxu0
        %v6278 = vadd.f32 %v6237, %v6277
        %v6279 = vpop.f32.mrf.mxu0
        %v6280 = vpop.f32.mrf.mxu0
        %6281 = vdwg.mxu0
        %6282 = vmatprep.subr.bf16.mxu0 %v5124
        %6283 = vmatpush1.bf16.msra.mxu0 %v5123
        %6284 = vmatprep.subr.bf16.mxu0 %v5120
        %6285 = vmatpush1.bf16.msra.mxu0 %v5119
        %6286 = vmatprep.subr.bf16.mxu0 %v5116
        %6287 = vmatpush1.bf16.msra.mxu0 %v5115
        %6288 = vmatprep.subr.bf16.mxu0 %v5112
        %6289 = vmatpush1.bf16.msra.mxu0 %v5111
        %6290 = vmatprep.subr.bf16.mxu0 %v5108
        %6291 = vmatpush1.bf16.msra.mxu0 %v5107
        %6292 = vmatprep.subr.bf16.mxu0 %v5104
        %6293 = vmatpush1.bf16.msra.mxu0 %v5103
        %6294 = vmatprep.subr.bf16.mxu0 %v5100
        %6295 = vmatpush1.bf16.msra.mxu0 %v5099
        %6296 = vmatprep.subr.bf16.mxu0 %v5096
        %6297 = vmatpush1.bf16.msra.mxu0 %v5095
        %6298 = vmatprep.subr.bf16.mxu0 %v5156
        %6299 = vmatpush2.bf16.msra.mxu0 %v5155
        %6300 = vmatprep.subr.bf16.mxu0 %v5152
        %6301 = vmatpush2.bf16.msra.mxu0 %v5151
        %6302 = vmatprep.subr.bf16.mxu0 %v5148
        %6303 = vmatpush2.bf16.msra.mxu0 %v5147
        %6304 = vmatprep.subr.bf16.mxu0 %v5144
        %6305 = vmatpush2.bf16.msra.mxu0 %v5143
        %6306 = vmatprep.subr.bf16.mxu0 %v5140
        %6307 = vmatpush2.bf16.msra.mxu0 %v5139
        %6308 = vmatprep.subr.bf16.mxu0 %v5136
        %6309 = vmatpush2.bf16.msra.mxu0 %v5135
        %6310 = vmatprep.subr.bf16.mxu0 %v5132
        %6311 = vmatpush2.bf16.msra.mxu0 %v5131
        %6312 = vmatprep.subr.bf16.mxu0 %v5128
        %6313 = vmatpush2.bf16.msra.mxu0 %v5127
        %6314 = vmatprep.mubr.bf16.mxu0 %v3125
        %6315 = vmatmul.mubr.bf16.gmra.mxu0 %v3124
        %v6316 = vpop.f32.mrf.mxu0
        %v6317 = vadd.f32 %v6276, %v6316
        %v6318 = vpop.f32.mrf.mxu0
        %v6319 = vadd.f32 %v6278, %v6318
        %v6320 = vpop.f32.mrf.mxu0
        %v6321 = vpop.f32.mrf.mxu0
        %6322 = vdwg.mxu0
        %6323 = vmatprep.subr.bf16.mxu0 %v5188
        %6324 = vmatpush1.bf16.msra.mxu0 %v5187
        %6325 = vmatprep.subr.bf16.mxu0 %v5184
        %6326 = vmatpush1.bf16.msra.mxu0 %v5183
        %6327 = vmatprep.subr.bf16.mxu0 %v5180
        %6328 = vmatpush1.bf16.msra.mxu0 %v5179
        %6329 = vmatprep.subr.bf16.mxu0 %v5176
        %6330 = vmatpush1.bf16.msra.mxu0 %v5175
        %6331 = vmatprep.subr.bf16.mxu0 %v5172
        %6332 = vmatpush1.bf16.msra.mxu0 %v5171
        %6333 = vmatprep.subr.bf16.mxu0 %v5168
        %6334 = vmatpush1.bf16.msra.mxu0 %v5167
        %6335 = vmatprep.subr.bf16.mxu0 %v5164
        %6336 = vmatpush1.bf16.msra.mxu0 %v5163
        %6337 = vmatprep.subr.bf16.mxu0 %v5160
        %6338 = vmatpush1.bf16.msra.mxu0 %v5159
        %6339 = vmatprep.subr.bf16.mxu0 %v5220
        %6340 = vmatpush2.bf16.msra.mxu0 %v5219
        %6341 = vmatprep.subr.bf16.mxu0 %v5216
        %6342 = vmatpush2.bf16.msra.mxu0 %v5215
        %6343 = vmatprep.subr.bf16.mxu0 %v5212
        %6344 = vmatpush2.bf16.msra.mxu0 %v5211
        %6345 = vmatprep.subr.bf16.mxu0 %v5208
        %6346 = vmatpush2.bf16.msra.mxu0 %v5207
        %6347 = vmatprep.subr.bf16.mxu0 %v5204
        %6348 = vmatpush2.bf16.msra.mxu0 %v5203
        %6349 = vmatprep.subr.bf16.mxu0 %v5200
        %6350 = vmatpush2.bf16.msra.mxu0 %v5199
        %6351 = vmatprep.subr.bf16.mxu0 %v5196
        %6352 = vmatpush2.bf16.msra.mxu0 %v5195
        %6353 = vmatprep.subr.bf16.mxu0 %v5192
        %6354 = vmatpush2.bf16.msra.mxu0 %v5191
        %6355 = vmatprep.mubr.bf16.mxu0 %v3127
        %6356 = vmatmul.mubr.bf16.gmra.mxu0 %v3126
        %v6357 = vpop.f32.mrf.mxu0
        %v6358 = vadd.f32 %v6317, %v6357
        %v6359 = vpop.f32.mrf.mxu0
        %v6360 = vadd.f32 %v6319, %v6359
        %v6361 = vpop.f32.mrf.mxu0
        %v6362 = vpop.f32.mrf.mxu0
        %6363 = vdwg.mxu0
        %6364 = vmatprep.subr.bf16.mxu0 %v5252
        %6365 = vmatpush1.bf16.msra.mxu0 %v5251
        %6366 = vmatprep.subr.bf16.mxu0 %v5248
        %6367 = vmatpush1.bf16.msra.mxu0 %v5247
        %6368 = vmatprep.subr.bf16.mxu0 %v5244
        %6369 = vmatpush1.bf16.msra.mxu0 %v5243
        %6370 = vmatprep.subr.bf16.mxu0 %v5240
        %6371 = vmatpush1.bf16.msra.mxu0 %v5239
        %6372 = vmatprep.subr.bf16.mxu0 %v5236
        %6373 = vmatpush1.bf16.msra.mxu0 %v5235
        %6374 = vmatprep.subr.bf16.mxu0 %v5232
        %6375 = vmatpush1.bf16.msra.mxu0 %v5231
        %6376 = vmatprep.subr.bf16.mxu0 %v5228
        %6377 = vmatpush1.bf16.msra.mxu0 %v5227
        %6378 = vmatprep.subr.bf16.mxu0 %v5224
        %6379 = vmatpush1.bf16.msra.mxu0 %v5223
        %6380 = vmatprep.subr.bf16.mxu0 %v5284
        %6381 = vmatpush2.bf16.msra.mxu0 %v5283
        %6382 = vmatprep.subr.bf16.mxu0 %v5280
        %6383 = vmatpush2.bf16.msra.mxu0 %v5279
        %6384 = vmatprep.subr.bf16.mxu0 %v5276
        %6385 = vmatpush2.bf16.msra.mxu0 %v5275
        %6386 = vmatprep.subr.bf16.mxu0 %v5272
        %6387 = vmatpush2.bf16.msra.mxu0 %v5271
        %6388 = vmatprep.subr.bf16.mxu0 %v5268
        %6389 = vmatpush2.bf16.msra.mxu0 %v5267
        %6390 = vmatprep.subr.bf16.mxu0 %v5264
        %6391 = vmatpush2.bf16.msra.mxu0 %v5263
        %6392 = vmatprep.subr.bf16.mxu0 %v5260
        %6393 = vmatpush2.bf16.msra.mxu0 %v5259
        %6394 = vmatprep.subr.bf16.mxu0 %v5256
        %6395 = vmatpush2.bf16.msra.mxu0 %v5255
        %6396 = vmatprep.mubr.bf16.mxu0 %v3129
        %6397 = vmatmul.mubr.bf16.gmra.mxu0 %v3128
        %v6398 = vpop.f32.mrf.mxu0
        %v6399 = vadd.f32 %v6358, %v6398
        %v6400 = vpop.f32.mrf.mxu0
        %v6401 = vadd.f32 %v6360, %v6400
        %v6402 = vpop.f32.mrf.mxu0
        %v6403 = vpop.f32.mrf.mxu0
        %6404 = vdwg.mxu0
        %6405 = vmatprep.subr.bf16.mxu0 %v5316
        %6406 = vmatpush1.bf16.msra.mxu0 %v5315
        %6407 = vmatprep.subr.bf16.mxu0 %v5312
        %6408 = vmatpush1.bf16.msra.mxu0 %v5311
        %6409 = vmatprep.subr.bf16.mxu0 %v5308
        %6410 = vmatpush1.bf16.msra.mxu0 %v5307
        %6411 = vmatprep.subr.bf16.mxu0 %v5304
        %6412 = vmatpush1.bf16.msra.mxu0 %v5303
        %6413 = vmatprep.subr.bf16.mxu0 %v5300
        %6414 = vmatpush1.bf16.msra.mxu0 %v5299
        %6415 = vmatprep.subr.bf16.mxu0 %v5296
        %6416 = vmatpush1.bf16.msra.mxu0 %v5295
        %6417 = vmatprep.subr.bf16.mxu0 %v5292
        %6418 = vmatpush1.bf16.msra.mxu0 %v5291
        %6419 = vmatprep.subr.bf16.mxu0 %v5288
        %6420 = vmatpush1.bf16.msra.mxu0 %v5287
        %6421 = vmatprep.subr.bf16.mxu0 %v5348
        %6422 = vmatpush2.bf16.msra.mxu0 %v5347
        %6423 = vmatprep.subr.bf16.mxu0 %v5344
        %6424 = vmatpush2.bf16.msra.mxu0 %v5343
        %6425 = vmatprep.subr.bf16.mxu0 %v5340
        %6426 = vmatpush2.bf16.msra.mxu0 %v5339
        %6427 = vmatprep.subr.bf16.mxu0 %v5336
        %6428 = vmatpush2.bf16.msra.mxu0 %v5335
        %6429 = vmatprep.subr.bf16.mxu0 %v5332
        %6430 = vmatpush2.bf16.msra.mxu0 %v5331
        %6431 = vmatprep.subr.bf16.mxu0 %v5328
        %6432 = vmatpush2.bf16.msra.mxu0 %v5327
        %6433 = vmatprep.subr.bf16.mxu0 %v5324
        %6434 = vmatpush2.bf16.msra.mxu0 %v5323
        %6435 = vmatprep.subr.bf16.mxu0 %v5320
        %6436 = vmatpush2.bf16.msra.mxu0 %v5319
        %6437 = vmatprep.mubr.bf16.mxu0 %v3131
        %6438 = vmatmul.mubr.bf16.gmra.mxu0 %v3130
        %v6439 = vpop.f32.mrf.mxu0
        %v6440 = vadd.f32 %v6399, %v6439
        %v6441 = vpop.f32.mrf.mxu0
        %v6442 = vadd.f32 %v6401, %v6441
        %v6443 = vpop.f32.mrf.mxu0
        %v6444 = vpop.f32.mrf.mxu0
        %6445 = vdwg.mxu0
        %6446 = vmatprep.subr.bf16.mxu0 %v5380
        %6447 = vmatpush1.bf16.msra.mxu0 %v5379
        %6448 = vmatprep.subr.bf16.mxu0 %v5376
        %6449 = vmatpush1.bf16.msra.mxu0 %v5375
        %6450 = vmatprep.subr.bf16.mxu0 %v5372
        %6451 = vmatpush1.bf16.msra.mxu0 %v5371
        %6452 = vmatprep.subr.bf16.mxu0 %v5368
        %6453 = vmatpush1.bf16.msra.mxu0 %v5367
        %6454 = vmatprep.subr.bf16.mxu0 %v5364
        %6455 = vmatpush1.bf16.msra.mxu0 %v5363
        %6456 = vmatprep.subr.bf16.mxu0 %v5360
        %6457 = vmatpush1.bf16.msra.mxu0 %v5359
        %6458 = vmatprep.subr.bf16.mxu0 %v5356
        %6459 = vmatpush1.bf16.msra.mxu0 %v5355
        %6460 = vmatprep.subr.bf16.mxu0 %v5352
        %6461 = vmatpush1.bf16.msra.mxu0 %v5351
        %6462 = vmatprep.subr.bf16.mxu0 %v5412
        %6463 = vmatpush2.bf16.msra.mxu0 %v5411
        %6464 = vmatprep.subr.bf16.mxu0 %v5408
        %6465 = vmatpush2.bf16.msra.mxu0 %v5407
        %6466 = vmatprep.subr.bf16.mxu0 %v5404
        %6467 = vmatpush2.bf16.msra.mxu0 %v5403
        %6468 = vmatprep.subr.bf16.mxu0 %v5400
        %6469 = vmatpush2.bf16.msra.mxu0 %v5399
        %6470 = vmatprep.subr.bf16.mxu0 %v5396
        %6471 = vmatpush2.bf16.msra.mxu0 %v5395
        %6472 = vmatprep.subr.bf16.mxu0 %v5392
        %6473 = vmatpush2.bf16.msra.mxu0 %v5391
        %6474 = vmatprep.subr.bf16.mxu0 %v5388
        %6475 = vmatpush2.bf16.msra.mxu0 %v5387
        %6476 = vmatprep.subr.bf16.mxu0 %v5384
        %6477 = vmatpush2.bf16.msra.mxu0 %v5383
        %6478 = vmatprep.mubr.bf16.mxu0 %v3133
        %6479 = vmatmul.mubr.bf16.gmra.mxu0 %v3132
        %v6480 = vpop.f32.mrf.mxu0
        %v6481 = vadd.f32 %v6440, %v6480
        %v6482 = vpop.f32.mrf.mxu0
        %v6483 = vadd.f32 %v6442, %v6482
        %v6484 = vpop.f32.mrf.mxu0
        %v6485 = vpop.f32.mrf.mxu0
        %6486 = vdwg.mxu0
        %6487 = vmatprep.subr.bf16.mxu0 0
        %6488 = vmatpush1.bf16.msra.mxu0 0
        %6489 = vmatprep.subr.bf16.mxu0 0
        %6490 = vmatpush1.bf16.msra.mxu0 0
        %6491 = vmatprep.subr.bf16.mxu0 0
        %6492 = vmatpush1.bf16.msra.mxu0 0
        %6493 = vmatprep.subr.bf16.mxu0 0
        %6494 = vmatpush1.bf16.msra.mxu0 0
        %6495 = vmatprep.subr.bf16.mxu0 0
        %6496 = vmatpush1.bf16.msra.mxu0 0
        %6497 = vmatprep.subr.bf16.mxu0 0
        %6498 = vmatpush1.bf16.msra.mxu0 0
        %6499 = vmatprep.subr.bf16.mxu0 0
        %6500 = vmatpush1.bf16.msra.mxu0 0
        %6501 = vmatprep.subr.bf16.mxu0 %v5416
        %6502 = vmatpush1.bf16.msra.mxu0 %v5415
        %6503 = vmatprep.subr.bf16.mxu0 0
        %6504 = vmatpush2.bf16.msra.mxu0 0
        %6505 = vmatprep.subr.bf16.mxu0 0
        %6506 = vmatpush2.bf16.msra.mxu0 0
        %6507 = vmatprep.subr.bf16.mxu0 0
        %6508 = vmatpush2.bf16.msra.mxu0 0
        %6509 = vmatprep.subr.bf16.mxu0 0
        %6510 = vmatpush2.bf16.msra.mxu0 0
        %6511 = vmatprep.subr.bf16.mxu0 0
        %6512 = vmatpush2.bf16.msra.mxu0 0
        %6513 = vmatprep.subr.bf16.mxu0 0
        %6514 = vmatpush2.bf16.msra.mxu0 0
        %6515 = vmatprep.subr.bf16.mxu0 0
        %6516 = vmatpush2.bf16.msra.mxu0 0
        %6517 = vmatprep.subr.bf16.mxu0 0
        %6518 = vmatpush2.bf16.msra.mxu0 0
        %6519 = vmatprep.mubr.bf16.mxu0 0
        %6520 = vmatmul.mubr.bf16.gmra.mxu0 %v5870
        %v6521 = vpop.f32.mrf.mxu0
        %v6522 = vadd.f32 %v6481, %v6521
        %v6523 = vpop.f32.mrf.mxu0
        %v6524 = vadd.f32 %v6483, %v6523
        %v6525 = vpop.f32.mrf.mxu0
        %v6526 = vpop.f32.mrf.mxu0
        %6527 = vdwg.mxu0
        %v6528 = vmax.f32 %v6194, 0.0
        %v6529 = vmax.f32 %v6196, 0.0
        %v6530 = vmax.f32 %v6522, 0.0
        %v6531 = vmax.f32 %v6524, 0.0
        %v6532 = vpack.c.bf16 %v6528, %v6528
        %v6533 = vpack.c.bf16 %v6529, %v6529
        %v6534 = vpack.c.bf16 %v6530, %v6530
        %v6535 = vpack.c.bf16 %v6531, %v6531
        %v6536 = vld [vmem:[#allocation24] sm:$0xf]
        %v6537 = vld [vmem:[#allocation24 + $0x4] sm:$0xf]
        %v6538 = vld [vmem:[#allocation24 + $0x8] sm:$0xf]
        %v6539 = vld [vmem:[#allocation24 + $0xc] sm:$0xf]
        %v6540 = vld [vmem:[#allocation24 + $0x10] sm:$0xf]
        %v6541 = vld [vmem:[#allocation24 + $0x14] sm:$0xf]
        %v6542 = vld [vmem:[#allocation24 + $0x18] sm:$0xf]
        %v6543 = vld [vmem:[#allocation24 + $0x1c] sm:$0xf]
        %v6544 = vld [vmem:[#allocation24 + $0x20] sm:$0xf]
        %v6545 = vld [vmem:[#allocation24 + $0x24] sm:$0xf]
        %v6546 = vld [vmem:[#allocation24 + $0x28] sm:$0xf]
        %v6547 = vld [vmem:[#allocation24 + $0x2c] sm:$0xf]
        %v6548 = vld [vmem:[#allocation24 + $0x30] sm:$0xf]
        %v6549 = vld [vmem:[#allocation24 + $0x34] sm:$0xf]
        %v6550 = vld [vmem:[#allocation24 + $0x38] sm:$0xf]
        %v6551 = vld [vmem:[#allocation24 + $0x3c] sm:$0xf]
        %v6552 = vld [vmem:[#allocation24 + $0x40] sm:$0xf]
        %v6553 = vld [vmem:[#allocation24 + $0x44] sm:$0xf]
        %v6554 = vld [vmem:[#allocation24 + $0x48] sm:$0xf]
        %v6555 = vld [vmem:[#allocation24 + $0x4c] sm:$0xf]
        %v6556 = vld [vmem:[#allocation24 + $0x50] sm:$0xf]
        %v6557 = vld [vmem:[#allocation24 + $0x54] sm:$0xf]
        %v6558 = vld [vmem:[#allocation24 + $0x58] sm:$0xf]
        %v6559 = vld [vmem:[#allocation24 + $0x5c] sm:$0xf]
        %v6560 = vld [vmem:[#allocation24 + $0x60] sm:$0xf]
        %v6561 = vld [vmem:[#allocation24 + $0x64] sm:$0xf]
        %v6562 = vld [vmem:[#allocation24 + $0x68] sm:$0xf]
        %v6563 = vld [vmem:[#allocation24 + $0x6c] sm:$0xf]
        %v6564 = vld [vmem:[#allocation24 + $0x70] sm:$0xf]
        %v6565 = vld [vmem:[#allocation24 + $0x74] sm:$0xf]
        %v6566 = vld [vmem:[#allocation24 + $0x78] sm:$0xf]
        %v6567 = vld [vmem:[#allocation24 + $0x7c] sm:$0xf]
        %v6568 = vld [vmem:[#allocation24 + $0x80] sm:$0xf]
        %v6569 = vld [vmem:[#allocation24 + $0x84] sm:$0xf]
        %v6570 = vld [vmem:[#allocation24 + $0x88] sm:$0xf]
        %v6571 = vld [vmem:[#allocation24 + $0x8c] sm:$0xf]
        %v6572 = vld [vmem:[#allocation24 + $0x90] sm:$0xf]
        %v6573 = vld [vmem:[#allocation24 + $0x94] sm:$0xf]
        %v6574 = vld [vmem:[#allocation24 + $0x98] sm:$0xf]
        %v6575 = vld [vmem:[#allocation24 + $0x9c] sm:$0xf]
        %v6576 = vld [vmem:[#allocation24 + $0xa0] sm:$0xf]
        %v6577 = vld [vmem:[#allocation24 + $0xa4] sm:$0xf]
        %v6578 = vld [vmem:[#allocation24 + $0xa8] sm:$0xf]
        %v6579 = vld [vmem:[#allocation24 + $0xac] sm:$0xf]
        %v6580 = vld [vmem:[#allocation24 + $0xb0] sm:$0xf]
        %v6581 = vld [vmem:[#allocation24 + $0xb4] sm:$0xf]
        %v6582 = vld [vmem:[#allocation24 + $0xb8] sm:$0xf]
        %v6583 = vld [vmem:[#allocation24 + $0xbc] sm:$0xf]
        %v6584 = vld [vmem:[#allocation24 + $0xc0] sm:$0xf]
        %v6585 = vld [vmem:[#allocation24 + $0xc4] sm:$0xf]
        %v6586 = vld [vmem:[#allocation24 + $0xc8] sm:$0xf]
        %v6587 = vld [vmem:[#allocation24 + $0xcc] sm:$0xf]
        %v6588 = vld [vmem:[#allocation24 + $0xd0] sm:$0xf]
        %v6589 = vld [vmem:[#allocation24 + $0xd4] sm:$0xf]
        %v6590 = vld [vmem:[#allocation24 + $0xd8] sm:$0xf]
        %v6591 = vld [vmem:[#allocation24 + $0xdc] sm:$0xf]
        %v6592 = vld [vmem:[#allocation24 + $0xe0] sm:$0xf]
        %v6593 = vld [vmem:[#allocation24 + $0xe4] sm:$0xf]
        %v6594 = vld [vmem:[#allocation24 + $0xe8] sm:$0xf]
        %v6595 = vld [vmem:[#allocation24 + $0xec] sm:$0xf]
        %v6596 = vld [vmem:[#allocation24 + $0xf0] sm:$0xf]
        %v6597 = vld [vmem:[#allocation24 + $0xf4] sm:$0xf]
        %v6598 = vld [vmem:[#allocation24 + $0xf8] sm:$0xf]
        %v6599 = vld [vmem:[#allocation24 + $0xfc] sm:$0xf]
        %v6600 = vld [vmem:[#allocation26] sm:$0x1]
        %v6602 = vlaneseq
        %v6603 = vshrl.u32 %v6602, 7
        %v6604 = vsub.s32 0, %v6603
        %v6605 = vrot.slane %v6600, %v6604
        %v6671 = vunpack.c.l.b16 %v6536
        %v6672 = vunpack.c.l.b16 %v6537
        %v6673 = vunpack.c.l.b16 %v6538
        %v6674 = vunpack.c.l.b16 %v6539
        %v6675 = vunpack.c.l.b16 %v6540
        %v6676 = vunpack.c.l.b16 %v6541
        %v6677 = vunpack.c.l.b16 %v6542
        %v6678 = vunpack.c.l.b16 %v6543
        %v6679 = vunpack.c.l.b16 %v6544
        %v6680 = vunpack.c.l.b16 %v6545
        %v6681 = vunpack.c.l.b16 %v6546
        %v6682 = vunpack.c.l.b16 %v6547
        %v6683 = vunpack.c.l.b16 %v6548
        %v6684 = vunpack.c.l.b16 %v6549
        %v6685 = vunpack.c.l.b16 %v6550
        %v6686 = vunpack.c.l.b16 %v6551
        %v6687 = vunpack.c.l.b16 %v6552
        %v6688 = vunpack.c.l.b16 %v6553
        %v6689 = vunpack.c.l.b16 %v6554
        %v6690 = vunpack.c.l.b16 %v6555
        %v6691 = vunpack.c.l.b16 %v6556
        %v6692 = vunpack.c.l.b16 %v6557
        %v6693 = vunpack.c.l.b16 %v6558
        %v6694 = vunpack.c.l.b16 %v6559
        %v6695 = vunpack.c.l.b16 %v6560
        %v6696 = vunpack.c.l.b16 %v6561
        %v6697 = vunpack.c.l.b16 %v6562
        %v6698 = vunpack.c.l.b16 %v6563
        %v6699 = vunpack.c.l.b16 %v6564
        %v6700 = vunpack.c.l.b16 %v6565
        %v6701 = vunpack.c.l.b16 %v6566
        %v6702 = vunpack.c.l.b16 %v6567
        %v6703 = vunpack.c.l.b16 %v6568
        %v6704 = vunpack.c.l.b16 %v6569
        %v6705 = vunpack.c.l.b16 %v6570
        %v6706 = vunpack.c.l.b16 %v6571
        %v6707 = vunpack.c.l.b16 %v6572
        %v6708 = vunpack.c.l.b16 %v6573
        %v6709 = vunpack.c.l.b16 %v6574
        %v6710 = vunpack.c.l.b16 %v6575
        %v6711 = vunpack.c.l.b16 %v6576
        %v6712 = vunpack.c.l.b16 %v6577
        %v6713 = vunpack.c.l.b16 %v6578
        %v6714 = vunpack.c.l.b16 %v6579
        %v6715 = vunpack.c.l.b16 %v6580
        %v6716 = vunpack.c.l.b16 %v6581
        %v6717 = vunpack.c.l.b16 %v6582
        %v6718 = vunpack.c.l.b16 %v6583
        %v6719 = vunpack.c.l.b16 %v6584
        %v6720 = vunpack.c.l.b16 %v6585
        %v6721 = vunpack.c.l.b16 %v6586
        %v6722 = vunpack.c.l.b16 %v6587
        %v6723 = vunpack.c.l.b16 %v6588
        %v6724 = vunpack.c.l.b16 %v6589
        %v6725 = vunpack.c.l.b16 %v6590
        %v6726 = vunpack.c.l.b16 %v6591
        %v6727 = vunpack.c.l.b16 %v6592
        %v6728 = vunpack.c.l.b16 %v6593
        %v6729 = vunpack.c.l.b16 %v6594
        %v6730 = vunpack.c.l.b16 %v6595
        %v6731 = vunpack.c.l.b16 %v6596
        %v6732 = vunpack.c.l.b16 %v6597
        %v6733 = vunpack.c.l.b16 %v6598
        %v6734 = vunpack.c.l.b16 %v6599
        %v6735 = vpack.c.b16 %v6672, %v6671
        %v6736 = vpack.c.b16 %v6674, %v6673
        %v6737 = vpack.c.b16 %v6676, %v6675
        %v6738 = vpack.c.b16 %v6678, %v6677
        %v6739 = vpack.c.b16 %v6680, %v6679
        %v6740 = vpack.c.b16 %v6682, %v6681
        %v6741 = vpack.c.b16 %v6684, %v6683
        %v6742 = vpack.c.b16 %v6686, %v6685
        %v6743 = vpack.c.b16 %v6688, %v6687
        %v6744 = vpack.c.b16 %v6690, %v6689
        %v6745 = vpack.c.b16 %v6692, %v6691
        %v6746 = vpack.c.b16 %v6694, %v6693
        %v6747 = vpack.c.b16 %v6696, %v6695
        %v6748 = vpack.c.b16 %v6698, %v6697
        %v6749 = vpack.c.b16 %v6700, %v6699
        %v6750 = vpack.c.b16 %v6702, %v6701
        %v6751 = vpack.c.b16 %v6704, %v6703
        %v6752 = vpack.c.b16 %v6706, %v6705
        %v6753 = vpack.c.b16 %v6708, %v6707
        %v6754 = vpack.c.b16 %v6710, %v6709
        %v6755 = vpack.c.b16 %v6712, %v6711
        %v6756 = vpack.c.b16 %v6714, %v6713
        %v6757 = vpack.c.b16 %v6716, %v6715
        %v6758 = vpack.c.b16 %v6718, %v6717
        %v6759 = vpack.c.b16 %v6720, %v6719
        %v6760 = vpack.c.b16 %v6722, %v6721
        %v6761 = vpack.c.b16 %v6724, %v6723
        %v6762 = vpack.c.b16 %v6726, %v6725
        %v6763 = vpack.c.b16 %v6728, %v6727
        %v6764 = vpack.c.b16 %v6730, %v6729
        %v6765 = vpack.c.b16 %v6732, %v6731
        %v6766 = vpack.c.b16 %v6734, %v6733
        %6799 = vmatprep.subr.bf16.mxu0 0
        %6800 = vmatpush1.bf16.msra.mxu0 %v6742
        %6801 = vmatprep.subr.bf16.mxu0 0
        %6802 = vmatpush1.bf16.msra.mxu0 %v6741
        %6803 = vmatprep.subr.bf16.mxu0 0
        %6804 = vmatpush1.bf16.msra.mxu0 %v6740
        %6805 = vmatprep.subr.bf16.mxu0 0
        %6806 = vmatpush1.bf16.msra.mxu0 %v6739
        %6807 = vmatprep.subr.bf16.mxu0 0
        %6808 = vmatpush1.bf16.msra.mxu0 %v6738
        %6809 = vmatprep.subr.bf16.mxu0 0
        %6810 = vmatpush1.bf16.msra.mxu0 %v6737
        %6811 = vmatprep.subr.bf16.mxu0 0
        %6812 = vmatpush1.bf16.msra.mxu0 %v6736
        %6813 = vmatprep.subr.bf16.mxu0 0
        %6814 = vmatpush1.bf16.msra.mxu0 %v6735
        %6815 = vmatprep.subr.bf16.mxu0 0
        %6816 = vmatpush2.bf16.msra.mxu0 %v6750
        %6817 = vmatprep.subr.bf16.mxu0 0
        %6818 = vmatpush2.bf16.msra.mxu0 %v6749
        %6819 = vmatprep.subr.bf16.mxu0 0
        %6820 = vmatpush2.bf16.msra.mxu0 %v6748
        %6821 = vmatprep.subr.bf16.mxu0 0
        %6822 = vmatpush2.bf16.msra.mxu0 %v6747
        %6823 = vmatprep.subr.bf16.mxu0 0
        %6824 = vmatpush2.bf16.msra.mxu0 %v6746
        %6825 = vmatprep.subr.bf16.mxu0 0
        %6826 = vmatpush2.bf16.msra.mxu0 %v6745
        %6827 = vmatprep.subr.bf16.mxu0 0
        %6828 = vmatpush2.bf16.msra.mxu0 %v6744
        %6829 = vmatprep.subr.bf16.mxu0 0
        %6830 = vmatpush2.bf16.msra.mxu0 %v6743
        %6831 = vmatprep.mubr.bf16.mxu0 %v6533
        %6832 = vmatmul.mubr.bf16.gmra.mxu0 %v6532
        %v6833 = vpop.f32.mrf.mxu0
        %v6834 = vadd.f32 %v6605, %v6833
        %v6835 = vpop.f32.mrf.mxu0
        %v6836 = vpop.f32.mrf.mxu0
        %v6837 = vpop.f32.mrf.mxu0
        %6838 = vdwg.mxu0
        %6839 = vmatprep.subr.bf16.mxu0 0
        %6840 = vmatpush1.bf16.msra.mxu0 %v6758
        %6841 = vmatprep.subr.bf16.mxu0 0
        %6842 = vmatpush1.bf16.msra.mxu0 %v6757
        %6843 = vmatprep.subr.bf16.mxu0 0
        %6844 = vmatpush1.bf16.msra.mxu0 %v6756
        %6845 = vmatprep.subr.bf16.mxu0 0
        %6846 = vmatpush1.bf16.msra.mxu0 %v6755
        %6847 = vmatprep.subr.bf16.mxu0 0
        %6848 = vmatpush1.bf16.msra.mxu0 %v6754
        %6849 = vmatprep.subr.bf16.mxu0 0
        %6850 = vmatpush1.bf16.msra.mxu0 %v6753
        %6851 = vmatprep.subr.bf16.mxu0 0
        %6852 = vmatpush1.bf16.msra.mxu0 %v6752
        %6853 = vmatprep.subr.bf16.mxu0 0
        %6854 = vmatpush1.bf16.msra.mxu0 %v6751
        %6855 = vmatprep.subr.bf16.mxu0 0
        %6856 = vmatpush2.bf16.msra.mxu0 %v6766
        %6857 = vmatprep.subr.bf16.mxu0 0
        %6858 = vmatpush2.bf16.msra.mxu0 %v6765
        %6859 = vmatprep.subr.bf16.mxu0 0
        %6860 = vmatpush2.bf16.msra.mxu0 %v6764
        %6861 = vmatprep.subr.bf16.mxu0 0
        %6862 = vmatpush2.bf16.msra.mxu0 %v6763
        %6863 = vmatprep.subr.bf16.mxu0 0
        %6864 = vmatpush2.bf16.msra.mxu0 %v6762
        %6865 = vmatprep.subr.bf16.mxu0 0
        %6866 = vmatpush2.bf16.msra.mxu0 %v6761
        %6867 = vmatprep.subr.bf16.mxu0 0
        %6868 = vmatpush2.bf16.msra.mxu0 %v6760
        %6869 = vmatprep.subr.bf16.mxu0 0
        %6870 = vmatpush2.bf16.msra.mxu0 %v6759
        %6871 = vmatprep.mubr.bf16.mxu0 %v6535
        %6872 = vmatmul.mubr.bf16.gmra.mxu0 %v6534
        %v6873 = vpop.f32.mrf.mxu0
        %v6874 = vadd.f32 %v6834, %v6873
        %v6875 = vpop.f32.mrf.mxu0
        %v6876 = vpop.f32.mrf.mxu0
        %v6877 = vpop.f32.mrf.mxu0
        %6878 = vdwg.mxu0
        %v6879 = vmax.f32 %v6874, 0.0
        %v6880 = vld [vmem:[#allocation27] sm:$0x1]
        %v6882 = vlaneseq
        %v6883 = vshrl.u32 %v6882, 7
        %v6884 = vsub.s32 0, %v6883
        %v6885 = vrot.slane %v6880, %v6884
        %v6887 = vmul.f32 %v6879, %v6885
        %6888 = vadd.xlane.f32.xlu0 %v6887
        %v6889 = vpop.xlane.xlu0 %6888
        %v6890 = vld [vmem:[#allocation5] sm:$0x1]
        %v6892 = vlaneseq
        %v6893 = vshrl.u32 %v6892, 7
        %v6894 = vsub.s32 0, %v6893
        %v6895 = vrot.slane %v6890, %v6894
        %v6897 = vadd.f32 %v6889, %v6895
        %vm6898 = vcmask 7168
        %6899 = vst.msk [vmem:[%s877] sm:$0xff] %vm6898, %v6897
        %p6900 = scmp.lt.s32.totalorder %s57, 3
        %s6901 = scalar_select %p6900, %s57, 3
        %s6902 = smul.addr %s6901, 8
        %s6903 = scalar_lea.vmem %s19, %s6902
        %s6904 = sand.u32 %s473, 1
        %s6905 = scalar_lea.sflag [#allocation8], %s6904
        %s6906 = sand.u32 %s473, 1
        %s6907 = smul.addr %s6906, 120
        %s6908 = scalar_lea.vmem [#allocation29], %s6907
        // Predicated region
        $region145: #{graph_classifier_forward.1} parent=87 // pred_check
          %p6909 = pneg %p457
        $region146: #{graph_classifier_forward.1} parent=87 // pred_check_branch
          %6911 = sbr.rel (%p6909) target = $region148
        $region147: #{graph_classifier_forward.1} parent=87 // pred_region
          _
        $region148: #{graph_classifier_forward.1} parent=87 // pred_fallthru
          _
        // Predicated region
        $region149: #{graph_classifier_forward.1} parent=87 // pred_check
          %p6912 = pneg %p483
        $region150: #{graph_classifier_forward.1} parent=87 // pred_check_branch
          %6914 = sbr.rel (%p6912) target = $region152
        $region151: #{graph_classifier_forward.1} parent=87 // pred_region
          %s6916 = ssub.s32 1920, 1920
          %6917 = vsyncadd %s6905, %s6916
          %s6918 = smul.addr %s57, 15
          %s6919 = smul.addr %s6918, 128
          %s6920 = scalar_lea.hbm %s20, %s6919
          %s6922 = sshll.u32 %s6908, 4
          %s6923 = int_to_ptr.vmem [resolvable:$true] %s6922
          %6925 = dma.vmem_to_hbm [thread:$0]  %s6923, 1920, %s6920, %s6905
        $region152: #{graph_classifier_forward.1} parent=87 // pred_fallthru
          _
      $region88: #{graph_classifier_forward.1} parent=5 // pred_fallthru
        _
      %p6926 = scmp.le.s32.totalorder 2, %s52
      // Predicated region
      $region153: #{graph_classifier_forward.1} parent=5 // pred_check
        %p6927 = pneg %p6926
      $region154: #{graph_classifier_forward.1} parent=5 // pred_check_branch
        %6929 = sbr.rel (%p6927) target = $region156
      $region155: #{graph_classifier_forward.1} parent=5 // pred_region
        %s6930 = ssub.s32 %s52, 2
        // Predicated region
        $region157: #{graph_classifier_forward.1} parent=155 // pred_check
          %p6931 = pneg %p463
        $region158: #{graph_classifier_forward.1} parent=155 // pred_check_branch
          %6933 = sbr.rel (%p6931) target = $region160
        $region159: #{graph_classifier_forward.1} parent=155 // pred_region
          %p6934 = scmp.lt.s32.totalorder %s58, 3
          %s6935 = scalar_select %p6934, %s58, 3
          %s6936 = smul.addr %s6935, 8
          %s6937 = scalar_lea.vmem %s19, %s6936
        $region160: #{graph_classifier_forward.1} parent=155 // pred_fallthru
          _
        // Predicated region
        $region161: #{graph_classifier_forward.1} parent=155 // pred_check
          %p6938 = pneg %p489
        $region162: #{graph_classifier_forward.1} parent=155 // pred_check_branch
          %6940 = sbr.rel (%p6938) target = $region164
        $region163: #{graph_classifier_forward.1} parent=155 // pred_region
          %s6941 = sand.u32 %s474, 1
          %s6942 = scalar_lea.sflag [#allocation8], %s6941
          %s6943 = sand.u32 %s474, 1
          %s6944 = smul.addr %s6943, 120
          %s6945 = scalar_lea.vmem [#allocation29], %s6944
          %6946 = dma.done %s6942, 1920
        $region164: #{graph_classifier_forward.1} parent=155 // pred_fallthru
          _
      $region156: #{graph_classifier_forward.1} parent=5 // pred_fallthru
        _
    $region6: #{graph_classifier_forward.1} parent=1 // loop_footer
      %s56 = sadd.s32 1, %s52
    $region7: #{graph_classifier_forward.1} parent=1 // loop_footer_branch
      %51 = sbr.rel target = $region3
    $region8: #{graph_classifier_forward.1} parent=1 // loop_exit
      _
    %6947 = vsyncpa [#allocation7], 1
    %s6948 = scalar_lea.sflag [#allocation7], 1
    %6949 = vsyncpa %s6948, 1
    %6950 = vsyncpa [#allocation10], 1
    %s6951 = scalar_lea.sflag [#allocation10], 1
    %6952 = vsyncpa %s6951, 1
    %6953 = vsyncpa [#allocation13], 1
    %s6954 = scalar_lea.sflag [#allocation13], 1
    %6955 = vsyncpa %s6954, 1
    %6956 = vsyncpa [#allocation16], 1
    %6957 = vsyncpa [#allocation19], 1
    %6958 = vsyncpa [#allocation22], 1
    %6959 = vsyncpa [#allocation25], 1
    %6960 = vsyncpa [#allocation28], 1
    %6961 = vsyncpa [#allocation8], 1
    %s6962 = scalar_lea.sflag [#allocation8], 1
    %6963 = vsyncpa %s6962, 1

</llo_original>
